<compile_context>
chip_gen: v7x
topology: tpu7x:2x2x1
jax: 0.10.0
libtpu: 0.0.40
codegen_flags: <defaults>
</compile_context>

<pallas_src>
import functools
import math

import jax
import jax.numpy as jnp
from jax.experimental import pallas as pl
from jax.experimental.pallas import tpu as pltpu

# ---- small, deterministic config (scaled down from the BartConfig in model.py) ----
D_MODEL = 128                      # lane-dense hidden size
N_HEADS = 4
HEAD_DIM = D_MODEL // N_HEADS      # 32
FFN_DIM = 256
ENC_LAYERS = 2
DEC_LAYERS = 2
ENG_DIM = 256                      # eng vocab (eng_embed rows / eng_lm_head outputs)
O_DIM = 128                        # "oth" vocab (tgt_embed rows)
MAX_POS = 64
LN_EPS = 1e-5
NEG_INF = -1e9
EMB_SCALE = math.sqrt(D_MODEL)     # self.scale_embedding = d_model ** 0.5
ATTN_SCALE = HEAD_DIM ** -0.5      # BartAttention q scaling (folded into q weights)


# ------------------------------ in-kernel helpers (pure jnp on values) ------------------------------

def _ln(h, g, b):
    mean = jnp.mean(h, axis=-1, keepdims=True)
    var = jnp.mean(jnp.square(h - mean), axis=-1, keepdims=True)
    return (h - mean) * jax.lax.rsqrt(var + LN_EPS) * g + b


def _attend(q, k, v, bias, wo, *, b, lq, lk):
    """Eager multi-head attention.

    q: (b*lq, D) f32, k/v: (b*lk, D) f32, bias: additive (b, 1|lq, lk) f32 (pad [+ causal]),
    wo: (D, D) bf16.  Both MXU einsums take bf16 operands with f32 accumulation; the
    out-projection is a single K=128 matmul over the concatenated per-head contexts.
    Note: pl.reciprocal(approx=True) means softmax rows sum to ~1 (1e-3-ish tolerance);
    fully-masked rows degrade to a uniform softmax (harmless, padded outputs are ignored).
    """
    q = q.astype(jnp.bfloat16)
    k = k.astype(jnp.bfloat16)
    v = v.astype(jnp.bfloat16)
    ctx_heads = []
    for h in range(N_HEADS):                                           # static unroll
        lo, hi = h * HEAD_DIM, (h + 1) * HEAD_DIM
        q_h = q[:, lo:hi].reshape(b, lq, HEAD_DIM)
        k_h = k[:, lo:hi].reshape(b, lk, HEAD_DIM)
        v_h = v[:, lo:hi].reshape(b, lk, HEAD_DIM)
        s = jnp.einsum('bqd,bkd->bqk', q_h, k_h,
                       preferred_element_type=jnp.float32)             # (b, lq, lk) f32
        s = s + bias                                                    # one fused mask add
        s = s - jnp.max(s, axis=-1, keepdims=True)
        p = jnp.exp(s)
        p = p * pl.reciprocal(jnp.sum(p, axis=-1, keepdims=True), approx=True)
        ctx = jnp.einsum('bqk,bkd->bqd', p.astype(jnp.bfloat16), v_h,
                         preferred_element_type=jnp.float32)            # (b, lq, Dh) f32
        ctx_heads.append(ctx.reshape(b * lq, HEAD_DIM))
    ctx_all = jnp.concatenate(ctx_heads, axis=-1).astype(jnp.bfloat16)  # (b*lq, D)
    return jnp.dot(ctx_all, wo, preferred_element_type=jnp.float32)     # single K=128 out-proj


def _self_attn_block(x, bias, wqkv, bqkv, wo, bo, g, beta, *, b, l):
    # LN( x + OutProj(MHA(x)) ); single packed [D,3D] QKV matmul.
    qkv = jnp.dot(x.astype(jnp.bfloat16), wqkv,
                  preferred_element_type=jnp.float32) + bqkv            # (b*l, 3D)
    attn = _attend(qkv[:, :D_MODEL], qkv[:, D_MODEL:2 * D_MODEL], qkv[:, 2 * D_MODEL:],
                   bias, wo, b=b, lq=l, lk=l)
    return _ln(attn + bo + x, g, beta)


def _cross_attn_block(x, enc_h_bf16, bias, wq, bq, wkv, bkv, wo, bo, g, beta, *, b, lq, lk):
    # LN( x + OutProj(MHA(q=x, kv=enc_out)) ); packed [D,2D] KV matmul.
    q = jnp.dot(x.astype(jnp.bfloat16), wq, preferred_element_type=jnp.float32) + bq
    kv = jnp.dot(enc_h_bf16, wkv, preferred_element_type=jnp.float32) + bkv
    attn = _attend(q, kv[:, :D_MODEL], kv[:, D_MODEL:], bias, wo, b=b, lq=lq, lk=lk)
    return _ln(attn + bo + x, g, beta)


def _ffn_block(x, w1, b1, w2, b2, g, beta):
    # LN( x + fc2( swish( fc1(x) ) ) )   -- activation_function='swish' == SiLU; f32 VPU math.
    y = jnp.dot(x.astype(jnp.bfloat16), w1, preferred_element_type=jnp.float32) + b1
    y = y * jax.nn.sigmoid(y)
    z = jnp.dot(y.astype(jnp.bfloat16), w2, preferred_element_type=jnp.float32) + b2
    return _ln(z + x, g, beta)


# ------------------------------ fused whole-forward kernel ------------------------------

_INPUT_NAMES = (
    "src_emb", "dec_emb", "enc_pos", "dec_pos", "enc_keep", "dec_keep",
    "enc_ln_emb_g", "enc_ln_emb_b", "dec_ln_emb_g", "dec_ln_emb_b",
    # encoder layer stacks (leading dim = layer)
    "e_wqkv", "e_bqkv", "e_wo", "e_bo", "e_sa_g", "e_sa_b",
    "e_w1", "e_b1", "e_w2", "e_b2", "e_ffn_g", "e_ffn_b",
    # decoder layer stacks
    "d_wqkv", "d_bqkv", "d_wo", "d_bo", "d_sa_g", "d_sa_b",
    "d_ca_wq", "d_ca_bq", "d_ca_wkv", "d_ca_bkv", "d_ca_wo", "d_ca_bo", "d_ca_g", "d_ca_b",
    "d_w1", "d_b1", "d_w2", "d_b2", "d_ffn_g", "d_ffn_b",
    # lm head
    "lm_w", "lm_b",
)


def _adapter_fwd_kernel(*refs, b, s, t):
    r = dict(zip(_INPUT_NAMES, refs[:len(_INPUT_NAMES)]))
    logits_ref = refs[len(_INPUT_NAMES)]

    # ---- additive attention biases, built once and reused by every layer ----
    enc_pad_bias = (1.0 - r["enc_keep"][...]) * NEG_INF                 # (b, 1, s)
    dec_pad_bias = (1.0 - r["dec_keep"][...]) * NEG_INF                 # (b, 1, t)
    qi = jax.lax.broadcasted_iota(jnp.int32, (1, t, t), 1)
    ki = jax.lax.broadcasted_iota(jnp.int32, (1, t, t), 2)
    causal_bias = jnp.where(qi >= ki, 0.0, NEG_INF)                     # (1, t, t)
    dec_self_bias = dec_pad_bias + causal_bias                          # (b, t, t)

    # ---- encoder: layernorm_embedding( embed*sqrt(d) + pos ) then layers ----
    h = _ln(r["src_emb"][...] * EMB_SCALE + r["enc_pos"][...],
            r["enc_ln_emb_g"][...], r["enc_ln_emb_b"][...])
    for i in range(ENC_LAYERS):                                          # static unroll
        h = _self_attn_block(h, enc_pad_bias,
                             r["e_wqkv"][i], r["e_bqkv"][i], r["e_wo"][i], r["e_bo"][i],
                             r["e_sa_g"][i], r["e_sa_b"][i], b=b, l=s)
        h = _ffn_block(h, r["e_w1"][i], r["e_b1"][i], r["e_w2"][i], r["e_b2"][i],
                       r["e_ffn_g"][i], r["e_ffn_b"][i])
    enc_h_bf16 = h.astype(jnp.bfloat16)                                  # (b*s, D), stays in VMEM

    # ---- decoder ----
    h = _ln(r["dec_emb"][...] * EMB_SCALE + r["dec_pos"][...],
            r["dec_ln_emb_g"][...], r["dec_ln_emb_b"][...])
    for i in range(DEC_LAYERS):
        h = _self_attn_block(h, dec_self_bias,
                             r["d_wqkv"][i], r["d_bqkv"][i], r["d_wo"][i], r["d_bo"][i],
                             r["d_sa_g"][i], r["d_sa_b"][i], b=b, l=t)
        h = _cross_attn_block(h, enc_h_bf16, enc_pad_bias,
                              r["d_ca_wq"][i], r["d_ca_bq"][i],
                              r["d_ca_wkv"][i], r["d_ca_bkv"][i],
                              r["d_ca_wo"][i], r["d_ca_bo"][i],
                              r["d_ca_g"][i], r["d_ca_b"][i], b=b, lq=t, lk=s)
        h = _ffn_block(h, r["d_w1"][i], r["d_b1"][i], r["d_w2"][i], r["d_b2"][i],
                       r["d_ffn_g"][i], r["d_ffn_b"][i])

    # ---- lm head fused into the same call ----
    logits_ref[...] = (jnp.dot(h.astype(jnp.bfloat16), r["lm_w"][...],
                               preferred_element_type=jnp.float32) + r["lm_b"][...])


# ------------------------------ parameters ------------------------------

def init_params(key):
    keys = iter(jax.random.split(key, 512))

    def nrm(shape, std=1.0):
        return std * jax.random.normal(next(keys), shape, jnp.float32)

    def lin(din, dout):   # weights stored (in, out) == transposed nn.Linear.weight
        return nrm((din, dout), 0.02), jnp.zeros((dout,), jnp.float32)

    def ones(d): return jnp.ones((1, d), jnp.float32)
    def zeros(d): return jnp.zeros((1, d), jnp.float32)

    def self_attn_layer():
        wq, bq = lin(D_MODEL, D_MODEL)
        wk, bk = lin(D_MODEL, D_MODEL)
        wv, bv = lin(D_MODEL, D_MODEL)
        wo, bo = lin(D_MODEL, D_MODEL)
        return dict(
            # attention scale folded into q weight/bias; packed [D, 3D] for one QKV matmul
            wqkv=jnp.concatenate([wq * ATTN_SCALE, wk, wv], axis=1).astype(jnp.bfloat16),
            bqkv=jnp.concatenate([bq * ATTN_SCALE, bk, bv]).reshape(1, 3 * D_MODEL),
            wo=wo.astype(jnp.bfloat16), bo=bo.reshape(1, D_MODEL),
            g=ones(D_MODEL), b=zeros(D_MODEL))

    def cross_attn_layer():
        wq, bq = lin(D_MODEL, D_MODEL)
        wk, bk = lin(D_MODEL, D_MODEL)
        wv, bv = lin(D_MODEL, D_MODEL)
        wo, bo = lin(D_MODEL, D_MODEL)
        return dict(
            wq=(wq * ATTN_SCALE).astype(jnp.bfloat16),
            bq=(bq * ATTN_SCALE).reshape(1, D_MODEL),
            wkv=jnp.concatenate([wk, wv], axis=1).astype(jnp.bfloat16),
            bkv=jnp.concatenate([bk, bv]).reshape(1, 2 * D_MODEL),
            wo=wo.astype(jnp.bfloat16), bo=bo.reshape(1, D_MODEL),
            g=ones(D_MODEL), b=zeros(D_MODEL))

    def ffn_layer():
        w1, b1 = lin(D_MODEL, FFN_DIM)
        w2, b2 = lin(FFN_DIM, D_MODEL)
        return dict(w1=w1.astype(jnp.bfloat16), b1=b1.reshape(1, FFN_DIM),
                    w2=w2.astype(jnp.bfloat16), b2=b2.reshape(1, D_MODEL),
                    g=ones(D_MODEL), b=zeros(D_MODEL))

    enc_layers = [{"sa": self_attn_layer(), "ffn": ffn_layer()} for _ in range(ENC_LAYERS)]
    dec_layers = [{"sa": self_attn_layer(), "ca": cross_attn_layer(), "ffn": ffn_layer()}
                  for _ in range(DEC_LAYERS)]

    def stack(layers, sub, key_):
        return jnp.stack([l[sub][key_] for l in layers])

    enc_stack = dict(
        e_wqkv=stack(enc_layers, "sa", "wqkv"), e_bqkv=stack(enc_layers, "sa", "bqkv"),
        e_wo=stack(enc_layers, "sa", "wo"), e_bo=stack(enc_layers, "sa", "bo"),
        e_sa_g=stack(enc_layers, "sa", "g"), e_sa_b=stack(enc_layers, "sa", "b"),
        e_w1=stack(enc_layers, "ffn", "w1"), e_b1=stack(enc_layers, "ffn", "b1"),
        e_w2=stack(enc_layers, "ffn", "w2"), e_b2=stack(enc_layers, "ffn", "b2"),
        e_ffn_g=stack(enc_layers, "ffn", "g"), e_ffn_b=stack(enc_layers, "ffn", "b"),
    )
    dec_stack = dict(
        d_wqkv=stack(dec_layers, "sa", "wqkv"), d_bqkv=stack(dec_layers, "sa", "bqkv"),
        d_wo=stack(dec_layers, "sa", "wo"), d_bo=stack(dec_layers, "sa", "bo"),
        d_sa_g=stack(dec_layers, "sa", "g"), d_sa_b=stack(dec_layers, "sa", "b"),
        d_ca_wq=stack(dec_layers, "ca", "wq"), d_ca_bq=stack(dec_layers, "ca", "bq"),
        d_ca_wkv=stack(dec_layers, "ca", "wkv"), d_ca_bkv=stack(dec_layers, "ca", "bkv"),
        d_ca_wo=stack(dec_layers, "ca", "wo"), d_ca_bo=stack(dec_layers, "ca", "bo"),
        d_ca_g=stack(dec_layers, "ca", "g"), d_ca_b=stack(dec_layers, "ca", "b"),
        d_w1=stack(dec_layers, "ffn", "w1"), d_b1=stack(dec_layers, "ffn", "b1"),
        d_w2=stack(dec_layers, "ffn", "w2"), d_b2=stack(dec_layers, "ffn", "b2"),
        d_ffn_g=stack(dec_layers, "ffn", "g"), d_ffn_b=stack(dec_layers, "ffn", "b"),
    )

    params = {
        "tgt_embed": nrm((O_DIM, D_MODEL)),             # nn.init.normal_
        "eng_embed": nrm((ENG_DIM, D_MODEL)),           # nn.init.normal_
        "enc_pos": nrm((MAX_POS + 2, D_MODEL), 0.02),   # BartLearnedPositionalEmbedding (offset=2)
        "dec_pos": nrm((MAX_POS + 2, D_MODEL), 0.02),
        "enc_ln_emb_g": ones(D_MODEL), "enc_ln_emb_b": zeros(D_MODEL),
        "dec_ln_emb_g": ones(D_MODEL), "dec_ln_emb_b": zeros(D_MODEL),
        "enc_stack": enc_stack, "dec_stack": dec_stack,
    }
    lw, lb = lin(D_MODEL, ENG_DIM)
    params["lm_w"], params["lm_b"] = lw.astype(jnp.bfloat16), lb.reshape(1, ENG_DIM)
    return params


# ------------------------------ model forward (one pallas_call) ------------------------------

def adapter_forward(params, input_ids, input_mask, dec_input_ids, dec_input_mask,
                    input_langs, output_langs):
    for l in input_langs:
        assert l == "oth"
    for l in output_langs:
        assert l == "eng"
    b, s = input_ids.shape
    t = dec_input_ids.shape[1]

    # embedding gathers + position tiling are XLA glue; scale_embedding mul fused in-kernel
    src_emb = jnp.take(params["tgt_embed"], input_ids, axis=0).reshape(b * s, D_MODEL)
    dec_emb = jnp.take(params["eng_embed"], dec_input_ids, axis=0).reshape(b * t, D_MODEL)
    enc_pos = jnp.tile(params["enc_pos"][2:2 + s], (b, 1))
    dec_pos = jnp.tile(params["dec_pos"][2:2 + t], (b, 1))
    enc_keep = input_mask.astype(jnp.float32).reshape(b, 1, s)
    dec_keep = dec_input_mask.astype(jnp.float32).reshape(b, 1, t)

    inputs = dict(
        src_emb=src_emb, dec_emb=dec_emb, enc_pos=enc_pos, dec_pos=dec_pos,
        enc_keep=enc_keep, dec_keep=dec_keep,
        enc_ln_emb_g=params["enc_ln_emb_g"], enc_ln_emb_b=params["enc_ln_emb_b"],
        dec_ln_emb_g=params["dec_ln_emb_g"], dec_ln_emb_b=params["dec_ln_emb_b"],
        **params["enc_stack"], **params["dec_stack"],
        lm_w=params["lm_w"], lm_b=params["lm_b"],
    )
    args = [inputs[name] for name in _INPUT_NAMES]

    logits = pl.pallas_call(
        functools.partial(_adapter_fwd_kernel, b=b, s=s, t=t),
        out_shape=jax.ShapeDtypeStruct((b * t, ENG_DIM), jnp.float32),
        compiler_params=pltpu.CompilerParams(vmem_limit_bytes=32 * 1024 * 1024),
    )(*args)
    return logits.reshape(b, t, ENG_DIM)


# ------------------------------ main ------------------------------

if __name__ == "__main__":
    key = jax.random.PRNGKey(0)
    pkey, k1, k2 = jax.random.split(key, 3)
    params = init_params(pkey)

    B, S, T = 2, 8, 8
    input_ids = jax.random.randint(k1, (B, S), 0, O_DIM)
    dec_input_ids = jax.random.randint(k2, (B, T), 0, ENG_DIM)
    input_mask = jnp.ones((B, S), jnp.int32).at[1, S - 2:].set(0)
    dec_input_mask = jnp.ones((B, T), jnp.int32).at[1, T - 3:].set(0)

    @jax.jit
    def run(ii, im, di, dm):
        return adapter_forward(params, ii, im, di, dm,
                               input_langs=["oth"] * B, output_langs=["eng"] * B)

    logits = jax.block_until_ready(run(input_ids, input_mask,
                                       dec_input_ids, dec_input_mask))
    assert logits.shape == (B, T, ENG_DIM)
    assert bool(jnp.all(jnp.isfinite(logits)))
    print("KERNEL_OK")
</pallas_src>

<mosaic_0001>
module attributes {stable_mosaic.version = 11 : i64} {
  func.func @_adapter_fwd_kernel(%arg0: memref<16x128xf32, #tpu.memory_space<vmem>>, %arg1: memref<16x128xf32, #tpu.memory_space<vmem>>, %arg2: memref<16x128xf32, #tpu.memory_space<vmem>>, %arg3: memref<16x128xf32, #tpu.memory_space<vmem>>, %arg4: memref<2x1x8xf32, #tpu.memory_space<vmem>>, %arg5: memref<2x1x8xf32, #tpu.memory_space<vmem>>, %arg6: memref<1x128xf32, #tpu.memory_space<vmem>>, %arg7: memref<1x128xf32, #tpu.memory_space<vmem>>, %arg8: memref<1x128xf32, #tpu.memory_space<vmem>>, %arg9: memref<1x128xf32, #tpu.memory_space<vmem>>, %arg10: memref<2x128x384xbf16, #tpu.memory_space<vmem>>, %arg11: memref<2x1x384xf32, #tpu.memory_space<vmem>>, %arg12: memref<2x128x128xbf16, #tpu.memory_space<vmem>>, %arg13: memref<2x1x128xf32, #tpu.memory_space<vmem>>, %arg14: memref<2x1x128xf32, #tpu.memory_space<vmem>>, %arg15: memref<2x1x128xf32, #tpu.memory_space<vmem>>, %arg16: memref<2x128x256xbf16, #tpu.memory_space<vmem>>, %arg17: memref<2x1x256xf32, #tpu.memory_space<vmem>>, %arg18: memref<2x256x128xbf16, #tpu.memory_space<vmem>>, %arg19: memref<2x1x128xf32, #tpu.memory_space<vmem>>, %arg20: memref<2x1x128xf32, #tpu.memory_space<vmem>>, %arg21: memref<2x1x128xf32, #tpu.memory_space<vmem>>, %arg22: memref<2x128x384xbf16, #tpu.memory_space<vmem>>, %arg23: memref<2x1x384xf32, #tpu.memory_space<vmem>>, %arg24: memref<2x128x128xbf16, #tpu.memory_space<vmem>>, %arg25: memref<2x1x128xf32, #tpu.memory_space<vmem>>, %arg26: memref<2x1x128xf32, #tpu.memory_space<vmem>>, %arg27: memref<2x1x128xf32, #tpu.memory_space<vmem>>, %arg28: memref<2x128x128xbf16, #tpu.memory_space<vmem>>, %arg29: memref<2x1x128xf32, #tpu.memory_space<vmem>>, %arg30: memref<2x128x256xbf16, #tpu.memory_space<vmem>>, %arg31: memref<2x1x256xf32, #tpu.memory_space<vmem>>, %arg32: memref<2x128x128xbf16, #tpu.memory_space<vmem>>, %arg33: memref<2x1x128xf32, #tpu.memory_space<vmem>>, %arg34: memref<2x1x128xf32, #tpu.memory_space<vmem>>, %arg35: memref<2x1x128xf32, #tpu.memory_space<vmem>>, %arg36: memref<2x128x256xbf16, #tpu.memory_space<vmem>>, %arg37: memref<2x1x256xf32, #tpu.memory_space<vmem>>, %arg38: memref<2x256x128xbf16, #tpu.memory_space<vmem>>, %arg39: memref<2x1x128xf32, #tpu.memory_space<vmem>>, %arg40: memref<2x1x128xf32, #tpu.memory_space<vmem>>, %arg41: memref<2x1x128xf32, #tpu.memory_space<vmem>>, %arg42: memref<128x256xbf16, #tpu.memory_space<vmem>>, %arg43: memref<1x256xf32, #tpu.memory_space<vmem>>, %arg44: memref<16x256xf32, #tpu.memory_space<vmem>>) attributes {dimension_semantics = [], scalar_prefetch = 0 : i64, scratch_operands = 0 : i64, tpu.core_type = #tpu.core_type<tc>} {
    %c0 = arith.constant 0 : index
    %c0_0 = arith.constant 0 : index
    %c0_1 = arith.constant 0 : index
    %0 = vector.load %arg4[%c0, %c0_0, %c0_1] : memref<2x1x8xf32, #tpu.memory_space<vmem>>, vector<2x1x8xf32>
    %cst = arith.constant 1.000000e+00 : f32
    %1 = vector.broadcast %cst : f32 to vector<2x1x8xf32>
    %2 = arith.subf %1, %0 : vector<2x1x8xf32>
    %cst_2 = arith.constant -1.000000e+09 : f32
    %3 = vector.broadcast %cst_2 : f32 to vector<2x1x8xf32>
    %4 = arith.mulf %2, %3 : vector<2x1x8xf32>
    %c0_3 = arith.constant 0 : index
    %c0_4 = arith.constant 0 : index
    %c0_5 = arith.constant 0 : index
    %5 = vector.load %arg5[%c0_3, %c0_4, %c0_5] : memref<2x1x8xf32, #tpu.memory_space<vmem>>, vector<2x1x8xf32>
    %cst_6 = arith.constant 1.000000e+00 : f32
    %6 = vector.broadcast %cst_6 : f32 to vector<2x1x8xf32>
    %7 = arith.subf %6, %5 : vector<2x1x8xf32>
    %cst_7 = arith.constant -1.000000e+09 : f32
    %8 = vector.broadcast %cst_7 : f32 to vector<2x1x8xf32>
    %9 = arith.mulf %7, %8 : vector<2x1x8xf32>
    %10 = tpu.iota {dimensions = array<i32: 1>} : vector<1x8x8xi32>
    %11 = tpu.iota {dimensions = array<i32: 2>} : vector<1x8x8xi32>
    %12 = arith.cmpi sge, %10, %11 : vector<1x8x8xi32>
    %cst_8 = arith.constant 0.000000e+00 : f32
    %cst_9 = arith.constant -1.000000e+09 : f32
    %13 = vector.broadcast %cst_8 : f32 to vector<1x8x8xf32>
    %14 = vector.broadcast %cst_9 : f32 to vector<1x8x8xf32>
    %15 = arith.select %12, %13, %14 : vector<1x8x8xi1>, vector<1x8x8xf32>
    %16 = vector.broadcast %9 : vector<2x1x8xf32> to vector<2x8x8xf32>
    %17 = vector.broadcast %15 : vector<1x8x8xf32> to vector<2x8x8xf32>
    %18 = arith.addf %16, %17 : vector<2x8x8xf32>
    %c0_10 = arith.constant 0 : index
    %c0_11 = arith.constant 0 : index
    %19 = vector.load %arg0[%c0_10, %c0_11] : memref<16x128xf32, #tpu.memory_space<vmem>>, vector<16x128xf32>
    %cst_12 = arith.constant 11.3137083 : f32
    %20 = vector.broadcast %cst_12 : f32 to vector<16x128xf32>
    %21 = arith.mulf %19, %20 : vector<16x128xf32>
    %c0_13 = arith.constant 0 : index
    %c0_14 = arith.constant 0 : index
    %22 = vector.load %arg2[%c0_13, %c0_14] : memref<16x128xf32, #tpu.memory_space<vmem>>, vector<16x128xf32>
    %23 = arith.addf %21, %22 : vector<16x128xf32>
    %c0_15 = arith.constant 0 : index
    %c0_16 = arith.constant 0 : index
    %24 = vector.load %arg6[%c0_15, %c0_16] : memref<1x128xf32, #tpu.memory_space<vmem>>, vector<1x128xf32>
    %c0_17 = arith.constant 0 : index
    %c0_18 = arith.constant 0 : index
    %25 = vector.load %arg7[%c0_17, %c0_18] : memref<1x128xf32, #tpu.memory_space<vmem>>, vector<1x128xf32>
    %cst_19 = arith.constant dense<0.000000e+00> : vector<16xf32>
    %26 = vector.multi_reduction <add>, %23, %cst_19 [1] : vector<16x128xf32> to vector<16xf32>
    %27 = vector.shape_cast %26 : vector<16xf32> to vector<16x1xf32>
    %cst_20 = arith.constant 1.280000e+02 : f32
    %28 = vector.broadcast %cst_20 : f32 to vector<16x1xf32>
    %29 = arith.divf %27, %28 : vector<16x1xf32>
    %30 = vector.broadcast %29 : vector<16x1xf32> to vector<16x128xf32>
    %31 = arith.subf %23, %30 : vector<16x128xf32>
    %32 = arith.mulf %31, %31 : vector<16x128xf32>
    %cst_21 = arith.constant dense<0.000000e+00> : vector<16xf32>
    %33 = vector.multi_reduction <add>, %32, %cst_21 [1] : vector<16x128xf32> to vector<16xf32>
    %34 = vector.shape_cast %33 : vector<16xf32> to vector<16x1xf32>
    %cst_22 = arith.constant 1.280000e+02 : f32
    %35 = vector.broadcast %cst_22 : f32 to vector<16x1xf32>
    %36 = arith.divf %34, %35 : vector<16x1xf32>
    %37 = vector.broadcast %29 : vector<16x1xf32> to vector<16x128xf32>
    %38 = arith.subf %23, %37 : vector<16x128xf32>
    %cst_23 = arith.constant 9.99999974E-6 : f32
    %39 = vector.broadcast %cst_23 : f32 to vector<16x1xf32>
    %40 = arith.addf %36, %39 : vector<16x1xf32>
    %41 = math.rsqrt %40 : vector<16x1xf32>
    %42 = vector.broadcast %41 : vector<16x1xf32> to vector<16x128xf32>
    %43 = arith.mulf %38, %42 : vector<16x128xf32>
    %44 = vector.broadcast %24 : vector<1x128xf32> to vector<16x128xf32>
    %45 = arith.mulf %43, %44 : vector<16x128xf32>
    %46 = vector.broadcast %25 : vector<1x128xf32> to vector<16x128xf32>
    %47 = arith.addf %45, %46 : vector<16x128xf32>
    %c0_24 = arith.constant 0 : index
    %c0_25 = arith.constant 0 : index
    %c0_26 = arith.constant 0 : index
    %48 = vector.load %arg10[%c0_24, %c0_25, %c0_26] : memref<2x128x384xbf16, #tpu.memory_space<vmem>>, vector<1x128x384xbf16>
    %49 = vector.shape_cast %48 : vector<1x128x384xbf16> to vector<128x384xbf16>
    %c0_27 = arith.constant 0 : index
    %c0_28 = arith.constant 0 : index
    %c0_29 = arith.constant 0 : index
    %50 = vector.load %arg11[%c0_27, %c0_28, %c0_29] : memref<2x1x384xf32, #tpu.memory_space<vmem>>, vector<1x1x384xf32>
    %51 = vector.shape_cast %50 : vector<1x1x384xf32> to vector<1x384xf32>
    %c0_30 = arith.constant 0 : index
    %c0_31 = arith.constant 0 : index
    %c0_32 = arith.constant 0 : index
    %52 = vector.load %arg12[%c0_30, %c0_31, %c0_32] : memref<2x128x128xbf16, #tpu.memory_space<vmem>>, vector<1x128x128xbf16>
    %53 = vector.shape_cast %52 : vector<1x128x128xbf16> to vector<128x128xbf16>
    %c0_33 = arith.constant 0 : index
    %c0_34 = arith.constant 0 : index
    %c0_35 = arith.constant 0 : index
    %54 = vector.load %arg13[%c0_33, %c0_34, %c0_35] : memref<2x1x128xf32, #tpu.memory_space<vmem>>, vector<1x1x128xf32>
    %55 = vector.shape_cast %54 : vector<1x1x128xf32> to vector<1x128xf32>
    %c0_36 = arith.constant 0 : index
    %c0_37 = arith.constant 0 : index
    %c0_38 = arith.constant 0 : index
    %56 = vector.load %arg14[%c0_36, %c0_37, %c0_38] : memref<2x1x128xf32, #tpu.memory_space<vmem>>, vector<1x1x128xf32>
    %57 = vector.shape_cast %56 : vector<1x1x128xf32> to vector<1x128xf32>
    %c0_39 = arith.constant 0 : index
    %c0_40 = arith.constant 0 : index
    %c0_41 = arith.constant 0 : index
    %58 = vector.load %arg15[%c0_39, %c0_40, %c0_41] : memref<2x1x128xf32, #tpu.memory_space<vmem>>, vector<1x1x128xf32>
    %59 = vector.shape_cast %58 : vector<1x1x128xf32> to vector<1x128xf32>
    %60 = arith.truncf %47 : vector<16x128xf32> to vector<16x128xbf16>
    %cst_42 = arith.constant dense<0.000000e+00> : vector<16x384xf32>
    %61 = tpu.matmul %60, %49, %cst_42 {dimension_numbers = #tpu.dot_dimension_numbers<[1], [0], [0], [1], [0, 0, 1, 1], [], []>} : vector<16x128xbf16>, vector<128x384xbf16>, vector<16x384xf32> -> vector<16x384xf32>
    %62 = vector.broadcast %51 : vector<1x384xf32> to vector<16x384xf32>
    %63 = arith.addf %61, %62 : vector<16x384xf32>
    %64 = vector.extract_strided_slice %63 {offsets = [0, 0], sizes = [16, 128], strides = [1, 1]} : vector<16x384xf32> to vector<16x128xf32>
    %65 = vector.extract_strided_slice %63 {offsets = [0, 128], sizes = [16, 128], strides = [1, 1]} : vector<16x384xf32> to vector<16x128xf32>
    %66 = vector.extract_strided_slice %63 {offsets = [0, 256], sizes = [16, 128], strides = [1, 1]} : vector<16x384xf32> to vector<16x128xf32>
    %67 = arith.truncf %64 : vector<16x128xf32> to vector<16x128xbf16>
    %68 = arith.truncf %65 : vector<16x128xf32> to vector<16x128xbf16>
    %69 = arith.truncf %66 : vector<16x128xf32> to vector<16x128xbf16>
    %70 = vector.extract_strided_slice %67 {offsets = [0, 0], sizes = [16, 32], strides = [1, 1]} : vector<16x128xbf16> to vector<16x32xbf16>
    %71 = vector.shape_cast %70 : vector<16x32xbf16> to vector<2x8x32xbf16>
    %72 = vector.extract_strided_slice %68 {offsets = [0, 0], sizes = [16, 32], strides = [1, 1]} : vector<16x128xbf16> to vector<16x32xbf16>
    %73 = vector.shape_cast %72 : vector<16x32xbf16> to vector<2x8x32xbf16>
    %74 = vector.extract_strided_slice %69 {offsets = [0, 0], sizes = [16, 32], strides = [1, 1]} : vector<16x128xbf16> to vector<16x32xbf16>
    %75 = vector.shape_cast %74 : vector<16x32xbf16> to vector<2x8x32xbf16>
    "tpu.trace_start"() <{level = 10 : i32, message = "bqd,bkd->bqk"}> : () -> ()
    %cst_43 = arith.constant dense<0.000000e+00> : vector<2x8x8xf32>
    %76 = tpu.matmul %71, %73, %cst_43 {dimension_numbers = #tpu.dot_dimension_numbers<[2], [2], [1], [1], [0, 0, 0, 1, 1, 1], [0], [0]>} : vector<2x8x32xbf16>, vector<2x8x32xbf16>, vector<2x8x8xf32> -> vector<2x8x8xf32>
    "tpu.trace_stop"() : () -> ()
    %77 = vector.broadcast %4 : vector<2x1x8xf32> to vector<2x8x8xf32>
    %78 = arith.addf %76, %77 : vector<2x8x8xf32>
    %cst_44 = arith.constant dense<0xFF800000> : vector<2x8xf32>
    %79 = vector.multi_reduction <maximumf>, %78, %cst_44 [2] : vector<2x8x8xf32> to vector<2x8xf32>
    %80 = vector.shape_cast %79 : vector<2x8xf32> to vector<2x8x1xf32>
    %81 = vector.broadcast %80 : vector<2x8x1xf32> to vector<2x8x8xf32>
    %82 = arith.subf %78, %81 : vector<2x8x8xf32>
    %83 = math.exp %82 : vector<2x8x8xf32>
    %cst_45 = arith.constant dense<0.000000e+00> : vector<2x8xf32>
    %84 = vector.multi_reduction <add>, %83, %cst_45 [2] : vector<2x8x8xf32> to vector<2x8xf32>
    %85 = vector.shape_cast %84 : vector<2x8xf32> to vector<2x8x1xf32>
    %86 = tpu.reciprocal %85 {approx = true} : vector<2x8x1xf32> -> vector<2x8x1xf32>
    %87 = vector.broadcast %86 : vector<2x8x1xf32> to vector<2x8x8xf32>
    %88 = arith.mulf %83, %87 : vector<2x8x8xf32>
    %89 = arith.truncf %88 : vector<2x8x8xf32> to vector<2x8x8xbf16>
    "tpu.trace_start"() <{level = 10 : i32, message = "bqk,bkd->bqd"}> : () -> ()
    %cst_46 = arith.constant dense<0.000000e+00> : vector<2x8x32xf32>
    %90 = tpu.matmul %89, %75, %cst_46 {dimension_numbers = #tpu.dot_dimension_numbers<[2], [1], [1], [2], [0, 0, 0, 1, 1, 2], [0], [0]>} : vector<2x8x8xbf16>, vector<2x8x32xbf16>, vector<2x8x32xf32> -> vector<2x8x32xf32>
    "tpu.trace_stop"() : () -> ()
    %91 = vector.shape_cast %90 : vector<2x8x32xf32> to vector<16x32xf32>
    %92 = vector.extract_strided_slice %67 {offsets = [0, 32], sizes = [16, 32], strides = [1, 1]} : vector<16x128xbf16> to vector<16x32xbf16>
    %93 = vector.shape_cast %92 : vector<16x32xbf16> to vector<2x8x32xbf16>
    %94 = vector.extract_strided_slice %68 {offsets = [0, 32], sizes = [16, 32], strides = [1, 1]} : vector<16x128xbf16> to vector<16x32xbf16>
    %95 = vector.shape_cast %94 : vector<16x32xbf16> to vector<2x8x32xbf16>
    %96 = vector.extract_strided_slice %69 {offsets = [0, 32], sizes = [16, 32], strides = [1, 1]} : vector<16x128xbf16> to vector<16x32xbf16>
    %97 = vector.shape_cast %96 : vector<16x32xbf16> to vector<2x8x32xbf16>
    "tpu.trace_start"() <{level = 10 : i32, message = "bqd,bkd->bqk"}> : () -> ()
    %cst_47 = arith.constant dense<0.000000e+00> : vector<2x8x8xf32>
    %98 = tpu.matmul %93, %95, %cst_47 {dimension_numbers = #tpu.dot_dimension_numbers<[2], [2], [1], [1], [0, 0, 0, 1, 1, 1], [0], [0]>} : vector<2x8x32xbf16>, vector<2x8x32xbf16>, vector<2x8x8xf32> -> vector<2x8x8xf32>
    "tpu.trace_stop"() : () -> ()
    %99 = vector.broadcast %4 : vector<2x1x8xf32> to vector<2x8x8xf32>
    %100 = arith.addf %98, %99 : vector<2x8x8xf32>
    %cst_48 = arith.constant dense<0xFF800000> : vector<2x8xf32>
    %101 = vector.multi_reduction <maximumf>, %100, %cst_48 [2] : vector<2x8x8xf32> to vector<2x8xf32>
    %102 = vector.shape_cast %101 : vector<2x8xf32> to vector<2x8x1xf32>
    %103 = vector.broadcast %102 : vector<2x8x1xf32> to vector<2x8x8xf32>
    %104 = arith.subf %100, %103 : vector<2x8x8xf32>
    %105 = math.exp %104 : vector<2x8x8xf32>
    %cst_49 = arith.constant dense<0.000000e+00> : vector<2x8xf32>
    %106 = vector.multi_reduction <add>, %105, %cst_49 [2] : vector<2x8x8xf32> to vector<2x8xf32>
    %107 = vector.shape_cast %106 : vector<2x8xf32> to vector<2x8x1xf32>
    %108 = tpu.reciprocal %107 {approx = true} : vector<2x8x1xf32> -> vector<2x8x1xf32>
    %109 = vector.broadcast %108 : vector<2x8x1xf32> to vector<2x8x8xf32>
    %110 = arith.mulf %105, %109 : vector<2x8x8xf32>
    %111 = arith.truncf %110 : vector<2x8x8xf32> to vector<2x8x8xbf16>
    "tpu.trace_start"() <{level = 10 : i32, message = "bqk,bkd->bqd"}> : () -> ()
    %cst_50 = arith.constant dense<0.000000e+00> : vector<2x8x32xf32>
    %112 = tpu.matmul %111, %97, %cst_50 {dimension_numbers = #tpu.dot_dimension_numbers<[2], [1], [1], [2], [0, 0, 0, 1, 1, 2], [0], [0]>} : vector<2x8x8xbf16>, vector<2x8x32xbf16>, vector<2x8x32xf32> -> vector<2x8x32xf32>
    "tpu.trace_stop"() : () -> ()
    %113 = vector.shape_cast %112 : vector<2x8x32xf32> to vector<16x32xf32>
    %114 = vector.extract_strided_slice %67 {offsets = [0, 64], sizes = [16, 32], strides = [1, 1]} : vector<16x128xbf16> to vector<16x32xbf16>
    %115 = vector.shape_cast %114 : vector<16x32xbf16> to vector<2x8x32xbf16>
    %116 = vector.extract_strided_slice %68 {offsets = [0, 64], sizes = [16, 32], strides = [1, 1]} : vector<16x128xbf16> to vector<16x32xbf16>
    %117 = vector.shape_cast %116 : vector<16x32xbf16> to vector<2x8x32xbf16>
    %118 = vector.extract_strided_slice %69 {offsets = [0, 64], sizes = [16, 32], strides = [1, 1]} : vector<16x128xbf16> to vector<16x32xbf16>
    %119 = vector.shape_cast %118 : vector<16x32xbf16> to vector<2x8x32xbf16>
    "tpu.trace_start"() <{level = 10 : i32, message = "bqd,bkd->bqk"}> : () -> ()
    %cst_51 = arith.constant dense<0.000000e+00> : vector<2x8x8xf32>
    %120 = tpu.matmul %115, %117, %cst_51 {dimension_numbers = #tpu.dot_dimension_numbers<[2], [2], [1], [1], [0, 0, 0, 1, 1, 1], [0], [0]>} : vector<2x8x32xbf16>, vector<2x8x32xbf16>, vector<2x8x8xf32> -> vector<2x8x8xf32>
    "tpu.trace_stop"() : () -> ()
    %121 = vector.broadcast %4 : vector<2x1x8xf32> to vector<2x8x8xf32>
    %122 = arith.addf %120, %121 : vector<2x8x8xf32>
    %cst_52 = arith.constant dense<0xFF800000> : vector<2x8xf32>
    %123 = vector.multi_reduction <maximumf>, %122, %cst_52 [2] : vector<2x8x8xf32> to vector<2x8xf32>
    %124 = vector.shape_cast %123 : vector<2x8xf32> to vector<2x8x1xf32>
    %125 = vector.broadcast %124 : vector<2x8x1xf32> to vector<2x8x8xf32>
    %126 = arith.subf %122, %125 : vector<2x8x8xf32>
    %127 = math.exp %126 : vector<2x8x8xf32>
    %cst_53 = arith.constant dense<0.000000e+00> : vector<2x8xf32>
    %128 = vector.multi_reduction <add>, %127, %cst_53 [2] : vector<2x8x8xf32> to vector<2x8xf32>
    %129 = vector.shape_cast %128 : vector<2x8xf32> to vector<2x8x1xf32>
    %130 = tpu.reciprocal %129 {approx = true} : vector<2x8x1xf32> -> vector<2x8x1xf32>
    %131 = vector.broadcast %130 : vector<2x8x1xf32> to vector<2x8x8xf32>
    %132 = arith.mulf %127, %131 : vector<2x8x8xf32>
    %133 = arith.truncf %132 : vector<2x8x8xf32> to vector<2x8x8xbf16>
    "tpu.trace_start"() <{level = 10 : i32, message = "bqk,bkd->bqd"}> : () -> ()
    %cst_54 = arith.constant dense<0.000000e+00> : vector<2x8x32xf32>
    %134 = tpu.matmul %133, %119, %cst_54 {dimension_numbers = #tpu.dot_dimension_numbers<[2], [1], [1], [2], [0, 0, 0, 1, 1, 2], [0], [0]>} : vector<2x8x8xbf16>, vector<2x8x32xbf16>, vector<2x8x32xf32> -> vector<2x8x32xf32>
    "tpu.trace_stop"() : () -> ()
    %135 = vector.shape_cast %134 : vector<2x8x32xf32> to vector<16x32xf32>
    %136 = vector.extract_strided_slice %67 {offsets = [0, 96], sizes = [16, 32], strides = [1, 1]} : vector<16x128xbf16> to vector<16x32xbf16>
    %137 = vector.shape_cast %136 : vector<16x32xbf16> to vector<2x8x32xbf16>
    %138 = vector.extract_strided_slice %68 {offsets = [0, 96], sizes = [16, 32], strides = [1, 1]} : vector<16x128xbf16> to vector<16x32xbf16>
    %139 = vector.shape_cast %138 : vector<16x32xbf16> to vector<2x8x32xbf16>
    %140 = vector.extract_strided_slice %69 {offsets = [0, 96], sizes = [16, 32], strides = [1, 1]} : vector<16x128xbf16> to vector<16x32xbf16>
    %141 = vector.shape_cast %140 : vector<16x32xbf16> to vector<2x8x32xbf16>
    "tpu.trace_start"() <{level = 10 : i32, message = "bqd,bkd->bqk"}> : () -> ()
    %cst_55 = arith.constant dense<0.000000e+00> : vector<2x8x8xf32>
    %142 = tpu.matmul %137, %139, %cst_55 {dimension_numbers = #tpu.dot_dimension_numbers<[2], [2], [1], [1], [0, 0, 0, 1, 1, 1], [0], [0]>} : vector<2x8x32xbf16>, vector<2x8x32xbf16>, vector<2x8x8xf32> -> vector<2x8x8xf32>
    "tpu.trace_stop"() : () -> ()
    %143 = vector.broadcast %4 : vector<2x1x8xf32> to vector<2x8x8xf32>
    %144 = arith.addf %142, %143 : vector<2x8x8xf32>
    %cst_56 = arith.constant dense<0xFF800000> : vector<2x8xf32>
    %145 = vector.multi_reduction <maximumf>, %144, %cst_56 [2] : vector<2x8x8xf32> to vector<2x8xf32>
    %146 = vector.shape_cast %145 : vector<2x8xf32> to vector<2x8x1xf32>
    %147 = vector.broadcast %146 : vector<2x8x1xf32> to vector<2x8x8xf32>
    %148 = arith.subf %144, %147 : vector<2x8x8xf32>
    %149 = math.exp %148 : vector<2x8x8xf32>
    %cst_57 = arith.constant dense<0.000000e+00> : vector<2x8xf32>
    %150 = vector.multi_reduction <add>, %149, %cst_57 [2] : vector<2x8x8xf32> to vector<2x8xf32>
    %151 = vector.shape_cast %150 : vector<2x8xf32> to vector<2x8x1xf32>
    %152 = tpu.reciprocal %151 {approx = true} : vector<2x8x1xf32> -> vector<2x8x1xf32>
    %153 = vector.broadcast %152 : vector<2x8x1xf32> to vector<2x8x8xf32>
    %154 = arith.mulf %149, %153 : vector<2x8x8xf32>
    %155 = arith.truncf %154 : vector<2x8x8xf32> to vector<2x8x8xbf16>
    "tpu.trace_start"() <{level = 10 : i32, message = "bqk,bkd->bqd"}> : () -> ()
    %cst_58 = arith.constant dense<0.000000e+00> : vector<2x8x32xf32>
    %156 = tpu.matmul %155, %141, %cst_58 {dimension_numbers = #tpu.dot_dimension_numbers<[2], [1], [1], [2], [0, 0, 0, 1, 1, 2], [0], [0]>} : vector<2x8x8xbf16>, vector<2x8x32xbf16>, vector<2x8x32xf32> -> vector<2x8x32xf32>
    "tpu.trace_stop"() : () -> ()
    %157 = vector.shape_cast %156 : vector<2x8x32xf32> to vector<16x32xf32>
    %158 = tpu.concatenate %91, %113, %135, %157 in 1 : vector<16x32xf32>, vector<16x32xf32>, vector<16x32xf32>, vector<16x32xf32> -> vector<16x128xf32>
    %159 = arith.truncf %158 : vector<16x128xf32> to vector<16x128xbf16>
    %cst_59 = arith.constant dense<0.000000e+00> : vector<16x128xf32>
    %160 = tpu.matmul %159, %53, %cst_59 {dimension_numbers = #tpu.dot_dimension_numbers<[1], [0], [0], [1], [0, 0, 1, 1], [], []>} : vector<16x128xbf16>, vector<128x128xbf16>, vector<16x128xf32> -> vector<16x128xf32>
    %161 = vector.broadcast %55 : vector<1x128xf32> to vector<16x128xf32>
    %162 = arith.addf %160, %161 : vector<16x128xf32>
    %163 = arith.addf %162, %47 : vector<16x128xf32>
    %cst_60 = arith.constant dense<0.000000e+00> : vector<16xf32>
    %164 = vector.multi_reduction <add>, %163, %cst_60 [1] : vector<16x128xf32> to vector<16xf32>
    %165 = vector.shape_cast %164 : vector<16xf32> to vector<16x1xf32>
    %cst_61 = arith.constant 1.280000e+02 : f32
    %166 = vector.broadcast %cst_61 : f32 to vector<16x1xf32>
    %167 = arith.divf %165, %166 : vector<16x1xf32>
    %168 = vector.broadcast %167 : vector<16x1xf32> to vector<16x128xf32>
    %169 = arith.subf %163, %168 : vector<16x128xf32>
    %170 = arith.mulf %169, %169 : vector<16x128xf32>
    %cst_62 = arith.constant dense<0.000000e+00> : vector<16xf32>
    %171 = vector.multi_reduction <add>, %170, %cst_62 [1] : vector<16x128xf32> to vector<16xf32>
    %172 = vector.shape_cast %171 : vector<16xf32> to vector<16x1xf32>
    %cst_63 = arith.constant 1.280000e+02 : f32
    %173 = vector.broadcast %cst_63 : f32 to vector<16x1xf32>
    %174 = arith.divf %172, %173 : vector<16x1xf32>
    %175 = vector.broadcast %167 : vector<16x1xf32> to vector<16x128xf32>
    %176 = arith.subf %163, %175 : vector<16x128xf32>
    %cst_64 = arith.constant 9.99999974E-6 : f32
    %177 = vector.broadcast %cst_64 : f32 to vector<16x1xf32>
    %178 = arith.addf %174, %177 : vector<16x1xf32>
    %179 = math.rsqrt %178 : vector<16x1xf32>
    %180 = vector.broadcast %179 : vector<16x1xf32> to vector<16x128xf32>
    %181 = arith.mulf %176, %180 : vector<16x128xf32>
    %182 = vector.broadcast %57 : vector<1x128xf32> to vector<16x128xf32>
    %183 = arith.mulf %181, %182 : vector<16x128xf32>
    %184 = vector.broadcast %59 : vector<1x128xf32> to vector<16x128xf32>
    %185 = arith.addf %183, %184 : vector<16x128xf32>
    %c0_65 = arith.constant 0 : index
    %c0_66 = arith.constant 0 : index
    %c0_67 = arith.constant 0 : index
    %186 = vector.load %arg16[%c0_65, %c0_66, %c0_67] : memref<2x128x256xbf16, #tpu.memory_space<vmem>>, vector<1x128x256xbf16>
    %187 = vector.shape_cast %186 : vector<1x128x256xbf16> to vector<128x256xbf16>
    %c0_68 = arith.constant 0 : index
    %c0_69 = arith.constant 0 : index
    %c0_70 = arith.constant 0 : index
    %188 = vector.load %arg17[%c0_68, %c0_69, %c0_70] : memref<2x1x256xf32, #tpu.memory_space<vmem>>, vector<1x1x256xf32>
    %189 = vector.shape_cast %188 : vector<1x1x256xf32> to vector<1x256xf32>
    %c0_71 = arith.constant 0 : index
    %c0_72 = arith.constant 0 : index
    %c0_73 = arith.constant 0 : index
    %190 = vector.load %arg18[%c0_71, %c0_72, %c0_73] : memref<2x256x128xbf16, #tpu.memory_space<vmem>>, vector<1x256x128xbf16>
    %191 = vector.shape_cast %190 : vector<1x256x128xbf16> to vector<256x128xbf16>
    %c0_74 = arith.constant 0 : index
    %c0_75 = arith.constant 0 : index
    %c0_76 = arith.constant 0 : index
    %192 = vector.load %arg19[%c0_74, %c0_75, %c0_76] : memref<2x1x128xf32, #tpu.memory_space<vmem>>, vector<1x1x128xf32>
    %193 = vector.shape_cast %192 : vector<1x1x128xf32> to vector<1x128xf32>
    %c0_77 = arith.constant 0 : index
    %c0_78 = arith.constant 0 : index
    %c0_79 = arith.constant 0 : index
    %194 = vector.load %arg20[%c0_77, %c0_78, %c0_79] : memref<2x1x128xf32, #tpu.memory_space<vmem>>, vector<1x1x128xf32>
    %195 = vector.shape_cast %194 : vector<1x1x128xf32> to vector<1x128xf32>
    %c0_80 = arith.constant 0 : index
    %c0_81 = arith.constant 0 : index
    %c0_82 = arith.constant 0 : index
    %196 = vector.load %arg21[%c0_80, %c0_81, %c0_82] : memref<2x1x128xf32, #tpu.memory_space<vmem>>, vector<1x1x128xf32>
    %197 = vector.shape_cast %196 : vector<1x1x128xf32> to vector<1x128xf32>
    %198 = arith.truncf %185 : vector<16x128xf32> to vector<16x128xbf16>
    %cst_83 = arith.constant dense<0.000000e+00> : vector<16x256xf32>
    %199 = tpu.matmul %198, %187, %cst_83 {dimension_numbers = #tpu.dot_dimension_numbers<[1], [0], [0], [1], [0, 0, 1, 1], [], []>} : vector<16x128xbf16>, vector<128x256xbf16>, vector<16x256xf32> -> vector<16x256xf32>
    %200 = vector.broadcast %189 : vector<1x256xf32> to vector<16x256xf32>
    %201 = arith.addf %199, %200 : vector<16x256xf32>
    %202 = arith.negf %201 : vector<16x256xf32>
    %203 = math.exp %202 : vector<16x256xf32>
    %cst_84 = arith.constant 1.000000e+00 : f32
    %204 = vector.broadcast %cst_84 : f32 to vector<16x256xf32>
    %205 = arith.addf %204, %203 : vector<16x256xf32>
    %206 = arith.divf %204, %205 : vector<16x256xf32>
    %207 = arith.mulf %201, %206 : vector<16x256xf32>
    %208 = arith.truncf %207 : vector<16x256xf32> to vector<16x256xbf16>
    %cst_85 = arith.constant dense<0.000000e+00> : vector<16x128xf32>
    %209 = tpu.matmul %208, %191, %cst_85 {dimension_numbers = #tpu.dot_dimension_numbers<[1], [0], [0], [1], [0, 0, 1, 1], [], []>} : vector<16x256xbf16>, vector<256x128xbf16>, vector<16x128xf32> -> vector<16x128xf32>
    %210 = vector.broadcast %193 : vector<1x128xf32> to vector<16x128xf32>
    %211 = arith.addf %209, %210 : vector<16x128xf32>
    %212 = arith.addf %211, %185 : vector<16x128xf32>
    %cst_86 = arith.constant dense<0.000000e+00> : vector<16xf32>
    %213 = vector.multi_reduction <add>, %212, %cst_86 [1] : vector<16x128xf32> to vector<16xf32>
    %214 = vector.shape_cast %213 : vector<16xf32> to vector<16x1xf32>
    %cst_87 = arith.constant 1.280000e+02 : f32
    %215 = vector.broadcast %cst_87 : f32 to vector<16x1xf32>
    %216 = arith.divf %214, %215 : vector<16x1xf32>
    %217 = vector.broadcast %216 : vector<16x1xf32> to vector<16x128xf32>
    %218 = arith.subf %212, %217 : vector<16x128xf32>
    %219 = arith.mulf %218, %218 : vector<16x128xf32>
    %cst_88 = arith.constant dense<0.000000e+00> : vector<16xf32>
    %220 = vector.multi_reduction <add>, %219, %cst_88 [1] : vector<16x128xf32> to vector<16xf32>
    %221 = vector.shape_cast %220 : vector<16xf32> to vector<16x1xf32>
    %cst_89 = arith.constant 1.280000e+02 : f32
    %222 = vector.broadcast %cst_89 : f32 to vector<16x1xf32>
    %223 = arith.divf %221, %222 : vector<16x1xf32>
    %224 = vector.broadcast %216 : vector<16x1xf32> to vector<16x128xf32>
    %225 = arith.subf %212, %224 : vector<16x128xf32>
    %cst_90 = arith.constant 9.99999974E-6 : f32
    %226 = vector.broadcast %cst_90 : f32 to vector<16x1xf32>
    %227 = arith.addf %223, %226 : vector<16x1xf32>
    %228 = math.rsqrt %227 : vector<16x1xf32>
    %229 = vector.broadcast %228 : vector<16x1xf32> to vector<16x128xf32>
    %230 = arith.mulf %225, %229 : vector<16x128xf32>
    %231 = vector.broadcast %195 : vector<1x128xf32> to vector<16x128xf32>
    %232 = arith.mulf %230, %231 : vector<16x128xf32>
    %233 = vector.broadcast %197 : vector<1x128xf32> to vector<16x128xf32>
    %234 = arith.addf %232, %233 : vector<16x128xf32>
    %c1 = arith.constant 1 : index
    %c0_91 = arith.constant 0 : index
    %c0_92 = arith.constant 0 : index
    %235 = vector.load %arg10[%c1, %c0_91, %c0_92] : memref<2x128x384xbf16, #tpu.memory_space<vmem>>, vector<1x128x384xbf16>
    %236 = vector.shape_cast %235 : vector<1x128x384xbf16> to vector<128x384xbf16>
    %c1_93 = arith.constant 1 : index
    %c0_94 = arith.constant 0 : index
    %c0_95 = arith.constant 0 : index
    %237 = vector.load %arg11[%c1_93, %c0_94, %c0_95] : memref<2x1x384xf32, #tpu.memory_space<vmem>>, vector<1x1x384xf32>
    %238 = vector.shape_cast %237 : vector<1x1x384xf32> to vector<1x384xf32>
    %c1_96 = arith.constant 1 : index
    %c0_97 = arith.constant 0 : index
    %c0_98 = arith.constant 0 : index
    %239 = vector.load %arg12[%c1_96, %c0_97, %c0_98] : memref<2x128x128xbf16, #tpu.memory_space<vmem>>, vector<1x128x128xbf16>
    %240 = vector.shape_cast %239 : vector<1x128x128xbf16> to vector<128x128xbf16>
    %c1_99 = arith.constant 1 : index
    %c0_100 = arith.constant 0 : index
    %c0_101 = arith.constant 0 : index
    %241 = vector.load %arg13[%c1_99, %c0_100, %c0_101] : memref<2x1x128xf32, #tpu.memory_space<vmem>>, vector<1x1x128xf32>
    %242 = vector.shape_cast %241 : vector<1x1x128xf32> to vector<1x128xf32>
    %c1_102 = arith.constant 1 : index
    %c0_103 = arith.constant 0 : index
    %c0_104 = arith.constant 0 : index
    %243 = vector.load %arg14[%c1_102, %c0_103, %c0_104] : memref<2x1x128xf32, #tpu.memory_space<vmem>>, vector<1x1x128xf32>
    %244 = vector.shape_cast %243 : vector<1x1x128xf32> to vector<1x128xf32>
    %c1_105 = arith.constant 1 : index
    %c0_106 = arith.constant 0 : index
    %c0_107 = arith.constant 0 : index
    %245 = vector.load %arg15[%c1_105, %c0_106, %c0_107] : memref<2x1x128xf32, #tpu.memory_space<vmem>>, vector<1x1x128xf32>
    %246 = vector.shape_cast %245 : vector<1x1x128xf32> to vector<1x128xf32>
    %247 = arith.truncf %234 : vector<16x128xf32> to vector<16x128xbf16>
    %cst_108 = arith.constant dense<0.000000e+00> : vector<16x384xf32>
    %248 = tpu.matmul %247, %236, %cst_108 {dimension_numbers = #tpu.dot_dimension_numbers<[1], [0], [0], [1], [0, 0, 1, 1], [], []>} : vector<16x128xbf16>, vector<128x384xbf16>, vector<16x384xf32> -> vector<16x384xf32>
    %249 = vector.broadcast %238 : vector<1x384xf32> to vector<16x384xf32>
    %250 = arith.addf %248, %249 : vector<16x384xf32>
    %251 = vector.extract_strided_slice %250 {offsets = [0, 0], sizes = [16, 128], strides = [1, 1]} : vector<16x384xf32> to vector<16x128xf32>
    %252 = vector.extract_strided_slice %250 {offsets = [0, 128], sizes = [16, 128], strides = [1, 1]} : vector<16x384xf32> to vector<16x128xf32>
    %253 = vector.extract_strided_slice %250 {offsets = [0, 256], sizes = [16, 128], strides = [1, 1]} : vector<16x384xf32> to vector<16x128xf32>
    %254 = arith.truncf %251 : vector<16x128xf32> to vector<16x128xbf16>
    %255 = arith.truncf %252 : vector<16x128xf32> to vector<16x128xbf16>
    %256 = arith.truncf %253 : vector<16x128xf32> to vector<16x128xbf16>
    %257 = vector.extract_strided_slice %254 {offsets = [0, 0], sizes = [16, 32], strides = [1, 1]} : vector<16x128xbf16> to vector<16x32xbf16>
    %258 = vector.shape_cast %257 : vector<16x32xbf16> to vector<2x8x32xbf16>
    %259 = vector.extract_strided_slice %255 {offsets = [0, 0], sizes = [16, 32], strides = [1, 1]} : vector<16x128xbf16> to vector<16x32xbf16>
    %260 = vector.shape_cast %259 : vector<16x32xbf16> to vector<2x8x32xbf16>
    %261 = vector.extract_strided_slice %256 {offsets = [0, 0], sizes = [16, 32], strides = [1, 1]} : vector<16x128xbf16> to vector<16x32xbf16>
    %262 = vector.shape_cast %261 : vector<16x32xbf16> to vector<2x8x32xbf16>
    "tpu.trace_start"() <{level = 10 : i32, message = "bqd,bkd->bqk"}> : () -> ()
    %cst_109 = arith.constant dense<0.000000e+00> : vector<2x8x8xf32>
    %263 = tpu.matmul %258, %260, %cst_109 {dimension_numbers = #tpu.dot_dimension_numbers<[2], [2], [1], [1], [0, 0, 0, 1, 1, 1], [0], [0]>} : vector<2x8x32xbf16>, vector<2x8x32xbf16>, vector<2x8x8xf32> -> vector<2x8x8xf32>
    "tpu.trace_stop"() : () -> ()
    %264 = vector.broadcast %4 : vector<2x1x8xf32> to vector<2x8x8xf32>
    %265 = arith.addf %263, %264 : vector<2x8x8xf32>
    %cst_110 = arith.constant dense<0xFF800000> : vector<2x8xf32>
    %266 = vector.multi_reduction <maximumf>, %265, %cst_110 [2] : vector<2x8x8xf32> to vector<2x8xf32>
    %267 = vector.shape_cast %266 : vector<2x8xf32> to vector<2x8x1xf32>
    %268 = vector.broadcast %267 : vector<2x8x1xf32> to vector<2x8x8xf32>
    %269 = arith.subf %265, %268 : vector<2x8x8xf32>
    %270 = math.exp %269 : vector<2x8x8xf32>
    %cst_111 = arith.constant dense<0.000000e+00> : vector<2x8xf32>
    %271 = vector.multi_reduction <add>, %270, %cst_111 [2] : vector<2x8x8xf32> to vector<2x8xf32>
    %272 = vector.shape_cast %271 : vector<2x8xf32> to vector<2x8x1xf32>
    %273 = tpu.reciprocal %272 {approx = true} : vector<2x8x1xf32> -> vector<2x8x1xf32>
    %274 = vector.broadcast %273 : vector<2x8x1xf32> to vector<2x8x8xf32>
    %275 = arith.mulf %270, %274 : vector<2x8x8xf32>
    %276 = arith.truncf %275 : vector<2x8x8xf32> to vector<2x8x8xbf16>
    "tpu.trace_start"() <{level = 10 : i32, message = "bqk,bkd->bqd"}> : () -> ()
    %cst_112 = arith.constant dense<0.000000e+00> : vector<2x8x32xf32>
    %277 = tpu.matmul %276, %262, %cst_112 {dimension_numbers = #tpu.dot_dimension_numbers<[2], [1], [1], [2], [0, 0, 0, 1, 1, 2], [0], [0]>} : vector<2x8x8xbf16>, vector<2x8x32xbf16>, vector<2x8x32xf32> -> vector<2x8x32xf32>
    "tpu.trace_stop"() : () -> ()
    %278 = vector.shape_cast %277 : vector<2x8x32xf32> to vector<16x32xf32>
    %279 = vector.extract_strided_slice %254 {offsets = [0, 32], sizes = [16, 32], strides = [1, 1]} : vector<16x128xbf16> to vector<16x32xbf16>
    %280 = vector.shape_cast %279 : vector<16x32xbf16> to vector<2x8x32xbf16>
    %281 = vector.extract_strided_slice %255 {offsets = [0, 32], sizes = [16, 32], strides = [1, 1]} : vector<16x128xbf16> to vector<16x32xbf16>
    %282 = vector.shape_cast %281 : vector<16x32xbf16> to vector<2x8x32xbf16>
    %283 = vector.extract_strided_slice %256 {offsets = [0, 32], sizes = [16, 32], strides = [1, 1]} : vector<16x128xbf16> to vector<16x32xbf16>
    %284 = vector.shape_cast %283 : vector<16x32xbf16> to vector<2x8x32xbf16>
    "tpu.trace_start"() <{level = 10 : i32, message = "bqd,bkd->bqk"}> : () -> ()
    %cst_113 = arith.constant dense<0.000000e+00> : vector<2x8x8xf32>
    %285 = tpu.matmul %280, %282, %cst_113 {dimension_numbers = #tpu.dot_dimension_numbers<[2], [2], [1], [1], [0, 0, 0, 1, 1, 1], [0], [0]>} : vector<2x8x32xbf16>, vector<2x8x32xbf16>, vector<2x8x8xf32> -> vector<2x8x8xf32>
    "tpu.trace_stop"() : () -> ()
    %286 = vector.broadcast %4 : vector<2x1x8xf32> to vector<2x8x8xf32>
    %287 = arith.addf %285, %286 : vector<2x8x8xf32>
    %cst_114 = arith.constant dense<0xFF800000> : vector<2x8xf32>
    %288 = vector.multi_reduction <maximumf>, %287, %cst_114 [2] : vector<2x8x8xf32> to vector<2x8xf32>
    %289 = vector.shape_cast %288 : vector<2x8xf32> to vector<2x8x1xf32>
    %290 = vector.broadcast %289 : vector<2x8x1xf32> to vector<2x8x8xf32>
    %291 = arith.subf %287, %290 : vector<2x8x8xf32>
    %292 = math.exp %291 : vector<2x8x8xf32>
    %cst_115 = arith.constant dense<0.000000e+00> : vector<2x8xf32>
    %293 = vector.multi_reduction <add>, %292, %cst_115 [2] : vector<2x8x8xf32> to vector<2x8xf32>
    %294 = vector.shape_cast %293 : vector<2x8xf32> to vector<2x8x1xf32>
    %295 = tpu.reciprocal %294 {approx = true} : vector<2x8x1xf32> -> vector<2x8x1xf32>
    %296 = vector.broadcast %295 : vector<2x8x1xf32> to vector<2x8x8xf32>
    %297 = arith.mulf %292, %296 : vector<2x8x8xf32>
    %298 = arith.truncf %297 : vector<2x8x8xf32> to vector<2x8x8xbf16>
    "tpu.trace_start"() <{level = 10 : i32, message = "bqk,bkd->bqd"}> : () -> ()
    %cst_116 = arith.constant dense<0.000000e+00> : vector<2x8x32xf32>
    %299 = tpu.matmul %298, %284, %cst_116 {dimension_numbers = #tpu.dot_dimension_numbers<[2], [1], [1], [2], [0, 0, 0, 1, 1, 2], [0], [0]>} : vector<2x8x8xbf16>, vector<2x8x32xbf16>, vector<2x8x32xf32> -> vector<2x8x32xf32>
    "tpu.trace_stop"() : () -> ()
    %300 = vector.shape_cast %299 : vector<2x8x32xf32> to vector<16x32xf32>
    %301 = vector.extract_strided_slice %254 {offsets = [0, 64], sizes = [16, 32], strides = [1, 1]} : vector<16x128xbf16> to vector<16x32xbf16>
    %302 = vector.shape_cast %301 : vector<16x32xbf16> to vector<2x8x32xbf16>
    %303 = vector.extract_strided_slice %255 {offsets = [0, 64], sizes = [16, 32], strides = [1, 1]} : vector<16x128xbf16> to vector<16x32xbf16>
    %304 = vector.shape_cast %303 : vector<16x32xbf16> to vector<2x8x32xbf16>
    %305 = vector.extract_strided_slice %256 {offsets = [0, 64], sizes = [16, 32], strides = [1, 1]} : vector<16x128xbf16> to vector<16x32xbf16>
    %306 = vector.shape_cast %305 : vector<16x32xbf16> to vector<2x8x32xbf16>
    "tpu.trace_start"() <{level = 10 : i32, message = "bqd,bkd->bqk"}> : () -> ()
    %cst_117 = arith.constant dense<0.000000e+00> : vector<2x8x8xf32>
    %307 = tpu.matmul %302, %304, %cst_117 {dimension_numbers = #tpu.dot_dimension_numbers<[2], [2], [1], [1], [0, 0, 0, 1, 1, 1], [0], [0]>} : vector<2x8x32xbf16>, vector<2x8x32xbf16>, vector<2x8x8xf32> -> vector<2x8x8xf32>
    "tpu.trace_stop"() : () -> ()
    %308 = vector.broadcast %4 : vector<2x1x8xf32> to vector<2x8x8xf32>
    %309 = arith.addf %307, %308 : vector<2x8x8xf32>
    %cst_118 = arith.constant dense<0xFF800000> : vector<2x8xf32>
    %310 = vector.multi_reduction <maximumf>, %309, %cst_118 [2] : vector<2x8x8xf32> to vector<2x8xf32>
    %311 = vector.shape_cast %310 : vector<2x8xf32> to vector<2x8x1xf32>
    %312 = vector.broadcast %311 : vector<2x8x1xf32> to vector<2x8x8xf32>
    %313 = arith.subf %309, %312 : vector<2x8x8xf32>
    %314 = math.exp %313 : vector<2x8x8xf32>
    %cst_119 = arith.constant dense<0.000000e+00> : vector<2x8xf32>
    %315 = vector.multi_reduction <add>, %314, %cst_119 [2] : vector<2x8x8xf32> to vector<2x8xf32>
    %316 = vector.shape_cast %315 : vector<2x8xf32> to vector<2x8x1xf32>
    %317 = tpu.reciprocal %316 {approx = true} : vector<2x8x1xf32> -> vector<2x8x1xf32>
    %318 = vector.broadcast %317 : vector<2x8x1xf32> to vector<2x8x8xf32>
    %319 = arith.mulf %314, %318 : vector<2x8x8xf32>
    %320 = arith.truncf %319 : vector<2x8x8xf32> to vector<2x8x8xbf16>
    "tpu.trace_start"() <{level = 10 : i32, message = "bqk,bkd->bqd"}> : () -> ()
    %cst_120 = arith.constant dense<0.000000e+00> : vector<2x8x32xf32>
    %321 = tpu.matmul %320, %306, %cst_120 {dimension_numbers = #tpu.dot_dimension_numbers<[2], [1], [1], [2], [0, 0, 0, 1, 1, 2], [0], [0]>} : vector<2x8x8xbf16>, vector<2x8x32xbf16>, vector<2x8x32xf32> -> vector<2x8x32xf32>
    "tpu.trace_stop"() : () -> ()
    %322 = vector.shape_cast %321 : vector<2x8x32xf32> to vector<16x32xf32>
    %323 = vector.extract_strided_slice %254 {offsets = [0, 96], sizes = [16, 32], strides = [1, 1]} : vector<16x128xbf16> to vector<16x32xbf16>
    %324 = vector.shape_cast %323 : vector<16x32xbf16> to vector<2x8x32xbf16>
    %325 = vector.extract_strided_slice %255 {offsets = [0, 96], sizes = [16, 32], strides = [1, 1]} : vector<16x128xbf16> to vector<16x32xbf16>
    %326 = vector.shape_cast %325 : vector<16x32xbf16> to vector<2x8x32xbf16>
    %327 = vector.extract_strided_slice %256 {offsets = [0, 96], sizes = [16, 32], strides = [1, 1]} : vector<16x128xbf16> to vector<16x32xbf16>
    %328 = vector.shape_cast %327 : vector<16x32xbf16> to vector<2x8x32xbf16>
    "tpu.trace_start"() <{level = 10 : i32, message = "bqd,bkd->bqk"}> : () -> ()
    %cst_121 = arith.constant dense<0.000000e+00> : vector<2x8x8xf32>
    %329 = tpu.matmul %324, %326, %cst_121 {dimension_numbers = #tpu.dot_dimension_numbers<[2], [2], [1], [1], [0, 0, 0, 1, 1, 1], [0], [0]>} : vector<2x8x32xbf16>, vector<2x8x32xbf16>, vector<2x8x8xf32> -> vector<2x8x8xf32>
    "tpu.trace_stop"() : () -> ()
    %330 = vector.broadcast %4 : vector<2x1x8xf32> to vector<2x8x8xf32>
    %331 = arith.addf %329, %330 : vector<2x8x8xf32>
    %cst_122 = arith.constant dense<0xFF800000> : vector<2x8xf32>
    %332 = vector.multi_reduction <maximumf>, %331, %cst_122 [2] : vector<2x8x8xf32> to vector<2x8xf32>
    %333 = vector.shape_cast %332 : vector<2x8xf32> to vector<2x8x1xf32>
    %334 = vector.broadcast %333 : vector<2x8x1xf32> to vector<2x8x8xf32>
    %335 = arith.subf %331, %334 : vector<2x8x8xf32>
    %336 = math.exp %335 : vector<2x8x8xf32>
    %cst_123 = arith.constant dense<0.000000e+00> : vector<2x8xf32>
    %337 = vector.multi_reduction <add>, %336, %cst_123 [2] : vector<2x8x8xf32> to vector<2x8xf32>
    %338 = vector.shape_cast %337 : vector<2x8xf32> to vector<2x8x1xf32>
    %339 = tpu.reciprocal %338 {approx = true} : vector<2x8x1xf32> -> vector<2x8x1xf32>
    %340 = vector.broadcast %339 : vector<2x8x1xf32> to vector<2x8x8xf32>
    %341 = arith.mulf %336, %340 : vector<2x8x8xf32>
    %342 = arith.truncf %341 : vector<2x8x8xf32> to vector<2x8x8xbf16>
    "tpu.trace_start"() <{level = 10 : i32, message = "bqk,bkd->bqd"}> : () -> ()
    %cst_124 = arith.constant dense<0.000000e+00> : vector<2x8x32xf32>
    %343 = tpu.matmul %342, %328, %cst_124 {dimension_numbers = #tpu.dot_dimension_numbers<[2], [1], [1], [2], [0, 0, 0, 1, 1, 2], [0], [0]>} : vector<2x8x8xbf16>, vector<2x8x32xbf16>, vector<2x8x32xf32> -> vector<2x8x32xf32>
    "tpu.trace_stop"() : () -> ()
    %344 = vector.shape_cast %343 : vector<2x8x32xf32> to vector<16x32xf32>
    %345 = tpu.concatenate %278, %300, %322, %344 in 1 : vector<16x32xf32>, vector<16x32xf32>, vector<16x32xf32>, vector<16x32xf32> -> vector<16x128xf32>
    %346 = arith.truncf %345 : vector<16x128xf32> to vector<16x128xbf16>
    %cst_125 = arith.constant dense<0.000000e+00> : vector<16x128xf32>
    %347 = tpu.matmul %346, %240, %cst_125 {dimension_numbers = #tpu.dot_dimension_numbers<[1], [0], [0], [1], [0, 0, 1, 1], [], []>} : vector<16x128xbf16>, vector<128x128xbf16>, vector<16x128xf32> -> vector<16x128xf32>
    %348 = vector.broadcast %242 : vector<1x128xf32> to vector<16x128xf32>
    %349 = arith.addf %347, %348 : vector<16x128xf32>
    %350 = arith.addf %349, %234 : vector<16x128xf32>
    %cst_126 = arith.constant dense<0.000000e+00> : vector<16xf32>
    %351 = vector.multi_reduction <add>, %350, %cst_126 [1] : vector<16x128xf32> to vector<16xf32>
    %352 = vector.shape_cast %351 : vector<16xf32> to vector<16x1xf32>
    %cst_127 = arith.constant 1.280000e+02 : f32
    %353 = vector.broadcast %cst_127 : f32 to vector<16x1xf32>
    %354 = arith.divf %352, %353 : vector<16x1xf32>
    %355 = vector.broadcast %354 : vector<16x1xf32> to vector<16x128xf32>
    %356 = arith.subf %350, %355 : vector<16x128xf32>
    %357 = arith.mulf %356, %356 : vector<16x128xf32>
    %cst_128 = arith.constant dense<0.000000e+00> : vector<16xf32>
    %358 = vector.multi_reduction <add>, %357, %cst_128 [1] : vector<16x128xf32> to vector<16xf32>
    %359 = vector.shape_cast %358 : vector<16xf32> to vector<16x1xf32>
    %cst_129 = arith.constant 1.280000e+02 : f32
    %360 = vector.broadcast %cst_129 : f32 to vector<16x1xf32>
    %361 = arith.divf %359, %360 : vector<16x1xf32>
    %362 = vector.broadcast %354 : vector<16x1xf32> to vector<16x128xf32>
    %363 = arith.subf %350, %362 : vector<16x128xf32>
    %cst_130 = arith.constant 9.99999974E-6 : f32
    %364 = vector.broadcast %cst_130 : f32 to vector<16x1xf32>
    %365 = arith.addf %361, %364 : vector<16x1xf32>
    %366 = math.rsqrt %365 : vector<16x1xf32>
    %367 = vector.broadcast %366 : vector<16x1xf32> to vector<16x128xf32>
    %368 = arith.mulf %363, %367 : vector<16x128xf32>
    %369 = vector.broadcast %244 : vector<1x128xf32> to vector<16x128xf32>
    %370 = arith.mulf %368, %369 : vector<16x128xf32>
    %371 = vector.broadcast %246 : vector<1x128xf32> to vector<16x128xf32>
    %372 = arith.addf %370, %371 : vector<16x128xf32>
    %c1_131 = arith.constant 1 : index
    %c0_132 = arith.constant 0 : index
    %c0_133 = arith.constant 0 : index
    %373 = vector.load %arg16[%c1_131, %c0_132, %c0_133] : memref<2x128x256xbf16, #tpu.memory_space<vmem>>, vector<1x128x256xbf16>
    %374 = vector.shape_cast %373 : vector<1x128x256xbf16> to vector<128x256xbf16>
    %c1_134 = arith.constant 1 : index
    %c0_135 = arith.constant 0 : index
    %c0_136 = arith.constant 0 : index
    %375 = vector.load %arg17[%c1_134, %c0_135, %c0_136] : memref<2x1x256xf32, #tpu.memory_space<vmem>>, vector<1x1x256xf32>
    %376 = vector.shape_cast %375 : vector<1x1x256xf32> to vector<1x256xf32>
    %c1_137 = arith.constant 1 : index
    %c0_138 = arith.constant 0 : index
    %c0_139 = arith.constant 0 : index
    %377 = vector.load %arg18[%c1_137, %c0_138, %c0_139] : memref<2x256x128xbf16, #tpu.memory_space<vmem>>, vector<1x256x128xbf16>
    %378 = vector.shape_cast %377 : vector<1x256x128xbf16> to vector<256x128xbf16>
    %c1_140 = arith.constant 1 : index
    %c0_141 = arith.constant 0 : index
    %c0_142 = arith.constant 0 : index
    %379 = vector.load %arg19[%c1_140, %c0_141, %c0_142] : memref<2x1x128xf32, #tpu.memory_space<vmem>>, vector<1x1x128xf32>
    %380 = vector.shape_cast %379 : vector<1x1x128xf32> to vector<1x128xf32>
    %c1_143 = arith.constant 1 : index
    %c0_144 = arith.constant 0 : index
    %c0_145 = arith.constant 0 : index
    %381 = vector.load %arg20[%c1_143, %c0_144, %c0_145] : memref<2x1x128xf32, #tpu.memory_space<vmem>>, vector<1x1x128xf32>
    %382 = vector.shape_cast %381 : vector<1x1x128xf32> to vector<1x128xf32>
    %c1_146 = arith.constant 1 : index
    %c0_147 = arith.constant 0 : index
    %c0_148 = arith.constant 0 : index
    %383 = vector.load %arg21[%c1_146, %c0_147, %c0_148] : memref<2x1x128xf32, #tpu.memory_space<vmem>>, vector<1x1x128xf32>
    %384 = vector.shape_cast %383 : vector<1x1x128xf32> to vector<1x128xf32>
    %385 = arith.truncf %372 : vector<16x128xf32> to vector<16x128xbf16>
    %cst_149 = arith.constant dense<0.000000e+00> : vector<16x256xf32>
    %386 = tpu.matmul %385, %374, %cst_149 {dimension_numbers = #tpu.dot_dimension_numbers<[1], [0], [0], [1], [0, 0, 1, 1], [], []>} : vector<16x128xbf16>, vector<128x256xbf16>, vector<16x256xf32> -> vector<16x256xf32>
    %387 = vector.broadcast %376 : vector<1x256xf32> to vector<16x256xf32>
    %388 = arith.addf %386, %387 : vector<16x256xf32>
    %389 = arith.negf %388 : vector<16x256xf32>
    %390 = math.exp %389 : vector<16x256xf32>
    %cst_150 = arith.constant 1.000000e+00 : f32
    %391 = vector.broadcast %cst_150 : f32 to vector<16x256xf32>
    %392 = arith.addf %391, %390 : vector<16x256xf32>
    %393 = arith.divf %391, %392 : vector<16x256xf32>
    %394 = arith.mulf %388, %393 : vector<16x256xf32>
    %395 = arith.truncf %394 : vector<16x256xf32> to vector<16x256xbf16>
    %cst_151 = arith.constant dense<0.000000e+00> : vector<16x128xf32>
    %396 = tpu.matmul %395, %378, %cst_151 {dimension_numbers = #tpu.dot_dimension_numbers<[1], [0], [0], [1], [0, 0, 1, 1], [], []>} : vector<16x256xbf16>, vector<256x128xbf16>, vector<16x128xf32> -> vector<16x128xf32>
    %397 = vector.broadcast %380 : vector<1x128xf32> to vector<16x128xf32>
    %398 = arith.addf %396, %397 : vector<16x128xf32>
    %399 = arith.addf %398, %372 : vector<16x128xf32>
    %cst_152 = arith.constant dense<0.000000e+00> : vector<16xf32>
    %400 = vector.multi_reduction <add>, %399, %cst_152 [1] : vector<16x128xf32> to vector<16xf32>
    %401 = vector.shape_cast %400 : vector<16xf32> to vector<16x1xf32>
    %cst_153 = arith.constant 1.280000e+02 : f32
    %402 = vector.broadcast %cst_153 : f32 to vector<16x1xf32>
    %403 = arith.divf %401, %402 : vector<16x1xf32>
    %404 = vector.broadcast %403 : vector<16x1xf32> to vector<16x128xf32>
    %405 = arith.subf %399, %404 : vector<16x128xf32>
    %406 = arith.mulf %405, %405 : vector<16x128xf32>
    %cst_154 = arith.constant dense<0.000000e+00> : vector<16xf32>
    %407 = vector.multi_reduction <add>, %406, %cst_154 [1] : vector<16x128xf32> to vector<16xf32>
    %408 = vector.shape_cast %407 : vector<16xf32> to vector<16x1xf32>
    %cst_155 = arith.constant 1.280000e+02 : f32
    %409 = vector.broadcast %cst_155 : f32 to vector<16x1xf32>
    %410 = arith.divf %408, %409 : vector<16x1xf32>
    %411 = vector.broadcast %403 : vector<16x1xf32> to vector<16x128xf32>
    %412 = arith.subf %399, %411 : vector<16x128xf32>
    %cst_156 = arith.constant 9.99999974E-6 : f32
    %413 = vector.broadcast %cst_156 : f32 to vector<16x1xf32>
    %414 = arith.addf %410, %413 : vector<16x1xf32>
    %415 = math.rsqrt %414 : vector<16x1xf32>
    %416 = vector.broadcast %415 : vector<16x1xf32> to vector<16x128xf32>
    %417 = arith.mulf %412, %416 : vector<16x128xf32>
    %418 = vector.broadcast %382 : vector<1x128xf32> to vector<16x128xf32>
    %419 = arith.mulf %417, %418 : vector<16x128xf32>
    %420 = vector.broadcast %384 : vector<1x128xf32> to vector<16x128xf32>
    %421 = arith.addf %419, %420 : vector<16x128xf32>
    %422 = arith.truncf %421 : vector<16x128xf32> to vector<16x128xbf16>
    %c0_157 = arith.constant 0 : index
    %c0_158 = arith.constant 0 : index
    %423 = vector.load %arg1[%c0_157, %c0_158] : memref<16x128xf32, #tpu.memory_space<vmem>>, vector<16x128xf32>
    %cst_159 = arith.constant 11.3137083 : f32
    %424 = vector.broadcast %cst_159 : f32 to vector<16x128xf32>
    %425 = arith.mulf %423, %424 : vector<16x128xf32>
    %c0_160 = arith.constant 0 : index
    %c0_161 = arith.constant 0 : index
    %426 = vector.load %arg3[%c0_160, %c0_161] : memref<16x128xf32, #tpu.memory_space<vmem>>, vector<16x128xf32>
    %427 = arith.addf %425, %426 : vector<16x128xf32>
    %c0_162 = arith.constant 0 : index
    %c0_163 = arith.constant 0 : index
    %428 = vector.load %arg8[%c0_162, %c0_163] : memref<1x128xf32, #tpu.memory_space<vmem>>, vector<1x128xf32>
    %c0_164 = arith.constant 0 : index
    %c0_165 = arith.constant 0 : index
    %429 = vector.load %arg9[%c0_164, %c0_165] : memref<1x128xf32, #tpu.memory_space<vmem>>, vector<1x128xf32>
    %cst_166 = arith.constant dense<0.000000e+00> : vector<16xf32>
    %430 = vector.multi_reduction <add>, %427, %cst_166 [1] : vector<16x128xf32> to vector<16xf32>
    %431 = vector.shape_cast %430 : vector<16xf32> to vector<16x1xf32>
    %cst_167 = arith.constant 1.280000e+02 : f32
    %432 = vector.broadcast %cst_167 : f32 to vector<16x1xf32>
    %433 = arith.divf %431, %432 : vector<16x1xf32>
    %434 = vector.broadcast %433 : vector<16x1xf32> to vector<16x128xf32>
    %435 = arith.subf %427, %434 : vector<16x128xf32>
    %436 = arith.mulf %435, %435 : vector<16x128xf32>
    %cst_168 = arith.constant dense<0.000000e+00> : vector<16xf32>
    %437 = vector.multi_reduction <add>, %436, %cst_168 [1] : vector<16x128xf32> to vector<16xf32>
    %438 = vector.shape_cast %437 : vector<16xf32> to vector<16x1xf32>
    %cst_169 = arith.constant 1.280000e+02 : f32
    %439 = vector.broadcast %cst_169 : f32 to vector<16x1xf32>
    %440 = arith.divf %438, %439 : vector<16x1xf32>
    %441 = vector.broadcast %433 : vector<16x1xf32> to vector<16x128xf32>
    %442 = arith.subf %427, %441 : vector<16x128xf32>
    %cst_170 = arith.constant 9.99999974E-6 : f32
    %443 = vector.broadcast %cst_170 : f32 to vector<16x1xf32>
    %444 = arith.addf %440, %443 : vector<16x1xf32>
    %445 = math.rsqrt %444 : vector<16x1xf32>
    %446 = vector.broadcast %445 : vector<16x1xf32> to vector<16x128xf32>
    %447 = arith.mulf %442, %446 : vector<16x128xf32>
    %448 = vector.broadcast %428 : vector<1x128xf32> to vector<16x128xf32>
    %449 = arith.mulf %447, %448 : vector<16x128xf32>
    %450 = vector.broadcast %429 : vector<1x128xf32> to vector<16x128xf32>
    %451 = arith.addf %449, %450 : vector<16x128xf32>
    %c0_171 = arith.constant 0 : index
    %c0_172 = arith.constant 0 : index
    %c0_173 = arith.constant 0 : index
    %452 = vector.load %arg22[%c0_171, %c0_172, %c0_173] : memref<2x128x384xbf16, #tpu.memory_space<vmem>>, vector<1x128x384xbf16>
    %453 = vector.shape_cast %452 : vector<1x128x384xbf16> to vector<128x384xbf16>
    %c0_174 = arith.constant 0 : index
    %c0_175 = arith.constant 0 : index
    %c0_176 = arith.constant 0 : index
    %454 = vector.load %arg23[%c0_174, %c0_175, %c0_176] : memref<2x1x384xf32, #tpu.memory_space<vmem>>, vector<1x1x384xf32>
    %455 = vector.shape_cast %454 : vector<1x1x384xf32> to vector<1x384xf32>
    %c0_177 = arith.constant 0 : index
    %c0_178 = arith.constant 0 : index
    %c0_179 = arith.constant 0 : index
    %456 = vector.load %arg24[%c0_177, %c0_178, %c0_179] : memref<2x128x128xbf16, #tpu.memory_space<vmem>>, vector<1x128x128xbf16>
    %457 = vector.shape_cast %456 : vector<1x128x128xbf16> to vector<128x128xbf16>
    %c0_180 = arith.constant 0 : index
    %c0_181 = arith.constant 0 : index
    %c0_182 = arith.constant 0 : index
    %458 = vector.load %arg25[%c0_180, %c0_181, %c0_182] : memref<2x1x128xf32, #tpu.memory_space<vmem>>, vector<1x1x128xf32>
    %459 = vector.shape_cast %458 : vector<1x1x128xf32> to vector<1x128xf32>
    %c0_183 = arith.constant 0 : index
    %c0_184 = arith.constant 0 : index
    %c0_185 = arith.constant 0 : index
    %460 = vector.load %arg26[%c0_183, %c0_184, %c0_185] : memref<2x1x128xf32, #tpu.memory_space<vmem>>, vector<1x1x128xf32>
    %461 = vector.shape_cast %460 : vector<1x1x128xf32> to vector<1x128xf32>
    %c0_186 = arith.constant 0 : index
    %c0_187 = arith.constant 0 : index
    %c0_188 = arith.constant 0 : index
    %462 = vector.load %arg27[%c0_186, %c0_187, %c0_188] : memref<2x1x128xf32, #tpu.memory_space<vmem>>, vector<1x1x128xf32>
    %463 = vector.shape_cast %462 : vector<1x1x128xf32> to vector<1x128xf32>
    %464 = arith.truncf %451 : vector<16x128xf32> to vector<16x128xbf16>
    %cst_189 = arith.constant dense<0.000000e+00> : vector<16x384xf32>
    %465 = tpu.matmul %464, %453, %cst_189 {dimension_numbers = #tpu.dot_dimension_numbers<[1], [0], [0], [1], [0, 0, 1, 1], [], []>} : vector<16x128xbf16>, vector<128x384xbf16>, vector<16x384xf32> -> vector<16x384xf32>
    %466 = vector.broadcast %455 : vector<1x384xf32> to vector<16x384xf32>
    %467 = arith.addf %465, %466 : vector<16x384xf32>
    %468 = vector.extract_strided_slice %467 {offsets = [0, 0], sizes = [16, 128], strides = [1, 1]} : vector<16x384xf32> to vector<16x128xf32>
    %469 = vector.extract_strided_slice %467 {offsets = [0, 128], sizes = [16, 128], strides = [1, 1]} : vector<16x384xf32> to vector<16x128xf32>
    %470 = vector.extract_strided_slice %467 {offsets = [0, 256], sizes = [16, 128], strides = [1, 1]} : vector<16x384xf32> to vector<16x128xf32>
    %471 = arith.truncf %468 : vector<16x128xf32> to vector<16x128xbf16>
    %472 = arith.truncf %469 : vector<16x128xf32> to vector<16x128xbf16>
    %473 = arith.truncf %470 : vector<16x128xf32> to vector<16x128xbf16>
    %474 = vector.extract_strided_slice %471 {offsets = [0, 0], sizes = [16, 32], strides = [1, 1]} : vector<16x128xbf16> to vector<16x32xbf16>
    %475 = vector.shape_cast %474 : vector<16x32xbf16> to vector<2x8x32xbf16>
    %476 = vector.extract_strided_slice %472 {offsets = [0, 0], sizes = [16, 32], strides = [1, 1]} : vector<16x128xbf16> to vector<16x32xbf16>
    %477 = vector.shape_cast %476 : vector<16x32xbf16> to vector<2x8x32xbf16>
    %478 = vector.extract_strided_slice %473 {offsets = [0, 0], sizes = [16, 32], strides = [1, 1]} : vector<16x128xbf16> to vector<16x32xbf16>
    %479 = vector.shape_cast %478 : vector<16x32xbf16> to vector<2x8x32xbf16>
    "tpu.trace_start"() <{level = 10 : i32, message = "bqd,bkd->bqk"}> : () -> ()
    %cst_190 = arith.constant dense<0.000000e+00> : vector<2x8x8xf32>
    %480 = tpu.matmul %475, %477, %cst_190 {dimension_numbers = #tpu.dot_dimension_numbers<[2], [2], [1], [1], [0, 0, 0, 1, 1, 1], [0], [0]>} : vector<2x8x32xbf16>, vector<2x8x32xbf16>, vector<2x8x8xf32> -> vector<2x8x8xf32>
    "tpu.trace_stop"() : () -> ()
    %481 = arith.addf %480, %18 : vector<2x8x8xf32>
    %cst_191 = arith.constant dense<0xFF800000> : vector<2x8xf32>
    %482 = vector.multi_reduction <maximumf>, %481, %cst_191 [2] : vector<2x8x8xf32> to vector<2x8xf32>
    %483 = vector.shape_cast %482 : vector<2x8xf32> to vector<2x8x1xf32>
    %484 = vector.broadcast %483 : vector<2x8x1xf32> to vector<2x8x8xf32>
    %485 = arith.subf %481, %484 : vector<2x8x8xf32>
    %486 = math.exp %485 : vector<2x8x8xf32>
    %cst_192 = arith.constant dense<0.000000e+00> : vector<2x8xf32>
    %487 = vector.multi_reduction <add>, %486, %cst_192 [2] : vector<2x8x8xf32> to vector<2x8xf32>
    %488 = vector.shape_cast %487 : vector<2x8xf32> to vector<2x8x1xf32>
    %489 = tpu.reciprocal %488 {approx = true} : vector<2x8x1xf32> -> vector<2x8x1xf32>
    %490 = vector.broadcast %489 : vector<2x8x1xf32> to vector<2x8x8xf32>
    %491 = arith.mulf %486, %490 : vector<2x8x8xf32>
    %492 = arith.truncf %491 : vector<2x8x8xf32> to vector<2x8x8xbf16>
    "tpu.trace_start"() <{level = 10 : i32, message = "bqk,bkd->bqd"}> : () -> ()
    %cst_193 = arith.constant dense<0.000000e+00> : vector<2x8x32xf32>
    %493 = tpu.matmul %492, %479, %cst_193 {dimension_numbers = #tpu.dot_dimension_numbers<[2], [1], [1], [2], [0, 0, 0, 1, 1, 2], [0], [0]>} : vector<2x8x8xbf16>, vector<2x8x32xbf16>, vector<2x8x32xf32> -> vector<2x8x32xf32>
    "tpu.trace_stop"() : () -> ()
    %494 = vector.shape_cast %493 : vector<2x8x32xf32> to vector<16x32xf32>
    %495 = vector.extract_strided_slice %471 {offsets = [0, 32], sizes = [16, 32], strides = [1, 1]} : vector<16x128xbf16> to vector<16x32xbf16>
    %496 = vector.shape_cast %495 : vector<16x32xbf16> to vector<2x8x32xbf16>
    %497 = vector.extract_strided_slice %472 {offsets = [0, 32], sizes = [16, 32], strides = [1, 1]} : vector<16x128xbf16> to vector<16x32xbf16>
    %498 = vector.shape_cast %497 : vector<16x32xbf16> to vector<2x8x32xbf16>
    %499 = vector.extract_strided_slice %473 {offsets = [0, 32], sizes = [16, 32], strides = [1, 1]} : vector<16x128xbf16> to vector<16x32xbf16>
    %500 = vector.shape_cast %499 : vector<16x32xbf16> to vector<2x8x32xbf16>
    "tpu.trace_start"() <{level = 10 : i32, message = "bqd,bkd->bqk"}> : () -> ()
    %cst_194 = arith.constant dense<0.000000e+00> : vector<2x8x8xf32>
    %501 = tpu.matmul %496, %498, %cst_194 {dimension_numbers = #tpu.dot_dimension_numbers<[2], [2], [1], [1], [0, 0, 0, 1, 1, 1], [0], [0]>} : vector<2x8x32xbf16>, vector<2x8x32xbf16>, vector<2x8x8xf32> -> vector<2x8x8xf32>
    "tpu.trace_stop"() : () -> ()
    %502 = arith.addf %501, %18 : vector<2x8x8xf32>
    %cst_195 = arith.constant dense<0xFF800000> : vector<2x8xf32>
    %503 = vector.multi_reduction <maximumf>, %502, %cst_195 [2] : vector<2x8x8xf32> to vector<2x8xf32>
    %504 = vector.shape_cast %503 : vector<2x8xf32> to vector<2x8x1xf32>
    %505 = vector.broadcast %504 : vector<2x8x1xf32> to vector<2x8x8xf32>
    %506 = arith.subf %502, %505 : vector<2x8x8xf32>
    %507 = math.exp %506 : vector<2x8x8xf32>
    %cst_196 = arith.constant dense<0.000000e+00> : vector<2x8xf32>
    %508 = vector.multi_reduction <add>, %507, %cst_196 [2] : vector<2x8x8xf32> to vector<2x8xf32>
    %509 = vector.shape_cast %508 : vector<2x8xf32> to vector<2x8x1xf32>
    %510 = tpu.reciprocal %509 {approx = true} : vector<2x8x1xf32> -> vector<2x8x1xf32>
    %511 = vector.broadcast %510 : vector<2x8x1xf32> to vector<2x8x8xf32>
    %512 = arith.mulf %507, %511 : vector<2x8x8xf32>
    %513 = arith.truncf %512 : vector<2x8x8xf32> to vector<2x8x8xbf16>
    "tpu.trace_start"() <{level = 10 : i32, message = "bqk,bkd->bqd"}> : () -> ()
    %cst_197 = arith.constant dense<0.000000e+00> : vector<2x8x32xf32>
    %514 = tpu.matmul %513, %500, %cst_197 {dimension_numbers = #tpu.dot_dimension_numbers<[2], [1], [1], [2], [0, 0, 0, 1, 1, 2], [0], [0]>} : vector<2x8x8xbf16>, vector<2x8x32xbf16>, vector<2x8x32xf32> -> vector<2x8x32xf32>
    "tpu.trace_stop"() : () -> ()
    %515 = vector.shape_cast %514 : vector<2x8x32xf32> to vector<16x32xf32>
    %516 = vector.extract_strided_slice %471 {offsets = [0, 64], sizes = [16, 32], strides = [1, 1]} : vector<16x128xbf16> to vector<16x32xbf16>
    %517 = vector.shape_cast %516 : vector<16x32xbf16> to vector<2x8x32xbf16>
    %518 = vector.extract_strided_slice %472 {offsets = [0, 64], sizes = [16, 32], strides = [1, 1]} : vector<16x128xbf16> to vector<16x32xbf16>
    %519 = vector.shape_cast %518 : vector<16x32xbf16> to vector<2x8x32xbf16>
    %520 = vector.extract_strided_slice %473 {offsets = [0, 64], sizes = [16, 32], strides = [1, 1]} : vector<16x128xbf16> to vector<16x32xbf16>
    %521 = vector.shape_cast %520 : vector<16x32xbf16> to vector<2x8x32xbf16>
    "tpu.trace_start"() <{level = 10 : i32, message = "bqd,bkd->bqk"}> : () -> ()
    %cst_198 = arith.constant dense<0.000000e+00> : vector<2x8x8xf32>
    %522 = tpu.matmul %517, %519, %cst_198 {dimension_numbers = #tpu.dot_dimension_numbers<[2], [2], [1], [1], [0, 0, 0, 1, 1, 1], [0], [0]>} : vector<2x8x32xbf16>, vector<2x8x32xbf16>, vector<2x8x8xf32> -> vector<2x8x8xf32>
    "tpu.trace_stop"() : () -> ()
    %523 = arith.addf %522, %18 : vector<2x8x8xf32>
    %cst_199 = arith.constant dense<0xFF800000> : vector<2x8xf32>
    %524 = vector.multi_reduction <maximumf>, %523, %cst_199 [2] : vector<2x8x8xf32> to vector<2x8xf32>
    %525 = vector.shape_cast %524 : vector<2x8xf32> to vector<2x8x1xf32>
    %526 = vector.broadcast %525 : vector<2x8x1xf32> to vector<2x8x8xf32>
    %527 = arith.subf %523, %526 : vector<2x8x8xf32>
    %528 = math.exp %527 : vector<2x8x8xf32>
    %cst_200 = arith.constant dense<0.000000e+00> : vector<2x8xf32>
    %529 = vector.multi_reduction <add>, %528, %cst_200 [2] : vector<2x8x8xf32> to vector<2x8xf32>
    %530 = vector.shape_cast %529 : vector<2x8xf32> to vector<2x8x1xf32>
    %531 = tpu.reciprocal %530 {approx = true} : vector<2x8x1xf32> -> vector<2x8x1xf32>
    %532 = vector.broadcast %531 : vector<2x8x1xf32> to vector<2x8x8xf32>
    %533 = arith.mulf %528, %532 : vector<2x8x8xf32>
    %534 = arith.truncf %533 : vector<2x8x8xf32> to vector<2x8x8xbf16>
    "tpu.trace_start"() <{level = 10 : i32, message = "bqk,bkd->bqd"}> : () -> ()
    %cst_201 = arith.constant dense<0.000000e+00> : vector<2x8x32xf32>
    %535 = tpu.matmul %534, %521, %cst_201 {dimension_numbers = #tpu.dot_dimension_numbers<[2], [1], [1], [2], [0, 0, 0, 1, 1, 2], [0], [0]>} : vector<2x8x8xbf16>, vector<2x8x32xbf16>, vector<2x8x32xf32> -> vector<2x8x32xf32>
    "tpu.trace_stop"() : () -> ()
    %536 = vector.shape_cast %535 : vector<2x8x32xf32> to vector<16x32xf32>
    %537 = vector.extract_strided_slice %471 {offsets = [0, 96], sizes = [16, 32], strides = [1, 1]} : vector<16x128xbf16> to vector<16x32xbf16>
    %538 = vector.shape_cast %537 : vector<16x32xbf16> to vector<2x8x32xbf16>
    %539 = vector.extract_strided_slice %472 {offsets = [0, 96], sizes = [16, 32], strides = [1, 1]} : vector<16x128xbf16> to vector<16x32xbf16>
    %540 = vector.shape_cast %539 : vector<16x32xbf16> to vector<2x8x32xbf16>
    %541 = vector.extract_strided_slice %473 {offsets = [0, 96], sizes = [16, 32], strides = [1, 1]} : vector<16x128xbf16> to vector<16x32xbf16>
    %542 = vector.shape_cast %541 : vector<16x32xbf16> to vector<2x8x32xbf16>
    "tpu.trace_start"() <{level = 10 : i32, message = "bqd,bkd->bqk"}> : () -> ()
    %cst_202 = arith.constant dense<0.000000e+00> : vector<2x8x8xf32>
    %543 = tpu.matmul %538, %540, %cst_202 {dimension_numbers = #tpu.dot_dimension_numbers<[2], [2], [1], [1], [0, 0, 0, 1, 1, 1], [0], [0]>} : vector<2x8x32xbf16>, vector<2x8x32xbf16>, vector<2x8x8xf32> -> vector<2x8x8xf32>
    "tpu.trace_stop"() : () -> ()
    %544 = arith.addf %543, %18 : vector<2x8x8xf32>
    %cst_203 = arith.constant dense<0xFF800000> : vector<2x8xf32>
    %545 = vector.multi_reduction <maximumf>, %544, %cst_203 [2] : vector<2x8x8xf32> to vector<2x8xf32>
    %546 = vector.shape_cast %545 : vector<2x8xf32> to vector<2x8x1xf32>
    %547 = vector.broadcast %546 : vector<2x8x1xf32> to vector<2x8x8xf32>
    %548 = arith.subf %544, %547 : vector<2x8x8xf32>
    %549 = math.exp %548 : vector<2x8x8xf32>
    %cst_204 = arith.constant dense<0.000000e+00> : vector<2x8xf32>
    %550 = vector.multi_reduction <add>, %549, %cst_204 [2] : vector<2x8x8xf32> to vector<2x8xf32>
    %551 = vector.shape_cast %550 : vector<2x8xf32> to vector<2x8x1xf32>
    %552 = tpu.reciprocal %551 {approx = true} : vector<2x8x1xf32> -> vector<2x8x1xf32>
    %553 = vector.broadcast %552 : vector<2x8x1xf32> to vector<2x8x8xf32>
    %554 = arith.mulf %549, %553 : vector<2x8x8xf32>
    %555 = arith.truncf %554 : vector<2x8x8xf32> to vector<2x8x8xbf16>
    "tpu.trace_start"() <{level = 10 : i32, message = "bqk,bkd->bqd"}> : () -> ()
    %cst_205 = arith.constant dense<0.000000e+00> : vector<2x8x32xf32>
    %556 = tpu.matmul %555, %542, %cst_205 {dimension_numbers = #tpu.dot_dimension_numbers<[2], [1], [1], [2], [0, 0, 0, 1, 1, 2], [0], [0]>} : vector<2x8x8xbf16>, vector<2x8x32xbf16>, vector<2x8x32xf32> -> vector<2x8x32xf32>
    "tpu.trace_stop"() : () -> ()
    %557 = vector.shape_cast %556 : vector<2x8x32xf32> to vector<16x32xf32>
    %558 = tpu.concatenate %494, %515, %536, %557 in 1 : vector<16x32xf32>, vector<16x32xf32>, vector<16x32xf32>, vector<16x32xf32> -> vector<16x128xf32>
    %559 = arith.truncf %558 : vector<16x128xf32> to vector<16x128xbf16>
    %cst_206 = arith.constant dense<0.000000e+00> : vector<16x128xf32>
    %560 = tpu.matmul %559, %457, %cst_206 {dimension_numbers = #tpu.dot_dimension_numbers<[1], [0], [0], [1], [0, 0, 1, 1], [], []>} : vector<16x128xbf16>, vector<128x128xbf16>, vector<16x128xf32> -> vector<16x128xf32>
    %561 = vector.broadcast %459 : vector<1x128xf32> to vector<16x128xf32>
    %562 = arith.addf %560, %561 : vector<16x128xf32>
    %563 = arith.addf %562, %451 : vector<16x128xf32>
    %cst_207 = arith.constant dense<0.000000e+00> : vector<16xf32>
    %564 = vector.multi_reduction <add>, %563, %cst_207 [1] : vector<16x128xf32> to vector<16xf32>
    %565 = vector.shape_cast %564 : vector<16xf32> to vector<16x1xf32>
    %cst_208 = arith.constant 1.280000e+02 : f32
    %566 = vector.broadcast %cst_208 : f32 to vector<16x1xf32>
    %567 = arith.divf %565, %566 : vector<16x1xf32>
    %568 = vector.broadcast %567 : vector<16x1xf32> to vector<16x128xf32>
    %569 = arith.subf %563, %568 : vector<16x128xf32>
    %570 = arith.mulf %569, %569 : vector<16x128xf32>
    %cst_209 = arith.constant dense<0.000000e+00> : vector<16xf32>
    %571 = vector.multi_reduction <add>, %570, %cst_209 [1] : vector<16x128xf32> to vector<16xf32>
    %572 = vector.shape_cast %571 : vector<16xf32> to vector<16x1xf32>
    %cst_210 = arith.constant 1.280000e+02 : f32
    %573 = vector.broadcast %cst_210 : f32 to vector<16x1xf32>
    %574 = arith.divf %572, %573 : vector<16x1xf32>
    %575 = vector.broadcast %567 : vector<16x1xf32> to vector<16x128xf32>
    %576 = arith.subf %563, %575 : vector<16x128xf32>
    %cst_211 = arith.constant 9.99999974E-6 : f32
    %577 = vector.broadcast %cst_211 : f32 to vector<16x1xf32>
    %578 = arith.addf %574, %577 : vector<16x1xf32>
    %579 = math.rsqrt %578 : vector<16x1xf32>
    %580 = vector.broadcast %579 : vector<16x1xf32> to vector<16x128xf32>
    %581 = arith.mulf %576, %580 : vector<16x128xf32>
    %582 = vector.broadcast %461 : vector<1x128xf32> to vector<16x128xf32>
    %583 = arith.mulf %581, %582 : vector<16x128xf32>
    %584 = vector.broadcast %463 : vector<1x128xf32> to vector<16x128xf32>
    %585 = arith.addf %583, %584 : vector<16x128xf32>
    %c0_212 = arith.constant 0 : index
    %c0_213 = arith.constant 0 : index
    %c0_214 = arith.constant 0 : index
    %586 = vector.load %arg28[%c0_212, %c0_213, %c0_214] : memref<2x128x128xbf16, #tpu.memory_space<vmem>>, vector<1x128x128xbf16>
    %587 = vector.shape_cast %586 : vector<1x128x128xbf16> to vector<128x128xbf16>
    %c0_215 = arith.constant 0 : index
    %c0_216 = arith.constant 0 : index
    %c0_217 = arith.constant 0 : index
    %588 = vector.load %arg29[%c0_215, %c0_216, %c0_217] : memref<2x1x128xf32, #tpu.memory_space<vmem>>, vector<1x1x128xf32>
    %589 = vector.shape_cast %588 : vector<1x1x128xf32> to vector<1x128xf32>
    %c0_218 = arith.constant 0 : index
    %c0_219 = arith.constant 0 : index
    %c0_220 = arith.constant 0 : index
    %590 = vector.load %arg30[%c0_218, %c0_219, %c0_220] : memref<2x128x256xbf16, #tpu.memory_space<vmem>>, vector<1x128x256xbf16>
    %591 = vector.shape_cast %590 : vector<1x128x256xbf16> to vector<128x256xbf16>
    %c0_221 = arith.constant 0 : index
    %c0_222 = arith.constant 0 : index
    %c0_223 = arith.constant 0 : index
    %592 = vector.load %arg31[%c0_221, %c0_222, %c0_223] : memref<2x1x256xf32, #tpu.memory_space<vmem>>, vector<1x1x256xf32>
    %593 = vector.shape_cast %592 : vector<1x1x256xf32> to vector<1x256xf32>
    %c0_224 = arith.constant 0 : index
    %c0_225 = arith.constant 0 : index
    %c0_226 = arith.constant 0 : index
    %594 = vector.load %arg32[%c0_224, %c0_225, %c0_226] : memref<2x128x128xbf16, #tpu.memory_space<vmem>>, vector<1x128x128xbf16>
    %595 = vector.shape_cast %594 : vector<1x128x128xbf16> to vector<128x128xbf16>
    %c0_227 = arith.constant 0 : index
    %c0_228 = arith.constant 0 : index
    %c0_229 = arith.constant 0 : index
    %596 = vector.load %arg33[%c0_227, %c0_228, %c0_229] : memref<2x1x128xf32, #tpu.memory_space<vmem>>, vector<1x1x128xf32>
    %597 = vector.shape_cast %596 : vector<1x1x128xf32> to vector<1x128xf32>
    %c0_230 = arith.constant 0 : index
    %c0_231 = arith.constant 0 : index
    %c0_232 = arith.constant 0 : index
    %598 = vector.load %arg34[%c0_230, %c0_231, %c0_232] : memref<2x1x128xf32, #tpu.memory_space<vmem>>, vector<1x1x128xf32>
    %599 = vector.shape_cast %598 : vector<1x1x128xf32> to vector<1x128xf32>
    %c0_233 = arith.constant 0 : index
    %c0_234 = arith.constant 0 : index
    %c0_235 = arith.constant 0 : index
    %600 = vector.load %arg35[%c0_233, %c0_234, %c0_235] : memref<2x1x128xf32, #tpu.memory_space<vmem>>, vector<1x1x128xf32>
    %601 = vector.shape_cast %600 : vector<1x1x128xf32> to vector<1x128xf32>
    %602 = arith.truncf %585 : vector<16x128xf32> to vector<16x128xbf16>
    %cst_236 = arith.constant dense<0.000000e+00> : vector<16x128xf32>
    %603 = tpu.matmul %602, %587, %cst_236 {dimension_numbers = #tpu.dot_dimension_numbers<[1], [0], [0], [1], [0, 0, 1, 1], [], []>} : vector<16x128xbf16>, vector<128x128xbf16>, vector<16x128xf32> -> vector<16x128xf32>
    %604 = vector.broadcast %589 : vector<1x128xf32> to vector<16x128xf32>
    %605 = arith.addf %603, %604 : vector<16x128xf32>
    %cst_237 = arith.constant dense<0.000000e+00> : vector<16x256xf32>
    %606 = tpu.matmul %422, %591, %cst_237 {dimension_numbers = #tpu.dot_dimension_numbers<[1], [0], [0], [1], [0, 0, 1, 1], [], []>} : vector<16x128xbf16>, vector<128x256xbf16>, vector<16x256xf32> -> vector<16x256xf32>
    %607 = vector.broadcast %593 : vector<1x256xf32> to vector<16x256xf32>
    %608 = arith.addf %606, %607 : vector<16x256xf32>
    %609 = vector.extract_strided_slice %608 {offsets = [0, 0], sizes = [16, 128], strides = [1, 1]} : vector<16x256xf32> to vector<16x128xf32>
    %610 = vector.extract_strided_slice %608 {offsets = [0, 128], sizes = [16, 128], strides = [1, 1]} : vector<16x256xf32> to vector<16x128xf32>
    %611 = arith.truncf %605 : vector<16x128xf32> to vector<16x128xbf16>
    %612 = arith.truncf %609 : vector<16x128xf32> to vector<16x128xbf16>
    %613 = arith.truncf %610 : vector<16x128xf32> to vector<16x128xbf16>
    %614 = vector.extract_strided_slice %611 {offsets = [0, 0], sizes = [16, 32], strides = [1, 1]} : vector<16x128xbf16> to vector<16x32xbf16>
    %615 = vector.shape_cast %614 : vector<16x32xbf16> to vector<2x8x32xbf16>
    %616 = vector.extract_strided_slice %612 {offsets = [0, 0], sizes = [16, 32], strides = [1, 1]} : vector<16x128xbf16> to vector<16x32xbf16>
    %617 = vector.shape_cast %616 : vector<16x32xbf16> to vector<2x8x32xbf16>
    %618 = vector.extract_strided_slice %613 {offsets = [0, 0], sizes = [16, 32], strides = [1, 1]} : vector<16x128xbf16> to vector<16x32xbf16>
    %619 = vector.shape_cast %618 : vector<16x32xbf16> to vector<2x8x32xbf16>
    "tpu.trace_start"() <{level = 10 : i32, message = "bqd,bkd->bqk"}> : () -> ()
    %cst_238 = arith.constant dense<0.000000e+00> : vector<2x8x8xf32>
    %620 = tpu.matmul %615, %617, %cst_238 {dimension_numbers = #tpu.dot_dimension_numbers<[2], [2], [1], [1], [0, 0, 0, 1, 1, 1], [0], [0]>} : vector<2x8x32xbf16>, vector<2x8x32xbf16>, vector<2x8x8xf32> -> vector<2x8x8xf32>
    "tpu.trace_stop"() : () -> ()
    %621 = vector.broadcast %4 : vector<2x1x8xf32> to vector<2x8x8xf32>
    %622 = arith.addf %620, %621 : vector<2x8x8xf32>
    %cst_239 = arith.constant dense<0xFF800000> : vector<2x8xf32>
    %623 = vector.multi_reduction <maximumf>, %622, %cst_239 [2] : vector<2x8x8xf32> to vector<2x8xf32>
    %624 = vector.shape_cast %623 : vector<2x8xf32> to vector<2x8x1xf32>
    %625 = vector.broadcast %624 : vector<2x8x1xf32> to vector<2x8x8xf32>
    %626 = arith.subf %622, %625 : vector<2x8x8xf32>
    %627 = math.exp %626 : vector<2x8x8xf32>
    %cst_240 = arith.constant dense<0.000000e+00> : vector<2x8xf32>
    %628 = vector.multi_reduction <add>, %627, %cst_240 [2] : vector<2x8x8xf32> to vector<2x8xf32>
    %629 = vector.shape_cast %628 : vector<2x8xf32> to vector<2x8x1xf32>
    %630 = tpu.reciprocal %629 {approx = true} : vector<2x8x1xf32> -> vector<2x8x1xf32>
    %631 = vector.broadcast %630 : vector<2x8x1xf32> to vector<2x8x8xf32>
    %632 = arith.mulf %627, %631 : vector<2x8x8xf32>
    %633 = arith.truncf %632 : vector<2x8x8xf32> to vector<2x8x8xbf16>
    "tpu.trace_start"() <{level = 10 : i32, message = "bqk,bkd->bqd"}> : () -> ()
    %cst_241 = arith.constant dense<0.000000e+00> : vector<2x8x32xf32>
    %634 = tpu.matmul %633, %619, %cst_241 {dimension_numbers = #tpu.dot_dimension_numbers<[2], [1], [1], [2], [0, 0, 0, 1, 1, 2], [0], [0]>} : vector<2x8x8xbf16>, vector<2x8x32xbf16>, vector<2x8x32xf32> -> vector<2x8x32xf32>
    "tpu.trace_stop"() : () -> ()
    %635 = vector.shape_cast %634 : vector<2x8x32xf32> to vector<16x32xf32>
    %636 = vector.extract_strided_slice %611 {offsets = [0, 32], sizes = [16, 32], strides = [1, 1]} : vector<16x128xbf16> to vector<16x32xbf16>
    %637 = vector.shape_cast %636 : vector<16x32xbf16> to vector<2x8x32xbf16>
    %638 = vector.extract_strided_slice %612 {offsets = [0, 32], sizes = [16, 32], strides = [1, 1]} : vector<16x128xbf16> to vector<16x32xbf16>
    %639 = vector.shape_cast %638 : vector<16x32xbf16> to vector<2x8x32xbf16>
    %640 = vector.extract_strided_slice %613 {offsets = [0, 32], sizes = [16, 32], strides = [1, 1]} : vector<16x128xbf16> to vector<16x32xbf16>
    %641 = vector.shape_cast %640 : vector<16x32xbf16> to vector<2x8x32xbf16>
    "tpu.trace_start"() <{level = 10 : i32, message = "bqd,bkd->bqk"}> : () -> ()
    %cst_242 = arith.constant dense<0.000000e+00> : vector<2x8x8xf32>
    %642 = tpu.matmul %637, %639, %cst_242 {dimension_numbers = #tpu.dot_dimension_numbers<[2], [2], [1], [1], [0, 0, 0, 1, 1, 1], [0], [0]>} : vector<2x8x32xbf16>, vector<2x8x32xbf16>, vector<2x8x8xf32> -> vector<2x8x8xf32>
    "tpu.trace_stop"() : () -> ()
    %643 = vector.broadcast %4 : vector<2x1x8xf32> to vector<2x8x8xf32>
    %644 = arith.addf %642, %643 : vector<2x8x8xf32>
    %cst_243 = arith.constant dense<0xFF800000> : vector<2x8xf32>
    %645 = vector.multi_reduction <maximumf>, %644, %cst_243 [2] : vector<2x8x8xf32> to vector<2x8xf32>
    %646 = vector.shape_cast %645 : vector<2x8xf32> to vector<2x8x1xf32>
    %647 = vector.broadcast %646 : vector<2x8x1xf32> to vector<2x8x8xf32>
    %648 = arith.subf %644, %647 : vector<2x8x8xf32>
    %649 = math.exp %648 : vector<2x8x8xf32>
    %cst_244 = arith.constant dense<0.000000e+00> : vector<2x8xf32>
    %650 = vector.multi_reduction <add>, %649, %cst_244 [2] : vector<2x8x8xf32> to vector<2x8xf32>
    %651 = vector.shape_cast %650 : vector<2x8xf32> to vector<2x8x1xf32>
    %652 = tpu.reciprocal %651 {approx = true} : vector<2x8x1xf32> -> vector<2x8x1xf32>
    %653 = vector.broadcast %652 : vector<2x8x1xf32> to vector<2x8x8xf32>
    %654 = arith.mulf %649, %653 : vector<2x8x8xf32>
    %655 = arith.truncf %654 : vector<2x8x8xf32> to vector<2x8x8xbf16>
    "tpu.trace_start"() <{level = 10 : i32, message = "bqk,bkd->bqd"}> : () -> ()
    %cst_245 = arith.constant dense<0.000000e+00> : vector<2x8x32xf32>
    %656 = tpu.matmul %655, %641, %cst_245 {dimension_numbers = #tpu.dot_dimension_numbers<[2], [1], [1], [2], [0, 0, 0, 1, 1, 2], [0], [0]>} : vector<2x8x8xbf16>, vector<2x8x32xbf16>, vector<2x8x32xf32> -> vector<2x8x32xf32>
    "tpu.trace_stop"() : () -> ()
    %657 = vector.shape_cast %656 : vector<2x8x32xf32> to vector<16x32xf32>
    %658 = vector.extract_strided_slice %611 {offsets = [0, 64], sizes = [16, 32], strides = [1, 1]} : vector<16x128xbf16> to vector<16x32xbf16>
    %659 = vector.shape_cast %658 : vector<16x32xbf16> to vector<2x8x32xbf16>
    %660 = vector.extract_strided_slice %612 {offsets = [0, 64], sizes = [16, 32], strides = [1, 1]} : vector<16x128xbf16> to vector<16x32xbf16>
    %661 = vector.shape_cast %660 : vector<16x32xbf16> to vector<2x8x32xbf16>
    %662 = vector.extract_strided_slice %613 {offsets = [0, 64], sizes = [16, 32], strides = [1, 1]} : vector<16x128xbf16> to vector<16x32xbf16>
    %663 = vector.shape_cast %662 : vector<16x32xbf16> to vector<2x8x32xbf16>
    "tpu.trace_start"() <{level = 10 : i32, message = "bqd,bkd->bqk"}> : () -> ()
    %cst_246 = arith.constant dense<0.000000e+00> : vector<2x8x8xf32>
    %664 = tpu.matmul %659, %661, %cst_246 {dimension_numbers = #tpu.dot_dimension_numbers<[2], [2], [1], [1], [0, 0, 0, 1, 1, 1], [0], [0]>} : vector<2x8x32xbf16>, vector<2x8x32xbf16>, vector<2x8x8xf32> -> vector<2x8x8xf32>
    "tpu.trace_stop"() : () -> ()
    %665 = vector.broadcast %4 : vector<2x1x8xf32> to vector<2x8x8xf32>
    %666 = arith.addf %664, %665 : vector<2x8x8xf32>
    %cst_247 = arith.constant dense<0xFF800000> : vector<2x8xf32>
    %667 = vector.multi_reduction <maximumf>, %666, %cst_247 [2] : vector<2x8x8xf32> to vector<2x8xf32>
    %668 = vector.shape_cast %667 : vector<2x8xf32> to vector<2x8x1xf32>
    %669 = vector.broadcast %668 : vector<2x8x1xf32> to vector<2x8x8xf32>
    %670 = arith.subf %666, %669 : vector<2x8x8xf32>
    %671 = math.exp %670 : vector<2x8x8xf32>
    %cst_248 = arith.constant dense<0.000000e+00> : vector<2x8xf32>
    %672 = vector.multi_reduction <add>, %671, %cst_248 [2] : vector<2x8x8xf32> to vector<2x8xf32>
    %673 = vector.shape_cast %672 : vector<2x8xf32> to vector<2x8x1xf32>
    %674 = tpu.reciprocal %673 {approx = true} : vector<2x8x1xf32> -> vector<2x8x1xf32>
    %675 = vector.broadcast %674 : vector<2x8x1xf32> to vector<2x8x8xf32>
    %676 = arith.mulf %671, %675 : vector<2x8x8xf32>
    %677 = arith.truncf %676 : vector<2x8x8xf32> to vector<2x8x8xbf16>
    "tpu.trace_start"() <{level = 10 : i32, message = "bqk,bkd->bqd"}> : () -> ()
    %cst_249 = arith.constant dense<0.000000e+00> : vector<2x8x32xf32>
    %678 = tpu.matmul %677, %663, %cst_249 {dimension_numbers = #tpu.dot_dimension_numbers<[2], [1], [1], [2], [0, 0, 0, 1, 1, 2], [0], [0]>} : vector<2x8x8xbf16>, vector<2x8x32xbf16>, vector<2x8x32xf32> -> vector<2x8x32xf32>
    "tpu.trace_stop"() : () -> ()
    %679 = vector.shape_cast %678 : vector<2x8x32xf32> to vector<16x32xf32>
    %680 = vector.extract_strided_slice %611 {offsets = [0, 96], sizes = [16, 32], strides = [1, 1]} : vector<16x128xbf16> to vector<16x32xbf16>
    %681 = vector.shape_cast %680 : vector<16x32xbf16> to vector<2x8x32xbf16>
    %682 = vector.extract_strided_slice %612 {offsets = [0, 96], sizes = [16, 32], strides = [1, 1]} : vector<16x128xbf16> to vector<16x32xbf16>
    %683 = vector.shape_cast %682 : vector<16x32xbf16> to vector<2x8x32xbf16>
    %684 = vector.extract_strided_slice %613 {offsets = [0, 96], sizes = [16, 32], strides = [1, 1]} : vector<16x128xbf16> to vector<16x32xbf16>
    %685 = vector.shape_cast %684 : vector<16x32xbf16> to vector<2x8x32xbf16>
    "tpu.trace_start"() <{level = 10 : i32, message = "bqd,bkd->bqk"}> : () -> ()
    %cst_250 = arith.constant dense<0.000000e+00> : vector<2x8x8xf32>
    %686 = tpu.matmul %681, %683, %cst_250 {dimension_numbers = #tpu.dot_dimension_numbers<[2], [2], [1], [1], [0, 0, 0, 1, 1, 1], [0], [0]>} : vector<2x8x32xbf16>, vector<2x8x32xbf16>, vector<2x8x8xf32> -> vector<2x8x8xf32>
    "tpu.trace_stop"() : () -> ()
    %687 = vector.broadcast %4 : vector<2x1x8xf32> to vector<2x8x8xf32>
    %688 = arith.addf %686, %687 : vector<2x8x8xf32>
    %cst_251 = arith.constant dense<0xFF800000> : vector<2x8xf32>
    %689 = vector.multi_reduction <maximumf>, %688, %cst_251 [2] : vector<2x8x8xf32> to vector<2x8xf32>
    %690 = vector.shape_cast %689 : vector<2x8xf32> to vector<2x8x1xf32>
    %691 = vector.broadcast %690 : vector<2x8x1xf32> to vector<2x8x8xf32>
    %692 = arith.subf %688, %691 : vector<2x8x8xf32>
    %693 = math.exp %692 : vector<2x8x8xf32>
    %cst_252 = arith.constant dense<0.000000e+00> : vector<2x8xf32>
    %694 = vector.multi_reduction <add>, %693, %cst_252 [2] : vector<2x8x8xf32> to vector<2x8xf32>
    %695 = vector.shape_cast %694 : vector<2x8xf32> to vector<2x8x1xf32>
    %696 = tpu.reciprocal %695 {approx = true} : vector<2x8x1xf32> -> vector<2x8x1xf32>
    %697 = vector.broadcast %696 : vector<2x8x1xf32> to vector<2x8x8xf32>
    %698 = arith.mulf %693, %697 : vector<2x8x8xf32>
    %699 = arith.truncf %698 : vector<2x8x8xf32> to vector<2x8x8xbf16>
    "tpu.trace_start"() <{level = 10 : i32, message = "bqk,bkd->bqd"}> : () -> ()
    %cst_253 = arith.constant dense<0.000000e+00> : vector<2x8x32xf32>
    %700 = tpu.matmul %699, %685, %cst_253 {dimension_numbers = #tpu.dot_dimension_numbers<[2], [1], [1], [2], [0, 0, 0, 1, 1, 2], [0], [0]>} : vector<2x8x8xbf16>, vector<2x8x32xbf16>, vector<2x8x32xf32> -> vector<2x8x32xf32>
    "tpu.trace_stop"() : () -> ()
    %701 = vector.shape_cast %700 : vector<2x8x32xf32> to vector<16x32xf32>
    %702 = tpu.concatenate %635, %657, %679, %701 in 1 : vector<16x32xf32>, vector<16x32xf32>, vector<16x32xf32>, vector<16x32xf32> -> vector<16x128xf32>
    %703 = arith.truncf %702 : vector<16x128xf32> to vector<16x128xbf16>
    %cst_254 = arith.constant dense<0.000000e+00> : vector<16x128xf32>
    %704 = tpu.matmul %703, %595, %cst_254 {dimension_numbers = #tpu.dot_dimension_numbers<[1], [0], [0], [1], [0, 0, 1, 1], [], []>} : vector<16x128xbf16>, vector<128x128xbf16>, vector<16x128xf32> -> vector<16x128xf32>
    %705 = vector.broadcast %597 : vector<1x128xf32> to vector<16x128xf32>
    %706 = arith.addf %704, %705 : vector<16x128xf32>
    %707 = arith.addf %706, %585 : vector<16x128xf32>
    %cst_255 = arith.constant dense<0.000000e+00> : vector<16xf32>
    %708 = vector.multi_reduction <add>, %707, %cst_255 [1] : vector<16x128xf32> to vector<16xf32>
    %709 = vector.shape_cast %708 : vector<16xf32> to vector<16x1xf32>
    %cst_256 = arith.constant 1.280000e+02 : f32
    %710 = vector.broadcast %cst_256 : f32 to vector<16x1xf32>
    %711 = arith.divf %709, %710 : vector<16x1xf32>
    %712 = vector.broadcast %711 : vector<16x1xf32> to vector<16x128xf32>
    %713 = arith.subf %707, %712 : vector<16x128xf32>
    %714 = arith.mulf %713, %713 : vector<16x128xf32>
    %cst_257 = arith.constant dense<0.000000e+00> : vector<16xf32>
    %715 = vector.multi_reduction <add>, %714, %cst_257 [1] : vector<16x128xf32> to vector<16xf32>
    %716 = vector.shape_cast %715 : vector<16xf32> to vector<16x1xf32>
    %cst_258 = arith.constant 1.280000e+02 : f32
    %717 = vector.broadcast %cst_258 : f32 to vector<16x1xf32>
    %718 = arith.divf %716, %717 : vector<16x1xf32>
    %719 = vector.broadcast %711 : vector<16x1xf32> to vector<16x128xf32>
    %720 = arith.subf %707, %719 : vector<16x128xf32>
    %cst_259 = arith.constant 9.99999974E-6 : f32
    %721 = vector.broadcast %cst_259 : f32 to vector<16x1xf32>
    %722 = arith.addf %718, %721 : vector<16x1xf32>
    %723 = math.rsqrt %722 : vector<16x1xf32>
    %724 = vector.broadcast %723 : vector<16x1xf32> to vector<16x128xf32>
    %725 = arith.mulf %720, %724 : vector<16x128xf32>
    %726 = vector.broadcast %599 : vector<1x128xf32> to vector<16x128xf32>
    %727 = arith.mulf %725, %726 : vector<16x128xf32>
    %728 = vector.broadcast %601 : vector<1x128xf32> to vector<16x128xf32>
    %729 = arith.addf %727, %728 : vector<16x128xf32>
    %c0_260 = arith.constant 0 : index
    %c0_261 = arith.constant 0 : index
    %c0_262 = arith.constant 0 : index
    %730 = vector.load %arg36[%c0_260, %c0_261, %c0_262] : memref<2x128x256xbf16, #tpu.memory_space<vmem>>, vector<1x128x256xbf16>
    %731 = vector.shape_cast %730 : vector<1x128x256xbf16> to vector<128x256xbf16>
    %c0_263 = arith.constant 0 : index
    %c0_264 = arith.constant 0 : index
    %c0_265 = arith.constant 0 : index
    %732 = vector.load %arg37[%c0_263, %c0_264, %c0_265] : memref<2x1x256xf32, #tpu.memory_space<vmem>>, vector<1x1x256xf32>
    %733 = vector.shape_cast %732 : vector<1x1x256xf32> to vector<1x256xf32>
    %c0_266 = arith.constant 0 : index
    %c0_267 = arith.constant 0 : index
    %c0_268 = arith.constant 0 : index
    %734 = vector.load %arg38[%c0_266, %c0_267, %c0_268] : memref<2x256x128xbf16, #tpu.memory_space<vmem>>, vector<1x256x128xbf16>
    %735 = vector.shape_cast %734 : vector<1x256x128xbf16> to vector<256x128xbf16>
    %c0_269 = arith.constant 0 : index
    %c0_270 = arith.constant 0 : index
    %c0_271 = arith.constant 0 : index
    %736 = vector.load %arg39[%c0_269, %c0_270, %c0_271] : memref<2x1x128xf32, #tpu.memory_space<vmem>>, vector<1x1x128xf32>
    %737 = vector.shape_cast %736 : vector<1x1x128xf32> to vector<1x128xf32>
    %c0_272 = arith.constant 0 : index
    %c0_273 = arith.constant 0 : index
    %c0_274 = arith.constant 0 : index
    %738 = vector.load %arg40[%c0_272, %c0_273, %c0_274] : memref<2x1x128xf32, #tpu.memory_space<vmem>>, vector<1x1x128xf32>
    %739 = vector.shape_cast %738 : vector<1x1x128xf32> to vector<1x128xf32>
    %c0_275 = arith.constant 0 : index
    %c0_276 = arith.constant 0 : index
    %c0_277 = arith.constant 0 : index
    %740 = vector.load %arg41[%c0_275, %c0_276, %c0_277] : memref<2x1x128xf32, #tpu.memory_space<vmem>>, vector<1x1x128xf32>
    %741 = vector.shape_cast %740 : vector<1x1x128xf32> to vector<1x128xf32>
    %742 = arith.truncf %729 : vector<16x128xf32> to vector<16x128xbf16>
    %cst_278 = arith.constant dense<0.000000e+00> : vector<16x256xf32>
    %743 = tpu.matmul %742, %731, %cst_278 {dimension_numbers = #tpu.dot_dimension_numbers<[1], [0], [0], [1], [0, 0, 1, 1], [], []>} : vector<16x128xbf16>, vector<128x256xbf16>, vector<16x256xf32> -> vector<16x256xf32>
    %744 = vector.broadcast %733 : vector<1x256xf32> to vector<16x256xf32>
    %745 = arith.addf %743, %744 : vector<16x256xf32>
    %746 = arith.negf %745 : vector<16x256xf32>
    %747 = math.exp %746 : vector<16x256xf32>
    %cst_279 = arith.constant 1.000000e+00 : f32
    %748 = vector.broadcast %cst_279 : f32 to vector<16x256xf32>
    %749 = arith.addf %748, %747 : vector<16x256xf32>
    %750 = arith.divf %748, %749 : vector<16x256xf32>
    %751 = arith.mulf %745, %750 : vector<16x256xf32>
    %752 = arith.truncf %751 : vector<16x256xf32> to vector<16x256xbf16>
    %cst_280 = arith.constant dense<0.000000e+00> : vector<16x128xf32>
    %753 = tpu.matmul %752, %735, %cst_280 {dimension_numbers = #tpu.dot_dimension_numbers<[1], [0], [0], [1], [0, 0, 1, 1], [], []>} : vector<16x256xbf16>, vector<256x128xbf16>, vector<16x128xf32> -> vector<16x128xf32>
    %754 = vector.broadcast %737 : vector<1x128xf32> to vector<16x128xf32>
    %755 = arith.addf %753, %754 : vector<16x128xf32>
    %756 = arith.addf %755, %729 : vector<16x128xf32>
    %cst_281 = arith.constant dense<0.000000e+00> : vector<16xf32>
    %757 = vector.multi_reduction <add>, %756, %cst_281 [1] : vector<16x128xf32> to vector<16xf32>
    %758 = vector.shape_cast %757 : vector<16xf32> to vector<16x1xf32>
    %cst_282 = arith.constant 1.280000e+02 : f32
    %759 = vector.broadcast %cst_282 : f32 to vector<16x1xf32>
    %760 = arith.divf %758, %759 : vector<16x1xf32>
    %761 = vector.broadcast %760 : vector<16x1xf32> to vector<16x128xf32>
    %762 = arith.subf %756, %761 : vector<16x128xf32>
    %763 = arith.mulf %762, %762 : vector<16x128xf32>
    %cst_283 = arith.constant dense<0.000000e+00> : vector<16xf32>
    %764 = vector.multi_reduction <add>, %763, %cst_283 [1] : vector<16x128xf32> to vector<16xf32>
    %765 = vector.shape_cast %764 : vector<16xf32> to vector<16x1xf32>
    %cst_284 = arith.constant 1.280000e+02 : f32
    %766 = vector.broadcast %cst_284 : f32 to vector<16x1xf32>
    %767 = arith.divf %765, %766 : vector<16x1xf32>
    %768 = vector.broadcast %760 : vector<16x1xf32> to vector<16x128xf32>
    %769 = arith.subf %756, %768 : vector<16x128xf32>
    %cst_285 = arith.constant 9.99999974E-6 : f32
    %770 = vector.broadcast %cst_285 : f32 to vector<16x1xf32>
    %771 = arith.addf %767, %770 : vector<16x1xf32>
    %772 = math.rsqrt %771 : vector<16x1xf32>
    %773 = vector.broadcast %772 : vector<16x1xf32> to vector<16x128xf32>
    %774 = arith.mulf %769, %773 : vector<16x128xf32>
    %775 = vector.broadcast %739 : vector<1x128xf32> to vector<16x128xf32>
    %776 = arith.mulf %774, %775 : vector<16x128xf32>
    %777 = vector.broadcast %741 : vector<1x128xf32> to vector<16x128xf32>
    %778 = arith.addf %776, %777 : vector<16x128xf32>
    %c1_286 = arith.constant 1 : index
    %c0_287 = arith.constant 0 : index
    %c0_288 = arith.constant 0 : index
    %779 = vector.load %arg22[%c1_286, %c0_287, %c0_288] : memref<2x128x384xbf16, #tpu.memory_space<vmem>>, vector<1x128x384xbf16>
    %780 = vector.shape_cast %779 : vector<1x128x384xbf16> to vector<128x384xbf16>
    %c1_289 = arith.constant 1 : index
    %c0_290 = arith.constant 0 : index
    %c0_291 = arith.constant 0 : index
    %781 = vector.load %arg23[%c1_289, %c0_290, %c0_291] : memref<2x1x384xf32, #tpu.memory_space<vmem>>, vector<1x1x384xf32>
    %782 = vector.shape_cast %781 : vector<1x1x384xf32> to vector<1x384xf32>
    %c1_292 = arith.constant 1 : index
    %c0_293 = arith.constant 0 : index
    %c0_294 = arith.constant 0 : index
    %783 = vector.load %arg24[%c1_292, %c0_293, %c0_294] : memref<2x128x128xbf16, #tpu.memory_space<vmem>>, vector<1x128x128xbf16>
    %784 = vector.shape_cast %783 : vector<1x128x128xbf16> to vector<128x128xbf16>
    %c1_295 = arith.constant 1 : index
    %c0_296 = arith.constant 0 : index
    %c0_297 = arith.constant 0 : index
    %785 = vector.load %arg25[%c1_295, %c0_296, %c0_297] : memref<2x1x128xf32, #tpu.memory_space<vmem>>, vector<1x1x128xf32>
    %786 = vector.shape_cast %785 : vector<1x1x128xf32> to vector<1x128xf32>
    %c1_298 = arith.constant 1 : index
    %c0_299 = arith.constant 0 : index
    %c0_300 = arith.constant 0 : index
    %787 = vector.load %arg26[%c1_298, %c0_299, %c0_300] : memref<2x1x128xf32, #tpu.memory_space<vmem>>, vector<1x1x128xf32>
    %788 = vector.shape_cast %787 : vector<1x1x128xf32> to vector<1x128xf32>
    %c1_301 = arith.constant 1 : index
    %c0_302 = arith.constant 0 : index
    %c0_303 = arith.constant 0 : index
    %789 = vector.load %arg27[%c1_301, %c0_302, %c0_303] : memref<2x1x128xf32, #tpu.memory_space<vmem>>, vector<1x1x128xf32>
    %790 = vector.shape_cast %789 : vector<1x1x128xf32> to vector<1x128xf32>
    %791 = arith.truncf %778 : vector<16x128xf32> to vector<16x128xbf16>
    %cst_304 = arith.constant dense<0.000000e+00> : vector<16x384xf32>
    %792 = tpu.matmul %791, %780, %cst_304 {dimension_numbers = #tpu.dot_dimension_numbers<[1], [0], [0], [1], [0, 0, 1, 1], [], []>} : vector<16x128xbf16>, vector<128x384xbf16>, vector<16x384xf32> -> vector<16x384xf32>
    %793 = vector.broadcast %782 : vector<1x384xf32> to vector<16x384xf32>
    %794 = arith.addf %792, %793 : vector<16x384xf32>
    %795 = vector.extract_strided_slice %794 {offsets = [0, 0], sizes = [16, 128], strides = [1, 1]} : vector<16x384xf32> to vector<16x128xf32>
    %796 = vector.extract_strided_slice %794 {offsets = [0, 128], sizes = [16, 128], strides = [1, 1]} : vector<16x384xf32> to vector<16x128xf32>
    %797 = vector.extract_strided_slice %794 {offsets = [0, 256], sizes = [16, 128], strides = [1, 1]} : vector<16x384xf32> to vector<16x128xf32>
    %798 = arith.truncf %795 : vector<16x128xf32> to vector<16x128xbf16>
    %799 = arith.truncf %796 : vector<16x128xf32> to vector<16x128xbf16>
    %800 = arith.truncf %797 : vector<16x128xf32> to vector<16x128xbf16>
    %801 = vector.extract_strided_slice %798 {offsets = [0, 0], sizes = [16, 32], strides = [1, 1]} : vector<16x128xbf16> to vector<16x32xbf16>
    %802 = vector.shape_cast %801 : vector<16x32xbf16> to vector<2x8x32xbf16>
    %803 = vector.extract_strided_slice %799 {offsets = [0, 0], sizes = [16, 32], strides = [1, 1]} : vector<16x128xbf16> to vector<16x32xbf16>
    %804 = vector.shape_cast %803 : vector<16x32xbf16> to vector<2x8x32xbf16>
    %805 = vector.extract_strided_slice %800 {offsets = [0, 0], sizes = [16, 32], strides = [1, 1]} : vector<16x128xbf16> to vector<16x32xbf16>
    %806 = vector.shape_cast %805 : vector<16x32xbf16> to vector<2x8x32xbf16>
    "tpu.trace_start"() <{level = 10 : i32, message = "bqd,bkd->bqk"}> : () -> ()
    %cst_305 = arith.constant dense<0.000000e+00> : vector<2x8x8xf32>
    %807 = tpu.matmul %802, %804, %cst_305 {dimension_numbers = #tpu.dot_dimension_numbers<[2], [2], [1], [1], [0, 0, 0, 1, 1, 1], [0], [0]>} : vector<2x8x32xbf16>, vector<2x8x32xbf16>, vector<2x8x8xf32> -> vector<2x8x8xf32>
    "tpu.trace_stop"() : () -> ()
    %808 = arith.addf %807, %18 : vector<2x8x8xf32>
    %cst_306 = arith.constant dense<0xFF800000> : vector<2x8xf32>
    %809 = vector.multi_reduction <maximumf>, %808, %cst_306 [2] : vector<2x8x8xf32> to vector<2x8xf32>
    %810 = vector.shape_cast %809 : vector<2x8xf32> to vector<2x8x1xf32>
    %811 = vector.broadcast %810 : vector<2x8x1xf32> to vector<2x8x8xf32>
    %812 = arith.subf %808, %811 : vector<2x8x8xf32>
    %813 = math.exp %812 : vector<2x8x8xf32>
    %cst_307 = arith.constant dense<0.000000e+00> : vector<2x8xf32>
    %814 = vector.multi_reduction <add>, %813, %cst_307 [2] : vector<2x8x8xf32> to vector<2x8xf32>
    %815 = vector.shape_cast %814 : vector<2x8xf32> to vector<2x8x1xf32>
    %816 = tpu.reciprocal %815 {approx = true} : vector<2x8x1xf32> -> vector<2x8x1xf32>
    %817 = vector.broadcast %816 : vector<2x8x1xf32> to vector<2x8x8xf32>
    %818 = arith.mulf %813, %817 : vector<2x8x8xf32>
    %819 = arith.truncf %818 : vector<2x8x8xf32> to vector<2x8x8xbf16>
    "tpu.trace_start"() <{level = 10 : i32, message = "bqk,bkd->bqd"}> : () -> ()
    %cst_308 = arith.constant dense<0.000000e+00> : vector<2x8x32xf32>
    %820 = tpu.matmul %819, %806, %cst_308 {dimension_numbers = #tpu.dot_dimension_numbers<[2], [1], [1], [2], [0, 0, 0, 1, 1, 2], [0], [0]>} : vector<2x8x8xbf16>, vector<2x8x32xbf16>, vector<2x8x32xf32> -> vector<2x8x32xf32>
    "tpu.trace_stop"() : () -> ()
    %821 = vector.shape_cast %820 : vector<2x8x32xf32> to vector<16x32xf32>
    %822 = vector.extract_strided_slice %798 {offsets = [0, 32], sizes = [16, 32], strides = [1, 1]} : vector<16x128xbf16> to vector<16x32xbf16>
    %823 = vector.shape_cast %822 : vector<16x32xbf16> to vector<2x8x32xbf16>
    %824 = vector.extract_strided_slice %799 {offsets = [0, 32], sizes = [16, 32], strides = [1, 1]} : vector<16x128xbf16> to vector<16x32xbf16>
    %825 = vector.shape_cast %824 : vector<16x32xbf16> to vector<2x8x32xbf16>
    %826 = vector.extract_strided_slice %800 {offsets = [0, 32], sizes = [16, 32], strides = [1, 1]} : vector<16x128xbf16> to vector<16x32xbf16>
    %827 = vector.shape_cast %826 : vector<16x32xbf16> to vector<2x8x32xbf16>
    "tpu.trace_start"() <{level = 10 : i32, message = "bqd,bkd->bqk"}> : () -> ()
    %cst_309 = arith.constant dense<0.000000e+00> : vector<2x8x8xf32>
    %828 = tpu.matmul %823, %825, %cst_309 {dimension_numbers = #tpu.dot_dimension_numbers<[2], [2], [1], [1], [0, 0, 0, 1, 1, 1], [0], [0]>} : vector<2x8x32xbf16>, vector<2x8x32xbf16>, vector<2x8x8xf32> -> vector<2x8x8xf32>
    "tpu.trace_stop"() : () -> ()
    %829 = arith.addf %828, %18 : vector<2x8x8xf32>
    %cst_310 = arith.constant dense<0xFF800000> : vector<2x8xf32>
    %830 = vector.multi_reduction <maximumf>, %829, %cst_310 [2] : vector<2x8x8xf32> to vector<2x8xf32>
    %831 = vector.shape_cast %830 : vector<2x8xf32> to vector<2x8x1xf32>
    %832 = vector.broadcast %831 : vector<2x8x1xf32> to vector<2x8x8xf32>
    %833 = arith.subf %829, %832 : vector<2x8x8xf32>
    %834 = math.exp %833 : vector<2x8x8xf32>
    %cst_311 = arith.constant dense<0.000000e+00> : vector<2x8xf32>
    %835 = vector.multi_reduction <add>, %834, %cst_311 [2] : vector<2x8x8xf32> to vector<2x8xf32>
    %836 = vector.shape_cast %835 : vector<2x8xf32> to vector<2x8x1xf32>
    %837 = tpu.reciprocal %836 {approx = true} : vector<2x8x1xf32> -> vector<2x8x1xf32>
    %838 = vector.broadcast %837 : vector<2x8x1xf32> to vector<2x8x8xf32>
    %839 = arith.mulf %834, %838 : vector<2x8x8xf32>
    %840 = arith.truncf %839 : vector<2x8x8xf32> to vector<2x8x8xbf16>
    "tpu.trace_start"() <{level = 10 : i32, message = "bqk,bkd->bqd"}> : () -> ()
    %cst_312 = arith.constant dense<0.000000e+00> : vector<2x8x32xf32>
    %841 = tpu.matmul %840, %827, %cst_312 {dimension_numbers = #tpu.dot_dimension_numbers<[2], [1], [1], [2], [0, 0, 0, 1, 1, 2], [0], [0]>} : vector<2x8x8xbf16>, vector<2x8x32xbf16>, vector<2x8x32xf32> -> vector<2x8x32xf32>
    "tpu.trace_stop"() : () -> ()
    %842 = vector.shape_cast %841 : vector<2x8x32xf32> to vector<16x32xf32>
    %843 = vector.extract_strided_slice %798 {offsets = [0, 64], sizes = [16, 32], strides = [1, 1]} : vector<16x128xbf16> to vector<16x32xbf16>
    %844 = vector.shape_cast %843 : vector<16x32xbf16> to vector<2x8x32xbf16>
    %845 = vector.extract_strided_slice %799 {offsets = [0, 64], sizes = [16, 32], strides = [1, 1]} : vector<16x128xbf16> to vector<16x32xbf16>
    %846 = vector.shape_cast %845 : vector<16x32xbf16> to vector<2x8x32xbf16>
    %847 = vector.extract_strided_slice %800 {offsets = [0, 64], sizes = [16, 32], strides = [1, 1]} : vector<16x128xbf16> to vector<16x32xbf16>
    %848 = vector.shape_cast %847 : vector<16x32xbf16> to vector<2x8x32xbf16>
    "tpu.trace_start"() <{level = 10 : i32, message = "bqd,bkd->bqk"}> : () -> ()
    %cst_313 = arith.constant dense<0.000000e+00> : vector<2x8x8xf32>
    %849 = tpu.matmul %844, %846, %cst_313 {dimension_numbers = #tpu.dot_dimension_numbers<[2], [2], [1], [1], [0, 0, 0, 1, 1, 1], [0], [0]>} : vector<2x8x32xbf16>, vector<2x8x32xbf16>, vector<2x8x8xf32> -> vector<2x8x8xf32>
    "tpu.trace_stop"() : () -> ()
    %850 = arith.addf %849, %18 : vector<2x8x8xf32>
    %cst_314 = arith.constant dense<0xFF800000> : vector<2x8xf32>
    %851 = vector.multi_reduction <maximumf>, %850, %cst_314 [2] : vector<2x8x8xf32> to vector<2x8xf32>
    %852 = vector.shape_cast %851 : vector<2x8xf32> to vector<2x8x1xf32>
    %853 = vector.broadcast %852 : vector<2x8x1xf32> to vector<2x8x8xf32>
    %854 = arith.subf %850, %853 : vector<2x8x8xf32>
    %855 = math.exp %854 : vector<2x8x8xf32>
    %cst_315 = arith.constant dense<0.000000e+00> : vector<2x8xf32>
    %856 = vector.multi_reduction <add>, %855, %cst_315 [2] : vector<2x8x8xf32> to vector<2x8xf32>
    %857 = vector.shape_cast %856 : vector<2x8xf32> to vector<2x8x1xf32>
    %858 = tpu.reciprocal %857 {approx = true} : vector<2x8x1xf32> -> vector<2x8x1xf32>
    %859 = vector.broadcast %858 : vector<2x8x1xf32> to vector<2x8x8xf32>
    %860 = arith.mulf %855, %859 : vector<2x8x8xf32>
    %861 = arith.truncf %860 : vector<2x8x8xf32> to vector<2x8x8xbf16>
    "tpu.trace_start"() <{level = 10 : i32, message = "bqk,bkd->bqd"}> : () -> ()
    %cst_316 = arith.constant dense<0.000000e+00> : vector<2x8x32xf32>
    %862 = tpu.matmul %861, %848, %cst_316 {dimension_numbers = #tpu.dot_dimension_numbers<[2], [1], [1], [2], [0, 0, 0, 1, 1, 2], [0], [0]>} : vector<2x8x8xbf16>, vector<2x8x32xbf16>, vector<2x8x32xf32> -> vector<2x8x32xf32>
    "tpu.trace_stop"() : () -> ()
    %863 = vector.shape_cast %862 : vector<2x8x32xf32> to vector<16x32xf32>
    %864 = vector.extract_strided_slice %798 {offsets = [0, 96], sizes = [16, 32], strides = [1, 1]} : vector<16x128xbf16> to vector<16x32xbf16>
    %865 = vector.shape_cast %864 : vector<16x32xbf16> to vector<2x8x32xbf16>
    %866 = vector.extract_strided_slice %799 {offsets = [0, 96], sizes = [16, 32], strides = [1, 1]} : vector<16x128xbf16> to vector<16x32xbf16>
    %867 = vector.shape_cast %866 : vector<16x32xbf16> to vector<2x8x32xbf16>
    %868 = vector.extract_strided_slice %800 {offsets = [0, 96], sizes = [16, 32], strides = [1, 1]} : vector<16x128xbf16> to vector<16x32xbf16>
    %869 = vector.shape_cast %868 : vector<16x32xbf16> to vector<2x8x32xbf16>
    "tpu.trace_start"() <{level = 10 : i32, message = "bqd,bkd->bqk"}> : () -> ()
    %cst_317 = arith.constant dense<0.000000e+00> : vector<2x8x8xf32>
    %870 = tpu.matmul %865, %867, %cst_317 {dimension_numbers = #tpu.dot_dimension_numbers<[2], [2], [1], [1], [0, 0, 0, 1, 1, 1], [0], [0]>} : vector<2x8x32xbf16>, vector<2x8x32xbf16>, vector<2x8x8xf32> -> vector<2x8x8xf32>
    "tpu.trace_stop"() : () -> ()
    %871 = arith.addf %870, %18 : vector<2x8x8xf32>
    %cst_318 = arith.constant dense<0xFF800000> : vector<2x8xf32>
    %872 = vector.multi_reduction <maximumf>, %871, %cst_318 [2] : vector<2x8x8xf32> to vector<2x8xf32>
    %873 = vector.shape_cast %872 : vector<2x8xf32> to vector<2x8x1xf32>
    %874 = vector.broadcast %873 : vector<2x8x1xf32> to vector<2x8x8xf32>
    %875 = arith.subf %871, %874 : vector<2x8x8xf32>
    %876 = math.exp %875 : vector<2x8x8xf32>
    %cst_319 = arith.constant dense<0.000000e+00> : vector<2x8xf32>
    %877 = vector.multi_reduction <add>, %876, %cst_319 [2] : vector<2x8x8xf32> to vector<2x8xf32>
    %878 = vector.shape_cast %877 : vector<2x8xf32> to vector<2x8x1xf32>
    %879 = tpu.reciprocal %878 {approx = true} : vector<2x8x1xf32> -> vector<2x8x1xf32>
    %880 = vector.broadcast %879 : vector<2x8x1xf32> to vector<2x8x8xf32>
    %881 = arith.mulf %876, %880 : vector<2x8x8xf32>
    %882 = arith.truncf %881 : vector<2x8x8xf32> to vector<2x8x8xbf16>
    "tpu.trace_start"() <{level = 10 : i32, message = "bqk,bkd->bqd"}> : () -> ()
    %cst_320 = arith.constant dense<0.000000e+00> : vector<2x8x32xf32>
    %883 = tpu.matmul %882, %869, %cst_320 {dimension_numbers = #tpu.dot_dimension_numbers<[2], [1], [1], [2], [0, 0, 0, 1, 1, 2], [0], [0]>} : vector<2x8x8xbf16>, vector<2x8x32xbf16>, vector<2x8x32xf32> -> vector<2x8x32xf32>
    "tpu.trace_stop"() : () -> ()
    %884 = vector.shape_cast %883 : vector<2x8x32xf32> to vector<16x32xf32>
    %885 = tpu.concatenate %821, %842, %863, %884 in 1 : vector<16x32xf32>, vector<16x32xf32>, vector<16x32xf32>, vector<16x32xf32> -> vector<16x128xf32>
    %886 = arith.truncf %885 : vector<16x128xf32> to vector<16x128xbf16>
    %cst_321 = arith.constant dense<0.000000e+00> : vector<16x128xf32>
    %887 = tpu.matmul %886, %784, %cst_321 {dimension_numbers = #tpu.dot_dimension_numbers<[1], [0], [0], [1], [0, 0, 1, 1], [], []>} : vector<16x128xbf16>, vector<128x128xbf16>, vector<16x128xf32> -> vector<16x128xf32>
    %888 = vector.broadcast %786 : vector<1x128xf32> to vector<16x128xf32>
    %889 = arith.addf %887, %888 : vector<16x128xf32>
    %890 = arith.addf %889, %778 : vector<16x128xf32>
    %cst_322 = arith.constant dense<0.000000e+00> : vector<16xf32>
    %891 = vector.multi_reduction <add>, %890, %cst_322 [1] : vector<16x128xf32> to vector<16xf32>
    %892 = vector.shape_cast %891 : vector<16xf32> to vector<16x1xf32>
    %cst_323 = arith.constant 1.280000e+02 : f32
    %893 = vector.broadcast %cst_323 : f32 to vector<16x1xf32>
    %894 = arith.divf %892, %893 : vector<16x1xf32>
    %895 = vector.broadcast %894 : vector<16x1xf32> to vector<16x128xf32>
    %896 = arith.subf %890, %895 : vector<16x128xf32>
    %897 = arith.mulf %896, %896 : vector<16x128xf32>
    %cst_324 = arith.constant dense<0.000000e+00> : vector<16xf32>
    %898 = vector.multi_reduction <add>, %897, %cst_324 [1] : vector<16x128xf32> to vector<16xf32>
    %899 = vector.shape_cast %898 : vector<16xf32> to vector<16x1xf32>
    %cst_325 = arith.constant 1.280000e+02 : f32
    %900 = vector.broadcast %cst_325 : f32 to vector<16x1xf32>
    %901 = arith.divf %899, %900 : vector<16x1xf32>
    %902 = vector.broadcast %894 : vector<16x1xf32> to vector<16x128xf32>
    %903 = arith.subf %890, %902 : vector<16x128xf32>
    %cst_326 = arith.constant 9.99999974E-6 : f32
    %904 = vector.broadcast %cst_326 : f32 to vector<16x1xf32>
    %905 = arith.addf %901, %904 : vector<16x1xf32>
    %906 = math.rsqrt %905 : vector<16x1xf32>
    %907 = vector.broadcast %906 : vector<16x1xf32> to vector<16x128xf32>
    %908 = arith.mulf %903, %907 : vector<16x128xf32>
    %909 = vector.broadcast %788 : vector<1x128xf32> to vector<16x128xf32>
    %910 = arith.mulf %908, %909 : vector<16x128xf32>
    %911 = vector.broadcast %790 : vector<1x128xf32> to vector<16x128xf32>
    %912 = arith.addf %910, %911 : vector<16x128xf32>
    %c1_327 = arith.constant 1 : index
    %c0_328 = arith.constant 0 : index
    %c0_329 = arith.constant 0 : index
    %913 = vector.load %arg28[%c1_327, %c0_328, %c0_329] : memref<2x128x128xbf16, #tpu.memory_space<vmem>>, vector<1x128x128xbf16>
    %914 = vector.shape_cast %913 : vector<1x128x128xbf16> to vector<128x128xbf16>
    %c1_330 = arith.constant 1 : index
    %c0_331 = arith.constant 0 : index
    %c0_332 = arith.constant 0 : index
    %915 = vector.load %arg29[%c1_330, %c0_331, %c0_332] : memref<2x1x128xf32, #tpu.memory_space<vmem>>, vector<1x1x128xf32>
    %916 = vector.shape_cast %915 : vector<1x1x128xf32> to vector<1x128xf32>
    %c1_333 = arith.constant 1 : index
    %c0_334 = arith.constant 0 : index
    %c0_335 = arith.constant 0 : index
    %917 = vector.load %arg30[%c1_333, %c0_334, %c0_335] : memref<2x128x256xbf16, #tpu.memory_space<vmem>>, vector<1x128x256xbf16>
    %918 = vector.shape_cast %917 : vector<1x128x256xbf16> to vector<128x256xbf16>
    %c1_336 = arith.constant 1 : index
    %c0_337 = arith.constant 0 : index
    %c0_338 = arith.constant 0 : index
    %919 = vector.load %arg31[%c1_336, %c0_337, %c0_338] : memref<2x1x256xf32, #tpu.memory_space<vmem>>, vector<1x1x256xf32>
    %920 = vector.shape_cast %919 : vector<1x1x256xf32> to vector<1x256xf32>
    %c1_339 = arith.constant 1 : index
    %c0_340 = arith.constant 0 : index
    %c0_341 = arith.constant 0 : index
    %921 = vector.load %arg32[%c1_339, %c0_340, %c0_341] : memref<2x128x128xbf16, #tpu.memory_space<vmem>>, vector<1x128x128xbf16>
    %922 = vector.shape_cast %921 : vector<1x128x128xbf16> to vector<128x128xbf16>
    %c1_342 = arith.constant 1 : index
    %c0_343 = arith.constant 0 : index
    %c0_344 = arith.constant 0 : index
    %923 = vector.load %arg33[%c1_342, %c0_343, %c0_344] : memref<2x1x128xf32, #tpu.memory_space<vmem>>, vector<1x1x128xf32>
    %924 = vector.shape_cast %923 : vector<1x1x128xf32> to vector<1x128xf32>
    %c1_345 = arith.constant 1 : index
    %c0_346 = arith.constant 0 : index
    %c0_347 = arith.constant 0 : index
    %925 = vector.load %arg34[%c1_345, %c0_346, %c0_347] : memref<2x1x128xf32, #tpu.memory_space<vmem>>, vector<1x1x128xf32>
    %926 = vector.shape_cast %925 : vector<1x1x128xf32> to vector<1x128xf32>
    %c1_348 = arith.constant 1 : index
    %c0_349 = arith.constant 0 : index
    %c0_350 = arith.constant 0 : index
    %927 = vector.load %arg35[%c1_348, %c0_349, %c0_350] : memref<2x1x128xf32, #tpu.memory_space<vmem>>, vector<1x1x128xf32>
    %928 = vector.shape_cast %927 : vector<1x1x128xf32> to vector<1x128xf32>
    %929 = arith.truncf %912 : vector<16x128xf32> to vector<16x128xbf16>
    %cst_351 = arith.constant dense<0.000000e+00> : vector<16x128xf32>
    %930 = tpu.matmul %929, %914, %cst_351 {dimension_numbers = #tpu.dot_dimension_numbers<[1], [0], [0], [1], [0, 0, 1, 1], [], []>} : vector<16x128xbf16>, vector<128x128xbf16>, vector<16x128xf32> -> vector<16x128xf32>
    %931 = vector.broadcast %916 : vector<1x128xf32> to vector<16x128xf32>
    %932 = arith.addf %930, %931 : vector<16x128xf32>
    %cst_352 = arith.constant dense<0.000000e+00> : vector<16x256xf32>
    %933 = tpu.matmul %422, %918, %cst_352 {dimension_numbers = #tpu.dot_dimension_numbers<[1], [0], [0], [1], [0, 0, 1, 1], [], []>} : vector<16x128xbf16>, vector<128x256xbf16>, vector<16x256xf32> -> vector<16x256xf32>
    %934 = vector.broadcast %920 : vector<1x256xf32> to vector<16x256xf32>
    %935 = arith.addf %933, %934 : vector<16x256xf32>
    %936 = vector.extract_strided_slice %935 {offsets = [0, 0], sizes = [16, 128], strides = [1, 1]} : vector<16x256xf32> to vector<16x128xf32>
    %937 = vector.extract_strided_slice %935 {offsets = [0, 128], sizes = [16, 128], strides = [1, 1]} : vector<16x256xf32> to vector<16x128xf32>
    %938 = arith.truncf %932 : vector<16x128xf32> to vector<16x128xbf16>
    %939 = arith.truncf %936 : vector<16x128xf32> to vector<16x128xbf16>
    %940 = arith.truncf %937 : vector<16x128xf32> to vector<16x128xbf16>
    %941 = vector.extract_strided_slice %938 {offsets = [0, 0], sizes = [16, 32], strides = [1, 1]} : vector<16x128xbf16> to vector<16x32xbf16>
    %942 = vector.shape_cast %941 : vector<16x32xbf16> to vector<2x8x32xbf16>
    %943 = vector.extract_strided_slice %939 {offsets = [0, 0], sizes = [16, 32], strides = [1, 1]} : vector<16x128xbf16> to vector<16x32xbf16>
    %944 = vector.shape_cast %943 : vector<16x32xbf16> to vector<2x8x32xbf16>
    %945 = vector.extract_strided_slice %940 {offsets = [0, 0], sizes = [16, 32], strides = [1, 1]} : vector<16x128xbf16> to vector<16x32xbf16>
    %946 = vector.shape_cast %945 : vector<16x32xbf16> to vector<2x8x32xbf16>
    "tpu.trace_start"() <{level = 10 : i32, message = "bqd,bkd->bqk"}> : () -> ()
    %cst_353 = arith.constant dense<0.000000e+00> : vector<2x8x8xf32>
    %947 = tpu.matmul %942, %944, %cst_353 {dimension_numbers = #tpu.dot_dimension_numbers<[2], [2], [1], [1], [0, 0, 0, 1, 1, 1], [0], [0]>} : vector<2x8x32xbf16>, vector<2x8x32xbf16>, vector<2x8x8xf32> -> vector<2x8x8xf32>
    "tpu.trace_stop"() : () -> ()
    %948 = vector.broadcast %4 : vector<2x1x8xf32> to vector<2x8x8xf32>
    %949 = arith.addf %947, %948 : vector<2x8x8xf32>
    %cst_354 = arith.constant dense<0xFF800000> : vector<2x8xf32>
    %950 = vector.multi_reduction <maximumf>, %949, %cst_354 [2] : vector<2x8x8xf32> to vector<2x8xf32>
    %951 = vector.shape_cast %950 : vector<2x8xf32> to vector<2x8x1xf32>
    %952 = vector.broadcast %951 : vector<2x8x1xf32> to vector<2x8x8xf32>
    %953 = arith.subf %949, %952 : vector<2x8x8xf32>
    %954 = math.exp %953 : vector<2x8x8xf32>
    %cst_355 = arith.constant dense<0.000000e+00> : vector<2x8xf32>
    %955 = vector.multi_reduction <add>, %954, %cst_355 [2] : vector<2x8x8xf32> to vector<2x8xf32>
    %956 = vector.shape_cast %955 : vector<2x8xf32> to vector<2x8x1xf32>
    %957 = tpu.reciprocal %956 {approx = true} : vector<2x8x1xf32> -> vector<2x8x1xf32>
    %958 = vector.broadcast %957 : vector<2x8x1xf32> to vector<2x8x8xf32>
    %959 = arith.mulf %954, %958 : vector<2x8x8xf32>
    %960 = arith.truncf %959 : vector<2x8x8xf32> to vector<2x8x8xbf16>
    "tpu.trace_start"() <{level = 10 : i32, message = "bqk,bkd->bqd"}> : () -> ()
    %cst_356 = arith.constant dense<0.000000e+00> : vector<2x8x32xf32>
    %961 = tpu.matmul %960, %946, %cst_356 {dimension_numbers = #tpu.dot_dimension_numbers<[2], [1], [1], [2], [0, 0, 0, 1, 1, 2], [0], [0]>} : vector<2x8x8xbf16>, vector<2x8x32xbf16>, vector<2x8x32xf32> -> vector<2x8x32xf32>
    "tpu.trace_stop"() : () -> ()
    %962 = vector.shape_cast %961 : vector<2x8x32xf32> to vector<16x32xf32>
    %963 = vector.extract_strided_slice %938 {offsets = [0, 32], sizes = [16, 32], strides = [1, 1]} : vector<16x128xbf16> to vector<16x32xbf16>
    %964 = vector.shape_cast %963 : vector<16x32xbf16> to vector<2x8x32xbf16>
    %965 = vector.extract_strided_slice %939 {offsets = [0, 32], sizes = [16, 32], strides = [1, 1]} : vector<16x128xbf16> to vector<16x32xbf16>
    %966 = vector.shape_cast %965 : vector<16x32xbf16> to vector<2x8x32xbf16>
    %967 = vector.extract_strided_slice %940 {offsets = [0, 32], sizes = [16, 32], strides = [1, 1]} : vector<16x128xbf16> to vector<16x32xbf16>
    %968 = vector.shape_cast %967 : vector<16x32xbf16> to vector<2x8x32xbf16>
    "tpu.trace_start"() <{level = 10 : i32, message = "bqd,bkd->bqk"}> : () -> ()
    %cst_357 = arith.constant dense<0.000000e+00> : vector<2x8x8xf32>
    %969 = tpu.matmul %964, %966, %cst_357 {dimension_numbers = #tpu.dot_dimension_numbers<[2], [2], [1], [1], [0, 0, 0, 1, 1, 1], [0], [0]>} : vector<2x8x32xbf16>, vector<2x8x32xbf16>, vector<2x8x8xf32> -> vector<2x8x8xf32>
    "tpu.trace_stop"() : () -> ()
    %970 = vector.broadcast %4 : vector<2x1x8xf32> to vector<2x8x8xf32>
    %971 = arith.addf %969, %970 : vector<2x8x8xf32>
    %cst_358 = arith.constant dense<0xFF800000> : vector<2x8xf32>
    %972 = vector.multi_reduction <maximumf>, %971, %cst_358 [2] : vector<2x8x8xf32> to vector<2x8xf32>
    %973 = vector.shape_cast %972 : vector<2x8xf32> to vector<2x8x1xf32>
    %974 = vector.broadcast %973 : vector<2x8x1xf32> to vector<2x8x8xf32>
    %975 = arith.subf %971, %974 : vector<2x8x8xf32>
    %976 = math.exp %975 : vector<2x8x8xf32>
    %cst_359 = arith.constant dense<0.000000e+00> : vector<2x8xf32>
    %977 = vector.multi_reduction <add>, %976, %cst_359 [2] : vector<2x8x8xf32> to vector<2x8xf32>
    %978 = vector.shape_cast %977 : vector<2x8xf32> to vector<2x8x1xf32>
    %979 = tpu.reciprocal %978 {approx = true} : vector<2x8x1xf32> -> vector<2x8x1xf32>
    %980 = vector.broadcast %979 : vector<2x8x1xf32> to vector<2x8x8xf32>
    %981 = arith.mulf %976, %980 : vector<2x8x8xf32>
    %982 = arith.truncf %981 : vector<2x8x8xf32> to vector<2x8x8xbf16>
    "tpu.trace_start"() <{level = 10 : i32, message = "bqk,bkd->bqd"}> : () -> ()
    %cst_360 = arith.constant dense<0.000000e+00> : vector<2x8x32xf32>
    %983 = tpu.matmul %982, %968, %cst_360 {dimension_numbers = #tpu.dot_dimension_numbers<[2], [1], [1], [2], [0, 0, 0, 1, 1, 2], [0], [0]>} : vector<2x8x8xbf16>, vector<2x8x32xbf16>, vector<2x8x32xf32> -> vector<2x8x32xf32>
    "tpu.trace_stop"() : () -> ()
    %984 = vector.shape_cast %983 : vector<2x8x32xf32> to vector<16x32xf32>
    %985 = vector.extract_strided_slice %938 {offsets = [0, 64], sizes = [16, 32], strides = [1, 1]} : vector<16x128xbf16> to vector<16x32xbf16>
    %986 = vector.shape_cast %985 : vector<16x32xbf16> to vector<2x8x32xbf16>
    %987 = vector.extract_strided_slice %939 {offsets = [0, 64], sizes = [16, 32], strides = [1, 1]} : vector<16x128xbf16> to vector<16x32xbf16>
    %988 = vector.shape_cast %987 : vector<16x32xbf16> to vector<2x8x32xbf16>
    %989 = vector.extract_strided_slice %940 {offsets = [0, 64], sizes = [16, 32], strides = [1, 1]} : vector<16x128xbf16> to vector<16x32xbf16>
    %990 = vector.shape_cast %989 : vector<16x32xbf16> to vector<2x8x32xbf16>
    "tpu.trace_start"() <{level = 10 : i32, message = "bqd,bkd->bqk"}> : () -> ()
    %cst_361 = arith.constant dense<0.000000e+00> : vector<2x8x8xf32>
    %991 = tpu.matmul %986, %988, %cst_361 {dimension_numbers = #tpu.dot_dimension_numbers<[2], [2], [1], [1], [0, 0, 0, 1, 1, 1], [0], [0]>} : vector<2x8x32xbf16>, vector<2x8x32xbf16>, vector<2x8x8xf32> -> vector<2x8x8xf32>
    "tpu.trace_stop"() : () -> ()
    %992 = vector.broadcast %4 : vector<2x1x8xf32> to vector<2x8x8xf32>
    %993 = arith.addf %991, %992 : vector<2x8x8xf32>
    %cst_362 = arith.constant dense<0xFF800000> : vector<2x8xf32>
    %994 = vector.multi_reduction <maximumf>, %993, %cst_362 [2] : vector<2x8x8xf32> to vector<2x8xf32>
    %995 = vector.shape_cast %994 : vector<2x8xf32> to vector<2x8x1xf32>
    %996 = vector.broadcast %995 : vector<2x8x1xf32> to vector<2x8x8xf32>
    %997 = arith.subf %993, %996 : vector<2x8x8xf32>
    %998 = math.exp %997 : vector<2x8x8xf32>
    %cst_363 = arith.constant dense<0.000000e+00> : vector<2x8xf32>
    %999 = vector.multi_reduction <add>, %998, %cst_363 [2] : vector<2x8x8xf32> to vector<2x8xf32>
    %1000 = vector.shape_cast %999 : vector<2x8xf32> to vector<2x8x1xf32>
    %1001 = tpu.reciprocal %1000 {approx = true} : vector<2x8x1xf32> -> vector<2x8x1xf32>
    %1002 = vector.broadcast %1001 : vector<2x8x1xf32> to vector<2x8x8xf32>
    %1003 = arith.mulf %998, %1002 : vector<2x8x8xf32>
    %1004 = arith.truncf %1003 : vector<2x8x8xf32> to vector<2x8x8xbf16>
    "tpu.trace_start"() <{level = 10 : i32, message = "bqk,bkd->bqd"}> : () -> ()
    %cst_364 = arith.constant dense<0.000000e+00> : vector<2x8x32xf32>
    %1005 = tpu.matmul %1004, %990, %cst_364 {dimension_numbers = #tpu.dot_dimension_numbers<[2], [1], [1], [2], [0, 0, 0, 1, 1, 2], [0], [0]>} : vector<2x8x8xbf16>, vector<2x8x32xbf16>, vector<2x8x32xf32> -> vector<2x8x32xf32>
    "tpu.trace_stop"() : () -> ()
    %1006 = vector.shape_cast %1005 : vector<2x8x32xf32> to vector<16x32xf32>
    %1007 = vector.extract_strided_slice %938 {offsets = [0, 96], sizes = [16, 32], strides = [1, 1]} : vector<16x128xbf16> to vector<16x32xbf16>
    %1008 = vector.shape_cast %1007 : vector<16x32xbf16> to vector<2x8x32xbf16>
    %1009 = vector.extract_strided_slice %939 {offsets = [0, 96], sizes = [16, 32], strides = [1, 1]} : vector<16x128xbf16> to vector<16x32xbf16>
    %1010 = vector.shape_cast %1009 : vector<16x32xbf16> to vector<2x8x32xbf16>
    %1011 = vector.extract_strided_slice %940 {offsets = [0, 96], sizes = [16, 32], strides = [1, 1]} : vector<16x128xbf16> to vector<16x32xbf16>
    %1012 = vector.shape_cast %1011 : vector<16x32xbf16> to vector<2x8x32xbf16>
    "tpu.trace_start"() <{level = 10 : i32, message = "bqd,bkd->bqk"}> : () -> ()
    %cst_365 = arith.constant dense<0.000000e+00> : vector<2x8x8xf32>
    %1013 = tpu.matmul %1008, %1010, %cst_365 {dimension_numbers = #tpu.dot_dimension_numbers<[2], [2], [1], [1], [0, 0, 0, 1, 1, 1], [0], [0]>} : vector<2x8x32xbf16>, vector<2x8x32xbf16>, vector<2x8x8xf32> -> vector<2x8x8xf32>
    "tpu.trace_stop"() : () -> ()
    %1014 = vector.broadcast %4 : vector<2x1x8xf32> to vector<2x8x8xf32>
    %1015 = arith.addf %1013, %1014 : vector<2x8x8xf32>
    %cst_366 = arith.constant dense<0xFF800000> : vector<2x8xf32>
    %1016 = vector.multi_reduction <maximumf>, %1015, %cst_366 [2] : vector<2x8x8xf32> to vector<2x8xf32>
    %1017 = vector.shape_cast %1016 : vector<2x8xf32> to vector<2x8x1xf32>
    %1018 = vector.broadcast %1017 : vector<2x8x1xf32> to vector<2x8x8xf32>
    %1019 = arith.subf %1015, %1018 : vector<2x8x8xf32>
    %1020 = math.exp %1019 : vector<2x8x8xf32>
    %cst_367 = arith.constant dense<0.000000e+00> : vector<2x8xf32>
    %1021 = vector.multi_reduction <add>, %1020, %cst_367 [2] : vector<2x8x8xf32> to vector<2x8xf32>
    %1022 = vector.shape_cast %1021 : vector<2x8xf32> to vector<2x8x1xf32>
    %1023 = tpu.reciprocal %1022 {approx = true} : vector<2x8x1xf32> -> vector<2x8x1xf32>
    %1024 = vector.broadcast %1023 : vector<2x8x1xf32> to vector<2x8x8xf32>
    %1025 = arith.mulf %1020, %1024 : vector<2x8x8xf32>
    %1026 = arith.truncf %1025 : vector<2x8x8xf32> to vector<2x8x8xbf16>
    "tpu.trace_start"() <{level = 10 : i32, message = "bqk,bkd->bqd"}> : () -> ()
    %cst_368 = arith.constant dense<0.000000e+00> : vector<2x8x32xf32>
    %1027 = tpu.matmul %1026, %1012, %cst_368 {dimension_numbers = #tpu.dot_dimension_numbers<[2], [1], [1], [2], [0, 0, 0, 1, 1, 2], [0], [0]>} : vector<2x8x8xbf16>, vector<2x8x32xbf16>, vector<2x8x32xf32> -> vector<2x8x32xf32>
    "tpu.trace_stop"() : () -> ()
    %1028 = vector.shape_cast %1027 : vector<2x8x32xf32> to vector<16x32xf32>
    %1029 = tpu.concatenate %962, %984, %1006, %1028 in 1 : vector<16x32xf32>, vector<16x32xf32>, vector<16x32xf32>, vector<16x32xf32> -> vector<16x128xf32>
    %1030 = arith.truncf %1029 : vector<16x128xf32> to vector<16x128xbf16>
    %cst_369 = arith.constant dense<0.000000e+00> : vector<16x128xf32>
    %1031 = tpu.matmul %1030, %922, %cst_369 {dimension_numbers = #tpu.dot_dimension_numbers<[1], [0], [0], [1], [0, 0, 1, 1], [], []>} : vector<16x128xbf16>, vector<128x128xbf16>, vector<16x128xf32> -> vector<16x128xf32>
    %1032 = vector.broadcast %924 : vector<1x128xf32> to vector<16x128xf32>
    %1033 = arith.addf %1031, %1032 : vector<16x128xf32>
    %1034 = arith.addf %1033, %912 : vector<16x128xf32>
    %cst_370 = arith.constant dense<0.000000e+00> : vector<16xf32>
    %1035 = vector.multi_reduction <add>, %1034, %cst_370 [1] : vector<16x128xf32> to vector<16xf32>
    %1036 = vector.shape_cast %1035 : vector<16xf32> to vector<16x1xf32>
    %cst_371 = arith.constant 1.280000e+02 : f32
    %1037 = vector.broadcast %cst_371 : f32 to vector<16x1xf32>
    %1038 = arith.divf %1036, %1037 : vector<16x1xf32>
    %1039 = vector.broadcast %1038 : vector<16x1xf32> to vector<16x128xf32>
    %1040 = arith.subf %1034, %1039 : vector<16x128xf32>
    %1041 = arith.mulf %1040, %1040 : vector<16x128xf32>
    %cst_372 = arith.constant dense<0.000000e+00> : vector<16xf32>
    %1042 = vector.multi_reduction <add>, %1041, %cst_372 [1] : vector<16x128xf32> to vector<16xf32>
    %1043 = vector.shape_cast %1042 : vector<16xf32> to vector<16x1xf32>
    %cst_373 = arith.constant 1.280000e+02 : f32
    %1044 = vector.broadcast %cst_373 : f32 to vector<16x1xf32>
    %1045 = arith.divf %1043, %1044 : vector<16x1xf32>
    %1046 = vector.broadcast %1038 : vector<16x1xf32> to vector<16x128xf32>
    %1047 = arith.subf %1034, %1046 : vector<16x128xf32>
    %cst_374 = arith.constant 9.99999974E-6 : f32
    %1048 = vector.broadcast %cst_374 : f32 to vector<16x1xf32>
    %1049 = arith.addf %1045, %1048 : vector<16x1xf32>
    %1050 = math.rsqrt %1049 : vector<16x1xf32>
    %1051 = vector.broadcast %1050 : vector<16x1xf32> to vector<16x128xf32>
    %1052 = arith.mulf %1047, %1051 : vector<16x128xf32>
    %1053 = vector.broadcast %926 : vector<1x128xf32> to vector<16x128xf32>
    %1054 = arith.mulf %1052, %1053 : vector<16x128xf32>
    %1055 = vector.broadcast %928 : vector<1x128xf32> to vector<16x128xf32>
    %1056 = arith.addf %1054, %1055 : vector<16x128xf32>
    %c1_375 = arith.constant 1 : index
    %c0_376 = arith.constant 0 : index
    %c0_377 = arith.constant 0 : index
    %1057 = vector.load %arg36[%c1_375, %c0_376, %c0_377] : memref<2x128x256xbf16, #tpu.memory_space<vmem>>, vector<1x128x256xbf16>
    %1058 = vector.shape_cast %1057 : vector<1x128x256xbf16> to vector<128x256xbf16>
    %c1_378 = arith.constant 1 : index
    %c0_379 = arith.constant 0 : index
    %c0_380 = arith.constant 0 : index
    %1059 = vector.load %arg37[%c1_378, %c0_379, %c0_380] : memref<2x1x256xf32, #tpu.memory_space<vmem>>, vector<1x1x256xf32>
    %1060 = vector.shape_cast %1059 : vector<1x1x256xf32> to vector<1x256xf32>
    %c1_381 = arith.constant 1 : index
    %c0_382 = arith.constant 0 : index
    %c0_383 = arith.constant 0 : index
    %1061 = vector.load %arg38[%c1_381, %c0_382, %c0_383] : memref<2x256x128xbf16, #tpu.memory_space<vmem>>, vector<1x256x128xbf16>
    %1062 = vector.shape_cast %1061 : vector<1x256x128xbf16> to vector<256x128xbf16>
    %c1_384 = arith.constant 1 : index
    %c0_385 = arith.constant 0 : index
    %c0_386 = arith.constant 0 : index
    %1063 = vector.load %arg39[%c1_384, %c0_385, %c0_386] : memref<2x1x128xf32, #tpu.memory_space<vmem>>, vector<1x1x128xf32>
    %1064 = vector.shape_cast %1063 : vector<1x1x128xf32> to vector<1x128xf32>
    %c1_387 = arith.constant 1 : index
    %c0_388 = arith.constant 0 : index
    %c0_389 = arith.constant 0 : index
    %1065 = vector.load %arg40[%c1_387, %c0_388, %c0_389] : memref<2x1x128xf32, #tpu.memory_space<vmem>>, vector<1x1x128xf32>
    %1066 = vector.shape_cast %1065 : vector<1x1x128xf32> to vector<1x128xf32>
    %c1_390 = arith.constant 1 : index
    %c0_391 = arith.constant 0 : index
    %c0_392 = arith.constant 0 : index
    %1067 = vector.load %arg41[%c1_390, %c0_391, %c0_392] : memref<2x1x128xf32, #tpu.memory_space<vmem>>, vector<1x1x128xf32>
    %1068 = vector.shape_cast %1067 : vector<1x1x128xf32> to vector<1x128xf32>
    %1069 = arith.truncf %1056 : vector<16x128xf32> to vector<16x128xbf16>
    %cst_393 = arith.constant dense<0.000000e+00> : vector<16x256xf32>
    %1070 = tpu.matmul %1069, %1058, %cst_393 {dimension_numbers = #tpu.dot_dimension_numbers<[1], [0], [0], [1], [0, 0, 1, 1], [], []>} : vector<16x128xbf16>, vector<128x256xbf16>, vector<16x256xf32> -> vector<16x256xf32>
    %1071 = vector.broadcast %1060 : vector<1x256xf32> to vector<16x256xf32>
    %1072 = arith.addf %1070, %1071 : vector<16x256xf32>
    %1073 = arith.negf %1072 : vector<16x256xf32>
    %1074 = math.exp %1073 : vector<16x256xf32>
    %cst_394 = arith.constant 1.000000e+00 : f32
    %1075 = vector.broadcast %cst_394 : f32 to vector<16x256xf32>
    %1076 = arith.addf %1075, %1074 : vector<16x256xf32>
    %1077 = arith.divf %1075, %1076 : vector<16x256xf32>
    %1078 = arith.mulf %1072, %1077 : vector<16x256xf32>
    %1079 = arith.truncf %1078 : vector<16x256xf32> to vector<16x256xbf16>
    %cst_395 = arith.constant dense<0.000000e+00> : vector<16x128xf32>
    %1080 = tpu.matmul %1079, %1062, %cst_395 {dimension_numbers = #tpu.dot_dimension_numbers<[1], [0], [0], [1], [0, 0, 1, 1], [], []>} : vector<16x256xbf16>, vector<256x128xbf16>, vector<16x128xf32> -> vector<16x128xf32>
    %1081 = vector.broadcast %1064 : vector<1x128xf32> to vector<16x128xf32>
    %1082 = arith.addf %1080, %1081 : vector<16x128xf32>
    %1083 = arith.addf %1082, %1056 : vector<16x128xf32>
    %cst_396 = arith.constant dense<0.000000e+00> : vector<16xf32>
    %1084 = vector.multi_reduction <add>, %1083, %cst_396 [1] : vector<16x128xf32> to vector<16xf32>
    %1085 = vector.shape_cast %1084 : vector<16xf32> to vector<16x1xf32>
    %cst_397 = arith.constant 1.280000e+02 : f32
    %1086 = vector.broadcast %cst_397 : f32 to vector<16x1xf32>
    %1087 = arith.divf %1085, %1086 : vector<16x1xf32>
    %1088 = vector.broadcast %1087 : vector<16x1xf32> to vector<16x128xf32>
    %1089 = arith.subf %1083, %1088 : vector<16x128xf32>
    %1090 = arith.mulf %1089, %1089 : vector<16x128xf32>
    %cst_398 = arith.constant dense<0.000000e+00> : vector<16xf32>
    %1091 = vector.multi_reduction <add>, %1090, %cst_398 [1] : vector<16x128xf32> to vector<16xf32>
    %1092 = vector.shape_cast %1091 : vector<16xf32> to vector<16x1xf32>
    %cst_399 = arith.constant 1.280000e+02 : f32
    %1093 = vector.broadcast %cst_399 : f32 to vector<16x1xf32>
    %1094 = arith.divf %1092, %1093 : vector<16x1xf32>
    %1095 = vector.broadcast %1087 : vector<16x1xf32> to vector<16x128xf32>
    %1096 = arith.subf %1083, %1095 : vector<16x128xf32>
    %cst_400 = arith.constant 9.99999974E-6 : f32
    %1097 = vector.broadcast %cst_400 : f32 to vector<16x1xf32>
    %1098 = arith.addf %1094, %1097 : vector<16x1xf32>
    %1099 = math.rsqrt %1098 : vector<16x1xf32>
    %1100 = vector.broadcast %1099 : vector<16x1xf32> to vector<16x128xf32>
    %1101 = arith.mulf %1096, %1100 : vector<16x128xf32>
    %1102 = vector.broadcast %1066 : vector<1x128xf32> to vector<16x128xf32>
    %1103 = arith.mulf %1101, %1102 : vector<16x128xf32>
    %1104 = vector.broadcast %1068 : vector<1x128xf32> to vector<16x128xf32>
    %1105 = arith.addf %1103, %1104 : vector<16x128xf32>
    %1106 = arith.truncf %1105 : vector<16x128xf32> to vector<16x128xbf16>
    %c0_401 = arith.constant 0 : index
    %c0_402 = arith.constant 0 : index
    %1107 = vector.load %arg42[%c0_401, %c0_402] : memref<128x256xbf16, #tpu.memory_space<vmem>>, vector<128x256xbf16>
    %cst_403 = arith.constant dense<0.000000e+00> : vector<16x256xf32>
    %1108 = tpu.matmul %1106, %1107, %cst_403 {dimension_numbers = #tpu.dot_dimension_numbers<[1], [0], [0], [1], [0, 0, 1, 1], [], []>} : vector<16x128xbf16>, vector<128x256xbf16>, vector<16x256xf32> -> vector<16x256xf32>
    %c0_404 = arith.constant 0 : index
    %c0_405 = arith.constant 0 : index
    %1109 = vector.load %arg43[%c0_404, %c0_405] : memref<1x256xf32, #tpu.memory_space<vmem>>, vector<1x256xf32>
    %1110 = vector.broadcast %1109 : vector<1x256xf32> to vector<16x256xf32>
    %1111 = arith.addf %1108, %1110 : vector<16x256xf32>
    %c0_406 = arith.constant 0 : index
    %c0_407 = arith.constant 0 : index
    %1112 = vector.load %arg44[%c0_406, %c0_407] : memref<16x256xf32, #tpu.memory_space<vmem>>, vector<16x256xf32>
    tpu.vector_store %arg44[%c0_406, %c0_407], %1111 {strides = array<i32>} : memref<16x256xf32, #tpu.memory_space<vmem>>, vector<16x256xf32>,
    return
  }
}

</mosaic_0001>

<llo_original>
// kernel: run.1
$region0: #{run.1}
  #allocation0 [shape = 'u32[]', space=smem, size = 0x4, offset = 0x4, fixed_abs, tag = 'smem constant byte address 0x4 - core index']
  #allocation1 [shape = 'u32[144,128]{1,0:T(1,128)}', space=vmem, size = 0x12000, scoped, tag = 'internal scratch']
  %s0 = inlined_call_operand.smem [shape: u32[45], index: -1, kind: input, shape index: {}]
  %s1 = sld [smem:[%s0]]
  %s2 = scalar_lea.smem %s0, 1
  %s3 = sld [smem:[%s2]]
  %s4 = scalar_lea.smem %s0, 2
  %s5 = sld [smem:[%s4]]
  %s6 = scalar_lea.smem %s0, 3
  %s7 = sld [smem:[%s6]]
  %s8 = scalar_lea.smem %s0, 4
  %s9 = sld [smem:[%s8]]
  %s10 = scalar_lea.smem %s0, 5
  %s11 = sld [smem:[%s10]]
  %s12 = scalar_lea.smem %s0, 6
  %s13 = sld [smem:[%s12]]
  %s14 = scalar_lea.smem %s0, 7
  %s15 = sld [smem:[%s14]]
  %s16 = scalar_lea.smem %s0, 8
  %s17 = sld [smem:[%s16]]
  %s18 = scalar_lea.smem %s0, 9
  %s19 = sld [smem:[%s18]]
  %s20 = scalar_lea.smem %s0, 10
  %s21 = sld [smem:[%s20]]
  %s22 = scalar_lea.smem %s0, 11
  %s23 = sld [smem:[%s22]]
  %s24 = scalar_lea.smem %s0, 12
  %s25 = sld [smem:[%s24]]
  %s26 = scalar_lea.smem %s0, 13
  %s27 = sld [smem:[%s26]]
  %s28 = scalar_lea.smem %s0, 14
  %s29 = sld [smem:[%s28]]
  %s30 = scalar_lea.smem %s0, 15
  %s31 = sld [smem:[%s30]]
  %s32 = scalar_lea.smem %s0, 16
  %s33 = sld [smem:[%s32]]
  %s34 = scalar_lea.smem %s0, 17
  %s35 = sld [smem:[%s34]]
  %s36 = scalar_lea.smem %s0, 18
  %s37 = sld [smem:[%s36]]
  %s38 = scalar_lea.smem %s0, 19
  %s39 = sld [smem:[%s38]]
  %s40 = scalar_lea.smem %s0, 20
  %s41 = sld [smem:[%s40]]
  %s42 = scalar_lea.smem %s0, 21
  %s43 = sld [smem:[%s42]]
  %s44 = scalar_lea.smem %s0, 22
  %s45 = sld [smem:[%s44]]
  %s46 = scalar_lea.smem %s0, 23
  %s47 = sld [smem:[%s46]]
  %s48 = scalar_lea.smem %s0, 24
  %s49 = sld [smem:[%s48]]
  %s50 = scalar_lea.smem %s0, 25
  %s51 = sld [smem:[%s50]]
  %s52 = scalar_lea.smem %s0, 26
  %s53 = sld [smem:[%s52]]
  %s54 = scalar_lea.smem %s0, 27
  %s55 = sld [smem:[%s54]]
  %s56 = scalar_lea.smem %s0, 28
  %s57 = sld [smem:[%s56]]
  %s58 = scalar_lea.smem %s0, 29
  %s59 = sld [smem:[%s58]]
  %s60 = scalar_lea.smem %s0, 30
  %s61 = sld [smem:[%s60]]
  %s62 = scalar_lea.smem %s0, 31
  %s63 = sld [smem:[%s62]]
  %s64 = scalar_lea.smem %s0, 32
  %s65 = sld [smem:[%s64]]
  %s66 = scalar_lea.smem %s0, 33
  %s67 = sld [smem:[%s66]]
  %s68 = scalar_lea.smem %s0, 34
  %s69 = sld [smem:[%s68]]
  %s70 = scalar_lea.smem %s0, 35
  %s71 = sld [smem:[%s70]]
  %s72 = scalar_lea.smem %s0, 36
  %s73 = sld [smem:[%s72]]
  %s74 = scalar_lea.smem %s0, 37
  %s75 = sld [smem:[%s74]]
  %s76 = scalar_lea.smem %s0, 38
  %s77 = sld [smem:[%s76]]
  %s78 = scalar_lea.smem %s0, 39
  %s79 = sld [smem:[%s78]]
  %s80 = scalar_lea.smem %s0, 40
  %s81 = sld [smem:[%s80]]
  %s82 = scalar_lea.smem %s0, 41
  %s83 = sld [smem:[%s82]]
  %s84 = scalar_lea.smem %s0, 42
  %s85 = sld [smem:[%s84]]
  %s86 = scalar_lea.smem %s0, 43
  %s87 = sld [smem:[%s86]]
  %s88 = scalar_lea.smem %s0, 44
  %s89 = sld [smem:[%s88]]
  %s90 = sld [smem:[#allocation0]]
  $region186: #{run.1} parent=0
    _
  %s92 = ssub.s32 1, %s90
  %s93 = scalar_select 0, %s92, %s90
  $region1: #{run.1} parent=0
    #allocation2 [shape = 'u8[16384]{0}', space=vmem, size = 0x4000, scoped, tag = 'output window, operand 0, single buffered']
    #allocation3 [shape = 's32[1]{0}', space=sflag, size = 0x4, scoped, tag = 'scoped memory for run.1']
    %94 = vsyncpa [#allocation3], 0
    // Predicated region
    $region2: #{run.1} parent=1 // pred_check
      _
    $region3: #{run.1} parent=1 // pred_check_branch
      %96 = sbr.rel (0) target = $region5
    $region4: #{run.1} parent=1 // pred_region
      _
    $region5: #{run.1} parent=1 // pred_fallthru
      _
    // Predicated region
    $region6: #{run.1} parent=1 // pred_check
      _
    $region7: #{run.1} parent=1 // pred_check_branch
      %98 = sbr.rel (0) target = $region9
    $region8: #{run.1} parent=1 // pred_region
      _
    $region9: #{run.1} parent=1 // pred_fallthru
      _
    // Predicated region
    $region10: #{run.1} parent=1 // pred_check
      _
    $region11: #{run.1} parent=1 // pred_check_branch
      %100 = sbr.rel (0) target = $region13
    $region12: #{run.1} parent=1 // pred_region
      _
    $region13: #{run.1} parent=1 // pred_fallthru
      _
    // Predicated region
    $region14: #{run.1} parent=1 // pred_check
      _
    $region15: #{run.1} parent=1 // pred_check_branch
      %102 = sbr.rel (0) target = $region17
    $region16: #{run.1} parent=1 // pred_region
      _
    $region17: #{run.1} parent=1 // pred_fallthru
      _
    // Predicated region
    $region18: #{run.1} parent=1 // pred_check
      _
    $region19: #{run.1} parent=1 // pred_check_branch
      %104 = sbr.rel (0) target = $region21
    $region20: #{run.1} parent=1 // pred_region
      _
    $region21: #{run.1} parent=1 // pred_fallthru
      _
    // Predicated region
    $region22: #{run.1} parent=1 // pred_check
      _
    $region23: #{run.1} parent=1 // pred_check_branch
      %106 = sbr.rel (0) target = $region25
    $region24: #{run.1} parent=1 // pred_region
      _
    $region25: #{run.1} parent=1 // pred_fallthru
      _
    // Predicated region
    $region26: #{run.1} parent=1 // pred_check
      _
    $region27: #{run.1} parent=1 // pred_check_branch
      %108 = sbr.rel (0) target = $region29
    $region28: #{run.1} parent=1 // pred_region
      _
    $region29: #{run.1} parent=1 // pred_fallthru
      _
    // Predicated region
    $region30: #{run.1} parent=1 // pred_check
      _
    $region31: #{run.1} parent=1 // pred_check_branch
      %110 = sbr.rel (0) target = $region33
    $region32: #{run.1} parent=1 // pred_region
      _
    $region33: #{run.1} parent=1 // pred_fallthru
      _
    // Predicated region
    $region34: #{run.1} parent=1 // pred_check
      _
    $region35: #{run.1} parent=1 // pred_check_branch
      %112 = sbr.rel (0) target = $region37
    $region36: #{run.1} parent=1 // pred_region
      _
    $region37: #{run.1} parent=1 // pred_fallthru
      _
    // Predicated region
    $region38: #{run.1} parent=1 // pred_check
      _
    $region39: #{run.1} parent=1 // pred_check_branch
      %114 = sbr.rel (0) target = $region41
    $region40: #{run.1} parent=1 // pred_region
      _
    $region41: #{run.1} parent=1 // pred_fallthru
      _
    // Predicated region
    $region42: #{run.1} parent=1 // pred_check
      _
    $region43: #{run.1} parent=1 // pred_check_branch
      %116 = sbr.rel (0) target = $region45
    $region44: #{run.1} parent=1 // pred_region
      _
    $region45: #{run.1} parent=1 // pred_fallthru
      _
    // Predicated region
    $region46: #{run.1} parent=1 // pred_check
      _
    $region47: #{run.1} parent=1 // pred_check_branch
      %118 = sbr.rel (0) target = $region49
    $region48: #{run.1} parent=1 // pred_region
      _
    $region49: #{run.1} parent=1 // pred_fallthru
      _
    // Predicated region
    $region50: #{run.1} parent=1 // pred_check
      _
    $region51: #{run.1} parent=1 // pred_check_branch
      %120 = sbr.rel (0) target = $region53
    $region52: #{run.1} parent=1 // pred_region
      _
    $region53: #{run.1} parent=1 // pred_fallthru
      _
    // Predicated region
    $region54: #{run.1} parent=1 // pred_check
      _
    $region55: #{run.1} parent=1 // pred_check_branch
      %122 = sbr.rel (0) target = $region57
    $region56: #{run.1} parent=1 // pred_region
      _
    $region57: #{run.1} parent=1 // pred_fallthru
      _
    // Predicated region
    $region58: #{run.1} parent=1 // pred_check
      _
    $region59: #{run.1} parent=1 // pred_check_branch
      %124 = sbr.rel (0) target = $region61
    $region60: #{run.1} parent=1 // pred_region
      _
    $region61: #{run.1} parent=1 // pred_fallthru
      _
    // Predicated region
    $region62: #{run.1} parent=1 // pred_check
      _
    $region63: #{run.1} parent=1 // pred_check_branch
      %126 = sbr.rel (0) target = $region65
    $region64: #{run.1} parent=1 // pred_region
      _
    $region65: #{run.1} parent=1 // pred_fallthru
      _
    // Predicated region
    $region66: #{run.1} parent=1 // pred_check
      _
    $region67: #{run.1} parent=1 // pred_check_branch
      %128 = sbr.rel (0) target = $region69
    $region68: #{run.1} parent=1 // pred_region
      _
    $region69: #{run.1} parent=1 // pred_fallthru
      _
    // Predicated region
    $region70: #{run.1} parent=1 // pred_check
      _
    $region71: #{run.1} parent=1 // pred_check_branch
      %130 = sbr.rel (0) target = $region73
    $region72: #{run.1} parent=1 // pred_region
      _
    $region73: #{run.1} parent=1 // pred_fallthru
      _
    // Predicated region
    $region74: #{run.1} parent=1 // pred_check
      _
    $region75: #{run.1} parent=1 // pred_check_branch
      %132 = sbr.rel (0) target = $region77
    $region76: #{run.1} parent=1 // pred_region
      _
    $region77: #{run.1} parent=1 // pred_fallthru
      _
    // Predicated region
    $region78: #{run.1} parent=1 // pred_check
      _
    $region79: #{run.1} parent=1 // pred_check_branch
      %134 = sbr.rel (0) target = $region81
    $region80: #{run.1} parent=1 // pred_region
      _
    $region81: #{run.1} parent=1 // pred_fallthru
      _
    // Predicated region
    $region82: #{run.1} parent=1 // pred_check
      _
    $region83: #{run.1} parent=1 // pred_check_branch
      %136 = sbr.rel (0) target = $region85
    $region84: #{run.1} parent=1 // pred_region
      _
    $region85: #{run.1} parent=1 // pred_fallthru
      _
    // Predicated region
    $region86: #{run.1} parent=1 // pred_check
      _
    $region87: #{run.1} parent=1 // pred_check_branch
      %138 = sbr.rel (0) target = $region89
    $region88: #{run.1} parent=1 // pred_region
      _
    $region89: #{run.1} parent=1 // pred_fallthru
      _
    // Predicated region
    $region90: #{run.1} parent=1 // pred_check
      _
    $region91: #{run.1} parent=1 // pred_check_branch
      %140 = sbr.rel (0) target = $region93
    $region92: #{run.1} parent=1 // pred_region
      _
    $region93: #{run.1} parent=1 // pred_fallthru
      _
    // Predicated region
    $region94: #{run.1} parent=1 // pred_check
      _
    $region95: #{run.1} parent=1 // pred_check_branch
      %142 = sbr.rel (0) target = $region97
    $region96: #{run.1} parent=1 // pred_region
      _
    $region97: #{run.1} parent=1 // pred_fallthru
      _
    // Predicated region
    $region98: #{run.1} parent=1 // pred_check
      _
    $region99: #{run.1} parent=1 // pred_check_branch
      %144 = sbr.rel (0) target = $region101
    $region100: #{run.1} parent=1 // pred_region
      _
    $region101: #{run.1} parent=1 // pred_fallthru
      _
    // Predicated region
    $region102: #{run.1} parent=1 // pred_check
      _
    $region103: #{run.1} parent=1 // pred_check_branch
      %146 = sbr.rel (0) target = $region105
    $region104: #{run.1} parent=1 // pred_region
      _
    $region105: #{run.1} parent=1 // pred_fallthru
      _
    // Predicated region
    $region106: #{run.1} parent=1 // pred_check
      _
    $region107: #{run.1} parent=1 // pred_check_branch
      %148 = sbr.rel (0) target = $region109
    $region108: #{run.1} parent=1 // pred_region
      _
    $region109: #{run.1} parent=1 // pred_fallthru
      _
    // Predicated region
    $region110: #{run.1} parent=1 // pred_check
      _
    $region111: #{run.1} parent=1 // pred_check_branch
      %150 = sbr.rel (0) target = $region113
    $region112: #{run.1} parent=1 // pred_region
      _
    $region113: #{run.1} parent=1 // pred_fallthru
      _
    // Predicated region
    $region114: #{run.1} parent=1 // pred_check
      _
    $region115: #{run.1} parent=1 // pred_check_branch
      %152 = sbr.rel (0) target = $region117
    $region116: #{run.1} parent=1 // pred_region
      _
    $region117: #{run.1} parent=1 // pred_fallthru
      _
    // Predicated region
    $region118: #{run.1} parent=1 // pred_check
      _
    $region119: #{run.1} parent=1 // pred_check_branch
      %154 = sbr.rel (0) target = $region121
    $region120: #{run.1} parent=1 // pred_region
      _
    $region121: #{run.1} parent=1 // pred_fallthru
      _
    // Predicated region
    $region122: #{run.1} parent=1 // pred_check
      _
    $region123: #{run.1} parent=1 // pred_check_branch
      %156 = sbr.rel (0) target = $region125
    $region124: #{run.1} parent=1 // pred_region
      _
    $region125: #{run.1} parent=1 // pred_fallthru
      _
    // Predicated region
    $region126: #{run.1} parent=1 // pred_check
      _
    $region127: #{run.1} parent=1 // pred_check_branch
      %158 = sbr.rel (0) target = $region129
    $region128: #{run.1} parent=1 // pred_region
      _
    $region129: #{run.1} parent=1 // pred_fallthru
      _
    // Predicated region
    $region130: #{run.1} parent=1 // pred_check
      _
    $region131: #{run.1} parent=1 // pred_check_branch
      %160 = sbr.rel (0) target = $region133
    $region132: #{run.1} parent=1 // pred_region
      _
    $region133: #{run.1} parent=1 // pred_fallthru
      _
    // Predicated region
    $region134: #{run.1} parent=1 // pred_check
      _
    $region135: #{run.1} parent=1 // pred_check_branch
      %162 = sbr.rel (0) target = $region137
    $region136: #{run.1} parent=1 // pred_region
      _
    $region137: #{run.1} parent=1 // pred_fallthru
      _
    // Predicated region
    $region138: #{run.1} parent=1 // pred_check
      _
    $region139: #{run.1} parent=1 // pred_check_branch
      %164 = sbr.rel (0) target = $region141
    $region140: #{run.1} parent=1 // pred_region
      _
    $region141: #{run.1} parent=1 // pred_fallthru
      _
    // Predicated region
    $region142: #{run.1} parent=1 // pred_check
      _
    $region143: #{run.1} parent=1 // pred_check_branch
      %166 = sbr.rel (0) target = $region145
    $region144: #{run.1} parent=1 // pred_region
      _
    $region145: #{run.1} parent=1 // pred_fallthru
      _
    // Predicated region
    $region146: #{run.1} parent=1 // pred_check
      _
    $region147: #{run.1} parent=1 // pred_check_branch
      %168 = sbr.rel (0) target = $region149
    $region148: #{run.1} parent=1 // pred_region
      _
    $region149: #{run.1} parent=1 // pred_fallthru
      _
    // Predicated region
    $region150: #{run.1} parent=1 // pred_check
      _
    $region151: #{run.1} parent=1 // pred_check_branch
      %170 = sbr.rel (0) target = $region153
    $region152: #{run.1} parent=1 // pred_region
      _
    $region153: #{run.1} parent=1 // pred_fallthru
      _
    // Predicated region
    $region154: #{run.1} parent=1 // pred_check
      _
    $region155: #{run.1} parent=1 // pred_check_branch
      %172 = sbr.rel (0) target = $region157
    $region156: #{run.1} parent=1 // pred_region
      _
    $region157: #{run.1} parent=1 // pred_fallthru
      _
    // Predicated region
    $region158: #{run.1} parent=1 // pred_check
      _
    $region159: #{run.1} parent=1 // pred_check_branch
      %174 = sbr.rel (0) target = $region161
    $region160: #{run.1} parent=1 // pred_region
      _
    $region161: #{run.1} parent=1 // pred_fallthru
      _
    // Predicated region
    $region162: #{run.1} parent=1 // pred_check
      _
    $region163: #{run.1} parent=1 // pred_check_branch
      %176 = sbr.rel (0) target = $region165
    $region164: #{run.1} parent=1 // pred_region
      _
    $region165: #{run.1} parent=1 // pred_fallthru
      _
    // Predicated region
    $region166: #{run.1} parent=1 // pred_check
      _
    $region167: #{run.1} parent=1 // pred_check_branch
      %178 = sbr.rel (0) target = $region169
    $region168: #{run.1} parent=1 // pred_region
      _
    $region169: #{run.1} parent=1 // pred_fallthru
      _
    // Predicated region
    $region170: #{run.1} parent=1 // pred_check
      _
    $region171: #{run.1} parent=1 // pred_check_branch
      %180 = sbr.rel (0) target = $region173
    $region172: #{run.1} parent=1 // pred_region
      _
    $region173: #{run.1} parent=1 // pred_fallthru
      _
    // Predicated region
    $region174: #{run.1} parent=1 // pred_check
      _
    $region175: #{run.1} parent=1 // pred_check_branch
      %182 = sbr.rel (0) target = $region177
    $region176: #{run.1} parent=1 // pred_region
      _
    $region177: #{run.1} parent=1 // pred_fallthru
      _
    %v184 = vld [vmem:[%s9] sm:$0x1]
    %v185 = vld [vmem:[%s9 + $0x1] sm:$0x1]
    %v186 = vsub.f32 1.0, %v184
    %v187 = vsub.f32 1.0, %v185
    %v188 = vmul.f32 %v186, -1e+09
    %v189 = vmul.f32 %v187, -1e+09
    %v190 = vld [vmem:[%s11] sm:$0x1]
    %v191 = vld [vmem:[%s11 + $0x1] sm:$0x1]
    %v192 = vsub.f32 1.0, %v190
    %v193 = vsub.f32 1.0, %v191
    %v194 = vmul.f32 %v192, -1e+09
    %v195 = vmul.f32 %v193, -1e+09
    %v196 = vlaneseq
    %v197 = vshrl.u32 %v196, 7
    %v198 = vlaneseq
    %v199 = vand.u32 %v198, 127
    %vm200 = vcmp.ge.s32.totalorder %v197, %v199
    %v201 = vsel %vm200, 0.0, -1e+09
    %v204 = vlaneseq
    %v205 = vshrl.u32 %v204, 7
    %v206 = vsub.s32 0, %v205
    %v207 = vrot.slane %v194, %v206
    %v208 = vlaneseq
    %v209 = vshrl.u32 %v208, 7
    %v210 = vsub.s32 0, %v209
    %v211 = vrot.slane %v195, %v210
    %v214 = vadd.f32 %v207, %v201
    %v215 = vadd.f32 %v211, %v201
    %v216 = vld [vmem:[%s1] sm:$0xff]
    %v217 = vld [vmem:[%s1 + $0x8] sm:$0xff]
    %v218 = vmul.f32 %v216, 11.313708
    %v219 = vmul.f32 %v217, 11.313708
    %v220 = vld [vmem:[%s5] sm:$0xff]
    %v221 = vld [vmem:[%s5 + $0x8] sm:$0xff]
    %v222 = vadd.f32 %v218, %v220
    %v223 = vadd.f32 %v219, %v221
    %v224 = vld [vmem:[%s13] sm:$0x1]
    %v225 = vld [vmem:[%s15] sm:$0x1]
    %226 = vadd.xlane.f32.xlu0 %v222
    %v227 = vpop.xlane.xlu0 %226
    %228 = vadd.xlane.f32.xlu0 %v223
    %v229 = vpop.xlane.xlu0 %228
    %v230 = vrcp.pop 128.0
    %v231 = vmul.f32 %v227, %v230
    %v232 = vmul.f32 %v229, %v230
    %v233 = vsub.f32 %v222, %v231
    %v234 = vsub.f32 %v223, %v232
    %v235 = vmul.f32 %v233, %v233
    %v236 = vmul.f32 %v234, %v234
    %237 = vadd.xlane.f32.xlu0 %v235
    %v238 = vpop.xlane.xlu0 %237
    %239 = vadd.xlane.f32.xlu0 %v236
    %v240 = vpop.xlane.xlu0 %239
    %v241 = vmul.f32 %v238, %v230
    %v242 = vmul.f32 %v240, %v230
    %v243 = vadd.f32 %v241, 1e-05
    %v244 = vadd.f32 %v242, 1e-05
    %v245 = vrsqrt.pop %v243
    %v246 = vrsqrt.pop %v244
    %v247 = vmul.f32 %v233, %v245
    %v248 = vmul.f32 %v234, %v246
    %v250 = vlaneseq
    %v251 = vshrl.u32 %v250, 7
    %v252 = vsub.s32 0, %v251
    %v253 = vrot.slane %v224, %v252
    %v255 = vmul.f32 %v247, %v253
    %v256 = vmul.f32 %v248, %v253
    %v258 = vlaneseq
    %v259 = vshrl.u32 %v258, 7
    %v260 = vsub.s32 0, %v259
    %v261 = vrot.slane %v225, %v260
    %v263 = vadd.f32 %v255, %v261
    %v264 = vadd.f32 %v256, %v261
    %v265 = vld [vmem:[%s21] sm:$0xff]
    %v266 = vld [vmem:[%s21 + $0x8] sm:$0xf]
    %v267 = vld [vmem:[%s21 + $0xc] sm:$0xff]
    %v268 = vld [vmem:[%s21 + $0x14] sm:$0xf]
    %v269 = vld [vmem:[%s21 + $0x18] sm:$0xff]
    %v270 = vld [vmem:[%s21 + $0x20] sm:$0xf]
    %v271 = vld [vmem:[%s21 + $0x24] sm:$0xff]
    %v272 = vld [vmem:[%s21 + $0x2c] sm:$0xf]
    %v273 = vld [vmem:[%s21 + $0x30] sm:$0xff]
    %v274 = vld [vmem:[%s21 + $0x38] sm:$0xf]
    %v275 = vld [vmem:[%s21 + $0x3c] sm:$0xff]
    %v276 = vld [vmem:[%s21 + $0x44] sm:$0xf]
    %v277 = vld [vmem:[%s21 + $0x48] sm:$0xff]
    %v278 = vld [vmem:[%s21 + $0x50] sm:$0xf]
    %v279 = vld [vmem:[%s21 + $0x54] sm:$0xff]
    %v280 = vld [vmem:[%s21 + $0x5c] sm:$0xf]
    %v281 = vld [vmem:[%s21 + $0x60] sm:$0xff]
    %v282 = vld [vmem:[%s21 + $0x68] sm:$0xf]
    %v283 = vld [vmem:[%s21 + $0x6c] sm:$0xff]
    %v284 = vld [vmem:[%s21 + $0x74] sm:$0xf]
    %v285 = vld [vmem:[%s21 + $0x78] sm:$0xff]
    %v286 = vld [vmem:[%s21 + $0x80] sm:$0xf]
    %v287 = vld [vmem:[%s21 + $0x84] sm:$0xff]
    %v288 = vld [vmem:[%s21 + $0x8c] sm:$0xf]
    %v289 = vld [vmem:[%s21 + $0x90] sm:$0xff]
    %v290 = vld [vmem:[%s21 + $0x98] sm:$0xf]
    %v291 = vld [vmem:[%s21 + $0x9c] sm:$0xff]
    %v292 = vld [vmem:[%s21 + $0xa4] sm:$0xf]
    %v293 = vld [vmem:[%s21 + $0xa8] sm:$0xff]
    %v294 = vld [vmem:[%s21 + $0xb0] sm:$0xf]
    %v295 = vld [vmem:[%s21 + $0xb4] sm:$0xff]
    %v296 = vld [vmem:[%s21 + $0xbc] sm:$0xf]
    %v297 = vld [vmem:[%s23] sm:$0x7]
    %v298 = vld [vmem:[%s25] sm:$0xf]
    %v299 = vld [vmem:[%s25 + $0x4] sm:$0xf]
    %v300 = vld [vmem:[%s25 + $0x8] sm:$0xf]
    %v301 = vld [vmem:[%s25 + $0xc] sm:$0xf]
    %v302 = vld [vmem:[%s25 + $0x10] sm:$0xf]
    %v303 = vld [vmem:[%s25 + $0x14] sm:$0xf]
    %v304 = vld [vmem:[%s25 + $0x18] sm:$0xf]
    %v305 = vld [vmem:[%s25 + $0x1c] sm:$0xf]
    %v306 = vld [vmem:[%s25 + $0x20] sm:$0xf]
    %v307 = vld [vmem:[%s25 + $0x24] sm:$0xf]
    %v308 = vld [vmem:[%s25 + $0x28] sm:$0xf]
    %v309 = vld [vmem:[%s25 + $0x2c] sm:$0xf]
    %v310 = vld [vmem:[%s25 + $0x30] sm:$0xf]
    %v311 = vld [vmem:[%s25 + $0x34] sm:$0xf]
    %v312 = vld [vmem:[%s25 + $0x38] sm:$0xf]
    %v313 = vld [vmem:[%s25 + $0x3c] sm:$0xf]
    %v314 = vld [vmem:[%s27] sm:$0x1]
    %v315 = vld [vmem:[%s29] sm:$0x1]
    %v316 = vld [vmem:[%s31] sm:$0x1]
    %v317 = vpack.c.bf16 %v264, %v263
    %v319 = vlaneseq
    %v320 = vshrl.u32 %v319, 7
    %v321 = vsub.s32 0, %v320
    %v322 = vrot.slane %v297, %v321
    %v323 = vlaneseq
    %v324 = vshrl.u32 %v323, 7
    %v325 = vsub.s32 1, %v324
    %v326 = vrot.slane %v297, %v325
    %v327 = vlaneseq
    %v328 = vshrl.u32 %v327, 7
    %v329 = vsub.s32 2, %v328
    %v330 = vrot.slane %v297, %v329
    %v366 = vunpack.c.l.b16 %v265
    %v367 = vunpack.c.h.b16 %v265
    %v368 = vunpack.c.l.b16 %v266
    %v369 = vunpack.c.l.b16 %v267
    %v370 = vunpack.c.h.b16 %v267
    %v371 = vunpack.c.l.b16 %v268
    %v372 = vunpack.c.l.b16 %v269
    %v373 = vunpack.c.h.b16 %v269
    %v374 = vunpack.c.l.b16 %v270
    %v375 = vunpack.c.l.b16 %v271
    %v376 = vunpack.c.h.b16 %v271
    %v377 = vunpack.c.l.b16 %v272
    %v378 = vunpack.c.l.b16 %v273
    %v379 = vunpack.c.h.b16 %v273
    %v380 = vunpack.c.l.b16 %v274
    %v381 = vunpack.c.l.b16 %v275
    %v382 = vunpack.c.h.b16 %v275
    %v383 = vunpack.c.l.b16 %v276
    %v384 = vunpack.c.l.b16 %v277
    %v385 = vunpack.c.h.b16 %v277
    %v386 = vunpack.c.l.b16 %v278
    %v387 = vunpack.c.l.b16 %v279
    %v388 = vunpack.c.h.b16 %v279
    %v389 = vunpack.c.l.b16 %v280
    %v390 = vunpack.c.l.b16 %v281
    %v391 = vunpack.c.h.b16 %v281
    %v392 = vunpack.c.l.b16 %v282
    %v393 = vunpack.c.l.b16 %v283
    %v394 = vunpack.c.h.b16 %v283
    %v395 = vunpack.c.l.b16 %v284
    %v396 = vunpack.c.l.b16 %v285
    %v397 = vunpack.c.h.b16 %v285
    %v398 = vunpack.c.l.b16 %v286
    %v399 = vunpack.c.l.b16 %v287
    %v400 = vunpack.c.h.b16 %v287
    %v401 = vunpack.c.l.b16 %v288
    %v402 = vunpack.c.l.b16 %v289
    %v403 = vunpack.c.h.b16 %v289
    %v404 = vunpack.c.l.b16 %v290
    %v405 = vunpack.c.l.b16 %v291
    %v406 = vunpack.c.h.b16 %v291
    %v407 = vunpack.c.l.b16 %v292
    %v408 = vunpack.c.l.b16 %v293
    %v409 = vunpack.c.h.b16 %v293
    %v410 = vunpack.c.l.b16 %v294
    %v411 = vunpack.c.l.b16 %v295
    %v412 = vunpack.c.h.b16 %v295
    %v413 = vunpack.c.l.b16 %v296
    %v414 = vpack.c.b16 %v369, %v366
    %v415 = vpack.c.b16 %v370, %v367
    %v416 = vpack.c.b16 %v371, %v368
    %v417 = vpack.c.b16 %v375, %v372
    %v418 = vpack.c.b16 %v376, %v373
    %v419 = vpack.c.b16 %v377, %v374
    %v420 = vpack.c.b16 %v381, %v378
    %v421 = vpack.c.b16 %v382, %v379
    %v422 = vpack.c.b16 %v383, %v380
    %v423 = vpack.c.b16 %v387, %v384
    %v424 = vpack.c.b16 %v388, %v385
    %v425 = vpack.c.b16 %v389, %v386
    %v426 = vpack.c.b16 %v393, %v390
    %v427 = vpack.c.b16 %v394, %v391
    %v428 = vpack.c.b16 %v395, %v392
    %v429 = vpack.c.b16 %v399, %v396
    %v430 = vpack.c.b16 %v400, %v397
    %v431 = vpack.c.b16 %v401, %v398
    %v432 = vpack.c.b16 %v405, %v402
    %v433 = vpack.c.b16 %v406, %v403
    %v434 = vpack.c.b16 %v407, %v404
    %v435 = vpack.c.b16 %v411, %v408
    %v436 = vpack.c.b16 %v412, %v409
    %v437 = vpack.c.b16 %v413, %v410
    %462 = vmatprep.subr.bf16.mxu0 %v415
    %463 = vmatpush1.bf16.msra.mxu0 %v414
    %464 = vmatprep.subr.bf16.mxu0 %v418
    %465 = vmatpush1.bf16.msra.mxu0 %v417
    %466 = vmatprep.subr.bf16.mxu0 %v421
    %467 = vmatpush1.bf16.msra.mxu0 %v420
    %468 = vmatprep.subr.bf16.mxu0 %v424
    %469 = vmatpush1.bf16.msra.mxu0 %v423
    %470 = vmatprep.subr.bf16.mxu0 %v427
    %471 = vmatpush1.bf16.msra.mxu0 %v426
    %472 = vmatprep.subr.bf16.mxu0 %v430
    %473 = vmatpush1.bf16.msra.mxu0 %v429
    %474 = vmatprep.subr.bf16.mxu0 %v433
    %475 = vmatpush1.bf16.msra.mxu0 %v432
    %476 = vmatprep.subr.bf16.mxu0 %v436
    %477 = vmatpush1.bf16.msra.mxu0 %v435
    %478 = vmatprep.subr.bf16.mxu0 0
    %479 = vmatpush1.bf16.msra.mxu0 0
    %480 = vmatprep.subr.bf16.mxu0 0
    %481 = vmatpush1.bf16.msra.mxu0 0
    %482 = vmatprep.subr.bf16.mxu0 0
    %483 = vmatpush1.bf16.msra.mxu0 0
    %484 = vmatprep.subr.bf16.mxu0 0
    %485 = vmatpush1.bf16.msra.mxu0 0
    %486 = vmatprep.subr.bf16.mxu0 0
    %487 = vmatpush1.bf16.msra.mxu0 0
    %488 = vmatprep.subr.bf16.mxu0 0
    %489 = vmatpush1.bf16.msra.mxu0 0
    %490 = vmatprep.subr.bf16.mxu0 0
    %491 = vmatpush1.bf16.msra.mxu0 0
    %492 = vmatprep.subr.bf16.mxu0 0
    %493 = vmatpush1.bf16.msra.mxu0 0
    %494 = vmatprep.mubr.bf16.mxu0 0
    %495 = vmatmul.mubr.bf16.gmra.mrb[0].mxu0 %v317
    %v496 = vpop.f32.mrb[0].mxu0
    %v497 = vadd.f32 %v322, %v496
    %v498 = vpop.f32.mrb[0].mxu0
    %v499 = vadd.f32 %v326, %v498
    %v500 = vpop.f32.mrb[0].mxu0
    %v501 = vadd.f32 %v322, %v500
    %v502 = vpop.f32.mrb[0].mxu0
    %v503 = vadd.f32 %v326, %v502
    %504 = vdwg.mxu0
    %505 = vmatprep.subr.bf16.mxu0 0
    %506 = vmatpush1.bf16.msra.mxu0 %v416
    %507 = vmatprep.subr.bf16.mxu0 0
    %508 = vmatpush1.bf16.msra.mxu0 %v419
    %509 = vmatprep.subr.bf16.mxu0 0
    %510 = vmatpush1.bf16.msra.mxu0 %v422
    %511 = vmatprep.subr.bf16.mxu0 0
    %512 = vmatpush1.bf16.msra.mxu0 %v425
    %513 = vmatprep.subr.bf16.mxu0 0
    %514 = vmatpush1.bf16.msra.mxu0 %v428
    %515 = vmatprep.subr.bf16.mxu0 0
    %516 = vmatpush1.bf16.msra.mxu0 %v431
    %517 = vmatprep.subr.bf16.mxu0 0
    %518 = vmatpush1.bf16.msra.mxu0 %v434
    %519 = vmatprep.subr.bf16.mxu0 0
    %520 = vmatpush1.bf16.msra.mxu0 %v437
    %521 = vmatprep.subr.bf16.mxu0 0
    %522 = vmatpush1.bf16.msra.mxu0 0
    %523 = vmatprep.subr.bf16.mxu0 0
    %524 = vmatpush1.bf16.msra.mxu0 0
    %525 = vmatprep.subr.bf16.mxu0 0
    %526 = vmatpush1.bf16.msra.mxu0 0
    %527 = vmatprep.subr.bf16.mxu0 0
    %528 = vmatpush1.bf16.msra.mxu0 0
    %529 = vmatprep.subr.bf16.mxu0 0
    %530 = vmatpush1.bf16.msra.mxu0 0
    %531 = vmatprep.subr.bf16.mxu0 0
    %532 = vmatpush1.bf16.msra.mxu0 0
    %533 = vmatprep.subr.bf16.mxu0 0
    %534 = vmatpush1.bf16.msra.mxu0 0
    %535 = vmatprep.subr.bf16.mxu0 0
    %536 = vmatpush1.bf16.msra.mxu0 0
    %537 = vmatprep.mubr.bf16.mxu0 0
    %538 = vmatmul.mubr.bf16.gmra.mrb[0].mxu0 %v317
    %v539 = vpop.f32.mrb[0].mxu0
    %v540 = vadd.f32 %v330, %v539
    %v541 = vpop.f32.mrb[0].mxu0
    %v542 = vpop.f32.mrb[0].mxu0
    %v543 = vadd.f32 %v330, %v542
    %v544 = vpop.f32.mrb[0].mxu0
    %545 = vdwg.mxu0
    %v546 = vpack.c.bf16 %v501, %v497
    %v547 = vpack.c.bf16 %v503, %v499
    %v548 = vpack.c.bf16 %v543, %v540
    %v550 = vunpack.c.l.b16 %v546
    %v551 = vunpack.c.h.b16 %v546
    %v552 = vpack.c.b16 %v550, %v550
    %v553 = vpack.c.b16 %v551, %v551
    %v555 = vunpack.c.l.b16 %v547
    %v556 = vunpack.c.h.b16 %v547
    %v557 = vpack.c.b16 %v555, %v555
    %v558 = vpack.c.b16 %v556, %v556
    %v560 = vunpack.c.l.b16 %v548
    %v561 = vunpack.c.h.b16 %v548
    %v562 = vpack.c.b16 %v560, %v560
    %v563 = vpack.c.b16 %v561, %v561
    %v566 = vlaneseq
    %v567 = vshrl.u32 %v566, 7
    %v568 = vsub.s32 0, %v567
    %v569 = vrot.slane %v188, %v568
    %v570 = vlaneseq
    %v571 = vshrl.u32 %v570, 7
    %v572 = vsub.s32 0, %v571
    %v573 = vrot.slane %v189, %v572
    %vm576 = vcmask 261120
    %v578 = vsel %vm576, %v552, 0
    %v581 = vsel %vm576, %v557, 0
    %583 = vmatprep.subr.bf16.mxu0 0
    %584 = vmatpush1.bf16.xpose.msra.mxu0 %v581
    %585 = vmatprep.subr.bf16.mxu0 0
    %586 = vmatpush1.bf16.xpose.msra.mxu0 0
    %587 = vmatprep.subr.bf16.mxu0 0
    %588 = vmatpush1.bf16.xpose.msra.mxu0 0
    %589 = vmatprep.subr.bf16.mxu0 0
    %590 = vmatpush1.bf16.xpose.msra.mxu0 0
    %591 = vmatprep.subr.bf16.mxu0 0
    %592 = vmatpush1.bf16.xpose.msra.mxu0 0
    %593 = vmatprep.subr.bf16.mxu0 0
    %594 = vmatpush1.bf16.xpose.msra.mxu0 0
    %595 = vmatprep.subr.bf16.mxu0 0
    %596 = vmatpush1.bf16.xpose.msra.mxu0 0
    %597 = vmatprep.subr.bf16.mxu0 0
    %598 = vmatpush1.bf16.xpose.msra.mxu0 0
    %599 = vmatprep.subr.bf16.mxu0 0
    %600 = vmatpush1.bf16.xpose.msra.mxu0 0
    %601 = vmatprep.subr.bf16.mxu0 0
    %602 = vmatpush1.bf16.xpose.msra.mxu0 0
    %603 = vmatprep.subr.bf16.mxu0 0
    %604 = vmatpush1.bf16.xpose.msra.mxu0 0
    %605 = vmatprep.subr.bf16.mxu0 0
    %606 = vmatpush1.bf16.xpose.msra.mxu0 0
    %607 = vmatprep.subr.bf16.mxu0 0
    %608 = vmatpush1.bf16.xpose.msra.mxu0 0
    %609 = vmatprep.subr.bf16.mxu0 0
    %610 = vmatpush1.bf16.xpose.msra.mxu0 0
    %611 = vmatprep.subr.bf16.mxu0 0
    %612 = vmatpush1.bf16.xpose.msra.mxu0 0
    %613 = vmatprep.subr.bf16.mxu0 0
    %614 = vmatpush1.bf16.xpose.msra.mxu0 0
    %615 = vmatprep.mubr.bf16.mxu0 0
    %616 = vmatmul.mubr.bf16.gmra.mrb[0].mxu0 %v578
    %v617 = vpop.f32.mrb[0].mxu0
    %v618 = vadd.f32 %v569, %v617
    %v619 = vpop.f32.mrb[0].mxu0
    %v620 = vpop.f32.mrb[0].mxu0
    %v621 = vpop.f32.mrb[0].mxu0
    %622 = vdwg.mxu0
    %v624 = vsel %vm576, %v553, 0
    %v627 = vsel %vm576, %v558, 0
    %629 = vmatprep.subr.bf16.mxu0 0
    %630 = vmatpush1.bf16.xpose.msra.mxu0 %v627
    %631 = vmatprep.subr.bf16.mxu0 0
    %632 = vmatpush1.bf16.xpose.msra.mxu0 0
    %633 = vmatprep.subr.bf16.mxu0 0
    %634 = vmatpush1.bf16.xpose.msra.mxu0 0
    %635 = vmatprep.subr.bf16.mxu0 0
    %636 = vmatpush1.bf16.xpose.msra.mxu0 0
    %637 = vmatprep.subr.bf16.mxu0 0
    %638 = vmatpush1.bf16.xpose.msra.mxu0 0
    %639 = vmatprep.subr.bf16.mxu0 0
    %640 = vmatpush1.bf16.xpose.msra.mxu0 0
    %641 = vmatprep.subr.bf16.mxu0 0
    %642 = vmatpush1.bf16.xpose.msra.mxu0 0
    %643 = vmatprep.subr.bf16.mxu0 0
    %644 = vmatpush1.bf16.xpose.msra.mxu0 0
    %645 = vmatprep.subr.bf16.mxu0 0
    %646 = vmatpush1.bf16.xpose.msra.mxu0 0
    %647 = vmatprep.subr.bf16.mxu0 0
    %648 = vmatpush1.bf16.xpose.msra.mxu0 0
    %649 = vmatprep.subr.bf16.mxu0 0
    %650 = vmatpush1.bf16.xpose.msra.mxu0 0
    %651 = vmatprep.subr.bf16.mxu0 0
    %652 = vmatpush1.bf16.xpose.msra.mxu0 0
    %653 = vmatprep.subr.bf16.mxu0 0
    %654 = vmatpush1.bf16.xpose.msra.mxu0 0
    %655 = vmatprep.subr.bf16.mxu0 0
    %656 = vmatpush1.bf16.xpose.msra.mxu0 0
    %657 = vmatprep.subr.bf16.mxu0 0
    %658 = vmatpush1.bf16.xpose.msra.mxu0 0
    %659 = vmatprep.subr.bf16.mxu0 0
    %660 = vmatpush1.bf16.xpose.msra.mxu0 0
    %661 = vmatprep.mubr.bf16.mxu0 0
    %662 = vmatmul.mubr.bf16.gmra.mrb[0].mxu0 %v624
    %v663 = vpop.f32.mrb[0].mxu0
    %v664 = vadd.f32 %v573, %v663
    %v665 = vpop.f32.mrb[0].mxu0
    %v666 = vpop.f32.mrb[0].mxu0
    %v667 = vpop.f32.mrb[0].mxu0
    %668 = vdwg.mxu0
    %vm669 = vcmask 64512
    %v670 = vsel %vm669, %v618, -inf
    %671 = vmax.xlane.f32.xlu0 %v670
    %v672 = vpop.xlane.xlu0 %671
    %v673 = vsel %vm669, %v664, -inf
    %674 = vmax.xlane.f32.xlu0 %v673
    %v675 = vpop.xlane.xlu0 %674
    %v676 = vsub.f32 %v618, %v672
    %v677 = vsub.f32 %v664, %v675
    %v678 = vmul.f32 %v676, 1.442695
    %v679 = vpow.pop %v678
    %v680 = vmul.f32 %v677, 1.442695
    %v681 = vpow.pop %v680
    %v682 = vsel %vm669, %v679, 0.0
    %683 = vadd.xlane.f32.xlu0 %v682
    %v684 = vpop.xlane.xlu0 %683
    %v685 = vsel %vm669, %v681, 0.0
    %686 = vadd.xlane.f32.xlu0 %v685
    %v687 = vpop.xlane.xlu0 %686
    %v688 = vrcp.pop %v684
    %v689 = vrcp.pop %v687
    %v690 = vmul.f32 %v679, %v688
    %v691 = vmul.f32 %v681, %v689
    %v692 = vpack.c.bf16 %v690, %v690
    %v693 = vpack.c.bf16 %v691, %v691
    %v695 = vsel %vm669, %v692, 0
    %vm697 = vcmask 1043456
    %v699 = vsel %vm697, %v562, 0
    %701 = vmatprep.subr.bf16.mxu0 0
    %702 = vmatpush1.bf16.msra.mxu0 %v699
    %703 = vmatprep.subr.bf16.mxu0 0
    %704 = vmatpush1.bf16.msra.mxu0 0
    %705 = vmatprep.subr.bf16.mxu0 0
    %706 = vmatpush1.bf16.msra.mxu0 0
    %707 = vmatprep.subr.bf16.mxu0 0
    %708 = vmatpush1.bf16.msra.mxu0 0
    %709 = vmatprep.subr.bf16.mxu0 0
    %710 = vmatpush1.bf16.msra.mxu0 0
    %711 = vmatprep.subr.bf16.mxu0 0
    %712 = vmatpush1.bf16.msra.mxu0 0
    %713 = vmatprep.subr.bf16.mxu0 0
    %714 = vmatpush1.bf16.msra.mxu0 0
    %715 = vmatprep.subr.bf16.mxu0 0
    %716 = vmatpush1.bf16.msra.mxu0 0
    %717 = vmatprep.subr.bf16.mxu0 0
    %718 = vmatpush1.bf16.msra.mxu0 0
    %719 = vmatprep.subr.bf16.mxu0 0
    %720 = vmatpush1.bf16.msra.mxu0 0
    %721 = vmatprep.subr.bf16.mxu0 0
    %722 = vmatpush1.bf16.msra.mxu0 0
    %723 = vmatprep.subr.bf16.mxu0 0
    %724 = vmatpush1.bf16.msra.mxu0 0
    %725 = vmatprep.subr.bf16.mxu0 0
    %726 = vmatpush1.bf16.msra.mxu0 0
    %727 = vmatprep.subr.bf16.mxu0 0
    %728 = vmatpush1.bf16.msra.mxu0 0
    %729 = vmatprep.subr.bf16.mxu0 0
    %730 = vmatpush1.bf16.msra.mxu0 0
    %731 = vmatprep.subr.bf16.mxu0 0
    %732 = vmatpush1.bf16.msra.mxu0 0
    %733 = vmatprep.mubr.bf16.mxu0 0
    %734 = vmatmul.mubr.bf16.gmra.mrb[0].mxu0 %v695
    %v735 = vpop.f32.mrb[0].mxu0
    %v736 = vadd.f32 0.0, %v735
    %v737 = vpop.f32.mrb[0].mxu0
    %v738 = vpop.f32.mrb[0].mxu0
    %v739 = vpop.f32.mrb[0].mxu0
    %740 = vdwg.mxu0
    %v742 = vsel %vm669, %v693, 0
    %v745 = vsel %vm697, %v563, 0
    %747 = vmatprep.subr.bf16.mxu0 0
    %748 = vmatpush1.bf16.msra.mxu0 %v745
    %749 = vmatprep.subr.bf16.mxu0 0
    %750 = vmatpush1.bf16.msra.mxu0 0
    %751 = vmatprep.subr.bf16.mxu0 0
    %752 = vmatpush1.bf16.msra.mxu0 0
    %753 = vmatprep.subr.bf16.mxu0 0
    %754 = vmatpush1.bf16.msra.mxu0 0
    %755 = vmatprep.subr.bf16.mxu0 0
    %756 = vmatpush1.bf16.msra.mxu0 0
    %757 = vmatprep.subr.bf16.mxu0 0
    %758 = vmatpush1.bf16.msra.mxu0 0
    %759 = vmatprep.subr.bf16.mxu0 0
    %760 = vmatpush1.bf16.msra.mxu0 0
    %761 = vmatprep.subr.bf16.mxu0 0
    %762 = vmatpush1.bf16.msra.mxu0 0
    %763 = vmatprep.subr.bf16.mxu0 0
    %764 = vmatpush1.bf16.msra.mxu0 0
    %765 = vmatprep.subr.bf16.mxu0 0
    %766 = vmatpush1.bf16.msra.mxu0 0
    %767 = vmatprep.subr.bf16.mxu0 0
    %768 = vmatpush1.bf16.msra.mxu0 0
    %769 = vmatprep.subr.bf16.mxu0 0
    %770 = vmatpush1.bf16.msra.mxu0 0
    %771 = vmatprep.subr.bf16.mxu0 0
    %772 = vmatpush1.bf16.msra.mxu0 0
    %773 = vmatprep.subr.bf16.mxu0 0
    %774 = vmatpush1.bf16.msra.mxu0 0
    %775 = vmatprep.subr.bf16.mxu0 0
    %776 = vmatpush1.bf16.msra.mxu0 0
    %777 = vmatprep.subr.bf16.mxu0 0
    %778 = vmatpush1.bf16.msra.mxu0 0
    %779 = vmatprep.mubr.bf16.mxu0 0
    %780 = vmatmul.mubr.bf16.gmra.mrb[0].mxu0 %v742
    %v781 = vpop.f32.mrb[0].mxu0
    %v782 = vadd.f32 0.0, %v781
    %v783 = vpop.f32.mrb[0].mxu0
    %v784 = vpop.f32.mrb[0].mxu0
    %v785 = vpop.f32.mrb[0].mxu0
    %786 = vdwg.mxu0
    %787 = vrot.lane.b32.xlu0 %v552, 96
    %v788 = vpop.permute.xlu0 %787
    %789 = vrot.lane.b32.xlu0 %v557, 96
    %v790 = vpop.permute.xlu0 %789
    %v792 = vsel %vm576, %v788, 0
    %v795 = vsel %vm576, %v790, 0
    %797 = vmatprep.subr.bf16.mxu0 0
    %798 = vmatpush1.bf16.xpose.msra.mxu0 %v795
    %799 = vmatprep.subr.bf16.mxu0 0
    %800 = vmatpush1.bf16.xpose.msra.mxu0 0
    %801 = vmatprep.subr.bf16.mxu0 0
    %802 = vmatpush1.bf16.xpose.msra.mxu0 0
    %803 = vmatprep.subr.bf16.mxu0 0
    %804 = vmatpush1.bf16.xpose.msra.mxu0 0
    %805 = vmatprep.subr.bf16.mxu0 0
    %806 = vmatpush1.bf16.xpose.msra.mxu0 0
    %807 = vmatprep.subr.bf16.mxu0 0
    %808 = vmatpush1.bf16.xpose.msra.mxu0 0
    %809 = vmatprep.subr.bf16.mxu0 0
    %810 = vmatpush1.bf16.xpose.msra.mxu0 0
    %811 = vmatprep.subr.bf16.mxu0 0
    %812 = vmatpush1.bf16.xpose.msra.mxu0 0
    %813 = vmatprep.subr.bf16.mxu0 0
    %814 = vmatpush1.bf16.xpose.msra.mxu0 0
    %815 = vmatprep.subr.bf16.mxu0 0
    %816 = vmatpush1.bf16.xpose.msra.mxu0 0
    %817 = vmatprep.subr.bf16.mxu0 0
    %818 = vmatpush1.bf16.xpose.msra.mxu0 0
    %819 = vmatprep.subr.bf16.mxu0 0
    %820 = vmatpush1.bf16.xpose.msra.mxu0 0
    %821 = vmatprep.subr.bf16.mxu0 0
    %822 = vmatpush1.bf16.xpose.msra.mxu0 0
    %823 = vmatprep.subr.bf16.mxu0 0
    %824 = vmatpush1.bf16.xpose.msra.mxu0 0
    %825 = vmatprep.subr.bf16.mxu0 0
    %826 = vmatpush1.bf16.xpose.msra.mxu0 0
    %827 = vmatprep.subr.bf16.mxu0 0
    %828 = vmatpush1.bf16.xpose.msra.mxu0 0
    %829 = vmatprep.mubr.bf16.mxu0 0
    %830 = vmatmul.mubr.bf16.gmra.mrb[0].mxu0 %v792
    %v831 = vpop.f32.mrb[0].mxu0
    %v832 = vadd.f32 %v569, %v831
    %v833 = vpop.f32.mrb[0].mxu0
    %v834 = vpop.f32.mrb[0].mxu0
    %v835 = vpop.f32.mrb[0].mxu0
    %836 = vdwg.mxu0
    %837 = vrot.lane.b32.xlu0 %v553, 96
    %v838 = vpop.permute.xlu0 %837
    %839 = vrot.lane.b32.xlu0 %v558, 96
    %v840 = vpop.permute.xlu0 %839
    %v842 = vsel %vm576, %v838, 0
    %v845 = vsel %vm576, %v840, 0
    %847 = vmatprep.subr.bf16.mxu0 0
    %848 = vmatpush1.bf16.xpose.msra.mxu0 %v845
    %849 = vmatprep.subr.bf16.mxu0 0
    %850 = vmatpush1.bf16.xpose.msra.mxu0 0
    %851 = vmatprep.subr.bf16.mxu0 0
    %852 = vmatpush1.bf16.xpose.msra.mxu0 0
    %853 = vmatprep.subr.bf16.mxu0 0
    %854 = vmatpush1.bf16.xpose.msra.mxu0 0
    %855 = vmatprep.subr.bf16.mxu0 0
    %856 = vmatpush1.bf16.xpose.msra.mxu0 0
    %857 = vmatprep.subr.bf16.mxu0 0
    %858 = vmatpush1.bf16.xpose.msra.mxu0 0
    %859 = vmatprep.subr.bf16.mxu0 0
    %860 = vmatpush1.bf16.xpose.msra.mxu0 0
    %861 = vmatprep.subr.bf16.mxu0 0
    %862 = vmatpush1.bf16.xpose.msra.mxu0 0
    %863 = vmatprep.subr.bf16.mxu0 0
    %864 = vmatpush1.bf16.xpose.msra.mxu0 0
    %865 = vmatprep.subr.bf16.mxu0 0
    %866 = vmatpush1.bf16.xpose.msra.mxu0 0
    %867 = vmatprep.subr.bf16.mxu0 0
    %868 = vmatpush1.bf16.xpose.msra.mxu0 0
    %869 = vmatprep.subr.bf16.mxu0 0
    %870 = vmatpush1.bf16.xpose.msra.mxu0 0
    %871 = vmatprep.subr.bf16.mxu0 0
    %872 = vmatpush1.bf16.xpose.msra.mxu0 0
    %873 = vmatprep.subr.bf16.mxu0 0
    %874 = vmatpush1.bf16.xpose.msra.mxu0 0
    %875 = vmatprep.subr.bf16.mxu0 0
    %876 = vmatpush1.bf16.xpose.msra.mxu0 0
    %877 = vmatprep.subr.bf16.mxu0 0
    %878 = vmatpush1.bf16.xpose.msra.mxu0 0
    %879 = vmatprep.mubr.bf16.mxu0 0
    %880 = vmatmul.mubr.bf16.gmra.mrb[0].mxu0 %v842
    %v881 = vpop.f32.mrb[0].mxu0
    %v882 = vadd.f32 %v573, %v881
    %v883 = vpop.f32.mrb[0].mxu0
    %v884 = vpop.f32.mrb[0].mxu0
    %v885 = vpop.f32.mrb[0].mxu0
    %886 = vdwg.mxu0
    %v887 = vsel %vm669, %v832, -inf
    %888 = vmax.xlane.f32.xlu0 %v887
    %v889 = vpop.xlane.xlu0 %888
    %v890 = vsel %vm669, %v882, -inf
    %891 = vmax.xlane.f32.xlu0 %v890
    %v892 = vpop.xlane.xlu0 %891
    %v893 = vsub.f32 %v832, %v889
    %v894 = vsub.f32 %v882, %v892
    %v895 = vmul.f32 %v893, 1.442695
    %v896 = vpow.pop %v895
    %v897 = vmul.f32 %v894, 1.442695
    %v898 = vpow.pop %v897
    %v899 = vsel %vm669, %v896, 0.0
    %900 = vadd.xlane.f32.xlu0 %v899
    %v901 = vpop.xlane.xlu0 %900
    %v902 = vsel %vm669, %v898, 0.0
    %903 = vadd.xlane.f32.xlu0 %v902
    %v904 = vpop.xlane.xlu0 %903
    %v905 = vrcp.pop %v901
    %v906 = vrcp.pop %v904
    %v907 = vmul.f32 %v896, %v905
    %v908 = vmul.f32 %v898, %v906
    %v909 = vpack.c.bf16 %v907, %v907
    %v910 = vpack.c.bf16 %v908, %v908
    %911 = vrot.lane.b32.xlu0 %v562, 96
    %v912 = vpop.permute.xlu0 %911
    %v914 = vsel %vm669, %v909, 0
    %v917 = vsel %vm697, %v912, 0
    %919 = vmatprep.subr.bf16.mxu0 0
    %920 = vmatpush1.bf16.msra.mxu0 %v917
    %921 = vmatprep.subr.bf16.mxu0 0
    %922 = vmatpush1.bf16.msra.mxu0 0
    %923 = vmatprep.subr.bf16.mxu0 0
    %924 = vmatpush1.bf16.msra.mxu0 0
    %925 = vmatprep.subr.bf16.mxu0 0
    %926 = vmatpush1.bf16.msra.mxu0 0
    %927 = vmatprep.subr.bf16.mxu0 0
    %928 = vmatpush1.bf16.msra.mxu0 0
    %929 = vmatprep.subr.bf16.mxu0 0
    %930 = vmatpush1.bf16.msra.mxu0 0
    %931 = vmatprep.subr.bf16.mxu0 0
    %932 = vmatpush1.bf16.msra.mxu0 0
    %933 = vmatprep.subr.bf16.mxu0 0
    %934 = vmatpush1.bf16.msra.mxu0 0
    %935 = vmatprep.subr.bf16.mxu0 0
    %936 = vmatpush1.bf16.msra.mxu0 0
    %937 = vmatprep.subr.bf16.mxu0 0
    %938 = vmatpush1.bf16.msra.mxu0 0
    %939 = vmatprep.subr.bf16.mxu0 0
    %940 = vmatpush1.bf16.msra.mxu0 0
    %941 = vmatprep.subr.bf16.mxu0 0
    %942 = vmatpush1.bf16.msra.mxu0 0
    %943 = vmatprep.subr.bf16.mxu0 0
    %944 = vmatpush1.bf16.msra.mxu0 0
    %945 = vmatprep.subr.bf16.mxu0 0
    %946 = vmatpush1.bf16.msra.mxu0 0
    %947 = vmatprep.subr.bf16.mxu0 0
    %948 = vmatpush1.bf16.msra.mxu0 0
    %949 = vmatprep.subr.bf16.mxu0 0
    %950 = vmatpush1.bf16.msra.mxu0 0
    %951 = vmatprep.mubr.bf16.mxu0 0
    %952 = vmatmul.mubr.bf16.gmra.mrb[0].mxu0 %v914
    %v953 = vpop.f32.mrb[0].mxu0
    %v954 = vadd.f32 0.0, %v953
    %v955 = vpop.f32.mrb[0].mxu0
    %v956 = vpop.f32.mrb[0].mxu0
    %v957 = vpop.f32.mrb[0].mxu0
    %958 = vdwg.mxu0
    %959 = vrot.lane.b32.xlu0 %v563, 96
    %v960 = vpop.permute.xlu0 %959
    %v962 = vsel %vm669, %v910, 0
    %v965 = vsel %vm697, %v960, 0
    %967 = vmatprep.subr.bf16.mxu0 0
    %968 = vmatpush1.bf16.msra.mxu0 %v965
    %969 = vmatprep.subr.bf16.mxu0 0
    %970 = vmatpush1.bf16.msra.mxu0 0
    %971 = vmatprep.subr.bf16.mxu0 0
    %972 = vmatpush1.bf16.msra.mxu0 0
    %973 = vmatprep.subr.bf16.mxu0 0
    %974 = vmatpush1.bf16.msra.mxu0 0
    %975 = vmatprep.subr.bf16.mxu0 0
    %976 = vmatpush1.bf16.msra.mxu0 0
    %977 = vmatprep.subr.bf16.mxu0 0
    %978 = vmatpush1.bf16.msra.mxu0 0
    %979 = vmatprep.subr.bf16.mxu0 0
    %980 = vmatpush1.bf16.msra.mxu0 0
    %981 = vmatprep.subr.bf16.mxu0 0
    %982 = vmatpush1.bf16.msra.mxu0 0
    %983 = vmatprep.subr.bf16.mxu0 0
    %984 = vmatpush1.bf16.msra.mxu0 0
    %985 = vmatprep.subr.bf16.mxu0 0
    %986 = vmatpush1.bf16.msra.mxu0 0
    %987 = vmatprep.subr.bf16.mxu0 0
    %988 = vmatpush1.bf16.msra.mxu0 0
    %989 = vmatprep.subr.bf16.mxu0 0
    %990 = vmatpush1.bf16.msra.mxu0 0
    %991 = vmatprep.subr.bf16.mxu0 0
    %992 = vmatpush1.bf16.msra.mxu0 0
    %993 = vmatprep.subr.bf16.mxu0 0
    %994 = vmatpush1.bf16.msra.mxu0 0
    %995 = vmatprep.subr.bf16.mxu0 0
    %996 = vmatpush1.bf16.msra.mxu0 0
    %997 = vmatprep.subr.bf16.mxu0 0
    %998 = vmatpush1.bf16.msra.mxu0 0
    %999 = vmatprep.mubr.bf16.mxu0 0
    %1000 = vmatmul.mubr.bf16.gmra.mrb[0].mxu0 %v962
    %v1001 = vpop.f32.mrb[0].mxu0
    %v1002 = vadd.f32 0.0, %v1001
    %v1003 = vpop.f32.mrb[0].mxu0
    %v1004 = vpop.f32.mrb[0].mxu0
    %v1005 = vpop.f32.mrb[0].mxu0
    %1006 = vdwg.mxu0
    %1007 = vrot.lane.b32.xlu0 %v552, 64
    %v1008 = vpop.permute.xlu0 %1007
    %1009 = vrot.lane.b32.xlu0 %v557, 64
    %v1010 = vpop.permute.xlu0 %1009
    %v1012 = vsel %vm576, %v1008, 0
    %v1015 = vsel %vm576, %v1010, 0
    %1017 = vmatprep.subr.bf16.mxu0 0
    %1018 = vmatpush1.bf16.xpose.msra.mxu0 %v1015
    %1019 = vmatprep.subr.bf16.mxu0 0
    %1020 = vmatpush1.bf16.xpose.msra.mxu0 0
    %1021 = vmatprep.subr.bf16.mxu0 0
    %1022 = vmatpush1.bf16.xpose.msra.mxu0 0
    %1023 = vmatprep.subr.bf16.mxu0 0
    %1024 = vmatpush1.bf16.xpose.msra.mxu0 0
    %1025 = vmatprep.subr.bf16.mxu0 0
    %1026 = vmatpush1.bf16.xpose.msra.mxu0 0
    %1027 = vmatprep.subr.bf16.mxu0 0
    %1028 = vmatpush1.bf16.xpose.msra.mxu0 0
    %1029 = vmatprep.subr.bf16.mxu0 0
    %1030 = vmatpush1.bf16.xpose.msra.mxu0 0
    %1031 = vmatprep.subr.bf16.mxu0 0
    %1032 = vmatpush1.bf16.xpose.msra.mxu0 0
    %1033 = vmatprep.subr.bf16.mxu0 0
    %1034 = vmatpush1.bf16.xpose.msra.mxu0 0
    %1035 = vmatprep.subr.bf16.mxu0 0
    %1036 = vmatpush1.bf16.xpose.msra.mxu0 0
    %1037 = vmatprep.subr.bf16.mxu0 0
    %1038 = vmatpush1.bf16.xpose.msra.mxu0 0
    %1039 = vmatprep.subr.bf16.mxu0 0
    %1040 = vmatpush1.bf16.xpose.msra.mxu0 0
    %1041 = vmatprep.subr.bf16.mxu0 0
    %1042 = vmatpush1.bf16.xpose.msra.mxu0 0
    %1043 = vmatprep.subr.bf16.mxu0 0
    %1044 = vmatpush1.bf16.xpose.msra.mxu0 0
    %1045 = vmatprep.subr.bf16.mxu0 0
    %1046 = vmatpush1.bf16.xpose.msra.mxu0 0
    %1047 = vmatprep.subr.bf16.mxu0 0
    %1048 = vmatpush1.bf16.xpose.msra.mxu0 0
    %1049 = vmatprep.mubr.bf16.mxu0 0
    %1050 = vmatmul.mubr.bf16.gmra.mrb[0].mxu0 %v1012
    %v1051 = vpop.f32.mrb[0].mxu0
    %v1052 = vadd.f32 %v569, %v1051
    %v1053 = vpop.f32.mrb[0].mxu0
    %v1054 = vpop.f32.mrb[0].mxu0
    %v1055 = vpop.f32.mrb[0].mxu0
    %1056 = vdwg.mxu0
    %1057 = vrot.lane.b32.xlu0 %v553, 64
    %v1058 = vpop.permute.xlu0 %1057
    %1059 = vrot.lane.b32.xlu0 %v558, 64
    %v1060 = vpop.permute.xlu0 %1059
    %v1062 = vsel %vm576, %v1058, 0
    %v1065 = vsel %vm576, %v1060, 0
    %1067 = vmatprep.subr.bf16.mxu0 0
    %1068 = vmatpush1.bf16.xpose.msra.mxu0 %v1065
    %1069 = vmatprep.subr.bf16.mxu0 0
    %1070 = vmatpush1.bf16.xpose.msra.mxu0 0
    %1071 = vmatprep.subr.bf16.mxu0 0
    %1072 = vmatpush1.bf16.xpose.msra.mxu0 0
    %1073 = vmatprep.subr.bf16.mxu0 0
    %1074 = vmatpush1.bf16.xpose.msra.mxu0 0
    %1075 = vmatprep.subr.bf16.mxu0 0
    %1076 = vmatpush1.bf16.xpose.msra.mxu0 0
    %1077 = vmatprep.subr.bf16.mxu0 0
    %1078 = vmatpush1.bf16.xpose.msra.mxu0 0
    %1079 = vmatprep.subr.bf16.mxu0 0
    %1080 = vmatpush1.bf16.xpose.msra.mxu0 0
    %1081 = vmatprep.subr.bf16.mxu0 0
    %1082 = vmatpush1.bf16.xpose.msra.mxu0 0
    %1083 = vmatprep.subr.bf16.mxu0 0
    %1084 = vmatpush1.bf16.xpose.msra.mxu0 0
    %1085 = vmatprep.subr.bf16.mxu0 0
    %1086 = vmatpush1.bf16.xpose.msra.mxu0 0
    %1087 = vmatprep.subr.bf16.mxu0 0
    %1088 = vmatpush1.bf16.xpose.msra.mxu0 0
    %1089 = vmatprep.subr.bf16.mxu0 0
    %1090 = vmatpush1.bf16.xpose.msra.mxu0 0
    %1091 = vmatprep.subr.bf16.mxu0 0
    %1092 = vmatpush1.bf16.xpose.msra.mxu0 0
    %1093 = vmatprep.subr.bf16.mxu0 0
    %1094 = vmatpush1.bf16.xpose.msra.mxu0 0
    %1095 = vmatprep.subr.bf16.mxu0 0
    %1096 = vmatpush1.bf16.xpose.msra.mxu0 0
    %1097 = vmatprep.subr.bf16.mxu0 0
    %1098 = vmatpush1.bf16.xpose.msra.mxu0 0
    %1099 = vmatprep.mubr.bf16.mxu0 0
    %1100 = vmatmul.mubr.bf16.gmra.mrb[0].mxu0 %v1062
    %v1101 = vpop.f32.mrb[0].mxu0
    %v1102 = vadd.f32 %v573, %v1101
    %v1103 = vpop.f32.mrb[0].mxu0
    %v1104 = vpop.f32.mrb[0].mxu0
    %v1105 = vpop.f32.mrb[0].mxu0
    %1106 = vdwg.mxu0
    %v1107 = vsel %vm669, %v1052, -inf
    %1108 = vmax.xlane.f32.xlu0 %v1107
    %v1109 = vpop.xlane.xlu0 %1108
    %v1110 = vsel %vm669, %v1102, -inf
    %1111 = vmax.xlane.f32.xlu0 %v1110
    %v1112 = vpop.xlane.xlu0 %1111
    %v1113 = vsub.f32 %v1052, %v1109
    %v1114 = vsub.f32 %v1102, %v1112
    %v1115 = vmul.f32 %v1113, 1.442695
    %v1116 = vpow.pop %v1115
    %v1117 = vmul.f32 %v1114, 1.442695
    %v1118 = vpow.pop %v1117
    %v1119 = vsel %vm669, %v1116, 0.0
    %1120 = vadd.xlane.f32.xlu0 %v1119
    %v1121 = vpop.xlane.xlu0 %1120
    %v1122 = vsel %vm669, %v1118, 0.0
    %1123 = vadd.xlane.f32.xlu0 %v1122
    %v1124 = vpop.xlane.xlu0 %1123
    %v1125 = vrcp.pop %v1121
    %v1126 = vrcp.pop %v1124
    %v1127 = vmul.f32 %v1116, %v1125
    %v1128 = vmul.f32 %v1118, %v1126
    %v1129 = vpack.c.bf16 %v1127, %v1127
    %v1130 = vpack.c.bf16 %v1128, %v1128
    %1131 = vrot.lane.b32.xlu0 %v562, 64
    %v1132 = vpop.permute.xlu0 %1131
    %v1134 = vsel %vm669, %v1129, 0
    %v1137 = vsel %vm697, %v1132, 0
    %1139 = vmatprep.subr.bf16.mxu0 0
    %1140 = vmatpush1.bf16.msra.mxu0 %v1137
    %1141 = vmatprep.subr.bf16.mxu0 0
    %1142 = vmatpush1.bf16.msra.mxu0 0
    %1143 = vmatprep.subr.bf16.mxu0 0
    %1144 = vmatpush1.bf16.msra.mxu0 0
    %1145 = vmatprep.subr.bf16.mxu0 0
    %1146 = vmatpush1.bf16.msra.mxu0 0
    %1147 = vmatprep.subr.bf16.mxu0 0
    %1148 = vmatpush1.bf16.msra.mxu0 0
    %1149 = vmatprep.subr.bf16.mxu0 0
    %1150 = vmatpush1.bf16.msra.mxu0 0
    %1151 = vmatprep.subr.bf16.mxu0 0
    %1152 = vmatpush1.bf16.msra.mxu0 0
    %1153 = vmatprep.subr.bf16.mxu0 0
    %1154 = vmatpush1.bf16.msra.mxu0 0
    %1155 = vmatprep.subr.bf16.mxu0 0
    %1156 = vmatpush1.bf16.msra.mxu0 0
    %1157 = vmatprep.subr.bf16.mxu0 0
    %1158 = vmatpush1.bf16.msra.mxu0 0
    %1159 = vmatprep.subr.bf16.mxu0 0
    %1160 = vmatpush1.bf16.msra.mxu0 0
    %1161 = vmatprep.subr.bf16.mxu0 0
    %1162 = vmatpush1.bf16.msra.mxu0 0
    %1163 = vmatprep.subr.bf16.mxu0 0
    %1164 = vmatpush1.bf16.msra.mxu0 0
    %1165 = vmatprep.subr.bf16.mxu0 0
    %1166 = vmatpush1.bf16.msra.mxu0 0
    %1167 = vmatprep.subr.bf16.mxu0 0
    %1168 = vmatpush1.bf16.msra.mxu0 0
    %1169 = vmatprep.subr.bf16.mxu0 0
    %1170 = vmatpush1.bf16.msra.mxu0 0
    %1171 = vmatprep.mubr.bf16.mxu0 0
    %1172 = vmatmul.mubr.bf16.gmra.mrb[0].mxu0 %v1134
    %v1173 = vpop.f32.mrb[0].mxu0
    %v1174 = vadd.f32 0.0, %v1173
    %v1175 = vpop.f32.mrb[0].mxu0
    %v1176 = vpop.f32.mrb[0].mxu0
    %v1177 = vpop.f32.mrb[0].mxu0
    %1178 = vdwg.mxu0
    %1179 = vrot.lane.b32.xlu0 %v563, 64
    %v1180 = vpop.permute.xlu0 %1179
    %v1182 = vsel %vm669, %v1130, 0
    %v1185 = vsel %vm697, %v1180, 0
    %1187 = vmatprep.subr.bf16.mxu0 0
    %1188 = vmatpush1.bf16.msra.mxu0 %v1185
    %1189 = vmatprep.subr.bf16.mxu0 0
    %1190 = vmatpush1.bf16.msra.mxu0 0
    %1191 = vmatprep.subr.bf16.mxu0 0
    %1192 = vmatpush1.bf16.msra.mxu0 0
    %1193 = vmatprep.subr.bf16.mxu0 0
    %1194 = vmatpush1.bf16.msra.mxu0 0
    %1195 = vmatprep.subr.bf16.mxu0 0
    %1196 = vmatpush1.bf16.msra.mxu0 0
    %1197 = vmatprep.subr.bf16.mxu0 0
    %1198 = vmatpush1.bf16.msra.mxu0 0
    %1199 = vmatprep.subr.bf16.mxu0 0
    %1200 = vmatpush1.bf16.msra.mxu0 0
    %1201 = vmatprep.subr.bf16.mxu0 0
    %1202 = vmatpush1.bf16.msra.mxu0 0
    %1203 = vmatprep.subr.bf16.mxu0 0
    %1204 = vmatpush1.bf16.msra.mxu0 0
    %1205 = vmatprep.subr.bf16.mxu0 0
    %1206 = vmatpush1.bf16.msra.mxu0 0
    %1207 = vmatprep.subr.bf16.mxu0 0
    %1208 = vmatpush1.bf16.msra.mxu0 0
    %1209 = vmatprep.subr.bf16.mxu0 0
    %1210 = vmatpush1.bf16.msra.mxu0 0
    %1211 = vmatprep.subr.bf16.mxu0 0
    %1212 = vmatpush1.bf16.msra.mxu0 0
    %1213 = vmatprep.subr.bf16.mxu0 0
    %1214 = vmatpush1.bf16.msra.mxu0 0
    %1215 = vmatprep.subr.bf16.mxu0 0
    %1216 = vmatpush1.bf16.msra.mxu0 0
    %1217 = vmatprep.subr.bf16.mxu0 0
    %1218 = vmatpush1.bf16.msra.mxu0 0
    %1219 = vmatprep.mubr.bf16.mxu0 0
    %1220 = vmatmul.mubr.bf16.gmra.mrb[0].mxu0 %v1182
    %v1221 = vpop.f32.mrb[0].mxu0
    %v1222 = vadd.f32 0.0, %v1221
    %v1223 = vpop.f32.mrb[0].mxu0
    %v1224 = vpop.f32.mrb[0].mxu0
    %v1225 = vpop.f32.mrb[0].mxu0
    %1226 = vdwg.mxu0
    %1227 = vrot.lane.b32.xlu0 %v552, 32
    %v1228 = vpop.permute.xlu0 %1227
    %1229 = vrot.lane.b32.xlu0 %v557, 32
    %v1230 = vpop.permute.xlu0 %1229
    %v1232 = vsel %vm576, %v1228, 0
    %v1235 = vsel %vm576, %v1230, 0
    %1237 = vmatprep.subr.bf16.mxu0 0
    %1238 = vmatpush1.bf16.xpose.msra.mxu0 %v1235
    %1239 = vmatprep.subr.bf16.mxu0 0
    %1240 = vmatpush1.bf16.xpose.msra.mxu0 0
    %1241 = vmatprep.subr.bf16.mxu0 0
    %1242 = vmatpush1.bf16.xpose.msra.mxu0 0
    %1243 = vmatprep.subr.bf16.mxu0 0
    %1244 = vmatpush1.bf16.xpose.msra.mxu0 0
    %1245 = vmatprep.subr.bf16.mxu0 0
    %1246 = vmatpush1.bf16.xpose.msra.mxu0 0
    %1247 = vmatprep.subr.bf16.mxu0 0
    %1248 = vmatpush1.bf16.xpose.msra.mxu0 0
    %1249 = vmatprep.subr.bf16.mxu0 0
    %1250 = vmatpush1.bf16.xpose.msra.mxu0 0
    %1251 = vmatprep.subr.bf16.mxu0 0
    %1252 = vmatpush1.bf16.xpose.msra.mxu0 0
    %1253 = vmatprep.subr.bf16.mxu0 0
    %1254 = vmatpush1.bf16.xpose.msra.mxu0 0
    %1255 = vmatprep.subr.bf16.mxu0 0
    %1256 = vmatpush1.bf16.xpose.msra.mxu0 0
    %1257 = vmatprep.subr.bf16.mxu0 0
    %1258 = vmatpush1.bf16.xpose.msra.mxu0 0
    %1259 = vmatprep.subr.bf16.mxu0 0
    %1260 = vmatpush1.bf16.xpose.msra.mxu0 0
    %1261 = vmatprep.subr.bf16.mxu0 0
    %1262 = vmatpush1.bf16.xpose.msra.mxu0 0
    %1263 = vmatprep.subr.bf16.mxu0 0
    %1264 = vmatpush1.bf16.xpose.msra.mxu0 0
    %1265 = vmatprep.subr.bf16.mxu0 0
    %1266 = vmatpush1.bf16.xpose.msra.mxu0 0
    %1267 = vmatprep.subr.bf16.mxu0 0
    %1268 = vmatpush1.bf16.xpose.msra.mxu0 0
    %1269 = vmatprep.mubr.bf16.mxu0 0
    %1270 = vmatmul.mubr.bf16.gmra.mrb[0].mxu0 %v1232
    %v1271 = vpop.f32.mrb[0].mxu0
    %v1272 = vadd.f32 %v569, %v1271
    %v1273 = vpop.f32.mrb[0].mxu0
    %v1274 = vpop.f32.mrb[0].mxu0
    %v1275 = vpop.f32.mrb[0].mxu0
    %1276 = vdwg.mxu0
    %1277 = vrot.lane.b32.xlu0 %v553, 32
    %v1278 = vpop.permute.xlu0 %1277
    %1279 = vrot.lane.b32.xlu0 %v558, 32
    %v1280 = vpop.permute.xlu0 %1279
    %v1282 = vsel %vm576, %v1278, 0
    %v1285 = vsel %vm576, %v1280, 0
    %1287 = vmatprep.subr.bf16.mxu0 0
    %1288 = vmatpush1.bf16.xpose.msra.mxu0 %v1285
    %1289 = vmatprep.subr.bf16.mxu0 0
    %1290 = vmatpush1.bf16.xpose.msra.mxu0 0
    %1291 = vmatprep.subr.bf16.mxu0 0
    %1292 = vmatpush1.bf16.xpose.msra.mxu0 0
    %1293 = vmatprep.subr.bf16.mxu0 0
    %1294 = vmatpush1.bf16.xpose.msra.mxu0 0
    %1295 = vmatprep.subr.bf16.mxu0 0
    %1296 = vmatpush1.bf16.xpose.msra.mxu0 0
    %1297 = vmatprep.subr.bf16.mxu0 0
    %1298 = vmatpush1.bf16.xpose.msra.mxu0 0
    %1299 = vmatprep.subr.bf16.mxu0 0
    %1300 = vmatpush1.bf16.xpose.msra.mxu0 0
    %1301 = vmatprep.subr.bf16.mxu0 0
    %1302 = vmatpush1.bf16.xpose.msra.mxu0 0
    %1303 = vmatprep.subr.bf16.mxu0 0
    %1304 = vmatpush1.bf16.xpose.msra.mxu0 0
    %1305 = vmatprep.subr.bf16.mxu0 0
    %1306 = vmatpush1.bf16.xpose.msra.mxu0 0
    %1307 = vmatprep.subr.bf16.mxu0 0
    %1308 = vmatpush1.bf16.xpose.msra.mxu0 0
    %1309 = vmatprep.subr.bf16.mxu0 0
    %1310 = vmatpush1.bf16.xpose.msra.mxu0 0
    %1311 = vmatprep.subr.bf16.mxu0 0
    %1312 = vmatpush1.bf16.xpose.msra.mxu0 0
    %1313 = vmatprep.subr.bf16.mxu0 0
    %1314 = vmatpush1.bf16.xpose.msra.mxu0 0
    %1315 = vmatprep.subr.bf16.mxu0 0
    %1316 = vmatpush1.bf16.xpose.msra.mxu0 0
    %1317 = vmatprep.subr.bf16.mxu0 0
    %1318 = vmatpush1.bf16.xpose.msra.mxu0 0
    %1319 = vmatprep.mubr.bf16.mxu0 0
    %1320 = vmatmul.mubr.bf16.gmra.mrb[0].mxu0 %v1282
    %v1321 = vpop.f32.mrb[0].mxu0
    %v1322 = vadd.f32 %v573, %v1321
    %v1323 = vpop.f32.mrb[0].mxu0
    %v1324 = vpop.f32.mrb[0].mxu0
    %v1325 = vpop.f32.mrb[0].mxu0
    %1326 = vdwg.mxu0
    %v1327 = vsel %vm669, %v1272, -inf
    %1328 = vmax.xlane.f32.xlu0 %v1327
    %v1329 = vpop.xlane.xlu0 %1328
    %v1330 = vsel %vm669, %v1322, -inf
    %1331 = vmax.xlane.f32.xlu0 %v1330
    %v1332 = vpop.xlane.xlu0 %1331
    %v1333 = vsub.f32 %v1272, %v1329
    %v1334 = vsub.f32 %v1322, %v1332
    %v1335 = vmul.f32 %v1333, 1.442695
    %v1336 = vpow.pop %v1335
    %v1337 = vmul.f32 %v1334, 1.442695
    %v1338 = vpow.pop %v1337
    %v1339 = vsel %vm669, %v1336, 0.0
    %1340 = vadd.xlane.f32.xlu0 %v1339
    %v1341 = vpop.xlane.xlu0 %1340
    %v1342 = vsel %vm669, %v1338, 0.0
    %1343 = vadd.xlane.f32.xlu0 %v1342
    %v1344 = vpop.xlane.xlu0 %1343
    %v1345 = vrcp.pop %v1341
    %v1346 = vrcp.pop %v1344
    %v1347 = vmul.f32 %v1336, %v1345
    %v1348 = vmul.f32 %v1338, %v1346
    %v1349 = vpack.c.bf16 %v1347, %v1347
    %v1350 = vpack.c.bf16 %v1348, %v1348
    %1351 = vrot.lane.b32.xlu0 %v562, 32
    %v1352 = vpop.permute.xlu0 %1351
    %v1354 = vsel %vm669, %v1349, 0
    %v1357 = vsel %vm697, %v1352, 0
    %1359 = vmatprep.subr.bf16.mxu0 0
    %1360 = vmatpush1.bf16.msra.mxu0 %v1357
    %1361 = vmatprep.subr.bf16.mxu0 0
    %1362 = vmatpush1.bf16.msra.mxu0 0
    %1363 = vmatprep.subr.bf16.mxu0 0
    %1364 = vmatpush1.bf16.msra.mxu0 0
    %1365 = vmatprep.subr.bf16.mxu0 0
    %1366 = vmatpush1.bf16.msra.mxu0 0
    %1367 = vmatprep.subr.bf16.mxu0 0
    %1368 = vmatpush1.bf16.msra.mxu0 0
    %1369 = vmatprep.subr.bf16.mxu0 0
    %1370 = vmatpush1.bf16.msra.mxu0 0
    %1371 = vmatprep.subr.bf16.mxu0 0
    %1372 = vmatpush1.bf16.msra.mxu0 0
    %1373 = vmatprep.subr.bf16.mxu0 0
    %1374 = vmatpush1.bf16.msra.mxu0 0
    %1375 = vmatprep.subr.bf16.mxu0 0
    %1376 = vmatpush1.bf16.msra.mxu0 0
    %1377 = vmatprep.subr.bf16.mxu0 0
    %1378 = vmatpush1.bf16.msra.mxu0 0
    %1379 = vmatprep.subr.bf16.mxu0 0
    %1380 = vmatpush1.bf16.msra.mxu0 0
    %1381 = vmatprep.subr.bf16.mxu0 0
    %1382 = vmatpush1.bf16.msra.mxu0 0
    %1383 = vmatprep.subr.bf16.mxu0 0
    %1384 = vmatpush1.bf16.msra.mxu0 0
    %1385 = vmatprep.subr.bf16.mxu0 0
    %1386 = vmatpush1.bf16.msra.mxu0 0
    %1387 = vmatprep.subr.bf16.mxu0 0
    %1388 = vmatpush1.bf16.msra.mxu0 0
    %1389 = vmatprep.subr.bf16.mxu0 0
    %1390 = vmatpush1.bf16.msra.mxu0 0
    %1391 = vmatprep.mubr.bf16.mxu0 0
    %1392 = vmatmul.mubr.bf16.gmra.mrb[0].mxu0 %v1354
    %v1393 = vpop.f32.mrb[0].mxu0
    %v1394 = vadd.f32 0.0, %v1393
    %v1395 = vpop.f32.mrb[0].mxu0
    %v1396 = vpop.f32.mrb[0].mxu0
    %v1397 = vpop.f32.mrb[0].mxu0
    %1398 = vdwg.mxu0
    %1399 = vrot.lane.b32.xlu0 %v563, 32
    %v1400 = vpop.permute.xlu0 %1399
    %v1402 = vsel %vm669, %v1350, 0
    %v1405 = vsel %vm697, %v1400, 0
    %1407 = vmatprep.subr.bf16.mxu0 0
    %1408 = vmatpush1.bf16.msra.mxu0 %v1405
    %1409 = vmatprep.subr.bf16.mxu0 0
    %1410 = vmatpush1.bf16.msra.mxu0 0
    %1411 = vmatprep.subr.bf16.mxu0 0
    %1412 = vmatpush1.bf16.msra.mxu0 0
    %1413 = vmatprep.subr.bf16.mxu0 0
    %1414 = vmatpush1.bf16.msra.mxu0 0
    %1415 = vmatprep.subr.bf16.mxu0 0
    %1416 = vmatpush1.bf16.msra.mxu0 0
    %1417 = vmatprep.subr.bf16.mxu0 0
    %1418 = vmatpush1.bf16.msra.mxu0 0
    %1419 = vmatprep.subr.bf16.mxu0 0
    %1420 = vmatpush1.bf16.msra.mxu0 0
    %1421 = vmatprep.subr.bf16.mxu0 0
    %1422 = vmatpush1.bf16.msra.mxu0 0
    %1423 = vmatprep.subr.bf16.mxu0 0
    %1424 = vmatpush1.bf16.msra.mxu0 0
    %1425 = vmatprep.subr.bf16.mxu0 0
    %1426 = vmatpush1.bf16.msra.mxu0 0
    %1427 = vmatprep.subr.bf16.mxu0 0
    %1428 = vmatpush1.bf16.msra.mxu0 0
    %1429 = vmatprep.subr.bf16.mxu0 0
    %1430 = vmatpush1.bf16.msra.mxu0 0
    %1431 = vmatprep.subr.bf16.mxu0 0
    %1432 = vmatpush1.bf16.msra.mxu0 0
    %1433 = vmatprep.subr.bf16.mxu0 0
    %1434 = vmatpush1.bf16.msra.mxu0 0
    %1435 = vmatprep.subr.bf16.mxu0 0
    %1436 = vmatpush1.bf16.msra.mxu0 0
    %1437 = vmatprep.subr.bf16.mxu0 0
    %1438 = vmatpush1.bf16.msra.mxu0 0
    %1439 = vmatprep.mubr.bf16.mxu0 0
    %1440 = vmatmul.mubr.bf16.gmra.mrb[0].mxu0 %v1402
    %v1441 = vpop.f32.mrb[0].mxu0
    %v1442 = vadd.f32 0.0, %v1441
    %v1443 = vpop.f32.mrb[0].mxu0
    %v1444 = vpop.f32.mrb[0].mxu0
    %v1445 = vpop.f32.mrb[0].mxu0
    %1446 = vdwg.mxu0
    %1449 = vrot.lane.b32.xlu0 %v954, 32
    %v1450 = vpop.permute.xlu0 %1449
    %1451 = vrot.lane.b32.xlu0 %v1002, 32
    %v1452 = vpop.permute.xlu0 %1451
    %1457 = vrot.lane.b32.xlu0 %v1174, 64
    %v1458 = vpop.permute.xlu0 %1457
    %1459 = vrot.lane.b32.xlu0 %v1222, 64
    %v1460 = vpop.permute.xlu0 %1459
    %1465 = vrot.lane.b32.xlu0 %v1394, 96
    %v1466 = vpop.permute.xlu0 %1465
    %1467 = vrot.lane.b32.xlu0 %v1442, 96
    %v1468 = vpop.permute.xlu0 %1467
    %v1471 = vsel %vm576, %v736, %v1450
    %v1472 = vsel %vm576, %v782, %v1452
    %vm1473 = vcmask 523264
    %v1474 = vsel %vm1473, %v1471, %v1458
    %v1475 = vsel %vm1473, %v1472, %v1460
    %vm1476 = vcmask 785408
    %v1477 = vsel %vm1476, %v1474, %v1466
    %v1478 = vsel %vm1476, %v1475, %v1468
    %v1479 = vpack.c.bf16 %v1478, %v1477
    %v1481 = vlaneseq
    %v1482 = vshrl.u32 %v1481, 7
    %v1483 = vsub.s32 0, %v1482
    %v1484 = vrot.slane %v314, %v1483
    %v1502 = vunpack.c.l.b16 %v298
    %v1503 = vunpack.c.l.b16 %v299
    %v1504 = vunpack.c.l.b16 %v300
    %v1505 = vunpack.c.l.b16 %v301
    %v1506 = vunpack.c.l.b16 %v302
    %v1507 = vunpack.c.l.b16 %v303
    %v1508 = vunpack.c.l.b16 %v304
    %v1509 = vunpack.c.l.b16 %v305
    %v1510 = vunpack.c.l.b16 %v306
    %v1511 = vunpack.c.l.b16 %v307
    %v1512 = vunpack.c.l.b16 %v308
    %v1513 = vunpack.c.l.b16 %v309
    %v1514 = vunpack.c.l.b16 %v310
    %v1515 = vunpack.c.l.b16 %v311
    %v1516 = vunpack.c.l.b16 %v312
    %v1517 = vunpack.c.l.b16 %v313
    %v1518 = vpack.c.b16 %v1503, %v1502
    %v1519 = vpack.c.b16 %v1505, %v1504
    %v1520 = vpack.c.b16 %v1507, %v1506
    %v1521 = vpack.c.b16 %v1509, %v1508
    %v1522 = vpack.c.b16 %v1511, %v1510
    %v1523 = vpack.c.b16 %v1513, %v1512
    %v1524 = vpack.c.b16 %v1515, %v1514
    %v1525 = vpack.c.b16 %v1517, %v1516
    %1534 = vmatprep.subr.bf16.mxu0 0
    %1535 = vmatpush1.bf16.msra.mxu0 %v1518
    %1536 = vmatprep.subr.bf16.mxu0 0
    %1537 = vmatpush1.bf16.msra.mxu0 %v1519
    %1538 = vmatprep.subr.bf16.mxu0 0
    %1539 = vmatpush1.bf16.msra.mxu0 %v1520
    %1540 = vmatprep.subr.bf16.mxu0 0
    %1541 = vmatpush1.bf16.msra.mxu0 %v1521
    %1542 = vmatprep.subr.bf16.mxu0 0
    %1543 = vmatpush1.bf16.msra.mxu0 %v1522
    %1544 = vmatprep.subr.bf16.mxu0 0
    %1545 = vmatpush1.bf16.msra.mxu0 %v1523
    %1546 = vmatprep.subr.bf16.mxu0 0
    %1547 = vmatpush1.bf16.msra.mxu0 %v1524
    %1548 = vmatprep.subr.bf16.mxu0 0
    %1549 = vmatpush1.bf16.msra.mxu0 %v1525
    %1550 = vmatprep.subr.bf16.mxu0 0
    %1551 = vmatpush1.bf16.msra.mxu0 0
    %1552 = vmatprep.subr.bf16.mxu0 0
    %1553 = vmatpush1.bf16.msra.mxu0 0
    %1554 = vmatprep.subr.bf16.mxu0 0
    %1555 = vmatpush1.bf16.msra.mxu0 0
    %1556 = vmatprep.subr.bf16.mxu0 0
    %1557 = vmatpush1.bf16.msra.mxu0 0
    %1558 = vmatprep.subr.bf16.mxu0 0
    %1559 = vmatpush1.bf16.msra.mxu0 0
    %1560 = vmatprep.subr.bf16.mxu0 0
    %1561 = vmatpush1.bf16.msra.mxu0 0
    %1562 = vmatprep.subr.bf16.mxu0 0
    %1563 = vmatpush1.bf16.msra.mxu0 0
    %1564 = vmatprep.subr.bf16.mxu0 0
    %1565 = vmatpush1.bf16.msra.mxu0 0
    %1566 = vmatprep.mubr.bf16.mxu0 0
    %1567 = vmatmul.mubr.bf16.gmra.mrb[0].mxu0 %v1479
    %v1568 = vpop.f32.mrb[0].mxu0
    %v1569 = vadd.f32 %v1484, %v1568
    %v1570 = vpop.f32.mrb[0].mxu0
    %v1571 = vpop.f32.mrb[0].mxu0
    %v1572 = vadd.f32 %v1484, %v1571
    %v1573 = vpop.f32.mrb[0].mxu0
    %1574 = vdwg.mxu0
    %v1575 = vadd.f32 %v1569, %v263
    %v1576 = vadd.f32 %v1572, %v264
    %1577 = vadd.xlane.f32.xlu0 %v1575
    %v1578 = vpop.xlane.xlu0 %1577
    %1579 = vadd.xlane.f32.xlu0 %v1576
    %v1580 = vpop.xlane.xlu0 %1579
    %v1581 = vmul.f32 %v1578, %v230
    %v1582 = vmul.f32 %v1580, %v230
    %v1583 = vsub.f32 %v1575, %v1581
    %v1584 = vsub.f32 %v1576, %v1582
    %v1585 = vmul.f32 %v1583, %v1583
    %v1586 = vmul.f32 %v1584, %v1584
    %1587 = vadd.xlane.f32.xlu0 %v1585
    %v1588 = vpop.xlane.xlu0 %1587
    %1589 = vadd.xlane.f32.xlu0 %v1586
    %v1590 = vpop.xlane.xlu0 %1589
    %v1591 = vmul.f32 %v1588, %v230
    %v1592 = vmul.f32 %v1590, %v230
    %v1593 = vadd.f32 %v1591, 1e-05
    %v1594 = vadd.f32 %v1592, 1e-05
    %v1595 = vrsqrt.pop %v1593
    %v1596 = vrsqrt.pop %v1594
    %v1597 = vmul.f32 %v1583, %v1595
    %v1598 = vmul.f32 %v1584, %v1596
    %v1600 = vlaneseq
    %v1601 = vshrl.u32 %v1600, 7
    %v1602 = vsub.s32 0, %v1601
    %v1603 = vrot.slane %v315, %v1602
    %v1605 = vmul.f32 %v1597, %v1603
    %v1606 = vmul.f32 %v1598, %v1603
    %v1608 = vlaneseq
    %v1609 = vshrl.u32 %v1608, 7
    %v1610 = vsub.s32 0, %v1609
    %v1611 = vrot.slane %v316, %v1610
    %v1613 = vadd.f32 %v1605, %v1611
    %v1614 = vadd.f32 %v1606, %v1611
    %v1615 = vld [vmem:[%s33] sm:$0xff]
    %v1616 = vld [vmem:[%s33 + $0x8] sm:$0xff]
    %v1617 = vld [vmem:[%s33 + $0x10] sm:$0xff]
    %v1618 = vld [vmem:[%s33 + $0x18] sm:$0xff]
    %v1619 = vld [vmem:[%s33 + $0x20] sm:$0xff]
    %v1620 = vld [vmem:[%s33 + $0x28] sm:$0xff]
    %v1621 = vld [vmem:[%s33 + $0x30] sm:$0xff]
    %v1622 = vld [vmem:[%s33 + $0x38] sm:$0xff]
    %v1623 = vld [vmem:[%s33 + $0x40] sm:$0xff]
    %v1624 = vld [vmem:[%s33 + $0x48] sm:$0xff]
    %v1625 = vld [vmem:[%s33 + $0x50] sm:$0xff]
    %v1626 = vld [vmem:[%s33 + $0x58] sm:$0xff]
    %v1627 = vld [vmem:[%s33 + $0x60] sm:$0xff]
    %v1628 = vld [vmem:[%s33 + $0x68] sm:$0xff]
    %v1629 = vld [vmem:[%s33 + $0x70] sm:$0xff]
    %v1630 = vld [vmem:[%s33 + $0x78] sm:$0xff]
    %v1631 = vld [vmem:[%s35] sm:$0x3]
    %v1632 = vld [vmem:[%s37] sm:$0xf]
    %v1633 = vld [vmem:[%s37 + $0x4] sm:$0xf]
    %v1634 = vld [vmem:[%s37 + $0x8] sm:$0xf]
    %v1635 = vld [vmem:[%s37 + $0xc] sm:$0xf]
    %v1636 = vld [vmem:[%s37 + $0x10] sm:$0xf]
    %v1637 = vld [vmem:[%s37 + $0x14] sm:$0xf]
    %v1638 = vld [vmem:[%s37 + $0x18] sm:$0xf]
    %v1639 = vld [vmem:[%s37 + $0x1c] sm:$0xf]
    %v1640 = vld [vmem:[%s37 + $0x20] sm:$0xf]
    %v1641 = vld [vmem:[%s37 + $0x24] sm:$0xf]
    %v1642 = vld [vmem:[%s37 + $0x28] sm:$0xf]
    %v1643 = vld [vmem:[%s37 + $0x2c] sm:$0xf]
    %v1644 = vld [vmem:[%s37 + $0x30] sm:$0xf]
    %v1645 = vld [vmem:[%s37 + $0x34] sm:$0xf]
    %v1646 = vld [vmem:[%s37 + $0x38] sm:$0xf]
    %v1647 = vld [vmem:[%s37 + $0x3c] sm:$0xf]
    %v1648 = vld [vmem:[%s37 + $0x40] sm:$0xf]
    %v1649 = vld [vmem:[%s37 + $0x44] sm:$0xf]
    %v1650 = vld [vmem:[%s37 + $0x48] sm:$0xf]
    %v1651 = vld [vmem:[%s37 + $0x4c] sm:$0xf]
    %v1652 = vld [vmem:[%s37 + $0x50] sm:$0xf]
    %v1653 = vld [vmem:[%s37 + $0x54] sm:$0xf]
    %v1654 = vld [vmem:[%s37 + $0x58] sm:$0xf]
    %v1655 = vld [vmem:[%s37 + $0x5c] sm:$0xf]
    %v1656 = vld [vmem:[%s37 + $0x60] sm:$0xf]
    %v1657 = vld [vmem:[%s37 + $0x64] sm:$0xf]
    %v1658 = vld [vmem:[%s37 + $0x68] sm:$0xf]
    %v1659 = vld [vmem:[%s37 + $0x6c] sm:$0xf]
    %v1660 = vld [vmem:[%s37 + $0x70] sm:$0xf]
    %v1661 = vld [vmem:[%s37 + $0x74] sm:$0xf]
    %v1662 = vld [vmem:[%s37 + $0x78] sm:$0xf]
    %v1663 = vld [vmem:[%s37 + $0x7c] sm:$0xf]
    %v1664 = vld [vmem:[%s39] sm:$0x1]
    %v1665 = vld [vmem:[%s41] sm:$0x1]
    %v1666 = vld [vmem:[%s43] sm:$0x1]
    %v1667 = vpack.c.bf16 %v1614, %v1613
    %v1669 = vlaneseq
    %v1670 = vshrl.u32 %v1669, 7
    %v1671 = vsub.s32 0, %v1670
    %v1672 = vrot.slane %v1631, %v1671
    %v1673 = vlaneseq
    %v1674 = vshrl.u32 %v1673, 7
    %v1675 = vsub.s32 1, %v1674
    %v1676 = vrot.slane %v1631, %v1675
    %v1695 = vunpack.c.l.b16 %v1615
    %v1696 = vunpack.c.h.b16 %v1615
    %v1697 = vunpack.c.l.b16 %v1616
    %v1698 = vunpack.c.h.b16 %v1616
    %v1699 = vunpack.c.l.b16 %v1617
    %v1700 = vunpack.c.h.b16 %v1617
    %v1701 = vunpack.c.l.b16 %v1618
    %v1702 = vunpack.c.h.b16 %v1618
    %v1703 = vunpack.c.l.b16 %v1619
    %v1704 = vunpack.c.h.b16 %v1619
    %v1705 = vunpack.c.l.b16 %v1620
    %v1706 = vunpack.c.h.b16 %v1620
    %v1707 = vunpack.c.l.b16 %v1621
    %v1708 = vunpack.c.h.b16 %v1621
    %v1709 = vunpack.c.l.b16 %v1622
    %v1710 = vunpack.c.h.b16 %v1622
    %v1711 = vunpack.c.l.b16 %v1623
    %v1712 = vunpack.c.h.b16 %v1623
    %v1713 = vunpack.c.l.b16 %v1624
    %v1714 = vunpack.c.h.b16 %v1624
    %v1715 = vunpack.c.l.b16 %v1625
    %v1716 = vunpack.c.h.b16 %v1625
    %v1717 = vunpack.c.l.b16 %v1626
    %v1718 = vunpack.c.h.b16 %v1626
    %v1719 = vunpack.c.l.b16 %v1627
    %v1720 = vunpack.c.h.b16 %v1627
    %v1721 = vunpack.c.l.b16 %v1628
    %v1722 = vunpack.c.h.b16 %v1628
    %v1723 = vunpack.c.l.b16 %v1629
    %v1724 = vunpack.c.h.b16 %v1629
    %v1725 = vunpack.c.l.b16 %v1630
    %v1726 = vunpack.c.h.b16 %v1630
    %v1727 = vpack.c.b16 %v1697, %v1695
    %v1728 = vpack.c.b16 %v1698, %v1696
    %v1729 = vpack.c.b16 %v1701, %v1699
    %v1730 = vpack.c.b16 %v1702, %v1700
    %v1731 = vpack.c.b16 %v1705, %v1703
    %v1732 = vpack.c.b16 %v1706, %v1704
    %v1733 = vpack.c.b16 %v1709, %v1707
    %v1734 = vpack.c.b16 %v1710, %v1708
    %v1735 = vpack.c.b16 %v1713, %v1711
    %v1736 = vpack.c.b16 %v1714, %v1712
    %v1737 = vpack.c.b16 %v1717, %v1715
    %v1738 = vpack.c.b16 %v1718, %v1716
    %v1739 = vpack.c.b16 %v1721, %v1719
    %v1740 = vpack.c.b16 %v1722, %v1720
    %v1741 = vpack.c.b16 %v1725, %v1723
    %v1742 = vpack.c.b16 %v1726, %v1724
    %1759 = vmatprep.subr.bf16.mxu0 %v1728
    %1760 = vmatpush1.bf16.msra.mxu0 %v1727
    %1761 = vmatprep.subr.bf16.mxu0 %v1730
    %1762 = vmatpush1.bf16.msra.mxu0 %v1729
    %1763 = vmatprep.subr.bf16.mxu0 %v1732
    %1764 = vmatpush1.bf16.msra.mxu0 %v1731
    %1765 = vmatprep.subr.bf16.mxu0 %v1734
    %1766 = vmatpush1.bf16.msra.mxu0 %v1733
    %1767 = vmatprep.subr.bf16.mxu0 %v1736
    %1768 = vmatpush1.bf16.msra.mxu0 %v1735
    %1769 = vmatprep.subr.bf16.mxu0 %v1738
    %1770 = vmatpush1.bf16.msra.mxu0 %v1737
    %1771 = vmatprep.subr.bf16.mxu0 %v1740
    %1772 = vmatpush1.bf16.msra.mxu0 %v1739
    %1773 = vmatprep.subr.bf16.mxu0 %v1742
    %1774 = vmatpush1.bf16.msra.mxu0 %v1741
    %1775 = vmatprep.subr.bf16.mxu0 0
    %1776 = vmatpush1.bf16.msra.mxu0 0
    %1777 = vmatprep.subr.bf16.mxu0 0
    %1778 = vmatpush1.bf16.msra.mxu0 0
    %1779 = vmatprep.subr.bf16.mxu0 0
    %1780 = vmatpush1.bf16.msra.mxu0 0
    %1781 = vmatprep.subr.bf16.mxu0 0
    %1782 = vmatpush1.bf16.msra.mxu0 0
    %1783 = vmatprep.subr.bf16.mxu0 0
    %1784 = vmatpush1.bf16.msra.mxu0 0
    %1785 = vmatprep.subr.bf16.mxu0 0
    %1786 = vmatpush1.bf16.msra.mxu0 0
    %1787 = vmatprep.subr.bf16.mxu0 0
    %1788 = vmatpush1.bf16.msra.mxu0 0
    %1789 = vmatprep.subr.bf16.mxu0 0
    %1790 = vmatpush1.bf16.msra.mxu0 0
    %1791 = vmatprep.mubr.bf16.mxu0 0
    %1792 = vmatmul.mubr.bf16.gmra.mrb[0].mxu0 %v1667
    %v1793 = vpop.f32.mrb[0].mxu0
    %v1794 = vadd.f32 %v1672, %v1793
    %v1795 = vpop.f32.mrb[0].mxu0
    %v1796 = vadd.f32 %v1676, %v1795
    %v1797 = vpop.f32.mrb[0].mxu0
    %v1798 = vadd.f32 %v1672, %v1797
    %v1799 = vpop.f32.mrb[0].mxu0
    %v1800 = vadd.f32 %v1676, %v1799
    %1801 = vdwg.mxu0
    %v1802 = vxor.u32 %v1794, 2147483648
    %v1803 = vxor.u32 %v1796, 2147483648
    %v1804 = vxor.u32 %v1798, 2147483648
    %v1805 = vxor.u32 %v1800, 2147483648
    %v1806 = vmul.f32 %v1802, 1.442695
    %v1807 = vpow.pop %v1806
    %v1808 = vmul.f32 %v1803, 1.442695
    %v1809 = vpow.pop %v1808
    %v1810 = vmul.f32 %v1804, 1.442695
    %v1811 = vpow.pop %v1810
    %v1812 = vmul.f32 %v1805, 1.442695
    %v1813 = vpow.pop %v1812
    %v1814 = vadd.f32 %v1807, 1.0
    %v1815 = vadd.f32 %v1809, 1.0
    %v1816 = vadd.f32 %v1811, 1.0
    %v1817 = vadd.f32 %v1813, 1.0
    %v1818 = vrcp.pop %v1814
    %v1819 = vmul.f32 1.0, %v1818
    %v1820 = vrcp.pop %v1815
    %v1821 = vmul.f32 1.0, %v1820
    %v1822 = vrcp.pop %v1816
    %v1823 = vmul.f32 1.0, %v1822
    %v1824 = vrcp.pop %v1817
    %v1825 = vmul.f32 1.0, %v1824
    %v1826 = vmul.f32 %v1794, %v1819
    %v1827 = vmul.f32 %v1796, %v1821
    %v1828 = vmul.f32 %v1798, %v1823
    %v1829 = vmul.f32 %v1800, %v1825
    %v1830 = vpack.c.bf16 %v1828, %v1826
    %v1831 = vpack.c.bf16 %v1829, %v1827
    %v1833 = vlaneseq
    %v1834 = vshrl.u32 %v1833, 7
    %v1835 = vsub.s32 0, %v1834
    %v1836 = vrot.slane %v1664, %v1835
    %v1870 = vunpack.c.l.b16 %v1632
    %v1871 = vunpack.c.l.b16 %v1633
    %v1872 = vunpack.c.l.b16 %v1634
    %v1873 = vunpack.c.l.b16 %v1635
    %v1874 = vunpack.c.l.b16 %v1636
    %v1875 = vunpack.c.l.b16 %v1637
    %v1876 = vunpack.c.l.b16 %v1638
    %v1877 = vunpack.c.l.b16 %v1639
    %v1878 = vunpack.c.l.b16 %v1640
    %v1879 = vunpack.c.l.b16 %v1641
    %v1880 = vunpack.c.l.b16 %v1642
    %v1881 = vunpack.c.l.b16 %v1643
    %v1882 = vunpack.c.l.b16 %v1644
    %v1883 = vunpack.c.l.b16 %v1645
    %v1884 = vunpack.c.l.b16 %v1646
    %v1885 = vunpack.c.l.b16 %v1647
    %v1886 = vunpack.c.l.b16 %v1648
    %v1887 = vunpack.c.l.b16 %v1649
    %v1888 = vunpack.c.l.b16 %v1650
    %v1889 = vunpack.c.l.b16 %v1651
    %v1890 = vunpack.c.l.b16 %v1652
    %v1891 = vunpack.c.l.b16 %v1653
    %v1892 = vunpack.c.l.b16 %v1654
    %v1893 = vunpack.c.l.b16 %v1655
    %v1894 = vunpack.c.l.b16 %v1656
    %v1895 = vunpack.c.l.b16 %v1657
    %v1896 = vunpack.c.l.b16 %v1658
    %v1897 = vunpack.c.l.b16 %v1659
    %v1898 = vunpack.c.l.b16 %v1660
    %v1899 = vunpack.c.l.b16 %v1661
    %v1900 = vunpack.c.l.b16 %v1662
    %v1901 = vunpack.c.l.b16 %v1663
    %v1902 = vpack.c.b16 %v1871, %v1870
    %v1903 = vpack.c.b16 %v1873, %v1872
    %v1904 = vpack.c.b16 %v1875, %v1874
    %v1905 = vpack.c.b16 %v1877, %v1876
    %v1906 = vpack.c.b16 %v1879, %v1878
    %v1907 = vpack.c.b16 %v1881, %v1880
    %v1908 = vpack.c.b16 %v1883, %v1882
    %v1909 = vpack.c.b16 %v1885, %v1884
    %v1910 = vpack.c.b16 %v1887, %v1886
    %v1911 = vpack.c.b16 %v1889, %v1888
    %v1912 = vpack.c.b16 %v1891, %v1890
    %v1913 = vpack.c.b16 %v1893, %v1892
    %v1914 = vpack.c.b16 %v1895, %v1894
    %v1915 = vpack.c.b16 %v1897, %v1896
    %v1916 = vpack.c.b16 %v1899, %v1898
    %v1917 = vpack.c.b16 %v1901, %v1900
    %1934 = vmatprep.subr.bf16.mxu0 0
    %1935 = vmatpush1.bf16.msra.mxu0 %v1902
    %1936 = vmatprep.subr.bf16.mxu0 0
    %1937 = vmatpush1.bf16.msra.mxu0 %v1903
    %1938 = vmatprep.subr.bf16.mxu0 0
    %1939 = vmatpush1.bf16.msra.mxu0 %v1904
    %1940 = vmatprep.subr.bf16.mxu0 0
    %1941 = vmatpush1.bf16.msra.mxu0 %v1905
    %1942 = vmatprep.subr.bf16.mxu0 0
    %1943 = vmatpush1.bf16.msra.mxu0 %v1906
    %1944 = vmatprep.subr.bf16.mxu0 0
    %1945 = vmatpush1.bf16.msra.mxu0 %v1907
    %1946 = vmatprep.subr.bf16.mxu0 0
    %1947 = vmatpush1.bf16.msra.mxu0 %v1908
    %1948 = vmatprep.subr.bf16.mxu0 0
    %1949 = vmatpush1.bf16.msra.mxu0 %v1909
    %1950 = vmatprep.subr.bf16.mxu0 0
    %1951 = vmatpush1.bf16.msra.mxu0 %v1910
    %1952 = vmatprep.subr.bf16.mxu0 0
    %1953 = vmatpush1.bf16.msra.mxu0 %v1911
    %1954 = vmatprep.subr.bf16.mxu0 0
    %1955 = vmatpush1.bf16.msra.mxu0 %v1912
    %1956 = vmatprep.subr.bf16.mxu0 0
    %1957 = vmatpush1.bf16.msra.mxu0 %v1913
    %1958 = vmatprep.subr.bf16.mxu0 0
    %1959 = vmatpush1.bf16.msra.mxu0 %v1914
    %1960 = vmatprep.subr.bf16.mxu0 0
    %1961 = vmatpush1.bf16.msra.mxu0 %v1915
    %1962 = vmatprep.subr.bf16.mxu0 0
    %1963 = vmatpush1.bf16.msra.mxu0 %v1916
    %1964 = vmatprep.subr.bf16.mxu0 0
    %1965 = vmatpush1.bf16.msra.mxu0 %v1917
    %1966 = vmatprep.mubr.bf16.mxu0 %v1831
    %1967 = vmatmul.mubr.bf16.gmra.mrb[0].mxu0 %v1830
    %v1968 = vpop.f32.mrb[0].mxu0
    %v1969 = vadd.f32 %v1836, %v1968
    %v1970 = vpop.f32.mrb[0].mxu0
    %v1971 = vpop.f32.mrb[0].mxu0
    %v1972 = vadd.f32 %v1836, %v1971
    %v1973 = vpop.f32.mrb[0].mxu0
    %1974 = vdwg.mxu0
    %v1975 = vadd.f32 %v1969, %v1613
    %v1976 = vadd.f32 %v1972, %v1614
    %1977 = vadd.xlane.f32.xlu0 %v1975
    %v1978 = vpop.xlane.xlu0 %1977
    %1979 = vadd.xlane.f32.xlu0 %v1976
    %v1980 = vpop.xlane.xlu0 %1979
    %v1981 = vmul.f32 %v1978, %v230
    %v1982 = vmul.f32 %v1980, %v230
    %v1983 = vsub.f32 %v1975, %v1981
    %v1984 = vsub.f32 %v1976, %v1982
    %v1985 = vmul.f32 %v1983, %v1983
    %v1986 = vmul.f32 %v1984, %v1984
    %1987 = vadd.xlane.f32.xlu0 %v1985
    %v1988 = vpop.xlane.xlu0 %1987
    %1989 = vadd.xlane.f32.xlu0 %v1986
    %v1990 = vpop.xlane.xlu0 %1989
    %v1991 = vmul.f32 %v1988, %v230
    %v1992 = vmul.f32 %v1990, %v230
    %v1993 = vadd.f32 %v1991, 1e-05
    %v1994 = vadd.f32 %v1992, 1e-05
    %v1995 = vrsqrt.pop %v1993
    %v1996 = vrsqrt.pop %v1994
    %v1997 = vmul.f32 %v1983, %v1995
    %v1998 = vmul.f32 %v1984, %v1996
    %v2000 = vlaneseq
    %v2001 = vshrl.u32 %v2000, 7
    %v2002 = vsub.s32 0, %v2001
    %v2003 = vrot.slane %v1665, %v2002
    %v2005 = vmul.f32 %v1997, %v2003
    %v2006 = vmul.f32 %v1998, %v2003
    %v2008 = vlaneseq
    %v2009 = vshrl.u32 %v2008, 7
    %v2010 = vsub.s32 0, %v2009
    %v2011 = vrot.slane %v1666, %v2010
    %v2013 = vadd.f32 %v2005, %v2011
    %v2014 = vadd.f32 %v2006, %v2011
    %s2015 = scalar_lea.vmem %s21, 192
    %v2016 = vld [vmem:[%s2015] sm:$0xff]
    %v2017 = vld [vmem:[%s2015 + $0x8] sm:$0xf]
    %v2018 = vld [vmem:[%s2015 + $0xc] sm:$0xff]
    %v2019 = vld [vmem:[%s2015 + $0x14] sm:$0xf]
    %v2020 = vld [vmem:[%s2015 + $0x18] sm:$0xff]
    %v2021 = vld [vmem:[%s2015 + $0x20] sm:$0xf]
    %v2022 = vld [vmem:[%s2015 + $0x24] sm:$0xff]
    %v2023 = vld [vmem:[%s2015 + $0x2c] sm:$0xf]
    %v2024 = vld [vmem:[%s2015 + $0x30] sm:$0xff]
    %v2025 = vld [vmem:[%s2015 + $0x38] sm:$0xf]
    %v2026 = vld [vmem:[%s2015 + $0x3c] sm:$0xff]
    %v2027 = vld [vmem:[%s2015 + $0x44] sm:$0xf]
    %v2028 = vld [vmem:[%s2015 + $0x48] sm:$0xff]
    %v2029 = vld [vmem:[%s2015 + $0x50] sm:$0xf]
    %v2030 = vld [vmem:[%s2015 + $0x54] sm:$0xff]
    %v2031 = vld [vmem:[%s2015 + $0x5c] sm:$0xf]
    %v2032 = vld [vmem:[%s2015 + $0x60] sm:$0xff]
    %v2033 = vld [vmem:[%s2015 + $0x68] sm:$0xf]
    %v2034 = vld [vmem:[%s2015 + $0x6c] sm:$0xff]
    %v2035 = vld [vmem:[%s2015 + $0x74] sm:$0xf]
    %v2036 = vld [vmem:[%s2015 + $0x78] sm:$0xff]
    %v2037 = vld [vmem:[%s2015 + $0x80] sm:$0xf]
    %v2038 = vld [vmem:[%s2015 + $0x84] sm:$0xff]
    %v2039 = vld [vmem:[%s2015 + $0x8c] sm:$0xf]
    %v2040 = vld [vmem:[%s2015 + $0x90] sm:$0xff]
    %v2041 = vld [vmem:[%s2015 + $0x98] sm:$0xf]
    %v2042 = vld [vmem:[%s2015 + $0x9c] sm:$0xff]
    %v2043 = vld [vmem:[%s2015 + $0xa4] sm:$0xf]
    %v2044 = vld [vmem:[%s2015 + $0xa8] sm:$0xff]
    %v2045 = vld [vmem:[%s2015 + $0xb0] sm:$0xf]
    %v2046 = vld [vmem:[%s2015 + $0xb4] sm:$0xff]
    %v2047 = vld [vmem:[%s2015 + $0xbc] sm:$0xf]
    %s2048 = scalar_lea.vmem %s23, 3
    %v2049 = vld [vmem:[%s2048] sm:$0x7]
    %s2050 = scalar_lea.vmem %s25, 64
    %v2051 = vld [vmem:[%s2050] sm:$0xf]
    %v2052 = vld [vmem:[%s2050 + $0x4] sm:$0xf]
    %v2053 = vld [vmem:[%s2050 + $0x8] sm:$0xf]
    %v2054 = vld [vmem:[%s2050 + $0xc] sm:$0xf]
    %v2055 = vld [vmem:[%s2050 + $0x10] sm:$0xf]
    %v2056 = vld [vmem:[%s2050 + $0x14] sm:$0xf]
    %v2057 = vld [vmem:[%s2050 + $0x18] sm:$0xf]
    %v2058 = vld [vmem:[%s2050 + $0x1c] sm:$0xf]
    %v2059 = vld [vmem:[%s2050 + $0x20] sm:$0xf]
    %v2060 = vld [vmem:[%s2050 + $0x24] sm:$0xf]
    %v2061 = vld [vmem:[%s2050 + $0x28] sm:$0xf]
    %v2062 = vld [vmem:[%s2050 + $0x2c] sm:$0xf]
    %v2063 = vld [vmem:[%s2050 + $0x30] sm:$0xf]
    %v2064 = vld [vmem:[%s2050 + $0x34] sm:$0xf]
    %v2065 = vld [vmem:[%s2050 + $0x38] sm:$0xf]
    %v2066 = vld [vmem:[%s2050 + $0x3c] sm:$0xf]
    %s2067 = scalar_lea.vmem %s27, 1
    %v2068 = vld [vmem:[%s2067] sm:$0x1]
    %s2069 = scalar_lea.vmem %s29, 1
    %v2070 = vld [vmem:[%s2069] sm:$0x1]
    %s2071 = scalar_lea.vmem %s31, 1
    %v2072 = vld [vmem:[%s2071] sm:$0x1]
    %v2073 = vpack.c.bf16 %v2014, %v2013
    %v2075 = vlaneseq
    %v2076 = vshrl.u32 %v2075, 7
    %v2077 = vsub.s32 0, %v2076
    %v2078 = vrot.slane %v2049, %v2077
    %v2079 = vlaneseq
    %v2080 = vshrl.u32 %v2079, 7
    %v2081 = vsub.s32 1, %v2080
    %v2082 = vrot.slane %v2049, %v2081
    %v2083 = vlaneseq
    %v2084 = vshrl.u32 %v2083, 7
    %v2085 = vsub.s32 2, %v2084
    %v2086 = vrot.slane %v2049, %v2085
    %v2122 = vunpack.c.l.b16 %v2016
    %v2123 = vunpack.c.h.b16 %v2016
    %v2124 = vunpack.c.l.b16 %v2017
    %v2125 = vunpack.c.l.b16 %v2018
    %v2126 = vunpack.c.h.b16 %v2018
    %v2127 = vunpack.c.l.b16 %v2019
    %v2128 = vunpack.c.l.b16 %v2020
    %v2129 = vunpack.c.h.b16 %v2020
    %v2130 = vunpack.c.l.b16 %v2021
    %v2131 = vunpack.c.l.b16 %v2022
    %v2132 = vunpack.c.h.b16 %v2022
    %v2133 = vunpack.c.l.b16 %v2023
    %v2134 = vunpack.c.l.b16 %v2024
    %v2135 = vunpack.c.h.b16 %v2024
    %v2136 = vunpack.c.l.b16 %v2025
    %v2137 = vunpack.c.l.b16 %v2026
    %v2138 = vunpack.c.h.b16 %v2026
    %v2139 = vunpack.c.l.b16 %v2027
    %v2140 = vunpack.c.l.b16 %v2028
    %v2141 = vunpack.c.h.b16 %v2028
    %v2142 = vunpack.c.l.b16 %v2029
    %v2143 = vunpack.c.l.b16 %v2030
    %v2144 = vunpack.c.h.b16 %v2030
    %v2145 = vunpack.c.l.b16 %v2031
    %v2146 = vunpack.c.l.b16 %v2032
    %v2147 = vunpack.c.h.b16 %v2032
    %v2148 = vunpack.c.l.b16 %v2033
    %v2149 = vunpack.c.l.b16 %v2034
    %v2150 = vunpack.c.h.b16 %v2034
    %v2151 = vunpack.c.l.b16 %v2035
    %v2152 = vunpack.c.l.b16 %v2036
    %v2153 = vunpack.c.h.b16 %v2036
    %v2154 = vunpack.c.l.b16 %v2037
    %v2155 = vunpack.c.l.b16 %v2038
    %v2156 = vunpack.c.h.b16 %v2038
    %v2157 = vunpack.c.l.b16 %v2039
    %v2158 = vunpack.c.l.b16 %v2040
    %v2159 = vunpack.c.h.b16 %v2040
    %v2160 = vunpack.c.l.b16 %v2041
    %v2161 = vunpack.c.l.b16 %v2042
    %v2162 = vunpack.c.h.b16 %v2042
    %v2163 = vunpack.c.l.b16 %v2043
    %v2164 = vunpack.c.l.b16 %v2044
    %v2165 = vunpack.c.h.b16 %v2044
    %v2166 = vunpack.c.l.b16 %v2045
    %v2167 = vunpack.c.l.b16 %v2046
    %v2168 = vunpack.c.h.b16 %v2046
    %v2169 = vunpack.c.l.b16 %v2047
    %v2170 = vpack.c.b16 %v2125, %v2122
    %v2171 = vpack.c.b16 %v2126, %v2123
    %v2172 = vpack.c.b16 %v2127, %v2124
    %v2173 = vpack.c.b16 %v2131, %v2128
    %v2174 = vpack.c.b16 %v2132, %v2129
    %v2175 = vpack.c.b16 %v2133, %v2130
    %v2176 = vpack.c.b16 %v2137, %v2134
    %v2177 = vpack.c.b16 %v2138, %v2135
    %v2178 = vpack.c.b16 %v2139, %v2136
    %v2179 = vpack.c.b16 %v2143, %v2140
    %v2180 = vpack.c.b16 %v2144, %v2141
    %v2181 = vpack.c.b16 %v2145, %v2142
    %v2182 = vpack.c.b16 %v2149, %v2146
    %v2183 = vpack.c.b16 %v2150, %v2147
    %v2184 = vpack.c.b16 %v2151, %v2148
    %v2185 = vpack.c.b16 %v2155, %v2152
    %v2186 = vpack.c.b16 %v2156, %v2153
    %v2187 = vpack.c.b16 %v2157, %v2154
    %v2188 = vpack.c.b16 %v2161, %v2158
    %v2189 = vpack.c.b16 %v2162, %v2159
    %v2190 = vpack.c.b16 %v2163, %v2160
    %v2191 = vpack.c.b16 %v2167, %v2164
    %v2192 = vpack.c.b16 %v2168, %v2165
    %v2193 = vpack.c.b16 %v2169, %v2166
    %2218 = vmatprep.subr.bf16.mxu0 %v2171
    %2219 = vmatpush1.bf16.msra.mxu0 %v2170
    %2220 = vmatprep.subr.bf16.mxu0 %v2174
    %2221 = vmatpush1.bf16.msra.mxu0 %v2173
    %2222 = vmatprep.subr.bf16.mxu0 %v2177
    %2223 = vmatpush1.bf16.msra.mxu0 %v2176
    %2224 = vmatprep.subr.bf16.mxu0 %v2180
    %2225 = vmatpush1.bf16.msra.mxu0 %v2179
    %2226 = vmatprep.subr.bf16.mxu0 %v2183
    %2227 = vmatpush1.bf16.msra.mxu0 %v2182
    %2228 = vmatprep.subr.bf16.mxu0 %v2186
    %2229 = vmatpush1.bf16.msra.mxu0 %v2185
    %2230 = vmatprep.subr.bf16.mxu0 %v2189
    %2231 = vmatpush1.bf16.msra.mxu0 %v2188
    %2232 = vmatprep.subr.bf16.mxu0 %v2192
    %2233 = vmatpush1.bf16.msra.mxu0 %v2191
    %2234 = vmatprep.subr.bf16.mxu0 0
    %2235 = vmatpush1.bf16.msra.mxu0 0
    %2236 = vmatprep.subr.bf16.mxu0 0
    %2237 = vmatpush1.bf16.msra.mxu0 0
    %2238 = vmatprep.subr.bf16.mxu0 0
    %2239 = vmatpush1.bf16.msra.mxu0 0
    %2240 = vmatprep.subr.bf16.mxu0 0
    %2241 = vmatpush1.bf16.msra.mxu0 0
    %2242 = vmatprep.subr.bf16.mxu0 0
    %2243 = vmatpush1.bf16.msra.mxu0 0
    %2244 = vmatprep.subr.bf16.mxu0 0
    %2245 = vmatpush1.bf16.msra.mxu0 0
    %2246 = vmatprep.subr.bf16.mxu0 0
    %2247 = vmatpush1.bf16.msra.mxu0 0
    %2248 = vmatprep.subr.bf16.mxu0 0
    %2249 = vmatpush1.bf16.msra.mxu0 0
    %2250 = vmatprep.mubr.bf16.mxu0 0
    %2251 = vmatmul.mubr.bf16.gmra.mrb[0].mxu0 %v2073
    %v2252 = vpop.f32.mrb[0].mxu0
    %v2253 = vadd.f32 %v2078, %v2252
    %v2254 = vpop.f32.mrb[0].mxu0
    %v2255 = vadd.f32 %v2082, %v2254
    %v2256 = vpop.f32.mrb[0].mxu0
    %v2257 = vadd.f32 %v2078, %v2256
    %v2258 = vpop.f32.mrb[0].mxu0
    %v2259 = vadd.f32 %v2082, %v2258
    %2260 = vdwg.mxu0
    %2261 = vmatprep.subr.bf16.mxu0 0
    %2262 = vmatpush1.bf16.msra.mxu0 %v2172
    %2263 = vmatprep.subr.bf16.mxu0 0
    %2264 = vmatpush1.bf16.msra.mxu0 %v2175
    %2265 = vmatprep.subr.bf16.mxu0 0
    %2266 = vmatpush1.bf16.msra.mxu0 %v2178
    %2267 = vmatprep.subr.bf16.mxu0 0
    %2268 = vmatpush1.bf16.msra.mxu0 %v2181
    %2269 = vmatprep.subr.bf16.mxu0 0
    %2270 = vmatpush1.bf16.msra.mxu0 %v2184
    %2271 = vmatprep.subr.bf16.mxu0 0
    %2272 = vmatpush1.bf16.msra.mxu0 %v2187
    %2273 = vmatprep.subr.bf16.mxu0 0
    %2274 = vmatpush1.bf16.msra.mxu0 %v2190
    %2275 = vmatprep.subr.bf16.mxu0 0
    %2276 = vmatpush1.bf16.msra.mxu0 %v2193
    %2277 = vmatprep.subr.bf16.mxu0 0
    %2278 = vmatpush1.bf16.msra.mxu0 0
    %2279 = vmatprep.subr.bf16.mxu0 0
    %2280 = vmatpush1.bf16.msra.mxu0 0
    %2281 = vmatprep.subr.bf16.mxu0 0
    %2282 = vmatpush1.bf16.msra.mxu0 0
    %2283 = vmatprep.subr.bf16.mxu0 0
    %2284 = vmatpush1.bf16.msra.mxu0 0
    %2285 = vmatprep.subr.bf16.mxu0 0
    %2286 = vmatpush1.bf16.msra.mxu0 0
    %2287 = vmatprep.subr.bf16.mxu0 0
    %2288 = vmatpush1.bf16.msra.mxu0 0
    %2289 = vmatprep.subr.bf16.mxu0 0
    %2290 = vmatpush1.bf16.msra.mxu0 0
    %2291 = vmatprep.subr.bf16.mxu0 0
    %2292 = vmatpush1.bf16.msra.mxu0 0
    %2293 = vmatprep.mubr.bf16.mxu0 0
    %2294 = vmatmul.mubr.bf16.gmra.mrb[0].mxu0 %v2073
    %v2295 = vpop.f32.mrb[0].mxu0
    %v2296 = vadd.f32 %v2086, %v2295
    %v2297 = vpop.f32.mrb[0].mxu0
    %v2298 = vpop.f32.mrb[0].mxu0
    %v2299 = vadd.f32 %v2086, %v2298
    %v2300 = vpop.f32.mrb[0].mxu0
    %2301 = vdwg.mxu0
    %v2302 = vpack.c.bf16 %v2257, %v2253
    %v2303 = vpack.c.bf16 %v2259, %v2255
    %v2304 = vpack.c.bf16 %v2299, %v2296
    %v2306 = vunpack.c.l.b16 %v2302
    %v2307 = vunpack.c.h.b16 %v2302
    %v2308 = vpack.c.b16 %v2306, %v2306
    %v2309 = vpack.c.b16 %v2307, %v2307
    %v2311 = vunpack.c.l.b16 %v2303
    %v2312 = vunpack.c.h.b16 %v2303
    %v2313 = vpack.c.b16 %v2311, %v2311
    %v2314 = vpack.c.b16 %v2312, %v2312
    %v2316 = vunpack.c.l.b16 %v2304
    %v2317 = vunpack.c.h.b16 %v2304
    %v2318 = vpack.c.b16 %v2316, %v2316
    %v2319 = vpack.c.b16 %v2317, %v2317
    %v2321 = vsel %vm576, %v2308, 0
    %v2324 = vsel %vm576, %v2313, 0
    %2326 = vmatprep.subr.bf16.mxu0 0
    %2327 = vmatpush1.bf16.xpose.msra.mxu0 %v2324
    %2328 = vmatprep.subr.bf16.mxu0 0
    %2329 = vmatpush1.bf16.xpose.msra.mxu0 0
    %2330 = vmatprep.subr.bf16.mxu0 0
    %2331 = vmatpush1.bf16.xpose.msra.mxu0 0
    %2332 = vmatprep.subr.bf16.mxu0 0
    %2333 = vmatpush1.bf16.xpose.msra.mxu0 0
    %2334 = vmatprep.subr.bf16.mxu0 0
    %2335 = vmatpush1.bf16.xpose.msra.mxu0 0
    %2336 = vmatprep.subr.bf16.mxu0 0
    %2337 = vmatpush1.bf16.xpose.msra.mxu0 0
    %2338 = vmatprep.subr.bf16.mxu0 0
    %2339 = vmatpush1.bf16.xpose.msra.mxu0 0
    %2340 = vmatprep.subr.bf16.mxu0 0
    %2341 = vmatpush1.bf16.xpose.msra.mxu0 0
    %2342 = vmatprep.subr.bf16.mxu0 0
    %2343 = vmatpush1.bf16.xpose.msra.mxu0 0
    %2344 = vmatprep.subr.bf16.mxu0 0
    %2345 = vmatpush1.bf16.xpose.msra.mxu0 0
    %2346 = vmatprep.subr.bf16.mxu0 0
    %2347 = vmatpush1.bf16.xpose.msra.mxu0 0
    %2348 = vmatprep.subr.bf16.mxu0 0
    %2349 = vmatpush1.bf16.xpose.msra.mxu0 0
    %2350 = vmatprep.subr.bf16.mxu0 0
    %2351 = vmatpush1.bf16.xpose.msra.mxu0 0
    %2352 = vmatprep.subr.bf16.mxu0 0
    %2353 = vmatpush1.bf16.xpose.msra.mxu0 0
    %2354 = vmatprep.subr.bf16.mxu0 0
    %2355 = vmatpush1.bf16.xpose.msra.mxu0 0
    %2356 = vmatprep.subr.bf16.mxu0 0
    %2357 = vmatpush1.bf16.xpose.msra.mxu0 0
    %2358 = vmatprep.mubr.bf16.mxu0 0
    %2359 = vmatmul.mubr.bf16.gmra.mrb[0].mxu0 %v2321
    %v2360 = vpop.f32.mrb[0].mxu0
    %v2361 = vadd.f32 %v569, %v2360
    %v2362 = vpop.f32.mrb[0].mxu0
    %v2363 = vpop.f32.mrb[0].mxu0
    %v2364 = vpop.f32.mrb[0].mxu0
    %2365 = vdwg.mxu0
    %v2367 = vsel %vm576, %v2309, 0
    %v2370 = vsel %vm576, %v2314, 0
    %2372 = vmatprep.subr.bf16.mxu0 0
    %2373 = vmatpush1.bf16.xpose.msra.mxu0 %v2370
    %2374 = vmatprep.subr.bf16.mxu0 0
    %2375 = vmatpush1.bf16.xpose.msra.mxu0 0
    %2376 = vmatprep.subr.bf16.mxu0 0
    %2377 = vmatpush1.bf16.xpose.msra.mxu0 0
    %2378 = vmatprep.subr.bf16.mxu0 0
    %2379 = vmatpush1.bf16.xpose.msra.mxu0 0
    %2380 = vmatprep.subr.bf16.mxu0 0
    %2381 = vmatpush1.bf16.xpose.msra.mxu0 0
    %2382 = vmatprep.subr.bf16.mxu0 0
    %2383 = vmatpush1.bf16.xpose.msra.mxu0 0
    %2384 = vmatprep.subr.bf16.mxu0 0
    %2385 = vmatpush1.bf16.xpose.msra.mxu0 0
    %2386 = vmatprep.subr.bf16.mxu0 0
    %2387 = vmatpush1.bf16.xpose.msra.mxu0 0
    %2388 = vmatprep.subr.bf16.mxu0 0
    %2389 = vmatpush1.bf16.xpose.msra.mxu0 0
    %2390 = vmatprep.subr.bf16.mxu0 0
    %2391 = vmatpush1.bf16.xpose.msra.mxu0 0
    %2392 = vmatprep.subr.bf16.mxu0 0
    %2393 = vmatpush1.bf16.xpose.msra.mxu0 0
    %2394 = vmatprep.subr.bf16.mxu0 0
    %2395 = vmatpush1.bf16.xpose.msra.mxu0 0
    %2396 = vmatprep.subr.bf16.mxu0 0
    %2397 = vmatpush1.bf16.xpose.msra.mxu0 0
    %2398 = vmatprep.subr.bf16.mxu0 0
    %2399 = vmatpush1.bf16.xpose.msra.mxu0 0
    %2400 = vmatprep.subr.bf16.mxu0 0
    %2401 = vmatpush1.bf16.xpose.msra.mxu0 0
    %2402 = vmatprep.subr.bf16.mxu0 0
    %2403 = vmatpush1.bf16.xpose.msra.mxu0 0
    %2404 = vmatprep.mubr.bf16.mxu0 0
    %2405 = vmatmul.mubr.bf16.gmra.mrb[0].mxu0 %v2367
    %v2406 = vpop.f32.mrb[0].mxu0
    %v2407 = vadd.f32 %v573, %v2406
    %v2408 = vpop.f32.mrb[0].mxu0
    %v2409 = vpop.f32.mrb[0].mxu0
    %v2410 = vpop.f32.mrb[0].mxu0
    %2411 = vdwg.mxu0
    %v2412 = vsel %vm669, %v2361, -inf
    %2413 = vmax.xlane.f32.xlu0 %v2412
    %v2414 = vpop.xlane.xlu0 %2413
    %v2415 = vsel %vm669, %v2407, -inf
    %2416 = vmax.xlane.f32.xlu0 %v2415
    %v2417 = vpop.xlane.xlu0 %2416
    %v2418 = vsub.f32 %v2361, %v2414
    %v2419 = vsub.f32 %v2407, %v2417
    %v2420 = vmul.f32 %v2418, 1.442695
    %v2421 = vpow.pop %v2420
    %v2422 = vmul.f32 %v2419, 1.442695
    %v2423 = vpow.pop %v2422
    %v2424 = vsel %vm669, %v2421, 0.0
    %2425 = vadd.xlane.f32.xlu0 %v2424
    %v2426 = vpop.xlane.xlu0 %2425
    %v2427 = vsel %vm669, %v2423, 0.0
    %2428 = vadd.xlane.f32.xlu0 %v2427
    %v2429 = vpop.xlane.xlu0 %2428
    %v2430 = vrcp.pop %v2426
    %v2431 = vrcp.pop %v2429
    %v2432 = vmul.f32 %v2421, %v2430
    %v2433 = vmul.f32 %v2423, %v2431
    %v2434 = vpack.c.bf16 %v2432, %v2432
    %v2435 = vpack.c.bf16 %v2433, %v2433
    %v2437 = vsel %vm669, %v2434, 0
    %v2440 = vsel %vm697, %v2318, 0
    %2442 = vmatprep.subr.bf16.mxu0 0
    %2443 = vmatpush1.bf16.msra.mxu0 %v2440
    %2444 = vmatprep.subr.bf16.mxu0 0
    %2445 = vmatpush1.bf16.msra.mxu0 0
    %2446 = vmatprep.subr.bf16.mxu0 0
    %2447 = vmatpush1.bf16.msra.mxu0 0
    %2448 = vmatprep.subr.bf16.mxu0 0
    %2449 = vmatpush1.bf16.msra.mxu0 0
    %2450 = vmatprep.subr.bf16.mxu0 0
    %2451 = vmatpush1.bf16.msra.mxu0 0
    %2452 = vmatprep.subr.bf16.mxu0 0
    %2453 = vmatpush1.bf16.msra.mxu0 0
    %2454 = vmatprep.subr.bf16.mxu0 0
    %2455 = vmatpush1.bf16.msra.mxu0 0
    %2456 = vmatprep.subr.bf16.mxu0 0
    %2457 = vmatpush1.bf16.msra.mxu0 0
    %2458 = vmatprep.subr.bf16.mxu0 0
    %2459 = vmatpush1.bf16.msra.mxu0 0
    %2460 = vmatprep.subr.bf16.mxu0 0
    %2461 = vmatpush1.bf16.msra.mxu0 0
    %2462 = vmatprep.subr.bf16.mxu0 0
    %2463 = vmatpush1.bf16.msra.mxu0 0
    %2464 = vmatprep.subr.bf16.mxu0 0
    %2465 = vmatpush1.bf16.msra.mxu0 0
    %2466 = vmatprep.subr.bf16.mxu0 0
    %2467 = vmatpush1.bf16.msra.mxu0 0
    %2468 = vmatprep.subr.bf16.mxu0 0
    %2469 = vmatpush1.bf16.msra.mxu0 0
    %2470 = vmatprep.subr.bf16.mxu0 0
    %2471 = vmatpush1.bf16.msra.mxu0 0
    %2472 = vmatprep.subr.bf16.mxu0 0
    %2473 = vmatpush1.bf16.msra.mxu0 0
    %2474 = vmatprep.mubr.bf16.mxu0 0
    %2475 = vmatmul.mubr.bf16.gmra.mrb[0].mxu0 %v2437
    %v2476 = vpop.f32.mrb[0].mxu0
    %v2477 = vadd.f32 0.0, %v2476
    %v2478 = vpop.f32.mrb[0].mxu0
    %v2479 = vpop.f32.mrb[0].mxu0
    %v2480 = vpop.f32.mrb[0].mxu0
    %2481 = vdwg.mxu0
    %v2483 = vsel %vm669, %v2435, 0
    %v2486 = vsel %vm697, %v2319, 0
    %2488 = vmatprep.subr.bf16.mxu0 0
    %2489 = vmatpush1.bf16.msra.mxu0 %v2486
    %2490 = vmatprep.subr.bf16.mxu0 0
    %2491 = vmatpush1.bf16.msra.mxu0 0
    %2492 = vmatprep.subr.bf16.mxu0 0
    %2493 = vmatpush1.bf16.msra.mxu0 0
    %2494 = vmatprep.subr.bf16.mxu0 0
    %2495 = vmatpush1.bf16.msra.mxu0 0
    %2496 = vmatprep.subr.bf16.mxu0 0
    %2497 = vmatpush1.bf16.msra.mxu0 0
    %2498 = vmatprep.subr.bf16.mxu0 0
    %2499 = vmatpush1.bf16.msra.mxu0 0
    %2500 = vmatprep.subr.bf16.mxu0 0
    %2501 = vmatpush1.bf16.msra.mxu0 0
    %2502 = vmatprep.subr.bf16.mxu0 0
    %2503 = vmatpush1.bf16.msra.mxu0 0
    %2504 = vmatprep.subr.bf16.mxu0 0
    %2505 = vmatpush1.bf16.msra.mxu0 0
    %2506 = vmatprep.subr.bf16.mxu0 0
    %2507 = vmatpush1.bf16.msra.mxu0 0
    %2508 = vmatprep.subr.bf16.mxu0 0
    %2509 = vmatpush1.bf16.msra.mxu0 0
    %2510 = vmatprep.subr.bf16.mxu0 0
    %2511 = vmatpush1.bf16.msra.mxu0 0
    %2512 = vmatprep.subr.bf16.mxu0 0
    %2513 = vmatpush1.bf16.msra.mxu0 0
    %2514 = vmatprep.subr.bf16.mxu0 0
    %2515 = vmatpush1.bf16.msra.mxu0 0
    %2516 = vmatprep.subr.bf16.mxu0 0
    %2517 = vmatpush1.bf16.msra.mxu0 0
    %2518 = vmatprep.subr.bf16.mxu0 0
    %2519 = vmatpush1.bf16.msra.mxu0 0
    %2520 = vmatprep.mubr.bf16.mxu0 0
    %2521 = vmatmul.mubr.bf16.gmra.mrb[0].mxu0 %v2483
    %v2522 = vpop.f32.mrb[0].mxu0
    %v2523 = vadd.f32 0.0, %v2522
    %v2524 = vpop.f32.mrb[0].mxu0
    %v2525 = vpop.f32.mrb[0].mxu0
    %v2526 = vpop.f32.mrb[0].mxu0
    %2527 = vdwg.mxu0
    %2528 = vrot.lane.b32.xlu0 %v2308, 96
    %v2529 = vpop.permute.xlu0 %2528
    %2530 = vrot.lane.b32.xlu0 %v2313, 96
    %v2531 = vpop.permute.xlu0 %2530
    %v2533 = vsel %vm576, %v2529, 0
    %v2536 = vsel %vm576, %v2531, 0
    %2538 = vmatprep.subr.bf16.mxu0 0
    %2539 = vmatpush1.bf16.xpose.msra.mxu0 %v2536
    %2540 = vmatprep.subr.bf16.mxu0 0
    %2541 = vmatpush1.bf16.xpose.msra.mxu0 0
    %2542 = vmatprep.subr.bf16.mxu0 0
    %2543 = vmatpush1.bf16.xpose.msra.mxu0 0
    %2544 = vmatprep.subr.bf16.mxu0 0
    %2545 = vmatpush1.bf16.xpose.msra.mxu0 0
    %2546 = vmatprep.subr.bf16.mxu0 0
    %2547 = vmatpush1.bf16.xpose.msra.mxu0 0
    %2548 = vmatprep.subr.bf16.mxu0 0
    %2549 = vmatpush1.bf16.xpose.msra.mxu0 0
    %2550 = vmatprep.subr.bf16.mxu0 0
    %2551 = vmatpush1.bf16.xpose.msra.mxu0 0
    %2552 = vmatprep.subr.bf16.mxu0 0
    %2553 = vmatpush1.bf16.xpose.msra.mxu0 0
    %2554 = vmatprep.subr.bf16.mxu0 0
    %2555 = vmatpush1.bf16.xpose.msra.mxu0 0
    %2556 = vmatprep.subr.bf16.mxu0 0
    %2557 = vmatpush1.bf16.xpose.msra.mxu0 0
    %2558 = vmatprep.subr.bf16.mxu0 0
    %2559 = vmatpush1.bf16.xpose.msra.mxu0 0
    %2560 = vmatprep.subr.bf16.mxu0 0
    %2561 = vmatpush1.bf16.xpose.msra.mxu0 0
    %2562 = vmatprep.subr.bf16.mxu0 0
    %2563 = vmatpush1.bf16.xpose.msra.mxu0 0
    %2564 = vmatprep.subr.bf16.mxu0 0
    %2565 = vmatpush1.bf16.xpose.msra.mxu0 0
    %2566 = vmatprep.subr.bf16.mxu0 0
    %2567 = vmatpush1.bf16.xpose.msra.mxu0 0
    %2568 = vmatprep.subr.bf16.mxu0 0
    %2569 = vmatpush1.bf16.xpose.msra.mxu0 0
    %2570 = vmatprep.mubr.bf16.mxu0 0
    %2571 = vmatmul.mubr.bf16.gmra.mrb[0].mxu0 %v2533
    %v2572 = vpop.f32.mrb[0].mxu0
    %v2573 = vadd.f32 %v569, %v2572
    %v2574 = vpop.f32.mrb[0].mxu0
    %v2575 = vpop.f32.mrb[0].mxu0
    %v2576 = vpop.f32.mrb[0].mxu0
    %2577 = vdwg.mxu0
    %2578 = vrot.lane.b32.xlu0 %v2309, 96
    %v2579 = vpop.permute.xlu0 %2578
    %2580 = vrot.lane.b32.xlu0 %v2314, 96
    %v2581 = vpop.permute.xlu0 %2580
    %v2583 = vsel %vm576, %v2579, 0
    %v2586 = vsel %vm576, %v2581, 0
    %2588 = vmatprep.subr.bf16.mxu0 0
    %2589 = vmatpush1.bf16.xpose.msra.mxu0 %v2586
    %2590 = vmatprep.subr.bf16.mxu0 0
    %2591 = vmatpush1.bf16.xpose.msra.mxu0 0
    %2592 = vmatprep.subr.bf16.mxu0 0
    %2593 = vmatpush1.bf16.xpose.msra.mxu0 0
    %2594 = vmatprep.subr.bf16.mxu0 0
    %2595 = vmatpush1.bf16.xpose.msra.mxu0 0
    %2596 = vmatprep.subr.bf16.mxu0 0
    %2597 = vmatpush1.bf16.xpose.msra.mxu0 0
    %2598 = vmatprep.subr.bf16.mxu0 0
    %2599 = vmatpush1.bf16.xpose.msra.mxu0 0
    %2600 = vmatprep.subr.bf16.mxu0 0
    %2601 = vmatpush1.bf16.xpose.msra.mxu0 0
    %2602 = vmatprep.subr.bf16.mxu0 0
    %2603 = vmatpush1.bf16.xpose.msra.mxu0 0
    %2604 = vmatprep.subr.bf16.mxu0 0
    %2605 = vmatpush1.bf16.xpose.msra.mxu0 0
    %2606 = vmatprep.subr.bf16.mxu0 0
    %2607 = vmatpush1.bf16.xpose.msra.mxu0 0
    %2608 = vmatprep.subr.bf16.mxu0 0
    %2609 = vmatpush1.bf16.xpose.msra.mxu0 0
    %2610 = vmatprep.subr.bf16.mxu0 0
    %2611 = vmatpush1.bf16.xpose.msra.mxu0 0
    %2612 = vmatprep.subr.bf16.mxu0 0
    %2613 = vmatpush1.bf16.xpose.msra.mxu0 0
    %2614 = vmatprep.subr.bf16.mxu0 0
    %2615 = vmatpush1.bf16.xpose.msra.mxu0 0
    %2616 = vmatprep.subr.bf16.mxu0 0
    %2617 = vmatpush1.bf16.xpose.msra.mxu0 0
    %2618 = vmatprep.subr.bf16.mxu0 0
    %2619 = vmatpush1.bf16.xpose.msra.mxu0 0
    %2620 = vmatprep.mubr.bf16.mxu0 0
    %2621 = vmatmul.mubr.bf16.gmra.mrb[0].mxu0 %v2583
    %v2622 = vpop.f32.mrb[0].mxu0
    %v2623 = vadd.f32 %v573, %v2622
    %v2624 = vpop.f32.mrb[0].mxu0
    %v2625 = vpop.f32.mrb[0].mxu0
    %v2626 = vpop.f32.mrb[0].mxu0
    %2627 = vdwg.mxu0
    %v2628 = vsel %vm669, %v2573, -inf
    %2629 = vmax.xlane.f32.xlu0 %v2628
    %v2630 = vpop.xlane.xlu0 %2629
    %v2631 = vsel %vm669, %v2623, -inf
    %2632 = vmax.xlane.f32.xlu0 %v2631
    %v2633 = vpop.xlane.xlu0 %2632
    %v2634 = vsub.f32 %v2573, %v2630
    %v2635 = vsub.f32 %v2623, %v2633
    %v2636 = vmul.f32 %v2634, 1.442695
    %v2637 = vpow.pop %v2636
    %v2638 = vmul.f32 %v2635, 1.442695
    %v2639 = vpow.pop %v2638
    %v2640 = vsel %vm669, %v2637, 0.0
    %2641 = vadd.xlane.f32.xlu0 %v2640
    %v2642 = vpop.xlane.xlu0 %2641
    %v2643 = vsel %vm669, %v2639, 0.0
    %2644 = vadd.xlane.f32.xlu0 %v2643
    %v2645 = vpop.xlane.xlu0 %2644
    %v2646 = vrcp.pop %v2642
    %v2647 = vrcp.pop %v2645
    %v2648 = vmul.f32 %v2637, %v2646
    %v2649 = vmul.f32 %v2639, %v2647
    %v2650 = vpack.c.bf16 %v2648, %v2648
    %v2651 = vpack.c.bf16 %v2649, %v2649
    %2652 = vrot.lane.b32.xlu0 %v2318, 96
    %v2653 = vpop.permute.xlu0 %2652
    %v2655 = vsel %vm669, %v2650, 0
    %v2658 = vsel %vm697, %v2653, 0
    %2660 = vmatprep.subr.bf16.mxu0 0
    %2661 = vmatpush1.bf16.msra.mxu0 %v2658
    %2662 = vmatprep.subr.bf16.mxu0 0
    %2663 = vmatpush1.bf16.msra.mxu0 0
    %2664 = vmatprep.subr.bf16.mxu0 0
    %2665 = vmatpush1.bf16.msra.mxu0 0
    %2666 = vmatprep.subr.bf16.mxu0 0
    %2667 = vmatpush1.bf16.msra.mxu0 0
    %2668 = vmatprep.subr.bf16.mxu0 0
    %2669 = vmatpush1.bf16.msra.mxu0 0
    %2670 = vmatprep.subr.bf16.mxu0 0
    %2671 = vmatpush1.bf16.msra.mxu0 0
    %2672 = vmatprep.subr.bf16.mxu0 0
    %2673 = vmatpush1.bf16.msra.mxu0 0
    %2674 = vmatprep.subr.bf16.mxu0 0
    %2675 = vmatpush1.bf16.msra.mxu0 0
    %2676 = vmatprep.subr.bf16.mxu0 0
    %2677 = vmatpush1.bf16.msra.mxu0 0
    %2678 = vmatprep.subr.bf16.mxu0 0
    %2679 = vmatpush1.bf16.msra.mxu0 0
    %2680 = vmatprep.subr.bf16.mxu0 0
    %2681 = vmatpush1.bf16.msra.mxu0 0
    %2682 = vmatprep.subr.bf16.mxu0 0
    %2683 = vmatpush1.bf16.msra.mxu0 0
    %2684 = vmatprep.subr.bf16.mxu0 0
    %2685 = vmatpush1.bf16.msra.mxu0 0
    %2686 = vmatprep.subr.bf16.mxu0 0
    %2687 = vmatpush1.bf16.msra.mxu0 0
    %2688 = vmatprep.subr.bf16.mxu0 0
    %2689 = vmatpush1.bf16.msra.mxu0 0
    %2690 = vmatprep.subr.bf16.mxu0 0
    %2691 = vmatpush1.bf16.msra.mxu0 0
    %2692 = vmatprep.mubr.bf16.mxu0 0
    %2693 = vmatmul.mubr.bf16.gmra.mrb[0].mxu0 %v2655
    %v2694 = vpop.f32.mrb[0].mxu0
    %v2695 = vadd.f32 0.0, %v2694
    %v2696 = vpop.f32.mrb[0].mxu0
    %v2697 = vpop.f32.mrb[0].mxu0
    %v2698 = vpop.f32.mrb[0].mxu0
    %2699 = vdwg.mxu0
    %2700 = vrot.lane.b32.xlu0 %v2319, 96
    %v2701 = vpop.permute.xlu0 %2700
    %v2703 = vsel %vm669, %v2651, 0
    %v2706 = vsel %vm697, %v2701, 0
    %2708 = vmatprep.subr.bf16.mxu0 0
    %2709 = vmatpush1.bf16.msra.mxu0 %v2706
    %2710 = vmatprep.subr.bf16.mxu0 0
    %2711 = vmatpush1.bf16.msra.mxu0 0
    %2712 = vmatprep.subr.bf16.mxu0 0
    %2713 = vmatpush1.bf16.msra.mxu0 0
    %2714 = vmatprep.subr.bf16.mxu0 0
    %2715 = vmatpush1.bf16.msra.mxu0 0
    %2716 = vmatprep.subr.bf16.mxu0 0
    %2717 = vmatpush1.bf16.msra.mxu0 0
    %2718 = vmatprep.subr.bf16.mxu0 0
    %2719 = vmatpush1.bf16.msra.mxu0 0
    %2720 = vmatprep.subr.bf16.mxu0 0
    %2721 = vmatpush1.bf16.msra.mxu0 0
    %2722 = vmatprep.subr.bf16.mxu0 0
    %2723 = vmatpush1.bf16.msra.mxu0 0
    %2724 = vmatprep.subr.bf16.mxu0 0
    %2725 = vmatpush1.bf16.msra.mxu0 0
    %2726 = vmatprep.subr.bf16.mxu0 0
    %2727 = vmatpush1.bf16.msra.mxu0 0
    %2728 = vmatprep.subr.bf16.mxu0 0
    %2729 = vmatpush1.bf16.msra.mxu0 0
    %2730 = vmatprep.subr.bf16.mxu0 0
    %2731 = vmatpush1.bf16.msra.mxu0 0
    %2732 = vmatprep.subr.bf16.mxu0 0
    %2733 = vmatpush1.bf16.msra.mxu0 0
    %2734 = vmatprep.subr.bf16.mxu0 0
    %2735 = vmatpush1.bf16.msra.mxu0 0
    %2736 = vmatprep.subr.bf16.mxu0 0
    %2737 = vmatpush1.bf16.msra.mxu0 0
    %2738 = vmatprep.subr.bf16.mxu0 0
    %2739 = vmatpush1.bf16.msra.mxu0 0
    %2740 = vmatprep.mubr.bf16.mxu0 0
    %2741 = vmatmul.mubr.bf16.gmra.mrb[0].mxu0 %v2703
    %v2742 = vpop.f32.mrb[0].mxu0
    %v2743 = vadd.f32 0.0, %v2742
    %v2744 = vpop.f32.mrb[0].mxu0
    %v2745 = vpop.f32.mrb[0].mxu0
    %v2746 = vpop.f32.mrb[0].mxu0
    %2747 = vdwg.mxu0
    %2748 = vrot.lane.b32.xlu0 %v2308, 64
    %v2749 = vpop.permute.xlu0 %2748
    %2750 = vrot.lane.b32.xlu0 %v2313, 64
    %v2751 = vpop.permute.xlu0 %2750
    %v2753 = vsel %vm576, %v2749, 0
    %v2756 = vsel %vm576, %v2751, 0
    %2758 = vmatprep.subr.bf16.mxu0 0
    %2759 = vmatpush1.bf16.xpose.msra.mxu0 %v2756
    %2760 = vmatprep.subr.bf16.mxu0 0
    %2761 = vmatpush1.bf16.xpose.msra.mxu0 0
    %2762 = vmatprep.subr.bf16.mxu0 0
    %2763 = vmatpush1.bf16.xpose.msra.mxu0 0
    %2764 = vmatprep.subr.bf16.mxu0 0
    %2765 = vmatpush1.bf16.xpose.msra.mxu0 0
    %2766 = vmatprep.subr.bf16.mxu0 0
    %2767 = vmatpush1.bf16.xpose.msra.mxu0 0
    %2768 = vmatprep.subr.bf16.mxu0 0
    %2769 = vmatpush1.bf16.xpose.msra.mxu0 0
    %2770 = vmatprep.subr.bf16.mxu0 0
    %2771 = vmatpush1.bf16.xpose.msra.mxu0 0
    %2772 = vmatprep.subr.bf16.mxu0 0
    %2773 = vmatpush1.bf16.xpose.msra.mxu0 0
    %2774 = vmatprep.subr.bf16.mxu0 0
    %2775 = vmatpush1.bf16.xpose.msra.mxu0 0
    %2776 = vmatprep.subr.bf16.mxu0 0
    %2777 = vmatpush1.bf16.xpose.msra.mxu0 0
    %2778 = vmatprep.subr.bf16.mxu0 0
    %2779 = vmatpush1.bf16.xpose.msra.mxu0 0
    %2780 = vmatprep.subr.bf16.mxu0 0
    %2781 = vmatpush1.bf16.xpose.msra.mxu0 0
    %2782 = vmatprep.subr.bf16.mxu0 0
    %2783 = vmatpush1.bf16.xpose.msra.mxu0 0
    %2784 = vmatprep.subr.bf16.mxu0 0
    %2785 = vmatpush1.bf16.xpose.msra.mxu0 0
    %2786 = vmatprep.subr.bf16.mxu0 0
    %2787 = vmatpush1.bf16.xpose.msra.mxu0 0
    %2788 = vmatprep.subr.bf16.mxu0 0
    %2789 = vmatpush1.bf16.xpose.msra.mxu0 0
    %2790 = vmatprep.mubr.bf16.mxu0 0
    %2791 = vmatmul.mubr.bf16.gmra.mrb[0].mxu0 %v2753
    %v2792 = vpop.f32.mrb[0].mxu0
    %v2793 = vadd.f32 %v569, %v2792
    %v2794 = vpop.f32.mrb[0].mxu0
    %v2795 = vpop.f32.mrb[0].mxu0
    %v2796 = vpop.f32.mrb[0].mxu0
    %2797 = vdwg.mxu0
    %2798 = vrot.lane.b32.xlu0 %v2309, 64
    %v2799 = vpop.permute.xlu0 %2798
    %2800 = vrot.lane.b32.xlu0 %v2314, 64
    %v2801 = vpop.permute.xlu0 %2800
    %v2803 = vsel %vm576, %v2799, 0
    %v2806 = vsel %vm576, %v2801, 0
    %2808 = vmatprep.subr.bf16.mxu0 0
    %2809 = vmatpush1.bf16.xpose.msra.mxu0 %v2806
    %2810 = vmatprep.subr.bf16.mxu0 0
    %2811 = vmatpush1.bf16.xpose.msra.mxu0 0
    %2812 = vmatprep.subr.bf16.mxu0 0
    %2813 = vmatpush1.bf16.xpose.msra.mxu0 0
    %2814 = vmatprep.subr.bf16.mxu0 0
    %2815 = vmatpush1.bf16.xpose.msra.mxu0 0
    %2816 = vmatprep.subr.bf16.mxu0 0
    %2817 = vmatpush1.bf16.xpose.msra.mxu0 0
    %2818 = vmatprep.subr.bf16.mxu0 0
    %2819 = vmatpush1.bf16.xpose.msra.mxu0 0
    %2820 = vmatprep.subr.bf16.mxu0 0
    %2821 = vmatpush1.bf16.xpose.msra.mxu0 0
    %2822 = vmatprep.subr.bf16.mxu0 0
    %2823 = vmatpush1.bf16.xpose.msra.mxu0 0
    %2824 = vmatprep.subr.bf16.mxu0 0
    %2825 = vmatpush1.bf16.xpose.msra.mxu0 0
    %2826 = vmatprep.subr.bf16.mxu0 0
    %2827 = vmatpush1.bf16.xpose.msra.mxu0 0
    %2828 = vmatprep.subr.bf16.mxu0 0
    %2829 = vmatpush1.bf16.xpose.msra.mxu0 0
    %2830 = vmatprep.subr.bf16.mxu0 0
    %2831 = vmatpush1.bf16.xpose.msra.mxu0 0
    %2832 = vmatprep.subr.bf16.mxu0 0
    %2833 = vmatpush1.bf16.xpose.msra.mxu0 0
    %2834 = vmatprep.subr.bf16.mxu0 0
    %2835 = vmatpush1.bf16.xpose.msra.mxu0 0
    %2836 = vmatprep.subr.bf16.mxu0 0
    %2837 = vmatpush1.bf16.xpose.msra.mxu0 0
    %2838 = vmatprep.subr.bf16.mxu0 0
    %2839 = vmatpush1.bf16.xpose.msra.mxu0 0
    %2840 = vmatprep.mubr.bf16.mxu0 0
    %2841 = vmatmul.mubr.bf16.gmra.mrb[0].mxu0 %v2803
    %v2842 = vpop.f32.mrb[0].mxu0
    %v2843 = vadd.f32 %v573, %v2842
    %v2844 = vpop.f32.mrb[0].mxu0
    %v2845 = vpop.f32.mrb[0].mxu0
    %v2846 = vpop.f32.mrb[0].mxu0
    %2847 = vdwg.mxu0
    %v2848 = vsel %vm669, %v2793, -inf
    %2849 = vmax.xlane.f32.xlu0 %v2848
    %v2850 = vpop.xlane.xlu0 %2849
    %v2851 = vsel %vm669, %v2843, -inf
    %2852 = vmax.xlane.f32.xlu0 %v2851
    %v2853 = vpop.xlane.xlu0 %2852
    %v2854 = vsub.f32 %v2793, %v2850
    %v2855 = vsub.f32 %v2843, %v2853
    %v2856 = vmul.f32 %v2854, 1.442695
    %v2857 = vpow.pop %v2856
    %v2858 = vmul.f32 %v2855, 1.442695
    %v2859 = vpow.pop %v2858
    %v2860 = vsel %vm669, %v2857, 0.0
    %2861 = vadd.xlane.f32.xlu0 %v2860
    %v2862 = vpop.xlane.xlu0 %2861
    %v2863 = vsel %vm669, %v2859, 0.0
    %2864 = vadd.xlane.f32.xlu0 %v2863
    %v2865 = vpop.xlane.xlu0 %2864
    %v2866 = vrcp.pop %v2862
    %v2867 = vrcp.pop %v2865
    %v2868 = vmul.f32 %v2857, %v2866
    %v2869 = vmul.f32 %v2859, %v2867
    %v2870 = vpack.c.bf16 %v2868, %v2868
    %v2871 = vpack.c.bf16 %v2869, %v2869
    %2872 = vrot.lane.b32.xlu0 %v2318, 64
    %v2873 = vpop.permute.xlu0 %2872
    %v2875 = vsel %vm669, %v2870, 0
    %v2878 = vsel %vm697, %v2873, 0
    %2880 = vmatprep.subr.bf16.mxu0 0
    %2881 = vmatpush1.bf16.msra.mxu0 %v2878
    %2882 = vmatprep.subr.bf16.mxu0 0
    %2883 = vmatpush1.bf16.msra.mxu0 0
    %2884 = vmatprep.subr.bf16.mxu0 0
    %2885 = vmatpush1.bf16.msra.mxu0 0
    %2886 = vmatprep.subr.bf16.mxu0 0
    %2887 = vmatpush1.bf16.msra.mxu0 0
    %2888 = vmatprep.subr.bf16.mxu0 0
    %2889 = vmatpush1.bf16.msra.mxu0 0
    %2890 = vmatprep.subr.bf16.mxu0 0
    %2891 = vmatpush1.bf16.msra.mxu0 0
    %2892 = vmatprep.subr.bf16.mxu0 0
    %2893 = vmatpush1.bf16.msra.mxu0 0
    %2894 = vmatprep.subr.bf16.mxu0 0
    %2895 = vmatpush1.bf16.msra.mxu0 0
    %2896 = vmatprep.subr.bf16.mxu0 0
    %2897 = vmatpush1.bf16.msra.mxu0 0
    %2898 = vmatprep.subr.bf16.mxu0 0
    %2899 = vmatpush1.bf16.msra.mxu0 0
    %2900 = vmatprep.subr.bf16.mxu0 0
    %2901 = vmatpush1.bf16.msra.mxu0 0
    %2902 = vmatprep.subr.bf16.mxu0 0
    %2903 = vmatpush1.bf16.msra.mxu0 0
    %2904 = vmatprep.subr.bf16.mxu0 0
    %2905 = vmatpush1.bf16.msra.mxu0 0
    %2906 = vmatprep.subr.bf16.mxu0 0
    %2907 = vmatpush1.bf16.msra.mxu0 0
    %2908 = vmatprep.subr.bf16.mxu0 0
    %2909 = vmatpush1.bf16.msra.mxu0 0
    %2910 = vmatprep.subr.bf16.mxu0 0
    %2911 = vmatpush1.bf16.msra.mxu0 0
    %2912 = vmatprep.mubr.bf16.mxu0 0
    %2913 = vmatmul.mubr.bf16.gmra.mrb[0].mxu0 %v2875
    %v2914 = vpop.f32.mrb[0].mxu0
    %v2915 = vadd.f32 0.0, %v2914
    %v2916 = vpop.f32.mrb[0].mxu0
    %v2917 = vpop.f32.mrb[0].mxu0
    %v2918 = vpop.f32.mrb[0].mxu0
    %2919 = vdwg.mxu0
    %2920 = vrot.lane.b32.xlu0 %v2319, 64
    %v2921 = vpop.permute.xlu0 %2920
    %v2923 = vsel %vm669, %v2871, 0
    %v2926 = vsel %vm697, %v2921, 0
    %2928 = vmatprep.subr.bf16.mxu0 0
    %2929 = vmatpush1.bf16.msra.mxu0 %v2926
    %2930 = vmatprep.subr.bf16.mxu0 0
    %2931 = vmatpush1.bf16.msra.mxu0 0
    %2932 = vmatprep.subr.bf16.mxu0 0
    %2933 = vmatpush1.bf16.msra.mxu0 0
    %2934 = vmatprep.subr.bf16.mxu0 0
    %2935 = vmatpush1.bf16.msra.mxu0 0
    %2936 = vmatprep.subr.bf16.mxu0 0
    %2937 = vmatpush1.bf16.msra.mxu0 0
    %2938 = vmatprep.subr.bf16.mxu0 0
    %2939 = vmatpush1.bf16.msra.mxu0 0
    %2940 = vmatprep.subr.bf16.mxu0 0
    %2941 = vmatpush1.bf16.msra.mxu0 0
    %2942 = vmatprep.subr.bf16.mxu0 0
    %2943 = vmatpush1.bf16.msra.mxu0 0
    %2944 = vmatprep.subr.bf16.mxu0 0
    %2945 = vmatpush1.bf16.msra.mxu0 0
    %2946 = vmatprep.subr.bf16.mxu0 0
    %2947 = vmatpush1.bf16.msra.mxu0 0
    %2948 = vmatprep.subr.bf16.mxu0 0
    %2949 = vmatpush1.bf16.msra.mxu0 0
    %2950 = vmatprep.subr.bf16.mxu0 0
    %2951 = vmatpush1.bf16.msra.mxu0 0
    %2952 = vmatprep.subr.bf16.mxu0 0
    %2953 = vmatpush1.bf16.msra.mxu0 0
    %2954 = vmatprep.subr.bf16.mxu0 0
    %2955 = vmatpush1.bf16.msra.mxu0 0
    %2956 = vmatprep.subr.bf16.mxu0 0
    %2957 = vmatpush1.bf16.msra.mxu0 0
    %2958 = vmatprep.subr.bf16.mxu0 0
    %2959 = vmatpush1.bf16.msra.mxu0 0
    %2960 = vmatprep.mubr.bf16.mxu0 0
    %2961 = vmatmul.mubr.bf16.gmra.mrb[0].mxu0 %v2923
    %v2962 = vpop.f32.mrb[0].mxu0
    %v2963 = vadd.f32 0.0, %v2962
    %v2964 = vpop.f32.mrb[0].mxu0
    %v2965 = vpop.f32.mrb[0].mxu0
    %v2966 = vpop.f32.mrb[0].mxu0
    %2967 = vdwg.mxu0
    %2968 = vrot.lane.b32.xlu0 %v2308, 32
    %v2969 = vpop.permute.xlu0 %2968
    %2970 = vrot.lane.b32.xlu0 %v2313, 32
    %v2971 = vpop.permute.xlu0 %2970
    %v2973 = vsel %vm576, %v2969, 0
    %v2976 = vsel %vm576, %v2971, 0
    %2978 = vmatprep.subr.bf16.mxu0 0
    %2979 = vmatpush1.bf16.xpose.msra.mxu0 %v2976
    %2980 = vmatprep.subr.bf16.mxu0 0
    %2981 = vmatpush1.bf16.xpose.msra.mxu0 0
    %2982 = vmatprep.subr.bf16.mxu0 0
    %2983 = vmatpush1.bf16.xpose.msra.mxu0 0
    %2984 = vmatprep.subr.bf16.mxu0 0
    %2985 = vmatpush1.bf16.xpose.msra.mxu0 0
    %2986 = vmatprep.subr.bf16.mxu0 0
    %2987 = vmatpush1.bf16.xpose.msra.mxu0 0
    %2988 = vmatprep.subr.bf16.mxu0 0
    %2989 = vmatpush1.bf16.xpose.msra.mxu0 0
    %2990 = vmatprep.subr.bf16.mxu0 0
    %2991 = vmatpush1.bf16.xpose.msra.mxu0 0
    %2992 = vmatprep.subr.bf16.mxu0 0
    %2993 = vmatpush1.bf16.xpose.msra.mxu0 0
    %2994 = vmatprep.subr.bf16.mxu0 0
    %2995 = vmatpush1.bf16.xpose.msra.mxu0 0
    %2996 = vmatprep.subr.bf16.mxu0 0
    %2997 = vmatpush1.bf16.xpose.msra.mxu0 0
    %2998 = vmatprep.subr.bf16.mxu0 0
    %2999 = vmatpush1.bf16.xpose.msra.mxu0 0
    %3000 = vmatprep.subr.bf16.mxu0 0
    %3001 = vmatpush1.bf16.xpose.msra.mxu0 0
    %3002 = vmatprep.subr.bf16.mxu0 0
    %3003 = vmatpush1.bf16.xpose.msra.mxu0 0
    %3004 = vmatprep.subr.bf16.mxu0 0
    %3005 = vmatpush1.bf16.xpose.msra.mxu0 0
    %3006 = vmatprep.subr.bf16.mxu0 0
    %3007 = vmatpush1.bf16.xpose.msra.mxu0 0
    %3008 = vmatprep.subr.bf16.mxu0 0
    %3009 = vmatpush1.bf16.xpose.msra.mxu0 0
    %3010 = vmatprep.mubr.bf16.mxu0 0
    %3011 = vmatmul.mubr.bf16.gmra.mrb[0].mxu0 %v2973
    %v3012 = vpop.f32.mrb[0].mxu0
    %v3013 = vadd.f32 %v569, %v3012
    %v3014 = vpop.f32.mrb[0].mxu0
    %v3015 = vpop.f32.mrb[0].mxu0
    %v3016 = vpop.f32.mrb[0].mxu0
    %3017 = vdwg.mxu0
    %3018 = vrot.lane.b32.xlu0 %v2309, 32
    %v3019 = vpop.permute.xlu0 %3018
    %3020 = vrot.lane.b32.xlu0 %v2314, 32
    %v3021 = vpop.permute.xlu0 %3020
    %v3023 = vsel %vm576, %v3019, 0
    %v3026 = vsel %vm576, %v3021, 0
    %3028 = vmatprep.subr.bf16.mxu0 0
    %3029 = vmatpush1.bf16.xpose.msra.mxu0 %v3026
    %3030 = vmatprep.subr.bf16.mxu0 0
    %3031 = vmatpush1.bf16.xpose.msra.mxu0 0
    %3032 = vmatprep.subr.bf16.mxu0 0
    %3033 = vmatpush1.bf16.xpose.msra.mxu0 0
    %3034 = vmatprep.subr.bf16.mxu0 0
    %3035 = vmatpush1.bf16.xpose.msra.mxu0 0
    %3036 = vmatprep.subr.bf16.mxu0 0
    %3037 = vmatpush1.bf16.xpose.msra.mxu0 0
    %3038 = vmatprep.subr.bf16.mxu0 0
    %3039 = vmatpush1.bf16.xpose.msra.mxu0 0
    %3040 = vmatprep.subr.bf16.mxu0 0
    %3041 = vmatpush1.bf16.xpose.msra.mxu0 0
    %3042 = vmatprep.subr.bf16.mxu0 0
    %3043 = vmatpush1.bf16.xpose.msra.mxu0 0
    %3044 = vmatprep.subr.bf16.mxu0 0
    %3045 = vmatpush1.bf16.xpose.msra.mxu0 0
    %3046 = vmatprep.subr.bf16.mxu0 0
    %3047 = vmatpush1.bf16.xpose.msra.mxu0 0
    %3048 = vmatprep.subr.bf16.mxu0 0
    %3049 = vmatpush1.bf16.xpose.msra.mxu0 0
    %3050 = vmatprep.subr.bf16.mxu0 0
    %3051 = vmatpush1.bf16.xpose.msra.mxu0 0
    %3052 = vmatprep.subr.bf16.mxu0 0
    %3053 = vmatpush1.bf16.xpose.msra.mxu0 0
    %3054 = vmatprep.subr.bf16.mxu0 0
    %3055 = vmatpush1.bf16.xpose.msra.mxu0 0
    %3056 = vmatprep.subr.bf16.mxu0 0
    %3057 = vmatpush1.bf16.xpose.msra.mxu0 0
    %3058 = vmatprep.subr.bf16.mxu0 0
    %3059 = vmatpush1.bf16.xpose.msra.mxu0 0
    %3060 = vmatprep.mubr.bf16.mxu0 0
    %3061 = vmatmul.mubr.bf16.gmra.mrb[0].mxu0 %v3023
    %v3062 = vpop.f32.mrb[0].mxu0
    %v3063 = vadd.f32 %v573, %v3062
    %v3064 = vpop.f32.mrb[0].mxu0
    %v3065 = vpop.f32.mrb[0].mxu0
    %v3066 = vpop.f32.mrb[0].mxu0
    %3067 = vdwg.mxu0
    %v3068 = vsel %vm669, %v3013, -inf
    %3069 = vmax.xlane.f32.xlu0 %v3068
    %v3070 = vpop.xlane.xlu0 %3069
    %v3071 = vsel %vm669, %v3063, -inf
    %3072 = vmax.xlane.f32.xlu0 %v3071
    %v3073 = vpop.xlane.xlu0 %3072
    %v3074 = vsub.f32 %v3013, %v3070
    %v3075 = vsub.f32 %v3063, %v3073
    %v3076 = vmul.f32 %v3074, 1.442695
    %v3077 = vpow.pop %v3076
    %v3078 = vmul.f32 %v3075, 1.442695
    %v3079 = vpow.pop %v3078
    %v3080 = vsel %vm669, %v3077, 0.0
    %3081 = vadd.xlane.f32.xlu0 %v3080
    %v3082 = vpop.xlane.xlu0 %3081
    %v3083 = vsel %vm669, %v3079, 0.0
    %3084 = vadd.xlane.f32.xlu0 %v3083
    %v3085 = vpop.xlane.xlu0 %3084
    %v3086 = vrcp.pop %v3082
    %v3087 = vrcp.pop %v3085
    %v3088 = vmul.f32 %v3077, %v3086
    %v3089 = vmul.f32 %v3079, %v3087
    %v3090 = vpack.c.bf16 %v3088, %v3088
    %v3091 = vpack.c.bf16 %v3089, %v3089
    %3092 = vrot.lane.b32.xlu0 %v2318, 32
    %v3093 = vpop.permute.xlu0 %3092
    %v3095 = vsel %vm669, %v3090, 0
    %v3098 = vsel %vm697, %v3093, 0
    %3100 = vmatprep.subr.bf16.mxu0 0
    %3101 = vmatpush1.bf16.msra.mxu0 %v3098
    %3102 = vmatprep.subr.bf16.mxu0 0
    %3103 = vmatpush1.bf16.msra.mxu0 0
    %3104 = vmatprep.subr.bf16.mxu0 0
    %3105 = vmatpush1.bf16.msra.mxu0 0
    %3106 = vmatprep.subr.bf16.mxu0 0
    %3107 = vmatpush1.bf16.msra.mxu0 0
    %3108 = vmatprep.subr.bf16.mxu0 0
    %3109 = vmatpush1.bf16.msra.mxu0 0
    %3110 = vmatprep.subr.bf16.mxu0 0
    %3111 = vmatpush1.bf16.msra.mxu0 0
    %3112 = vmatprep.subr.bf16.mxu0 0
    %3113 = vmatpush1.bf16.msra.mxu0 0
    %3114 = vmatprep.subr.bf16.mxu0 0
    %3115 = vmatpush1.bf16.msra.mxu0 0
    %3116 = vmatprep.subr.bf16.mxu0 0
    %3117 = vmatpush1.bf16.msra.mxu0 0
    %3118 = vmatprep.subr.bf16.mxu0 0
    %3119 = vmatpush1.bf16.msra.mxu0 0
    %3120 = vmatprep.subr.bf16.mxu0 0
    %3121 = vmatpush1.bf16.msra.mxu0 0
    %3122 = vmatprep.subr.bf16.mxu0 0
    %3123 = vmatpush1.bf16.msra.mxu0 0
    %3124 = vmatprep.subr.bf16.mxu0 0
    %3125 = vmatpush1.bf16.msra.mxu0 0
    %3126 = vmatprep.subr.bf16.mxu0 0
    %3127 = vmatpush1.bf16.msra.mxu0 0
    %3128 = vmatprep.subr.bf16.mxu0 0
    %3129 = vmatpush1.bf16.msra.mxu0 0
    %3130 = vmatprep.subr.bf16.mxu0 0
    %3131 = vmatpush1.bf16.msra.mxu0 0
    %3132 = vmatprep.mubr.bf16.mxu0 0
    %3133 = vmatmul.mubr.bf16.gmra.mrb[0].mxu0 %v3095
    %v3134 = vpop.f32.mrb[0].mxu0
    %v3135 = vadd.f32 0.0, %v3134
    %v3136 = vpop.f32.mrb[0].mxu0
    %v3137 = vpop.f32.mrb[0].mxu0
    %v3138 = vpop.f32.mrb[0].mxu0
    %3139 = vdwg.mxu0
    %3140 = vrot.lane.b32.xlu0 %v2319, 32
    %v3141 = vpop.permute.xlu0 %3140
    %v3143 = vsel %vm669, %v3091, 0
    %v3146 = vsel %vm697, %v3141, 0
    %3148 = vmatprep.subr.bf16.mxu0 0
    %3149 = vmatpush1.bf16.msra.mxu0 %v3146
    %3150 = vmatprep.subr.bf16.mxu0 0
    %3151 = vmatpush1.bf16.msra.mxu0 0
    %3152 = vmatprep.subr.bf16.mxu0 0
    %3153 = vmatpush1.bf16.msra.mxu0 0
    %3154 = vmatprep.subr.bf16.mxu0 0
    %3155 = vmatpush1.bf16.msra.mxu0 0
    %3156 = vmatprep.subr.bf16.mxu0 0
    %3157 = vmatpush1.bf16.msra.mxu0 0
    %3158 = vmatprep.subr.bf16.mxu0 0
    %3159 = vmatpush1.bf16.msra.mxu0 0
    %3160 = vmatprep.subr.bf16.mxu0 0
    %3161 = vmatpush1.bf16.msra.mxu0 0
    %3162 = vmatprep.subr.bf16.mxu0 0
    %3163 = vmatpush1.bf16.msra.mxu0 0
    %3164 = vmatprep.subr.bf16.mxu0 0
    %3165 = vmatpush1.bf16.msra.mxu0 0
    %3166 = vmatprep.subr.bf16.mxu0 0
    %3167 = vmatpush1.bf16.msra.mxu0 0
    %3168 = vmatprep.subr.bf16.mxu0 0
    %3169 = vmatpush1.bf16.msra.mxu0 0
    %3170 = vmatprep.subr.bf16.mxu0 0
    %3171 = vmatpush1.bf16.msra.mxu0 0
    %3172 = vmatprep.subr.bf16.mxu0 0
    %3173 = vmatpush1.bf16.msra.mxu0 0
    %3174 = vmatprep.subr.bf16.mxu0 0
    %3175 = vmatpush1.bf16.msra.mxu0 0
    %3176 = vmatprep.subr.bf16.mxu0 0
    %3177 = vmatpush1.bf16.msra.mxu0 0
    %3178 = vmatprep.subr.bf16.mxu0 0
    %3179 = vmatpush1.bf16.msra.mxu0 0
    %3180 = vmatprep.mubr.bf16.mxu0 0
    %3181 = vmatmul.mubr.bf16.gmra.mrb[0].mxu0 %v3143
    %v3182 = vpop.f32.mrb[0].mxu0
    %v3183 = vadd.f32 0.0, %v3182
    %v3184 = vpop.f32.mrb[0].mxu0
    %v3185 = vpop.f32.mrb[0].mxu0
    %v3186 = vpop.f32.mrb[0].mxu0
    %3187 = vdwg.mxu0
    %3190 = vrot.lane.b32.xlu0 %v2695, 32
    %v3191 = vpop.permute.xlu0 %3190
    %3192 = vrot.lane.b32.xlu0 %v2743, 32
    %v3193 = vpop.permute.xlu0 %3192
    %3198 = vrot.lane.b32.xlu0 %v2915, 64
    %v3199 = vpop.permute.xlu0 %3198
    %3200 = vrot.lane.b32.xlu0 %v2963, 64
    %v3201 = vpop.permute.xlu0 %3200
    %3206 = vrot.lane.b32.xlu0 %v3135, 96
    %v3207 = vpop.permute.xlu0 %3206
    %3208 = vrot.lane.b32.xlu0 %v3183, 96
    %v3209 = vpop.permute.xlu0 %3208
    %v3212 = vsel %vm576, %v2477, %v3191
    %v3213 = vsel %vm576, %v2523, %v3193
    %v3214 = vsel %vm1473, %v3212, %v3199
    %v3215 = vsel %vm1473, %v3213, %v3201
    %v3216 = vsel %vm1476, %v3214, %v3207
    %v3217 = vsel %vm1476, %v3215, %v3209
    %v3218 = vpack.c.bf16 %v3217, %v3216
    %v3220 = vlaneseq
    %v3221 = vshrl.u32 %v3220, 7
    %v3222 = vsub.s32 0, %v3221
    %v3223 = vrot.slane %v2068, %v3222
    %v3241 = vunpack.c.l.b16 %v2051
    %v3242 = vunpack.c.l.b16 %v2052
    %v3243 = vunpack.c.l.b16 %v2053
    %v3244 = vunpack.c.l.b16 %v2054
    %v3245 = vunpack.c.l.b16 %v2055
    %v3246 = vunpack.c.l.b16 %v2056
    %v3247 = vunpack.c.l.b16 %v2057
    %v3248 = vunpack.c.l.b16 %v2058
    %v3249 = vunpack.c.l.b16 %v2059
    %v3250 = vunpack.c.l.b16 %v2060
    %v3251 = vunpack.c.l.b16 %v2061
    %v3252 = vunpack.c.l.b16 %v2062
    %v3253 = vunpack.c.l.b16 %v2063
    %v3254 = vunpack.c.l.b16 %v2064
    %v3255 = vunpack.c.l.b16 %v2065
    %v3256 = vunpack.c.l.b16 %v2066
    %v3257 = vpack.c.b16 %v3242, %v3241
    %v3258 = vpack.c.b16 %v3244, %v3243
    %v3259 = vpack.c.b16 %v3246, %v3245
    %v3260 = vpack.c.b16 %v3248, %v3247
    %v3261 = vpack.c.b16 %v3250, %v3249
    %v3262 = vpack.c.b16 %v3252, %v3251
    %v3263 = vpack.c.b16 %v3254, %v3253
    %v3264 = vpack.c.b16 %v3256, %v3255
    %3273 = vmatprep.subr.bf16.mxu0 0
    %3274 = vmatpush1.bf16.msra.mxu0 %v3257
    %3275 = vmatprep.subr.bf16.mxu0 0
    %3276 = vmatpush1.bf16.msra.mxu0 %v3258
    %3277 = vmatprep.subr.bf16.mxu0 0
    %3278 = vmatpush1.bf16.msra.mxu0 %v3259
    %3279 = vmatprep.subr.bf16.mxu0 0
    %3280 = vmatpush1.bf16.msra.mxu0 %v3260
    %3281 = vmatprep.subr.bf16.mxu0 0
    %3282 = vmatpush1.bf16.msra.mxu0 %v3261
    %3283 = vmatprep.subr.bf16.mxu0 0
    %3284 = vmatpush1.bf16.msra.mxu0 %v3262
    %3285 = vmatprep.subr.bf16.mxu0 0
    %3286 = vmatpush1.bf16.msra.mxu0 %v3263
    %3287 = vmatprep.subr.bf16.mxu0 0
    %3288 = vmatpush1.bf16.msra.mxu0 %v3264
    %3289 = vmatprep.subr.bf16.mxu0 0
    %3290 = vmatpush1.bf16.msra.mxu0 0
    %3291 = vmatprep.subr.bf16.mxu0 0
    %3292 = vmatpush1.bf16.msra.mxu0 0
    %3293 = vmatprep.subr.bf16.mxu0 0
    %3294 = vmatpush1.bf16.msra.mxu0 0
    %3295 = vmatprep.subr.bf16.mxu0 0
    %3296 = vmatpush1.bf16.msra.mxu0 0
    %3297 = vmatprep.subr.bf16.mxu0 0
    %3298 = vmatpush1.bf16.msra.mxu0 0
    %3299 = vmatprep.subr.bf16.mxu0 0
    %3300 = vmatpush1.bf16.msra.mxu0 0
    %3301 = vmatprep.subr.bf16.mxu0 0
    %3302 = vmatpush1.bf16.msra.mxu0 0
    %3303 = vmatprep.subr.bf16.mxu0 0
    %3304 = vmatpush1.bf16.msra.mxu0 0
    %3305 = vmatprep.mubr.bf16.mxu0 0
    %3306 = vmatmul.mubr.bf16.gmra.mrb[0].mxu0 %v3218
    %v3307 = vpop.f32.mrb[0].mxu0
    %v3308 = vadd.f32 %v3223, %v3307
    %v3309 = vpop.f32.mrb[0].mxu0
    %v3310 = vpop.f32.mrb[0].mxu0
    %v3311 = vadd.f32 %v3223, %v3310
    %v3312 = vpop.f32.mrb[0].mxu0
    %3313 = vdwg.mxu0
    %v3314 = vadd.f32 %v3308, %v2013
    %v3315 = vadd.f32 %v3311, %v2014
    %3316 = vadd.xlane.f32.xlu0 %v3314
    %v3317 = vpop.xlane.xlu0 %3316
    %3318 = vadd.xlane.f32.xlu0 %v3315
    %v3319 = vpop.xlane.xlu0 %3318
    %v3320 = vmul.f32 %v3317, %v230
    %v3321 = vmul.f32 %v3319, %v230
    %v3322 = vsub.f32 %v3314, %v3320
    %v3323 = vsub.f32 %v3315, %v3321
    %v3324 = vmul.f32 %v3322, %v3322
    %v3325 = vmul.f32 %v3323, %v3323
    %3326 = vadd.xlane.f32.xlu0 %v3324
    %v3327 = vpop.xlane.xlu0 %3326
    %3328 = vadd.xlane.f32.xlu0 %v3325
    %v3329 = vpop.xlane.xlu0 %3328
    %v3330 = vmul.f32 %v3327, %v230
    %v3331 = vmul.f32 %v3329, %v230
    %v3332 = vadd.f32 %v3330, 1e-05
    %v3333 = vadd.f32 %v3331, 1e-05
    %v3334 = vrsqrt.pop %v3332
    %v3335 = vrsqrt.pop %v3333
    %v3336 = vmul.f32 %v3322, %v3334
    %v3337 = vmul.f32 %v3323, %v3335
    %v3339 = vlaneseq
    %v3340 = vshrl.u32 %v3339, 7
    %v3341 = vsub.s32 0, %v3340
    %v3342 = vrot.slane %v2070, %v3341
    %v3344 = vmul.f32 %v3336, %v3342
    %v3345 = vmul.f32 %v3337, %v3342
    %v3347 = vlaneseq
    %v3348 = vshrl.u32 %v3347, 7
    %v3349 = vsub.s32 0, %v3348
    %v3350 = vrot.slane %v2072, %v3349
    %v3352 = vadd.f32 %v3344, %v3350
    %v3353 = vadd.f32 %v3345, %v3350
    %s3354 = scalar_lea.vmem %s33, 128
    %v3355 = vld [vmem:[%s3354] sm:$0xff]
    %v3356 = vld [vmem:[%s3354 + $0x8] sm:$0xff]
    %v3357 = vld [vmem:[%s3354 + $0x10] sm:$0xff]
    %v3358 = vld [vmem:[%s3354 + $0x18] sm:$0xff]
    %v3359 = vld [vmem:[%s3354 + $0x20] sm:$0xff]
    %v3360 = vld [vmem:[%s3354 + $0x28] sm:$0xff]
    %v3361 = vld [vmem:[%s3354 + $0x30] sm:$0xff]
    %v3362 = vld [vmem:[%s3354 + $0x38] sm:$0xff]
    %v3363 = vld [vmem:[%s3354 + $0x40] sm:$0xff]
    %v3364 = vld [vmem:[%s3354 + $0x48] sm:$0xff]
    %v3365 = vld [vmem:[%s3354 + $0x50] sm:$0xff]
    %v3366 = vld [vmem:[%s3354 + $0x58] sm:$0xff]
    %v3367 = vld [vmem:[%s3354 + $0x60] sm:$0xff]
    %v3368 = vld [vmem:[%s3354 + $0x68] sm:$0xff]
    %v3369 = vld [vmem:[%s3354 + $0x70] sm:$0xff]
    %v3370 = vld [vmem:[%s3354 + $0x78] sm:$0xff]
    %s3371 = scalar_lea.vmem %s35, 2
    %v3372 = vld [vmem:[%s3371] sm:$0x3]
    %s3373 = scalar_lea.vmem %s37, 128
    %v3374 = vld [vmem:[%s3373] sm:$0xf]
    %v3375 = vld [vmem:[%s3373 + $0x4] sm:$0xf]
    %v3376 = vld [vmem:[%s3373 + $0x8] sm:$0xf]
    %v3377 = vld [vmem:[%s3373 + $0xc] sm:$0xf]
    %v3378 = vld [vmem:[%s3373 + $0x10] sm:$0xf]
    %v3379 = vld [vmem:[%s3373 + $0x14] sm:$0xf]
    %v3380 = vld [vmem:[%s3373 + $0x18] sm:$0xf]
    %v3381 = vld [vmem:[%s3373 + $0x1c] sm:$0xf]
    %v3382 = vld [vmem:[%s3373 + $0x20] sm:$0xf]
    %v3383 = vld [vmem:[%s3373 + $0x24] sm:$0xf]
    %v3384 = vld [vmem:[%s3373 + $0x28] sm:$0xf]
    %v3385 = vld [vmem:[%s3373 + $0x2c] sm:$0xf]
    %v3386 = vld [vmem:[%s3373 + $0x30] sm:$0xf]
    %v3387 = vld [vmem:[%s3373 + $0x34] sm:$0xf]
    %v3388 = vld [vmem:[%s3373 + $0x38] sm:$0xf]
    %v3389 = vld [vmem:[%s3373 + $0x3c] sm:$0xf]
    %v3390 = vld [vmem:[%s3373 + $0x40] sm:$0xf]
    %v3391 = vld [vmem:[%s3373 + $0x44] sm:$0xf]
    %v3392 = vld [vmem:[%s3373 + $0x48] sm:$0xf]
    %v3393 = vld [vmem:[%s3373 + $0x4c] sm:$0xf]
    %v3394 = vld [vmem:[%s3373 + $0x50] sm:$0xf]
    %v3395 = vld [vmem:[%s3373 + $0x54] sm:$0xf]
    %v3396 = vld [vmem:[%s3373 + $0x58] sm:$0xf]
    %v3397 = vld [vmem:[%s3373 + $0x5c] sm:$0xf]
    %v3398 = vld [vmem:[%s3373 + $0x60] sm:$0xf]
    %v3399 = vld [vmem:[%s3373 + $0x64] sm:$0xf]
    %v3400 = vld [vmem:[%s3373 + $0x68] sm:$0xf]
    %v3401 = vld [vmem:[%s3373 + $0x6c] sm:$0xf]
    %v3402 = vld [vmem:[%s3373 + $0x70] sm:$0xf]
    %v3403 = vld [vmem:[%s3373 + $0x74] sm:$0xf]
    %v3404 = vld [vmem:[%s3373 + $0x78] sm:$0xf]
    %v3405 = vld [vmem:[%s3373 + $0x7c] sm:$0xf]
    %s3406 = scalar_lea.vmem %s39, 1
    %v3407 = vld [vmem:[%s3406] sm:$0x1]
    %s3408 = scalar_lea.vmem %s41, 1
    %v3409 = vld [vmem:[%s3408] sm:$0x1]
    %s3410 = scalar_lea.vmem %s43, 1
    %v3411 = vld [vmem:[%s3410] sm:$0x1]
    %v3412 = vpack.c.bf16 %v3353, %v3352
    %v3414 = vlaneseq
    %v3415 = vshrl.u32 %v3414, 7
    %v3416 = vsub.s32 0, %v3415
    %v3417 = vrot.slane %v3372, %v3416
    %v3418 = vlaneseq
    %v3419 = vshrl.u32 %v3418, 7
    %v3420 = vsub.s32 1, %v3419
    %v3421 = vrot.slane %v3372, %v3420
    %v3440 = vunpack.c.l.b16 %v3355
    %v3441 = vunpack.c.h.b16 %v3355
    %v3442 = vunpack.c.l.b16 %v3356
    %v3443 = vunpack.c.h.b16 %v3356
    %v3444 = vunpack.c.l.b16 %v3357
    %v3445 = vunpack.c.h.b16 %v3357
    %v3446 = vunpack.c.l.b16 %v3358
    %v3447 = vunpack.c.h.b16 %v3358
    %v3448 = vunpack.c.l.b16 %v3359
    %v3449 = vunpack.c.h.b16 %v3359
    %v3450 = vunpack.c.l.b16 %v3360
    %v3451 = vunpack.c.h.b16 %v3360
    %v3452 = vunpack.c.l.b16 %v3361
    %v3453 = vunpack.c.h.b16 %v3361
    %v3454 = vunpack.c.l.b16 %v3362
    %v3455 = vunpack.c.h.b16 %v3362
    %v3456 = vunpack.c.l.b16 %v3363
    %v3457 = vunpack.c.h.b16 %v3363
    %v3458 = vunpack.c.l.b16 %v3364
    %v3459 = vunpack.c.h.b16 %v3364
    %v3460 = vunpack.c.l.b16 %v3365
    %v3461 = vunpack.c.h.b16 %v3365
    %v3462 = vunpack.c.l.b16 %v3366
    %v3463 = vunpack.c.h.b16 %v3366
    %v3464 = vunpack.c.l.b16 %v3367
    %v3465 = vunpack.c.h.b16 %v3367
    %v3466 = vunpack.c.l.b16 %v3368
    %v3467 = vunpack.c.h.b16 %v3368
    %v3468 = vunpack.c.l.b16 %v3369
    %v3469 = vunpack.c.h.b16 %v3369
    %v3470 = vunpack.c.l.b16 %v3370
    %v3471 = vunpack.c.h.b16 %v3370
    %v3472 = vpack.c.b16 %v3442, %v3440
    %v3473 = vpack.c.b16 %v3443, %v3441
    %v3474 = vpack.c.b16 %v3446, %v3444
    %v3475 = vpack.c.b16 %v3447, %v3445
    %v3476 = vpack.c.b16 %v3450, %v3448
    %v3477 = vpack.c.b16 %v3451, %v3449
    %v3478 = vpack.c.b16 %v3454, %v3452
    %v3479 = vpack.c.b16 %v3455, %v3453
    %v3480 = vpack.c.b16 %v3458, %v3456
    %v3481 = vpack.c.b16 %v3459, %v3457
    %v3482 = vpack.c.b16 %v3462, %v3460
    %v3483 = vpack.c.b16 %v3463, %v3461
    %v3484 = vpack.c.b16 %v3466, %v3464
    %v3485 = vpack.c.b16 %v3467, %v3465
    %v3486 = vpack.c.b16 %v3470, %v3468
    %v3487 = vpack.c.b16 %v3471, %v3469
    %3504 = vmatprep.subr.bf16.mxu0 %v3473
    %3505 = vmatpush1.bf16.msra.mxu0 %v3472
    %3506 = vmatprep.subr.bf16.mxu0 %v3475
    %3507 = vmatpush1.bf16.msra.mxu0 %v3474
    %3508 = vmatprep.subr.bf16.mxu0 %v3477
    %3509 = vmatpush1.bf16.msra.mxu0 %v3476
    %3510 = vmatprep.subr.bf16.mxu0 %v3479
    %3511 = vmatpush1.bf16.msra.mxu0 %v3478
    %3512 = vmatprep.subr.bf16.mxu0 %v3481
    %3513 = vmatpush1.bf16.msra.mxu0 %v3480
    %3514 = vmatprep.subr.bf16.mxu0 %v3483
    %3515 = vmatpush1.bf16.msra.mxu0 %v3482
    %3516 = vmatprep.subr.bf16.mxu0 %v3485
    %3517 = vmatpush1.bf16.msra.mxu0 %v3484
    %3518 = vmatprep.subr.bf16.mxu0 %v3487
    %3519 = vmatpush1.bf16.msra.mxu0 %v3486
    %3520 = vmatprep.subr.bf16.mxu0 0
    %3521 = vmatpush1.bf16.msra.mxu0 0
    %3522 = vmatprep.subr.bf16.mxu0 0
    %3523 = vmatpush1.bf16.msra.mxu0 0
    %3524 = vmatprep.subr.bf16.mxu0 0
    %3525 = vmatpush1.bf16.msra.mxu0 0
    %3526 = vmatprep.subr.bf16.mxu0 0
    %3527 = vmatpush1.bf16.msra.mxu0 0
    %3528 = vmatprep.subr.bf16.mxu0 0
    %3529 = vmatpush1.bf16.msra.mxu0 0
    %3530 = vmatprep.subr.bf16.mxu0 0
    %3531 = vmatpush1.bf16.msra.mxu0 0
    %3532 = vmatprep.subr.bf16.mxu0 0
    %3533 = vmatpush1.bf16.msra.mxu0 0
    %3534 = vmatprep.subr.bf16.mxu0 0
    %3535 = vmatpush1.bf16.msra.mxu0 0
    %3536 = vmatprep.mubr.bf16.mxu0 0
    %3537 = vmatmul.mubr.bf16.gmra.mrb[0].mxu0 %v3412
    %v3538 = vpop.f32.mrb[0].mxu0
    %v3539 = vadd.f32 %v3417, %v3538
    %v3540 = vpop.f32.mrb[0].mxu0
    %v3541 = vadd.f32 %v3421, %v3540
    %v3542 = vpop.f32.mrb[0].mxu0
    %v3543 = vadd.f32 %v3417, %v3542
    %v3544 = vpop.f32.mrb[0].mxu0
    %v3545 = vadd.f32 %v3421, %v3544
    %3546 = vdwg.mxu0
    %v3547 = vxor.u32 %v3539, 2147483648
    %v3548 = vxor.u32 %v3541, 2147483648
    %v3549 = vxor.u32 %v3543, 2147483648
    %v3550 = vxor.u32 %v3545, 2147483648
    %v3551 = vmul.f32 %v3547, 1.442695
    %v3552 = vpow.pop %v3551
    %v3553 = vmul.f32 %v3548, 1.442695
    %v3554 = vpow.pop %v3553
    %v3555 = vmul.f32 %v3549, 1.442695
    %v3556 = vpow.pop %v3555
    %v3557 = vmul.f32 %v3550, 1.442695
    %v3558 = vpow.pop %v3557
    %v3559 = vadd.f32 %v3552, 1.0
    %v3560 = vadd.f32 %v3554, 1.0
    %v3561 = vadd.f32 %v3556, 1.0
    %v3562 = vadd.f32 %v3558, 1.0
    %v3563 = vrcp.pop %v3559
    %v3564 = vmul.f32 1.0, %v3563
    %v3565 = vrcp.pop %v3560
    %v3566 = vmul.f32 1.0, %v3565
    %v3567 = vrcp.pop %v3561
    %v3568 = vmul.f32 1.0, %v3567
    %v3569 = vrcp.pop %v3562
    %v3570 = vmul.f32 1.0, %v3569
    %v3571 = vmul.f32 %v3539, %v3564
    %v3572 = vmul.f32 %v3541, %v3566
    %v3573 = vmul.f32 %v3543, %v3568
    %v3574 = vmul.f32 %v3545, %v3570
    %v3575 = vpack.c.bf16 %v3573, %v3571
    %v3576 = vpack.c.bf16 %v3574, %v3572
    %v3578 = vlaneseq
    %v3579 = vshrl.u32 %v3578, 7
    %v3580 = vsub.s32 0, %v3579
    %v3581 = vrot.slane %v3407, %v3580
    %v3615 = vunpack.c.l.b16 %v3374
    %v3616 = vunpack.c.l.b16 %v3375
    %v3617 = vunpack.c.l.b16 %v3376
    %v3618 = vunpack.c.l.b16 %v3377
    %v3619 = vunpack.c.l.b16 %v3378
    %v3620 = vunpack.c.l.b16 %v3379
    %v3621 = vunpack.c.l.b16 %v3380
    %v3622 = vunpack.c.l.b16 %v3381
    %v3623 = vunpack.c.l.b16 %v3382
    %v3624 = vunpack.c.l.b16 %v3383
    %v3625 = vunpack.c.l.b16 %v3384
    %v3626 = vunpack.c.l.b16 %v3385
    %v3627 = vunpack.c.l.b16 %v3386
    %v3628 = vunpack.c.l.b16 %v3387
    %v3629 = vunpack.c.l.b16 %v3388
    %v3630 = vunpack.c.l.b16 %v3389
    %v3631 = vunpack.c.l.b16 %v3390
    %v3632 = vunpack.c.l.b16 %v3391
    %v3633 = vunpack.c.l.b16 %v3392
    %v3634 = vunpack.c.l.b16 %v3393
    %v3635 = vunpack.c.l.b16 %v3394
    %v3636 = vunpack.c.l.b16 %v3395
    %v3637 = vunpack.c.l.b16 %v3396
    %v3638 = vunpack.c.l.b16 %v3397
    %v3639 = vunpack.c.l.b16 %v3398
    %v3640 = vunpack.c.l.b16 %v3399
    %v3641 = vunpack.c.l.b16 %v3400
    %v3642 = vunpack.c.l.b16 %v3401
    %v3643 = vunpack.c.l.b16 %v3402
    %v3644 = vunpack.c.l.b16 %v3403
    %v3645 = vunpack.c.l.b16 %v3404
    %v3646 = vunpack.c.l.b16 %v3405
    %v3647 = vpack.c.b16 %v3616, %v3615
    %v3648 = vpack.c.b16 %v3618, %v3617
    %v3649 = vpack.c.b16 %v3620, %v3619
    %v3650 = vpack.c.b16 %v3622, %v3621
    %v3651 = vpack.c.b16 %v3624, %v3623
    %v3652 = vpack.c.b16 %v3626, %v3625
    %v3653 = vpack.c.b16 %v3628, %v3627
    %v3654 = vpack.c.b16 %v3630, %v3629
    %v3655 = vpack.c.b16 %v3632, %v3631
    %v3656 = vpack.c.b16 %v3634, %v3633
    %v3657 = vpack.c.b16 %v3636, %v3635
    %v3658 = vpack.c.b16 %v3638, %v3637
    %v3659 = vpack.c.b16 %v3640, %v3639
    %v3660 = vpack.c.b16 %v3642, %v3641
    %v3661 = vpack.c.b16 %v3644, %v3643
    %v3662 = vpack.c.b16 %v3646, %v3645
    %3679 = vmatprep.subr.bf16.mxu0 0
    %3680 = vmatpush1.bf16.msra.mxu0 %v3647
    %3681 = vmatprep.subr.bf16.mxu0 0
    %3682 = vmatpush1.bf16.msra.mxu0 %v3648
    %3683 = vmatprep.subr.bf16.mxu0 0
    %3684 = vmatpush1.bf16.msra.mxu0 %v3649
    %3685 = vmatprep.subr.bf16.mxu0 0
    %3686 = vmatpush1.bf16.msra.mxu0 %v3650
    %3687 = vmatprep.subr.bf16.mxu0 0
    %3688 = vmatpush1.bf16.msra.mxu0 %v3651
    %3689 = vmatprep.subr.bf16.mxu0 0
    %3690 = vmatpush1.bf16.msra.mxu0 %v3652
    %3691 = vmatprep.subr.bf16.mxu0 0
    %3692 = vmatpush1.bf16.msra.mxu0 %v3653
    %3693 = vmatprep.subr.bf16.mxu0 0
    %3694 = vmatpush1.bf16.msra.mxu0 %v3654
    %3695 = vmatprep.subr.bf16.mxu0 0
    %3696 = vmatpush1.bf16.msra.mxu0 %v3655
    %3697 = vmatprep.subr.bf16.mxu0 0
    %3698 = vmatpush1.bf16.msra.mxu0 %v3656
    %3699 = vmatprep.subr.bf16.mxu0 0
    %3700 = vmatpush1.bf16.msra.mxu0 %v3657
    %3701 = vmatprep.subr.bf16.mxu0 0
    %3702 = vmatpush1.bf16.msra.mxu0 %v3658
    %3703 = vmatprep.subr.bf16.mxu0 0
    %3704 = vmatpush1.bf16.msra.mxu0 %v3659
    %3705 = vmatprep.subr.bf16.mxu0 0
    %3706 = vmatpush1.bf16.msra.mxu0 %v3660
    %3707 = vmatprep.subr.bf16.mxu0 0
    %3708 = vmatpush1.bf16.msra.mxu0 %v3661
    %3709 = vmatprep.subr.bf16.mxu0 0
    %3710 = vmatpush1.bf16.msra.mxu0 %v3662
    %3711 = vmatprep.mubr.bf16.mxu0 %v3576
    %3712 = vmatmul.mubr.bf16.gmra.mrb[0].mxu0 %v3575
    %v3713 = vpop.f32.mrb[0].mxu0
    %v3714 = vadd.f32 %v3581, %v3713
    %v3715 = vpop.f32.mrb[0].mxu0
    %v3716 = vpop.f32.mrb[0].mxu0
    %v3717 = vadd.f32 %v3581, %v3716
    %v3718 = vpop.f32.mrb[0].mxu0
    %3719 = vdwg.mxu0
    %v3720 = vadd.f32 %v3714, %v3352
    %v3721 = vadd.f32 %v3717, %v3353
    %3722 = vadd.xlane.f32.xlu0 %v3720
    %v3723 = vpop.xlane.xlu0 %3722
    %3724 = vadd.xlane.f32.xlu0 %v3721
    %v3725 = vpop.xlane.xlu0 %3724
    %v3726 = vmul.f32 %v3723, %v230
    %v3727 = vmul.f32 %v3725, %v230
    %v3728 = vsub.f32 %v3720, %v3726
    %v3729 = vsub.f32 %v3721, %v3727
    %v3730 = vmul.f32 %v3728, %v3728
    %v3731 = vmul.f32 %v3729, %v3729
    %3732 = vadd.xlane.f32.xlu0 %v3730
    %v3733 = vpop.xlane.xlu0 %3732
    %3734 = vadd.xlane.f32.xlu0 %v3731
    %v3735 = vpop.xlane.xlu0 %3734
    %v3736 = vmul.f32 %v3733, %v230
    %v3737 = vmul.f32 %v3735, %v230
    %v3738 = vadd.f32 %v3736, 1e-05
    %v3739 = vadd.f32 %v3737, 1e-05
    %v3740 = vrsqrt.pop %v3738
    %v3741 = vrsqrt.pop %v3739
    %v3742 = vmul.f32 %v3728, %v3740
    %v3743 = vmul.f32 %v3729, %v3741
    %v3745 = vlaneseq
    %v3746 = vshrl.u32 %v3745, 7
    %v3747 = vsub.s32 0, %v3746
    %v3748 = vrot.slane %v3409, %v3747
    %v3750 = vmul.f32 %v3742, %v3748
    %v3751 = vmul.f32 %v3743, %v3748
    %v3753 = vlaneseq
    %v3754 = vshrl.u32 %v3753, 7
    %v3755 = vsub.s32 0, %v3754
    %v3756 = vrot.slane %v3411, %v3755
    %v3758 = vadd.f32 %v3750, %v3756
    %v3759 = vadd.f32 %v3751, %v3756
    %v3760 = vpack.c.bf16 %v3759, %v3758
    %v3761 = vld [vmem:[%s3] sm:$0xff]
    %v3762 = vld [vmem:[%s3 + $0x8] sm:$0xff]
    %v3763 = vmul.f32 %v3761, 11.313708
    %v3764 = vmul.f32 %v3762, 11.313708
    %v3765 = vld [vmem:[%s7] sm:$0xff]
    %v3766 = vld [vmem:[%s7 + $0x8] sm:$0xff]
    %v3767 = vadd.f32 %v3763, %v3765
    %v3768 = vadd.f32 %v3764, %v3766
    %v3769 = vld [vmem:[%s17] sm:$0x1]
    %v3770 = vld [vmem:[%s19] sm:$0x1]
    %3771 = vadd.xlane.f32.xlu0 %v3767
    %v3772 = vpop.xlane.xlu0 %3771
    %3773 = vadd.xlane.f32.xlu0 %v3768
    %v3774 = vpop.xlane.xlu0 %3773
    %v3775 = vmul.f32 %v3772, %v230
    %v3776 = vmul.f32 %v3774, %v230
    %v3777 = vsub.f32 %v3767, %v3775
    %v3778 = vsub.f32 %v3768, %v3776
    %v3779 = vmul.f32 %v3777, %v3777
    %v3780 = vmul.f32 %v3778, %v3778
    %3781 = vadd.xlane.f32.xlu0 %v3779
    %v3782 = vpop.xlane.xlu0 %3781
    %3783 = vadd.xlane.f32.xlu0 %v3780
    %v3784 = vpop.xlane.xlu0 %3783
    %v3785 = vmul.f32 %v3782, %v230
    %v3786 = vmul.f32 %v3784, %v230
    %v3787 = vadd.f32 %v3785, 1e-05
    %v3788 = vadd.f32 %v3786, 1e-05
    %v3789 = vrsqrt.pop %v3787
    %v3790 = vrsqrt.pop %v3788
    %v3791 = vmul.f32 %v3777, %v3789
    %v3792 = vmul.f32 %v3778, %v3790
    %v3794 = vlaneseq
    %v3795 = vshrl.u32 %v3794, 7
    %v3796 = vsub.s32 0, %v3795
    %v3797 = vrot.slane %v3769, %v3796
    %v3799 = vmul.f32 %v3791, %v3797
    %v3800 = vmul.f32 %v3792, %v3797
    %v3802 = vlaneseq
    %v3803 = vshrl.u32 %v3802, 7
    %v3804 = vsub.s32 0, %v3803
    %v3805 = vrot.slane %v3770, %v3804
    %v3807 = vadd.f32 %v3799, %v3805
    %v3808 = vadd.f32 %v3800, %v3805
    %v3809 = vld [vmem:[%s45] sm:$0xff]
    %v3810 = vld [vmem:[%s45 + $0x8] sm:$0xf]
    %v3811 = vld [vmem:[%s45 + $0xc] sm:$0xff]
    %v3812 = vld [vmem:[%s45 + $0x14] sm:$0xf]
    %v3813 = vld [vmem:[%s45 + $0x18] sm:$0xff]
    %v3814 = vld [vmem:[%s45 + $0x20] sm:$0xf]
    %v3815 = vld [vmem:[%s45 + $0x24] sm:$0xff]
    %v3816 = vld [vmem:[%s45 + $0x2c] sm:$0xf]
    %v3817 = vld [vmem:[%s45 + $0x30] sm:$0xff]
    %v3818 = vld [vmem:[%s45 + $0x38] sm:$0xf]
    %v3819 = vld [vmem:[%s45 + $0x3c] sm:$0xff]
    %v3820 = vld [vmem:[%s45 + $0x44] sm:$0xf]
    %v3821 = vld [vmem:[%s45 + $0x48] sm:$0xff]
    %v3822 = vld [vmem:[%s45 + $0x50] sm:$0xf]
    %v3823 = vld [vmem:[%s45 + $0x54] sm:$0xff]
    %v3824 = vld [vmem:[%s45 + $0x5c] sm:$0xf]
    %v3825 = vld [vmem:[%s45 + $0x60] sm:$0xff]
    %v3826 = vld [vmem:[%s45 + $0x68] sm:$0xf]
    %v3827 = vld [vmem:[%s45 + $0x6c] sm:$0xff]
    %v3828 = vld [vmem:[%s45 + $0x74] sm:$0xf]
    %v3829 = vld [vmem:[%s45 + $0x78] sm:$0xff]
    %v3830 = vld [vmem:[%s45 + $0x80] sm:$0xf]
    %v3831 = vld [vmem:[%s45 + $0x84] sm:$0xff]
    %v3832 = vld [vmem:[%s45 + $0x8c] sm:$0xf]
    %v3833 = vld [vmem:[%s45 + $0x90] sm:$0xff]
    %v3834 = vld [vmem:[%s45 + $0x98] sm:$0xf]
    %v3835 = vld [vmem:[%s45 + $0x9c] sm:$0xff]
    %v3836 = vld [vmem:[%s45 + $0xa4] sm:$0xf]
    %v3837 = vld [vmem:[%s45 + $0xa8] sm:$0xff]
    %v3838 = vld [vmem:[%s45 + $0xb0] sm:$0xf]
    %v3839 = vld [vmem:[%s45 + $0xb4] sm:$0xff]
    %v3840 = vld [vmem:[%s45 + $0xbc] sm:$0xf]
    %v3841 = vld [vmem:[%s47] sm:$0x7]
    %v3842 = vld [vmem:[%s49] sm:$0xf]
    %v3843 = vld [vmem:[%s49 + $0x4] sm:$0xf]
    %v3844 = vld [vmem:[%s49 + $0x8] sm:$0xf]
    %v3845 = vld [vmem:[%s49 + $0xc] sm:$0xf]
    %v3846 = vld [vmem:[%s49 + $0x10] sm:$0xf]
    %v3847 = vld [vmem:[%s49 + $0x14] sm:$0xf]
    %v3848 = vld [vmem:[%s49 + $0x18] sm:$0xf]
    %v3849 = vld [vmem:[%s49 + $0x1c] sm:$0xf]
    %v3850 = vld [vmem:[%s49 + $0x20] sm:$0xf]
    %v3851 = vld [vmem:[%s49 + $0x24] sm:$0xf]
    %v3852 = vld [vmem:[%s49 + $0x28] sm:$0xf]
    %v3853 = vld [vmem:[%s49 + $0x2c] sm:$0xf]
    %v3854 = vld [vmem:[%s49 + $0x30] sm:$0xf]
    %v3855 = vld [vmem:[%s49 + $0x34] sm:$0xf]
    %v3856 = vld [vmem:[%s49 + $0x38] sm:$0xf]
    %v3857 = vld [vmem:[%s49 + $0x3c] sm:$0xf]
    %v3858 = vld [vmem:[%s51] sm:$0x1]
    %v3859 = vld [vmem:[%s53] sm:$0x1]
    %v3860 = vld [vmem:[%s55] sm:$0x1]
    %v3861 = vpack.c.bf16 %v3808, %v3807
    %v3863 = vlaneseq
    %v3864 = vshrl.u32 %v3863, 7
    %v3865 = vsub.s32 0, %v3864
    %v3866 = vrot.slane %v3841, %v3865
    %v3867 = vlaneseq
    %v3868 = vshrl.u32 %v3867, 7
    %v3869 = vsub.s32 1, %v3868
    %v3870 = vrot.slane %v3841, %v3869
    %v3871 = vlaneseq
    %v3872 = vshrl.u32 %v3871, 7
    %v3873 = vsub.s32 2, %v3872
    %v3874 = vrot.slane %v3841, %v3873
    %v3910 = vunpack.c.l.b16 %v3809
    %v3911 = vunpack.c.h.b16 %v3809
    %v3912 = vunpack.c.l.b16 %v3810
    %v3913 = vunpack.c.l.b16 %v3811
    %v3914 = vunpack.c.h.b16 %v3811
    %v3915 = vunpack.c.l.b16 %v3812
    %v3916 = vunpack.c.l.b16 %v3813
    %v3917 = vunpack.c.h.b16 %v3813
    %v3918 = vunpack.c.l.b16 %v3814
    %v3919 = vunpack.c.l.b16 %v3815
    %v3920 = vunpack.c.h.b16 %v3815
    %v3921 = vunpack.c.l.b16 %v3816
    %v3922 = vunpack.c.l.b16 %v3817
    %v3923 = vunpack.c.h.b16 %v3817
    %v3924 = vunpack.c.l.b16 %v3818
    %v3925 = vunpack.c.l.b16 %v3819
    %v3926 = vunpack.c.h.b16 %v3819
    %v3927 = vunpack.c.l.b16 %v3820
    %v3928 = vunpack.c.l.b16 %v3821
    %v3929 = vunpack.c.h.b16 %v3821
    %v3930 = vunpack.c.l.b16 %v3822
    %v3931 = vunpack.c.l.b16 %v3823
    %v3932 = vunpack.c.h.b16 %v3823
    %v3933 = vunpack.c.l.b16 %v3824
    %v3934 = vunpack.c.l.b16 %v3825
    %v3935 = vunpack.c.h.b16 %v3825
    %v3936 = vunpack.c.l.b16 %v3826
    %v3937 = vunpack.c.l.b16 %v3827
    %v3938 = vunpack.c.h.b16 %v3827
    %v3939 = vunpack.c.l.b16 %v3828
    %v3940 = vunpack.c.l.b16 %v3829
    %v3941 = vunpack.c.h.b16 %v3829
    %v3942 = vunpack.c.l.b16 %v3830
    %v3943 = vunpack.c.l.b16 %v3831
    %v3944 = vunpack.c.h.b16 %v3831
    %v3945 = vunpack.c.l.b16 %v3832
    %v3946 = vunpack.c.l.b16 %v3833
    %v3947 = vunpack.c.h.b16 %v3833
    %v3948 = vunpack.c.l.b16 %v3834
    %v3949 = vunpack.c.l.b16 %v3835
    %v3950 = vunpack.c.h.b16 %v3835
    %v3951 = vunpack.c.l.b16 %v3836
    %v3952 = vunpack.c.l.b16 %v3837
    %v3953 = vunpack.c.h.b16 %v3837
    %v3954 = vunpack.c.l.b16 %v3838
    %v3955 = vunpack.c.l.b16 %v3839
    %v3956 = vunpack.c.h.b16 %v3839
    %v3957 = vunpack.c.l.b16 %v3840
    %v3958 = vpack.c.b16 %v3913, %v3910
    %v3959 = vpack.c.b16 %v3914, %v3911
    %v3960 = vpack.c.b16 %v3915, %v3912
    %v3961 = vpack.c.b16 %v3919, %v3916
    %v3962 = vpack.c.b16 %v3920, %v3917
    %v3963 = vpack.c.b16 %v3921, %v3918
    %v3964 = vpack.c.b16 %v3925, %v3922
    %v3965 = vpack.c.b16 %v3926, %v3923
    %v3966 = vpack.c.b16 %v3927, %v3924
    %v3967 = vpack.c.b16 %v3931, %v3928
    %v3968 = vpack.c.b16 %v3932, %v3929
    %v3969 = vpack.c.b16 %v3933, %v3930
    %v3970 = vpack.c.b16 %v3937, %v3934
    %v3971 = vpack.c.b16 %v3938, %v3935
    %v3972 = vpack.c.b16 %v3939, %v3936
    %v3973 = vpack.c.b16 %v3943, %v3940
    %v3974 = vpack.c.b16 %v3944, %v3941
    %v3975 = vpack.c.b16 %v3945, %v3942
    %v3976 = vpack.c.b16 %v3949, %v3946
    %v3977 = vpack.c.b16 %v3950, %v3947
    %v3978 = vpack.c.b16 %v3951, %v3948
    %v3979 = vpack.c.b16 %v3955, %v3952
    %v3980 = vpack.c.b16 %v3956, %v3953
    %v3981 = vpack.c.b16 %v3957, %v3954
    %4006 = vmatprep.subr.bf16.mxu0 %v3959
    %4007 = vmatpush1.bf16.msra.mxu0 %v3958
    %4008 = vmatprep.subr.bf16.mxu0 %v3962
    %4009 = vmatpush1.bf16.msra.mxu0 %v3961
    %4010 = vmatprep.subr.bf16.mxu0 %v3965
    %4011 = vmatpush1.bf16.msra.mxu0 %v3964
    %4012 = vmatprep.subr.bf16.mxu0 %v3968
    %4013 = vmatpush1.bf16.msra.mxu0 %v3967
    %4014 = vmatprep.subr.bf16.mxu0 %v3971
    %4015 = vmatpush1.bf16.msra.mxu0 %v3970
    %4016 = vmatprep.subr.bf16.mxu0 %v3974
    %4017 = vmatpush1.bf16.msra.mxu0 %v3973
    %4018 = vmatprep.subr.bf16.mxu0 %v3977
    %4019 = vmatpush1.bf16.msra.mxu0 %v3976
    %4020 = vmatprep.subr.bf16.mxu0 %v3980
    %4021 = vmatpush1.bf16.msra.mxu0 %v3979
    %4022 = vmatprep.subr.bf16.mxu0 0
    %4023 = vmatpush1.bf16.msra.mxu0 0
    %4024 = vmatprep.subr.bf16.mxu0 0
    %4025 = vmatpush1.bf16.msra.mxu0 0
    %4026 = vmatprep.subr.bf16.mxu0 0
    %4027 = vmatpush1.bf16.msra.mxu0 0
    %4028 = vmatprep.subr.bf16.mxu0 0
    %4029 = vmatpush1.bf16.msra.mxu0 0
    %4030 = vmatprep.subr.bf16.mxu0 0
    %4031 = vmatpush1.bf16.msra.mxu0 0
    %4032 = vmatprep.subr.bf16.mxu0 0
    %4033 = vmatpush1.bf16.msra.mxu0 0
    %4034 = vmatprep.subr.bf16.mxu0 0
    %4035 = vmatpush1.bf16.msra.mxu0 0
    %4036 = vmatprep.subr.bf16.mxu0 0
    %4037 = vmatpush1.bf16.msra.mxu0 0
    %4038 = vmatprep.mubr.bf16.mxu0 0
    %4039 = vmatmul.mubr.bf16.gmra.mrb[0].mxu0 %v3861
    %v4040 = vpop.f32.mrb[0].mxu0
    %v4041 = vadd.f32 %v3866, %v4040
    %v4042 = vpop.f32.mrb[0].mxu0
    %v4043 = vadd.f32 %v3870, %v4042
    %v4044 = vpop.f32.mrb[0].mxu0
    %v4045 = vadd.f32 %v3866, %v4044
    %v4046 = vpop.f32.mrb[0].mxu0
    %v4047 = vadd.f32 %v3870, %v4046
    %4048 = vdwg.mxu0
    %4049 = vmatprep.subr.bf16.mxu0 0
    %4050 = vmatpush1.bf16.msra.mxu0 %v3960
    %4051 = vmatprep.subr.bf16.mxu0 0
    %4052 = vmatpush1.bf16.msra.mxu0 %v3963
    %4053 = vmatprep.subr.bf16.mxu0 0
    %4054 = vmatpush1.bf16.msra.mxu0 %v3966
    %4055 = vmatprep.subr.bf16.mxu0 0
    %4056 = vmatpush1.bf16.msra.mxu0 %v3969
    %4057 = vmatprep.subr.bf16.mxu0 0
    %4058 = vmatpush1.bf16.msra.mxu0 %v3972
    %4059 = vmatprep.subr.bf16.mxu0 0
    %4060 = vmatpush1.bf16.msra.mxu0 %v3975
    %4061 = vmatprep.subr.bf16.mxu0 0
    %4062 = vmatpush1.bf16.msra.mxu0 %v3978
    %4063 = vmatprep.subr.bf16.mxu0 0
    %4064 = vmatpush1.bf16.msra.mxu0 %v3981
    %4065 = vmatprep.subr.bf16.mxu0 0
    %4066 = vmatpush1.bf16.msra.mxu0 0
    %4067 = vmatprep.subr.bf16.mxu0 0
    %4068 = vmatpush1.bf16.msra.mxu0 0
    %4069 = vmatprep.subr.bf16.mxu0 0
    %4070 = vmatpush1.bf16.msra.mxu0 0
    %4071 = vmatprep.subr.bf16.mxu0 0
    %4072 = vmatpush1.bf16.msra.mxu0 0
    %4073 = vmatprep.subr.bf16.mxu0 0
    %4074 = vmatpush1.bf16.msra.mxu0 0
    %4075 = vmatprep.subr.bf16.mxu0 0
    %4076 = vmatpush1.bf16.msra.mxu0 0
    %4077 = vmatprep.subr.bf16.mxu0 0
    %4078 = vmatpush1.bf16.msra.mxu0 0
    %4079 = vmatprep.subr.bf16.mxu0 0
    %4080 = vmatpush1.bf16.msra.mxu0 0
    %4081 = vmatprep.mubr.bf16.mxu0 0
    %4082 = vmatmul.mubr.bf16.gmra.mrb[0].mxu0 %v3861
    %v4083 = vpop.f32.mrb[0].mxu0
    %v4084 = vadd.f32 %v3874, %v4083
    %v4085 = vpop.f32.mrb[0].mxu0
    %v4086 = vpop.f32.mrb[0].mxu0
    %v4087 = vadd.f32 %v3874, %v4086
    %v4088 = vpop.f32.mrb[0].mxu0
    %4089 = vdwg.mxu0
    %v4090 = vpack.c.bf16 %v4045, %v4041
    %v4091 = vpack.c.bf16 %v4047, %v4043
    %v4092 = vpack.c.bf16 %v4087, %v4084
    %v4094 = vunpack.c.l.b16 %v4090
    %v4095 = vunpack.c.h.b16 %v4090
    %v4096 = vpack.c.b16 %v4094, %v4094
    %v4097 = vpack.c.b16 %v4095, %v4095
    %v4099 = vunpack.c.l.b16 %v4091
    %v4100 = vunpack.c.h.b16 %v4091
    %v4101 = vpack.c.b16 %v4099, %v4099
    %v4102 = vpack.c.b16 %v4100, %v4100
    %v4104 = vunpack.c.l.b16 %v4092
    %v4105 = vunpack.c.h.b16 %v4092
    %v4106 = vpack.c.b16 %v4104, %v4104
    %v4107 = vpack.c.b16 %v4105, %v4105
    %v4109 = vsel %vm576, %v4096, 0
    %v4112 = vsel %vm576, %v4101, 0
    %4114 = vmatprep.subr.bf16.mxu0 0
    %4115 = vmatpush1.bf16.xpose.msra.mxu0 %v4112
    %4116 = vmatprep.subr.bf16.mxu0 0
    %4117 = vmatpush1.bf16.xpose.msra.mxu0 0
    %4118 = vmatprep.subr.bf16.mxu0 0
    %4119 = vmatpush1.bf16.xpose.msra.mxu0 0
    %4120 = vmatprep.subr.bf16.mxu0 0
    %4121 = vmatpush1.bf16.xpose.msra.mxu0 0
    %4122 = vmatprep.subr.bf16.mxu0 0
    %4123 = vmatpush1.bf16.xpose.msra.mxu0 0
    %4124 = vmatprep.subr.bf16.mxu0 0
    %4125 = vmatpush1.bf16.xpose.msra.mxu0 0
    %4126 = vmatprep.subr.bf16.mxu0 0
    %4127 = vmatpush1.bf16.xpose.msra.mxu0 0
    %4128 = vmatprep.subr.bf16.mxu0 0
    %4129 = vmatpush1.bf16.xpose.msra.mxu0 0
    %4130 = vmatprep.subr.bf16.mxu0 0
    %4131 = vmatpush1.bf16.xpose.msra.mxu0 0
    %4132 = vmatprep.subr.bf16.mxu0 0
    %4133 = vmatpush1.bf16.xpose.msra.mxu0 0
    %4134 = vmatprep.subr.bf16.mxu0 0
    %4135 = vmatpush1.bf16.xpose.msra.mxu0 0
    %4136 = vmatprep.subr.bf16.mxu0 0
    %4137 = vmatpush1.bf16.xpose.msra.mxu0 0
    %4138 = vmatprep.subr.bf16.mxu0 0
    %4139 = vmatpush1.bf16.xpose.msra.mxu0 0
    %4140 = vmatprep.subr.bf16.mxu0 0
    %4141 = vmatpush1.bf16.xpose.msra.mxu0 0
    %4142 = vmatprep.subr.bf16.mxu0 0
    %4143 = vmatpush1.bf16.xpose.msra.mxu0 0
    %4144 = vmatprep.subr.bf16.mxu0 0
    %4145 = vmatpush1.bf16.xpose.msra.mxu0 0
    %4146 = vmatprep.mubr.bf16.mxu0 0
    %4147 = vmatmul.mubr.bf16.gmra.mrb[0].mxu0 %v4109
    %v4148 = vpop.f32.mrb[0].mxu0
    %v4149 = vadd.f32 %v214, %v4148
    %v4150 = vpop.f32.mrb[0].mxu0
    %v4151 = vpop.f32.mrb[0].mxu0
    %v4152 = vpop.f32.mrb[0].mxu0
    %4153 = vdwg.mxu0
    %v4155 = vsel %vm576, %v4097, 0
    %v4158 = vsel %vm576, %v4102, 0
    %4160 = vmatprep.subr.bf16.mxu0 0
    %4161 = vmatpush1.bf16.xpose.msra.mxu0 %v4158
    %4162 = vmatprep.subr.bf16.mxu0 0
    %4163 = vmatpush1.bf16.xpose.msra.mxu0 0
    %4164 = vmatprep.subr.bf16.mxu0 0
    %4165 = vmatpush1.bf16.xpose.msra.mxu0 0
    %4166 = vmatprep.subr.bf16.mxu0 0
    %4167 = vmatpush1.bf16.xpose.msra.mxu0 0
    %4168 = vmatprep.subr.bf16.mxu0 0
    %4169 = vmatpush1.bf16.xpose.msra.mxu0 0
    %4170 = vmatprep.subr.bf16.mxu0 0
    %4171 = vmatpush1.bf16.xpose.msra.mxu0 0
    %4172 = vmatprep.subr.bf16.mxu0 0
    %4173 = vmatpush1.bf16.xpose.msra.mxu0 0
    %4174 = vmatprep.subr.bf16.mxu0 0
    %4175 = vmatpush1.bf16.xpose.msra.mxu0 0
    %4176 = vmatprep.subr.bf16.mxu0 0
    %4177 = vmatpush1.bf16.xpose.msra.mxu0 0
    %4178 = vmatprep.subr.bf16.mxu0 0
    %4179 = vmatpush1.bf16.xpose.msra.mxu0 0
    %4180 = vmatprep.subr.bf16.mxu0 0
    %4181 = vmatpush1.bf16.xpose.msra.mxu0 0
    %4182 = vmatprep.subr.bf16.mxu0 0
    %4183 = vmatpush1.bf16.xpose.msra.mxu0 0
    %4184 = vmatprep.subr.bf16.mxu0 0
    %4185 = vmatpush1.bf16.xpose.msra.mxu0 0
    %4186 = vmatprep.subr.bf16.mxu0 0
    %4187 = vmatpush1.bf16.xpose.msra.mxu0 0
    %4188 = vmatprep.subr.bf16.mxu0 0
    %4189 = vmatpush1.bf16.xpose.msra.mxu0 0
    %4190 = vmatprep.subr.bf16.mxu0 0
    %4191 = vmatpush1.bf16.xpose.msra.mxu0 0
    %4192 = vmatprep.mubr.bf16.mxu0 0
    %4193 = vmatmul.mubr.bf16.gmra.mrb[0].mxu0 %v4155
    %v4194 = vpop.f32.mrb[0].mxu0
    %v4195 = vadd.f32 %v215, %v4194
    %v4196 = vpop.f32.mrb[0].mxu0
    %v4197 = vpop.f32.mrb[0].mxu0
    %v4198 = vpop.f32.mrb[0].mxu0
    %4199 = vdwg.mxu0
    %v4200 = vsel %vm669, %v4149, -inf
    %4201 = vmax.xlane.f32.xlu0 %v4200
    %v4202 = vpop.xlane.xlu0 %4201
    %v4203 = vsel %vm669, %v4195, -inf
    %4204 = vmax.xlane.f32.xlu0 %v4203
    %v4205 = vpop.xlane.xlu0 %4204
    %v4206 = vsub.f32 %v4149, %v4202
    %v4207 = vsub.f32 %v4195, %v4205
    %v4208 = vmul.f32 %v4206, 1.442695
    %v4209 = vpow.pop %v4208
    %v4210 = vmul.f32 %v4207, 1.442695
    %v4211 = vpow.pop %v4210
    %v4212 = vsel %vm669, %v4209, 0.0
    %4213 = vadd.xlane.f32.xlu0 %v4212
    %v4214 = vpop.xlane.xlu0 %4213
    %v4215 = vsel %vm669, %v4211, 0.0
    %4216 = vadd.xlane.f32.xlu0 %v4215
    %v4217 = vpop.xlane.xlu0 %4216
    %v4218 = vrcp.pop %v4214
    %v4219 = vrcp.pop %v4217
    %v4220 = vmul.f32 %v4209, %v4218
    %v4221 = vmul.f32 %v4211, %v4219
    %v4222 = vpack.c.bf16 %v4220, %v4220
    %v4223 = vpack.c.bf16 %v4221, %v4221
    %v4225 = vsel %vm669, %v4222, 0
    %v4228 = vsel %vm697, %v4106, 0
    %4230 = vmatprep.subr.bf16.mxu0 0
    %4231 = vmatpush1.bf16.msra.mxu0 %v4228
    %4232 = vmatprep.subr.bf16.mxu0 0
    %4233 = vmatpush1.bf16.msra.mxu0 0
    %4234 = vmatprep.subr.bf16.mxu0 0
    %4235 = vmatpush1.bf16.msra.mxu0 0
    %4236 = vmatprep.subr.bf16.mxu0 0
    %4237 = vmatpush1.bf16.msra.mxu0 0
    %4238 = vmatprep.subr.bf16.mxu0 0
    %4239 = vmatpush1.bf16.msra.mxu0 0
    %4240 = vmatprep.subr.bf16.mxu0 0
    %4241 = vmatpush1.bf16.msra.mxu0 0
    %4242 = vmatprep.subr.bf16.mxu0 0
    %4243 = vmatpush1.bf16.msra.mxu0 0
    %4244 = vmatprep.subr.bf16.mxu0 0
    %4245 = vmatpush1.bf16.msra.mxu0 0
    %4246 = vmatprep.subr.bf16.mxu0 0
    %4247 = vmatpush1.bf16.msra.mxu0 0
    %4248 = vmatprep.subr.bf16.mxu0 0
    %4249 = vmatpush1.bf16.msra.mxu0 0
    %4250 = vmatprep.subr.bf16.mxu0 0
    %4251 = vmatpush1.bf16.msra.mxu0 0
    %4252 = vmatprep.subr.bf16.mxu0 0
    %4253 = vmatpush1.bf16.msra.mxu0 0
    %4254 = vmatprep.subr.bf16.mxu0 0
    %4255 = vmatpush1.bf16.msra.mxu0 0
    %4256 = vmatprep.subr.bf16.mxu0 0
    %4257 = vmatpush1.bf16.msra.mxu0 0
    %4258 = vmatprep.subr.bf16.mxu0 0
    %4259 = vmatpush1.bf16.msra.mxu0 0
    %4260 = vmatprep.subr.bf16.mxu0 0
    %4261 = vmatpush1.bf16.msra.mxu0 0
    %4262 = vmatprep.mubr.bf16.mxu0 0
    %4263 = vmatmul.mubr.bf16.gmra.mrb[0].mxu0 %v4225
    %v4264 = vpop.f32.mrb[0].mxu0
    %v4265 = vadd.f32 0.0, %v4264
    %v4266 = vpop.f32.mrb[0].mxu0
    %v4267 = vpop.f32.mrb[0].mxu0
    %v4268 = vpop.f32.mrb[0].mxu0
    %4269 = vdwg.mxu0
    %v4271 = vsel %vm669, %v4223, 0
    %v4274 = vsel %vm697, %v4107, 0
    %4276 = vmatprep.subr.bf16.mxu0 0
    %4277 = vmatpush1.bf16.msra.mxu0 %v4274
    %4278 = vmatprep.subr.bf16.mxu0 0
    %4279 = vmatpush1.bf16.msra.mxu0 0
    %4280 = vmatprep.subr.bf16.mxu0 0
    %4281 = vmatpush1.bf16.msra.mxu0 0
    %4282 = vmatprep.subr.bf16.mxu0 0
    %4283 = vmatpush1.bf16.msra.mxu0 0
    %4284 = vmatprep.subr.bf16.mxu0 0
    %4285 = vmatpush1.bf16.msra.mxu0 0
    %4286 = vmatprep.subr.bf16.mxu0 0
    %4287 = vmatpush1.bf16.msra.mxu0 0
    %4288 = vmatprep.subr.bf16.mxu0 0
    %4289 = vmatpush1.bf16.msra.mxu0 0
    %4290 = vmatprep.subr.bf16.mxu0 0
    %4291 = vmatpush1.bf16.msra.mxu0 0
    %4292 = vmatprep.subr.bf16.mxu0 0
    %4293 = vmatpush1.bf16.msra.mxu0 0
    %4294 = vmatprep.subr.bf16.mxu0 0
    %4295 = vmatpush1.bf16.msra.mxu0 0
    %4296 = vmatprep.subr.bf16.mxu0 0
    %4297 = vmatpush1.bf16.msra.mxu0 0
    %4298 = vmatprep.subr.bf16.mxu0 0
    %4299 = vmatpush1.bf16.msra.mxu0 0
    %4300 = vmatprep.subr.bf16.mxu0 0
    %4301 = vmatpush1.bf16.msra.mxu0 0
    %4302 = vmatprep.subr.bf16.mxu0 0
    %4303 = vmatpush1.bf16.msra.mxu0 0
    %4304 = vmatprep.subr.bf16.mxu0 0
    %4305 = vmatpush1.bf16.msra.mxu0 0
    %4306 = vmatprep.subr.bf16.mxu0 0
    %4307 = vmatpush1.bf16.msra.mxu0 0
    %4308 = vmatprep.mubr.bf16.mxu0 0
    %4309 = vmatmul.mubr.bf16.gmra.mrb[0].mxu0 %v4271
    %v4310 = vpop.f32.mrb[0].mxu0
    %v4311 = vadd.f32 0.0, %v4310
    %v4312 = vpop.f32.mrb[0].mxu0
    %v4313 = vpop.f32.mrb[0].mxu0
    %v4314 = vpop.f32.mrb[0].mxu0
    %4315 = vdwg.mxu0
    %4316 = vrot.lane.b32.xlu0 %v4096, 96
    %v4317 = vpop.permute.xlu0 %4316
    %4318 = vrot.lane.b32.xlu0 %v4101, 96
    %v4319 = vpop.permute.xlu0 %4318
    %v4321 = vsel %vm576, %v4317, 0
    %v4324 = vsel %vm576, %v4319, 0
    %4326 = vmatprep.subr.bf16.mxu0 0
    %4327 = vmatpush1.bf16.xpose.msra.mxu0 %v4324
    %4328 = vmatprep.subr.bf16.mxu0 0
    %4329 = vmatpush1.bf16.xpose.msra.mxu0 0
    %4330 = vmatprep.subr.bf16.mxu0 0
    %4331 = vmatpush1.bf16.xpose.msra.mxu0 0
    %4332 = vmatprep.subr.bf16.mxu0 0
    %4333 = vmatpush1.bf16.xpose.msra.mxu0 0
    %4334 = vmatprep.subr.bf16.mxu0 0
    %4335 = vmatpush1.bf16.xpose.msra.mxu0 0
    %4336 = vmatprep.subr.bf16.mxu0 0
    %4337 = vmatpush1.bf16.xpose.msra.mxu0 0
    %4338 = vmatprep.subr.bf16.mxu0 0
    %4339 = vmatpush1.bf16.xpose.msra.mxu0 0
    %4340 = vmatprep.subr.bf16.mxu0 0
    %4341 = vmatpush1.bf16.xpose.msra.mxu0 0
    %4342 = vmatprep.subr.bf16.mxu0 0
    %4343 = vmatpush1.bf16.xpose.msra.mxu0 0
    %4344 = vmatprep.subr.bf16.mxu0 0
    %4345 = vmatpush1.bf16.xpose.msra.mxu0 0
    %4346 = vmatprep.subr.bf16.mxu0 0
    %4347 = vmatpush1.bf16.xpose.msra.mxu0 0
    %4348 = vmatprep.subr.bf16.mxu0 0
    %4349 = vmatpush1.bf16.xpose.msra.mxu0 0
    %4350 = vmatprep.subr.bf16.mxu0 0
    %4351 = vmatpush1.bf16.xpose.msra.mxu0 0
    %4352 = vmatprep.subr.bf16.mxu0 0
    %4353 = vmatpush1.bf16.xpose.msra.mxu0 0
    %4354 = vmatprep.subr.bf16.mxu0 0
    %4355 = vmatpush1.bf16.xpose.msra.mxu0 0
    %4356 = vmatprep.subr.bf16.mxu0 0
    %4357 = vmatpush1.bf16.xpose.msra.mxu0 0
    %4358 = vmatprep.mubr.bf16.mxu0 0
    %4359 = vmatmul.mubr.bf16.gmra.mrb[0].mxu0 %v4321
    %v4360 = vpop.f32.mrb[0].mxu0
    %v4361 = vadd.f32 %v214, %v4360
    %v4362 = vpop.f32.mrb[0].mxu0
    %v4363 = vpop.f32.mrb[0].mxu0
    %v4364 = vpop.f32.mrb[0].mxu0
    %4365 = vdwg.mxu0
    %4366 = vrot.lane.b32.xlu0 %v4097, 96
    %v4367 = vpop.permute.xlu0 %4366
    %4368 = vrot.lane.b32.xlu0 %v4102, 96
    %v4369 = vpop.permute.xlu0 %4368
    %v4371 = vsel %vm576, %v4367, 0
    %v4374 = vsel %vm576, %v4369, 0
    %4376 = vmatprep.subr.bf16.mxu0 0
    %4377 = vmatpush1.bf16.xpose.msra.mxu0 %v4374
    %4378 = vmatprep.subr.bf16.mxu0 0
    %4379 = vmatpush1.bf16.xpose.msra.mxu0 0
    %4380 = vmatprep.subr.bf16.mxu0 0
    %4381 = vmatpush1.bf16.xpose.msra.mxu0 0
    %4382 = vmatprep.subr.bf16.mxu0 0
    %4383 = vmatpush1.bf16.xpose.msra.mxu0 0
    %4384 = vmatprep.subr.bf16.mxu0 0
    %4385 = vmatpush1.bf16.xpose.msra.mxu0 0
    %4386 = vmatprep.subr.bf16.mxu0 0
    %4387 = vmatpush1.bf16.xpose.msra.mxu0 0
    %4388 = vmatprep.subr.bf16.mxu0 0
    %4389 = vmatpush1.bf16.xpose.msra.mxu0 0
    %4390 = vmatprep.subr.bf16.mxu0 0
    %4391 = vmatpush1.bf16.xpose.msra.mxu0 0
    %4392 = vmatprep.subr.bf16.mxu0 0
    %4393 = vmatpush1.bf16.xpose.msra.mxu0 0
    %4394 = vmatprep.subr.bf16.mxu0 0
    %4395 = vmatpush1.bf16.xpose.msra.mxu0 0
    %4396 = vmatprep.subr.bf16.mxu0 0
    %4397 = vmatpush1.bf16.xpose.msra.mxu0 0
    %4398 = vmatprep.subr.bf16.mxu0 0
    %4399 = vmatpush1.bf16.xpose.msra.mxu0 0
    %4400 = vmatprep.subr.bf16.mxu0 0
    %4401 = vmatpush1.bf16.xpose.msra.mxu0 0
    %4402 = vmatprep.subr.bf16.mxu0 0
    %4403 = vmatpush1.bf16.xpose.msra.mxu0 0
    %4404 = vmatprep.subr.bf16.mxu0 0
    %4405 = vmatpush1.bf16.xpose.msra.mxu0 0
    %4406 = vmatprep.subr.bf16.mxu0 0
    %4407 = vmatpush1.bf16.xpose.msra.mxu0 0
    %4408 = vmatprep.mubr.bf16.mxu0 0
    %4409 = vmatmul.mubr.bf16.gmra.mrb[0].mxu0 %v4371
    %v4410 = vpop.f32.mrb[0].mxu0
    %v4411 = vadd.f32 %v215, %v4410
    %v4412 = vpop.f32.mrb[0].mxu0
    %v4413 = vpop.f32.mrb[0].mxu0
    %v4414 = vpop.f32.mrb[0].mxu0
    %4415 = vdwg.mxu0
    %v4416 = vsel %vm669, %v4361, -inf
    %4417 = vmax.xlane.f32.xlu0 %v4416
    %v4418 = vpop.xlane.xlu0 %4417
    %v4419 = vsel %vm669, %v4411, -inf
    %4420 = vmax.xlane.f32.xlu0 %v4419
    %v4421 = vpop.xlane.xlu0 %4420
    %v4422 = vsub.f32 %v4361, %v4418
    %v4423 = vsub.f32 %v4411, %v4421
    %v4424 = vmul.f32 %v4422, 1.442695
    %v4425 = vpow.pop %v4424
    %v4426 = vmul.f32 %v4423, 1.442695
    %v4427 = vpow.pop %v4426
    %v4428 = vsel %vm669, %v4425, 0.0
    %4429 = vadd.xlane.f32.xlu0 %v4428
    %v4430 = vpop.xlane.xlu0 %4429
    %v4431 = vsel %vm669, %v4427, 0.0
    %4432 = vadd.xlane.f32.xlu0 %v4431
    %v4433 = vpop.xlane.xlu0 %4432
    %v4434 = vrcp.pop %v4430
    %v4435 = vrcp.pop %v4433
    %v4436 = vmul.f32 %v4425, %v4434
    %v4437 = vmul.f32 %v4427, %v4435
    %v4438 = vpack.c.bf16 %v4436, %v4436
    %v4439 = vpack.c.bf16 %v4437, %v4437
    %4440 = vrot.lane.b32.xlu0 %v4106, 96
    %v4441 = vpop.permute.xlu0 %4440
    %v4443 = vsel %vm669, %v4438, 0
    %v4446 = vsel %vm697, %v4441, 0
    %4448 = vmatprep.subr.bf16.mxu0 0
    %4449 = vmatpush1.bf16.msra.mxu0 %v4446
    %4450 = vmatprep.subr.bf16.mxu0 0
    %4451 = vmatpush1.bf16.msra.mxu0 0
    %4452 = vmatprep.subr.bf16.mxu0 0
    %4453 = vmatpush1.bf16.msra.mxu0 0
    %4454 = vmatprep.subr.bf16.mxu0 0
    %4455 = vmatpush1.bf16.msra.mxu0 0
    %4456 = vmatprep.subr.bf16.mxu0 0
    %4457 = vmatpush1.bf16.msra.mxu0 0
    %4458 = vmatprep.subr.bf16.mxu0 0
    %4459 = vmatpush1.bf16.msra.mxu0 0
    %4460 = vmatprep.subr.bf16.mxu0 0
    %4461 = vmatpush1.bf16.msra.mxu0 0
    %4462 = vmatprep.subr.bf16.mxu0 0
    %4463 = vmatpush1.bf16.msra.mxu0 0
    %4464 = vmatprep.subr.bf16.mxu0 0
    %4465 = vmatpush1.bf16.msra.mxu0 0
    %4466 = vmatprep.subr.bf16.mxu0 0
    %4467 = vmatpush1.bf16.msra.mxu0 0
    %4468 = vmatprep.subr.bf16.mxu0 0
    %4469 = vmatpush1.bf16.msra.mxu0 0
    %4470 = vmatprep.subr.bf16.mxu0 0
    %4471 = vmatpush1.bf16.msra.mxu0 0
    %4472 = vmatprep.subr.bf16.mxu0 0
    %4473 = vmatpush1.bf16.msra.mxu0 0
    %4474 = vmatprep.subr.bf16.mxu0 0
    %4475 = vmatpush1.bf16.msra.mxu0 0
    %4476 = vmatprep.subr.bf16.mxu0 0
    %4477 = vmatpush1.bf16.msra.mxu0 0
    %4478 = vmatprep.subr.bf16.mxu0 0
    %4479 = vmatpush1.bf16.msra.mxu0 0
    %4480 = vmatprep.mubr.bf16.mxu0 0
    %4481 = vmatmul.mubr.bf16.gmra.mrb[0].mxu0 %v4443
    %v4482 = vpop.f32.mrb[0].mxu0
    %v4483 = vadd.f32 0.0, %v4482
    %v4484 = vpop.f32.mrb[0].mxu0
    %v4485 = vpop.f32.mrb[0].mxu0
    %v4486 = vpop.f32.mrb[0].mxu0
    %4487 = vdwg.mxu0
    %4488 = vrot.lane.b32.xlu0 %v4107, 96
    %v4489 = vpop.permute.xlu0 %4488
    %v4491 = vsel %vm669, %v4439, 0
    %v4494 = vsel %vm697, %v4489, 0
    %4496 = vmatprep.subr.bf16.mxu0 0
    %4497 = vmatpush1.bf16.msra.mxu0 %v4494
    %4498 = vmatprep.subr.bf16.mxu0 0
    %4499 = vmatpush1.bf16.msra.mxu0 0
    %4500 = vmatprep.subr.bf16.mxu0 0
    %4501 = vmatpush1.bf16.msra.mxu0 0
    %4502 = vmatprep.subr.bf16.mxu0 0
    %4503 = vmatpush1.bf16.msra.mxu0 0
    %4504 = vmatprep.subr.bf16.mxu0 0
    %4505 = vmatpush1.bf16.msra.mxu0 0
    %4506 = vmatprep.subr.bf16.mxu0 0
    %4507 = vmatpush1.bf16.msra.mxu0 0
    %4508 = vmatprep.subr.bf16.mxu0 0
    %4509 = vmatpush1.bf16.msra.mxu0 0
    %4510 = vmatprep.subr.bf16.mxu0 0
    %4511 = vmatpush1.bf16.msra.mxu0 0
    %4512 = vmatprep.subr.bf16.mxu0 0
    %4513 = vmatpush1.bf16.msra.mxu0 0
    %4514 = vmatprep.subr.bf16.mxu0 0
    %4515 = vmatpush1.bf16.msra.mxu0 0
    %4516 = vmatprep.subr.bf16.mxu0 0
    %4517 = vmatpush1.bf16.msra.mxu0 0
    %4518 = vmatprep.subr.bf16.mxu0 0
    %4519 = vmatpush1.bf16.msra.mxu0 0
    %4520 = vmatprep.subr.bf16.mxu0 0
    %4521 = vmatpush1.bf16.msra.mxu0 0
    %4522 = vmatprep.subr.bf16.mxu0 0
    %4523 = vmatpush1.bf16.msra.mxu0 0
    %4524 = vmatprep.subr.bf16.mxu0 0
    %4525 = vmatpush1.bf16.msra.mxu0 0
    %4526 = vmatprep.subr.bf16.mxu0 0
    %4527 = vmatpush1.bf16.msra.mxu0 0
    %4528 = vmatprep.mubr.bf16.mxu0 0
    %4529 = vmatmul.mubr.bf16.gmra.mrb[0].mxu0 %v4491
    %v4530 = vpop.f32.mrb[0].mxu0
    %v4531 = vadd.f32 0.0, %v4530
    %v4532 = vpop.f32.mrb[0].mxu0
    %v4533 = vpop.f32.mrb[0].mxu0
    %v4534 = vpop.f32.mrb[0].mxu0
    %4535 = vdwg.mxu0
    %4536 = vrot.lane.b32.xlu0 %v4096, 64
    %v4537 = vpop.permute.xlu0 %4536
    %4538 = vrot.lane.b32.xlu0 %v4101, 64
    %v4539 = vpop.permute.xlu0 %4538
    %v4541 = vsel %vm576, %v4537, 0
    %v4544 = vsel %vm576, %v4539, 0
    %4546 = vmatprep.subr.bf16.mxu0 0
    %4547 = vmatpush1.bf16.xpose.msra.mxu0 %v4544
    %4548 = vmatprep.subr.bf16.mxu0 0
    %4549 = vmatpush1.bf16.xpose.msra.mxu0 0
    %4550 = vmatprep.subr.bf16.mxu0 0
    %4551 = vmatpush1.bf16.xpose.msra.mxu0 0
    %4552 = vmatprep.subr.bf16.mxu0 0
    %4553 = vmatpush1.bf16.xpose.msra.mxu0 0
    %4554 = vmatprep.subr.bf16.mxu0 0
    %4555 = vmatpush1.bf16.xpose.msra.mxu0 0
    %4556 = vmatprep.subr.bf16.mxu0 0
    %4557 = vmatpush1.bf16.xpose.msra.mxu0 0
    %4558 = vmatprep.subr.bf16.mxu0 0
    %4559 = vmatpush1.bf16.xpose.msra.mxu0 0
    %4560 = vmatprep.subr.bf16.mxu0 0
    %4561 = vmatpush1.bf16.xpose.msra.mxu0 0
    %4562 = vmatprep.subr.bf16.mxu0 0
    %4563 = vmatpush1.bf16.xpose.msra.mxu0 0
    %4564 = vmatprep.subr.bf16.mxu0 0
    %4565 = vmatpush1.bf16.xpose.msra.mxu0 0
    %4566 = vmatprep.subr.bf16.mxu0 0
    %4567 = vmatpush1.bf16.xpose.msra.mxu0 0
    %4568 = vmatprep.subr.bf16.mxu0 0
    %4569 = vmatpush1.bf16.xpose.msra.mxu0 0
    %4570 = vmatprep.subr.bf16.mxu0 0
    %4571 = vmatpush1.bf16.xpose.msra.mxu0 0
    %4572 = vmatprep.subr.bf16.mxu0 0
    %4573 = vmatpush1.bf16.xpose.msra.mxu0 0
    %4574 = vmatprep.subr.bf16.mxu0 0
    %4575 = vmatpush1.bf16.xpose.msra.mxu0 0
    %4576 = vmatprep.subr.bf16.mxu0 0
    %4577 = vmatpush1.bf16.xpose.msra.mxu0 0
    %4578 = vmatprep.mubr.bf16.mxu0 0
    %4579 = vmatmul.mubr.bf16.gmra.mrb[0].mxu0 %v4541
    %v4580 = vpop.f32.mrb[0].mxu0
    %v4581 = vadd.f32 %v214, %v4580
    %v4582 = vpop.f32.mrb[0].mxu0
    %v4583 = vpop.f32.mrb[0].mxu0
    %v4584 = vpop.f32.mrb[0].mxu0
    %4585 = vdwg.mxu0
    %4586 = vrot.lane.b32.xlu0 %v4097, 64
    %v4587 = vpop.permute.xlu0 %4586
    %4588 = vrot.lane.b32.xlu0 %v4102, 64
    %v4589 = vpop.permute.xlu0 %4588
    %v4591 = vsel %vm576, %v4587, 0
    %v4594 = vsel %vm576, %v4589, 0
    %4596 = vmatprep.subr.bf16.mxu0 0
    %4597 = vmatpush1.bf16.xpose.msra.mxu0 %v4594
    %4598 = vmatprep.subr.bf16.mxu0 0
    %4599 = vmatpush1.bf16.xpose.msra.mxu0 0
    %4600 = vmatprep.subr.bf16.mxu0 0
    %4601 = vmatpush1.bf16.xpose.msra.mxu0 0
    %4602 = vmatprep.subr.bf16.mxu0 0
    %4603 = vmatpush1.bf16.xpose.msra.mxu0 0
    %4604 = vmatprep.subr.bf16.mxu0 0
    %4605 = vmatpush1.bf16.xpose.msra.mxu0 0
    %4606 = vmatprep.subr.bf16.mxu0 0
    %4607 = vmatpush1.bf16.xpose.msra.mxu0 0
    %4608 = vmatprep.subr.bf16.mxu0 0
    %4609 = vmatpush1.bf16.xpose.msra.mxu0 0
    %4610 = vmatprep.subr.bf16.mxu0 0
    %4611 = vmatpush1.bf16.xpose.msra.mxu0 0
    %4612 = vmatprep.subr.bf16.mxu0 0
    %4613 = vmatpush1.bf16.xpose.msra.mxu0 0
    %4614 = vmatprep.subr.bf16.mxu0 0
    %4615 = vmatpush1.bf16.xpose.msra.mxu0 0
    %4616 = vmatprep.subr.bf16.mxu0 0
    %4617 = vmatpush1.bf16.xpose.msra.mxu0 0
    %4618 = vmatprep.subr.bf16.mxu0 0
    %4619 = vmatpush1.bf16.xpose.msra.mxu0 0
    %4620 = vmatprep.subr.bf16.mxu0 0
    %4621 = vmatpush1.bf16.xpose.msra.mxu0 0
    %4622 = vmatprep.subr.bf16.mxu0 0
    %4623 = vmatpush1.bf16.xpose.msra.mxu0 0
    %4624 = vmatprep.subr.bf16.mxu0 0
    %4625 = vmatpush1.bf16.xpose.msra.mxu0 0
    %4626 = vmatprep.subr.bf16.mxu0 0
    %4627 = vmatpush1.bf16.xpose.msra.mxu0 0
    %4628 = vmatprep.mubr.bf16.mxu0 0
    %4629 = vmatmul.mubr.bf16.gmra.mrb[0].mxu0 %v4591
    %v4630 = vpop.f32.mrb[0].mxu0
    %v4631 = vadd.f32 %v215, %v4630
    %v4632 = vpop.f32.mrb[0].mxu0
    %v4633 = vpop.f32.mrb[0].mxu0
    %v4634 = vpop.f32.mrb[0].mxu0
    %4635 = vdwg.mxu0
    %v4636 = vsel %vm669, %v4581, -inf
    %4637 = vmax.xlane.f32.xlu0 %v4636
    %v4638 = vpop.xlane.xlu0 %4637
    %v4639 = vsel %vm669, %v4631, -inf
    %4640 = vmax.xlane.f32.xlu0 %v4639
    %v4641 = vpop.xlane.xlu0 %4640
    %v4642 = vsub.f32 %v4581, %v4638
    %v4643 = vsub.f32 %v4631, %v4641
    %v4644 = vmul.f32 %v4642, 1.442695
    %v4645 = vpow.pop %v4644
    %v4646 = vmul.f32 %v4643, 1.442695
    %v4647 = vpow.pop %v4646
    %v4648 = vsel %vm669, %v4645, 0.0
    %4649 = vadd.xlane.f32.xlu0 %v4648
    %v4650 = vpop.xlane.xlu0 %4649
    %v4651 = vsel %vm669, %v4647, 0.0
    %4652 = vadd.xlane.f32.xlu0 %v4651
    %v4653 = vpop.xlane.xlu0 %4652
    %v4654 = vrcp.pop %v4650
    %v4655 = vrcp.pop %v4653
    %v4656 = vmul.f32 %v4645, %v4654
    %v4657 = vmul.f32 %v4647, %v4655
    %v4658 = vpack.c.bf16 %v4656, %v4656
    %v4659 = vpack.c.bf16 %v4657, %v4657
    %4660 = vrot.lane.b32.xlu0 %v4106, 64
    %v4661 = vpop.permute.xlu0 %4660
    %v4663 = vsel %vm669, %v4658, 0
    %v4666 = vsel %vm697, %v4661, 0
    %4668 = vmatprep.subr.bf16.mxu0 0
    %4669 = vmatpush1.bf16.msra.mxu0 %v4666
    %4670 = vmatprep.subr.bf16.mxu0 0
    %4671 = vmatpush1.bf16.msra.mxu0 0
    %4672 = vmatprep.subr.bf16.mxu0 0
    %4673 = vmatpush1.bf16.msra.mxu0 0
    %4674 = vmatprep.subr.bf16.mxu0 0
    %4675 = vmatpush1.bf16.msra.mxu0 0
    %4676 = vmatprep.subr.bf16.mxu0 0
    %4677 = vmatpush1.bf16.msra.mxu0 0
    %4678 = vmatprep.subr.bf16.mxu0 0
    %4679 = vmatpush1.bf16.msra.mxu0 0
    %4680 = vmatprep.subr.bf16.mxu0 0
    %4681 = vmatpush1.bf16.msra.mxu0 0
    %4682 = vmatprep.subr.bf16.mxu0 0
    %4683 = vmatpush1.bf16.msra.mxu0 0
    %4684 = vmatprep.subr.bf16.mxu0 0
    %4685 = vmatpush1.bf16.msra.mxu0 0
    %4686 = vmatprep.subr.bf16.mxu0 0
    %4687 = vmatpush1.bf16.msra.mxu0 0
    %4688 = vmatprep.subr.bf16.mxu0 0
    %4689 = vmatpush1.bf16.msra.mxu0 0
    %4690 = vmatprep.subr.bf16.mxu0 0
    %4691 = vmatpush1.bf16.msra.mxu0 0
    %4692 = vmatprep.subr.bf16.mxu0 0
    %4693 = vmatpush1.bf16.msra.mxu0 0
    %4694 = vmatprep.subr.bf16.mxu0 0
    %4695 = vmatpush1.bf16.msra.mxu0 0
    %4696 = vmatprep.subr.bf16.mxu0 0
    %4697 = vmatpush1.bf16.msra.mxu0 0
    %4698 = vmatprep.subr.bf16.mxu0 0
    %4699 = vmatpush1.bf16.msra.mxu0 0
    %4700 = vmatprep.mubr.bf16.mxu0 0
    %4701 = vmatmul.mubr.bf16.gmra.mrb[0].mxu0 %v4663
    %v4702 = vpop.f32.mrb[0].mxu0
    %v4703 = vadd.f32 0.0, %v4702
    %v4704 = vpop.f32.mrb[0].mxu0
    %v4705 = vpop.f32.mrb[0].mxu0
    %v4706 = vpop.f32.mrb[0].mxu0
    %4707 = vdwg.mxu0
    %4708 = vrot.lane.b32.xlu0 %v4107, 64
    %v4709 = vpop.permute.xlu0 %4708
    %v4711 = vsel %vm669, %v4659, 0
    %v4714 = vsel %vm697, %v4709, 0
    %4716 = vmatprep.subr.bf16.mxu0 0
    %4717 = vmatpush1.bf16.msra.mxu0 %v4714
    %4718 = vmatprep.subr.bf16.mxu0 0
    %4719 = vmatpush1.bf16.msra.mxu0 0
    %4720 = vmatprep.subr.bf16.mxu0 0
    %4721 = vmatpush1.bf16.msra.mxu0 0
    %4722 = vmatprep.subr.bf16.mxu0 0
    %4723 = vmatpush1.bf16.msra.mxu0 0
    %4724 = vmatprep.subr.bf16.mxu0 0
    %4725 = vmatpush1.bf16.msra.mxu0 0
    %4726 = vmatprep.subr.bf16.mxu0 0
    %4727 = vmatpush1.bf16.msra.mxu0 0
    %4728 = vmatprep.subr.bf16.mxu0 0
    %4729 = vmatpush1.bf16.msra.mxu0 0
    %4730 = vmatprep.subr.bf16.mxu0 0
    %4731 = vmatpush1.bf16.msra.mxu0 0
    %4732 = vmatprep.subr.bf16.mxu0 0
    %4733 = vmatpush1.bf16.msra.mxu0 0
    %4734 = vmatprep.subr.bf16.mxu0 0
    %4735 = vmatpush1.bf16.msra.mxu0 0
    %4736 = vmatprep.subr.bf16.mxu0 0
    %4737 = vmatpush1.bf16.msra.mxu0 0
    %4738 = vmatprep.subr.bf16.mxu0 0
    %4739 = vmatpush1.bf16.msra.mxu0 0
    %4740 = vmatprep.subr.bf16.mxu0 0
    %4741 = vmatpush1.bf16.msra.mxu0 0
    %4742 = vmatprep.subr.bf16.mxu0 0
    %4743 = vmatpush1.bf16.msra.mxu0 0
    %4744 = vmatprep.subr.bf16.mxu0 0
    %4745 = vmatpush1.bf16.msra.mxu0 0
    %4746 = vmatprep.subr.bf16.mxu0 0
    %4747 = vmatpush1.bf16.msra.mxu0 0
    %4748 = vmatprep.mubr.bf16.mxu0 0
    %4749 = vmatmul.mubr.bf16.gmra.mrb[0].mxu0 %v4711
    %v4750 = vpop.f32.mrb[0].mxu0
    %v4751 = vadd.f32 0.0, %v4750
    %v4752 = vpop.f32.mrb[0].mxu0
    %v4753 = vpop.f32.mrb[0].mxu0
    %v4754 = vpop.f32.mrb[0].mxu0
    %4755 = vdwg.mxu0
    %4756 = vrot.lane.b32.xlu0 %v4096, 32
    %v4757 = vpop.permute.xlu0 %4756
    %4758 = vrot.lane.b32.xlu0 %v4101, 32
    %v4759 = vpop.permute.xlu0 %4758
    %v4761 = vsel %vm576, %v4757, 0
    %v4764 = vsel %vm576, %v4759, 0
    %4766 = vmatprep.subr.bf16.mxu0 0
    %4767 = vmatpush1.bf16.xpose.msra.mxu0 %v4764
    %4768 = vmatprep.subr.bf16.mxu0 0
    %4769 = vmatpush1.bf16.xpose.msra.mxu0 0
    %4770 = vmatprep.subr.bf16.mxu0 0
    %4771 = vmatpush1.bf16.xpose.msra.mxu0 0
    %4772 = vmatprep.subr.bf16.mxu0 0
    %4773 = vmatpush1.bf16.xpose.msra.mxu0 0
    %4774 = vmatprep.subr.bf16.mxu0 0
    %4775 = vmatpush1.bf16.xpose.msra.mxu0 0
    %4776 = vmatprep.subr.bf16.mxu0 0
    %4777 = vmatpush1.bf16.xpose.msra.mxu0 0
    %4778 = vmatprep.subr.bf16.mxu0 0
    %4779 = vmatpush1.bf16.xpose.msra.mxu0 0
    %4780 = vmatprep.subr.bf16.mxu0 0
    %4781 = vmatpush1.bf16.xpose.msra.mxu0 0
    %4782 = vmatprep.subr.bf16.mxu0 0
    %4783 = vmatpush1.bf16.xpose.msra.mxu0 0
    %4784 = vmatprep.subr.bf16.mxu0 0
    %4785 = vmatpush1.bf16.xpose.msra.mxu0 0
    %4786 = vmatprep.subr.bf16.mxu0 0
    %4787 = vmatpush1.bf16.xpose.msra.mxu0 0
    %4788 = vmatprep.subr.bf16.mxu0 0
    %4789 = vmatpush1.bf16.xpose.msra.mxu0 0
    %4790 = vmatprep.subr.bf16.mxu0 0
    %4791 = vmatpush1.bf16.xpose.msra.mxu0 0
    %4792 = vmatprep.subr.bf16.mxu0 0
    %4793 = vmatpush1.bf16.xpose.msra.mxu0 0
    %4794 = vmatprep.subr.bf16.mxu0 0
    %4795 = vmatpush1.bf16.xpose.msra.mxu0 0
    %4796 = vmatprep.subr.bf16.mxu0 0
    %4797 = vmatpush1.bf16.xpose.msra.mxu0 0
    %4798 = vmatprep.mubr.bf16.mxu0 0
    %4799 = vmatmul.mubr.bf16.gmra.mrb[0].mxu0 %v4761
    %v4800 = vpop.f32.mrb[0].mxu0
    %v4801 = vadd.f32 %v214, %v4800
    %v4802 = vpop.f32.mrb[0].mxu0
    %v4803 = vpop.f32.mrb[0].mxu0
    %v4804 = vpop.f32.mrb[0].mxu0
    %4805 = vdwg.mxu0
    %4806 = vrot.lane.b32.xlu0 %v4097, 32
    %v4807 = vpop.permute.xlu0 %4806
    %4808 = vrot.lane.b32.xlu0 %v4102, 32
    %v4809 = vpop.permute.xlu0 %4808
    %v4811 = vsel %vm576, %v4807, 0
    %v4814 = vsel %vm576, %v4809, 0
    %4816 = vmatprep.subr.bf16.mxu0 0
    %4817 = vmatpush1.bf16.xpose.msra.mxu0 %v4814
    %4818 = vmatprep.subr.bf16.mxu0 0
    %4819 = vmatpush1.bf16.xpose.msra.mxu0 0
    %4820 = vmatprep.subr.bf16.mxu0 0
    %4821 = vmatpush1.bf16.xpose.msra.mxu0 0
    %4822 = vmatprep.subr.bf16.mxu0 0
    %4823 = vmatpush1.bf16.xpose.msra.mxu0 0
    %4824 = vmatprep.subr.bf16.mxu0 0
    %4825 = vmatpush1.bf16.xpose.msra.mxu0 0
    %4826 = vmatprep.subr.bf16.mxu0 0
    %4827 = vmatpush1.bf16.xpose.msra.mxu0 0
    %4828 = vmatprep.subr.bf16.mxu0 0
    %4829 = vmatpush1.bf16.xpose.msra.mxu0 0
    %4830 = vmatprep.subr.bf16.mxu0 0
    %4831 = vmatpush1.bf16.xpose.msra.mxu0 0
    %4832 = vmatprep.subr.bf16.mxu0 0
    %4833 = vmatpush1.bf16.xpose.msra.mxu0 0
    %4834 = vmatprep.subr.bf16.mxu0 0
    %4835 = vmatpush1.bf16.xpose.msra.mxu0 0
    %4836 = vmatprep.subr.bf16.mxu0 0
    %4837 = vmatpush1.bf16.xpose.msra.mxu0 0
    %4838 = vmatprep.subr.bf16.mxu0 0
    %4839 = vmatpush1.bf16.xpose.msra.mxu0 0
    %4840 = vmatprep.subr.bf16.mxu0 0
    %4841 = vmatpush1.bf16.xpose.msra.mxu0 0
    %4842 = vmatprep.subr.bf16.mxu0 0
    %4843 = vmatpush1.bf16.xpose.msra.mxu0 0
    %4844 = vmatprep.subr.bf16.mxu0 0
    %4845 = vmatpush1.bf16.xpose.msra.mxu0 0
    %4846 = vmatprep.subr.bf16.mxu0 0
    %4847 = vmatpush1.bf16.xpose.msra.mxu0 0
    %4848 = vmatprep.mubr.bf16.mxu0 0
    %4849 = vmatmul.mubr.bf16.gmra.mrb[0].mxu0 %v4811
    %v4850 = vpop.f32.mrb[0].mxu0
    %v4851 = vadd.f32 %v215, %v4850
    %v4852 = vpop.f32.mrb[0].mxu0
    %v4853 = vpop.f32.mrb[0].mxu0
    %v4854 = vpop.f32.mrb[0].mxu0
    %4855 = vdwg.mxu0
    %v4856 = vsel %vm669, %v4801, -inf
    %4857 = vmax.xlane.f32.xlu0 %v4856
    %v4858 = vpop.xlane.xlu0 %4857
    %v4859 = vsel %vm669, %v4851, -inf
    %4860 = vmax.xlane.f32.xlu0 %v4859
    %v4861 = vpop.xlane.xlu0 %4860
    %v4862 = vsub.f32 %v4801, %v4858
    %v4863 = vsub.f32 %v4851, %v4861
    %v4864 = vmul.f32 %v4862, 1.442695
    %v4865 = vpow.pop %v4864
    %v4866 = vmul.f32 %v4863, 1.442695
    %v4867 = vpow.pop %v4866
    %v4868 = vsel %vm669, %v4865, 0.0
    %4869 = vadd.xlane.f32.xlu0 %v4868
    %v4870 = vpop.xlane.xlu0 %4869
    %v4871 = vsel %vm669, %v4867, 0.0
    %4872 = vadd.xlane.f32.xlu0 %v4871
    %v4873 = vpop.xlane.xlu0 %4872
    %v4874 = vrcp.pop %v4870
    %v4875 = vrcp.pop %v4873
    %v4876 = vmul.f32 %v4865, %v4874
    %v4877 = vmul.f32 %v4867, %v4875
    %v4878 = vpack.c.bf16 %v4876, %v4876
    %v4879 = vpack.c.bf16 %v4877, %v4877
    %4880 = vrot.lane.b32.xlu0 %v4106, 32
    %v4881 = vpop.permute.xlu0 %4880
    %v4883 = vsel %vm669, %v4878, 0
    %v4886 = vsel %vm697, %v4881, 0
    %4888 = vmatprep.subr.bf16.mxu0 0
    %4889 = vmatpush1.bf16.msra.mxu0 %v4886
    %4890 = vmatprep.subr.bf16.mxu0 0
    %4891 = vmatpush1.bf16.msra.mxu0 0
    %4892 = vmatprep.subr.bf16.mxu0 0
    %4893 = vmatpush1.bf16.msra.mxu0 0
    %4894 = vmatprep.subr.bf16.mxu0 0
    %4895 = vmatpush1.bf16.msra.mxu0 0
    %4896 = vmatprep.subr.bf16.mxu0 0
    %4897 = vmatpush1.bf16.msra.mxu0 0
    %4898 = vmatprep.subr.bf16.mxu0 0
    %4899 = vmatpush1.bf16.msra.mxu0 0
    %4900 = vmatprep.subr.bf16.mxu0 0
    %4901 = vmatpush1.bf16.msra.mxu0 0
    %4902 = vmatprep.subr.bf16.mxu0 0
    %4903 = vmatpush1.bf16.msra.mxu0 0
    %4904 = vmatprep.subr.bf16.mxu0 0
    %4905 = vmatpush1.bf16.msra.mxu0 0
    %4906 = vmatprep.subr.bf16.mxu0 0
    %4907 = vmatpush1.bf16.msra.mxu0 0
    %4908 = vmatprep.subr.bf16.mxu0 0
    %4909 = vmatpush1.bf16.msra.mxu0 0
    %4910 = vmatprep.subr.bf16.mxu0 0
    %4911 = vmatpush1.bf16.msra.mxu0 0
    %4912 = vmatprep.subr.bf16.mxu0 0
    %4913 = vmatpush1.bf16.msra.mxu0 0
    %4914 = vmatprep.subr.bf16.mxu0 0
    %4915 = vmatpush1.bf16.msra.mxu0 0
    %4916 = vmatprep.subr.bf16.mxu0 0
    %4917 = vmatpush1.bf16.msra.mxu0 0
    %4918 = vmatprep.subr.bf16.mxu0 0
    %4919 = vmatpush1.bf16.msra.mxu0 0
    %4920 = vmatprep.mubr.bf16.mxu0 0
    %4921 = vmatmul.mubr.bf16.gmra.mrb[0].mxu0 %v4883
    %v4922 = vpop.f32.mrb[0].mxu0
    %v4923 = vadd.f32 0.0, %v4922
    %v4924 = vpop.f32.mrb[0].mxu0
    %v4925 = vpop.f32.mrb[0].mxu0
    %v4926 = vpop.f32.mrb[0].mxu0
    %4927 = vdwg.mxu0
    %4928 = vrot.lane.b32.xlu0 %v4107, 32
    %v4929 = vpop.permute.xlu0 %4928
    %v4931 = vsel %vm669, %v4879, 0
    %v4934 = vsel %vm697, %v4929, 0
    %4936 = vmatprep.subr.bf16.mxu0 0
    %4937 = vmatpush1.bf16.msra.mxu0 %v4934
    %4938 = vmatprep.subr.bf16.mxu0 0
    %4939 = vmatpush1.bf16.msra.mxu0 0
    %4940 = vmatprep.subr.bf16.mxu0 0
    %4941 = vmatpush1.bf16.msra.mxu0 0
    %4942 = vmatprep.subr.bf16.mxu0 0
    %4943 = vmatpush1.bf16.msra.mxu0 0
    %4944 = vmatprep.subr.bf16.mxu0 0
    %4945 = vmatpush1.bf16.msra.mxu0 0
    %4946 = vmatprep.subr.bf16.mxu0 0
    %4947 = vmatpush1.bf16.msra.mxu0 0
    %4948 = vmatprep.subr.bf16.mxu0 0
    %4949 = vmatpush1.bf16.msra.mxu0 0
    %4950 = vmatprep.subr.bf16.mxu0 0
    %4951 = vmatpush1.bf16.msra.mxu0 0
    %4952 = vmatprep.subr.bf16.mxu0 0
    %4953 = vmatpush1.bf16.msra.mxu0 0
    %4954 = vmatprep.subr.bf16.mxu0 0
    %4955 = vmatpush1.bf16.msra.mxu0 0
    %4956 = vmatprep.subr.bf16.mxu0 0
    %4957 = vmatpush1.bf16.msra.mxu0 0
    %4958 = vmatprep.subr.bf16.mxu0 0
    %4959 = vmatpush1.bf16.msra.mxu0 0
    %4960 = vmatprep.subr.bf16.mxu0 0
    %4961 = vmatpush1.bf16.msra.mxu0 0
    %4962 = vmatprep.subr.bf16.mxu0 0
    %4963 = vmatpush1.bf16.msra.mxu0 0
    %4964 = vmatprep.subr.bf16.mxu0 0
    %4965 = vmatpush1.bf16.msra.mxu0 0
    %4966 = vmatprep.subr.bf16.mxu0 0
    %4967 = vmatpush1.bf16.msra.mxu0 0
    %4968 = vmatprep.mubr.bf16.mxu0 0
    %4969 = vmatmul.mubr.bf16.gmra.mrb[0].mxu0 %v4931
    %v4970 = vpop.f32.mrb[0].mxu0
    %v4971 = vadd.f32 0.0, %v4970
    %v4972 = vpop.f32.mrb[0].mxu0
    %v4973 = vpop.f32.mrb[0].mxu0
    %v4974 = vpop.f32.mrb[0].mxu0
    %4975 = vdwg.mxu0
    %4978 = vrot.lane.b32.xlu0 %v4483, 32
    %v4979 = vpop.permute.xlu0 %4978
    %4980 = vrot.lane.b32.xlu0 %v4531, 32
    %v4981 = vpop.permute.xlu0 %4980
    %4986 = vrot.lane.b32.xlu0 %v4703, 64
    %v4987 = vpop.permute.xlu0 %4986
    %4988 = vrot.lane.b32.xlu0 %v4751, 64
    %v4989 = vpop.permute.xlu0 %4988
    %4994 = vrot.lane.b32.xlu0 %v4923, 96
    %v4995 = vpop.permute.xlu0 %4994
    %4996 = vrot.lane.b32.xlu0 %v4971, 96
    %v4997 = vpop.permute.xlu0 %4996
    %v5000 = vsel %vm576, %v4265, %v4979
    %v5001 = vsel %vm576, %v4311, %v4981
    %v5002 = vsel %vm1473, %v5000, %v4987
    %v5003 = vsel %vm1473, %v5001, %v4989
    %v5004 = vsel %vm1476, %v5002, %v4995
    %v5005 = vsel %vm1476, %v5003, %v4997
    %v5006 = vpack.c.bf16 %v5005, %v5004
    %v5008 = vlaneseq
    %v5009 = vshrl.u32 %v5008, 7
    %v5010 = vsub.s32 0, %v5009
    %v5011 = vrot.slane %v3858, %v5010
    %v5029 = vunpack.c.l.b16 %v3842
    %v5030 = vunpack.c.l.b16 %v3843
    %v5031 = vunpack.c.l.b16 %v3844
    %v5032 = vunpack.c.l.b16 %v3845
    %v5033 = vunpack.c.l.b16 %v3846
    %v5034 = vunpack.c.l.b16 %v3847
    %v5035 = vunpack.c.l.b16 %v3848
    %v5036 = vunpack.c.l.b16 %v3849
    %v5037 = vunpack.c.l.b16 %v3850
    %v5038 = vunpack.c.l.b16 %v3851
    %v5039 = vunpack.c.l.b16 %v3852
    %v5040 = vunpack.c.l.b16 %v3853
    %v5041 = vunpack.c.l.b16 %v3854
    %v5042 = vunpack.c.l.b16 %v3855
    %v5043 = vunpack.c.l.b16 %v3856
    %v5044 = vunpack.c.l.b16 %v3857
    %v5045 = vpack.c.b16 %v5030, %v5029
    %v5046 = vpack.c.b16 %v5032, %v5031
    %v5047 = vpack.c.b16 %v5034, %v5033
    %v5048 = vpack.c.b16 %v5036, %v5035
    %v5049 = vpack.c.b16 %v5038, %v5037
    %v5050 = vpack.c.b16 %v5040, %v5039
    %v5051 = vpack.c.b16 %v5042, %v5041
    %v5052 = vpack.c.b16 %v5044, %v5043
    %5061 = vmatprep.subr.bf16.mxu0 0
    %5062 = vmatpush1.bf16.msra.mxu0 %v5045
    %5063 = vmatprep.subr.bf16.mxu0 0
    %5064 = vmatpush1.bf16.msra.mxu0 %v5046
    %5065 = vmatprep.subr.bf16.mxu0 0
    %5066 = vmatpush1.bf16.msra.mxu0 %v5047
    %5067 = vmatprep.subr.bf16.mxu0 0
    %5068 = vmatpush1.bf16.msra.mxu0 %v5048
    %5069 = vmatprep.subr.bf16.mxu0 0
    %5070 = vmatpush1.bf16.msra.mxu0 %v5049
    %5071 = vmatprep.subr.bf16.mxu0 0
    %5072 = vmatpush1.bf16.msra.mxu0 %v5050
    %5073 = vmatprep.subr.bf16.mxu0 0
    %5074 = vmatpush1.bf16.msra.mxu0 %v5051
    %5075 = vmatprep.subr.bf16.mxu0 0
    %5076 = vmatpush1.bf16.msra.mxu0 %v5052
    %5077 = vmatprep.subr.bf16.mxu0 0
    %5078 = vmatpush1.bf16.msra.mxu0 0
    %5079 = vmatprep.subr.bf16.mxu0 0
    %5080 = vmatpush1.bf16.msra.mxu0 0
    %5081 = vmatprep.subr.bf16.mxu0 0
    %5082 = vmatpush1.bf16.msra.mxu0 0
    %5083 = vmatprep.subr.bf16.mxu0 0
    %5084 = vmatpush1.bf16.msra.mxu0 0
    %5085 = vmatprep.subr.bf16.mxu0 0
    %5086 = vmatpush1.bf16.msra.mxu0 0
    %5087 = vmatprep.subr.bf16.mxu0 0
    %5088 = vmatpush1.bf16.msra.mxu0 0
    %5089 = vmatprep.subr.bf16.mxu0 0
    %5090 = vmatpush1.bf16.msra.mxu0 0
    %5091 = vmatprep.subr.bf16.mxu0 0
    %5092 = vmatpush1.bf16.msra.mxu0 0
    %5093 = vmatprep.mubr.bf16.mxu0 0
    %5094 = vmatmul.mubr.bf16.gmra.mrb[0].mxu0 %v5006
    %v5095 = vpop.f32.mrb[0].mxu0
    %v5096 = vadd.f32 %v5011, %v5095
    %v5097 = vpop.f32.mrb[0].mxu0
    %v5098 = vpop.f32.mrb[0].mxu0
    %v5099 = vadd.f32 %v5011, %v5098
    %v5100 = vpop.f32.mrb[0].mxu0
    %5101 = vdwg.mxu0
    %v5102 = vadd.f32 %v5096, %v3807
    %v5103 = vadd.f32 %v5099, %v3808
    %5104 = vadd.xlane.f32.xlu0 %v5102
    %v5105 = vpop.xlane.xlu0 %5104
    %5106 = vadd.xlane.f32.xlu0 %v5103
    %v5107 = vpop.xlane.xlu0 %5106
    %v5108 = vmul.f32 %v5105, %v230
    %v5109 = vmul.f32 %v5107, %v230
    %v5110 = vsub.f32 %v5102, %v5108
    %v5111 = vsub.f32 %v5103, %v5109
    %v5112 = vmul.f32 %v5110, %v5110
    %v5113 = vmul.f32 %v5111, %v5111
    %5114 = vadd.xlane.f32.xlu0 %v5112
    %v5115 = vpop.xlane.xlu0 %5114
    %5116 = vadd.xlane.f32.xlu0 %v5113
    %v5117 = vpop.xlane.xlu0 %5116
    %v5118 = vmul.f32 %v5115, %v230
    %v5119 = vmul.f32 %v5117, %v230
    %v5120 = vadd.f32 %v5118, 1e-05
    %v5121 = vadd.f32 %v5119, 1e-05
    %v5122 = vrsqrt.pop %v5120
    %v5123 = vrsqrt.pop %v5121
    %v5124 = vmul.f32 %v5110, %v5122
    %v5125 = vmul.f32 %v5111, %v5123
    %v5127 = vlaneseq
    %v5128 = vshrl.u32 %v5127, 7
    %v5129 = vsub.s32 0, %v5128
    %v5130 = vrot.slane %v3859, %v5129
    %v5132 = vmul.f32 %v5124, %v5130
    %v5133 = vmul.f32 %v5125, %v5130
    %v5135 = vlaneseq
    %v5136 = vshrl.u32 %v5135, 7
    %v5137 = vsub.s32 0, %v5136
    %v5138 = vrot.slane %v3860, %v5137
    %v5140 = vadd.f32 %v5132, %v5138
    %v5141 = vadd.f32 %v5133, %v5138
    %v5142 = vld [vmem:[%s57] sm:$0xf]
    %v5143 = vld [vmem:[%s57 + $0x4] sm:$0xf]
    %v5144 = vld [vmem:[%s57 + $0x8] sm:$0xf]
    %v5145 = vld [vmem:[%s57 + $0xc] sm:$0xf]
    %v5146 = vld [vmem:[%s57 + $0x10] sm:$0xf]
    %v5147 = vld [vmem:[%s57 + $0x14] sm:$0xf]
    %v5148 = vld [vmem:[%s57 + $0x18] sm:$0xf]
    %v5149 = vld [vmem:[%s57 + $0x1c] sm:$0xf]
    %v5150 = vld [vmem:[%s57 + $0x20] sm:$0xf]
    %v5151 = vld [vmem:[%s57 + $0x24] sm:$0xf]
    %v5152 = vld [vmem:[%s57 + $0x28] sm:$0xf]
    %v5153 = vld [vmem:[%s57 + $0x2c] sm:$0xf]
    %v5154 = vld [vmem:[%s57 + $0x30] sm:$0xf]
    %v5155 = vld [vmem:[%s57 + $0x34] sm:$0xf]
    %v5156 = vld [vmem:[%s57 + $0x38] sm:$0xf]
    %v5157 = vld [vmem:[%s57 + $0x3c] sm:$0xf]
    %v5158 = vld [vmem:[%s59] sm:$0x1]
    %v5159 = vld [vmem:[%s61] sm:$0xff]
    %v5160 = vld [vmem:[%s61 + $0x8] sm:$0xff]
    %v5161 = vld [vmem:[%s61 + $0x10] sm:$0xff]
    %v5162 = vld [vmem:[%s61 + $0x18] sm:$0xff]
    %v5163 = vld [vmem:[%s61 + $0x20] sm:$0xff]
    %v5164 = vld [vmem:[%s61 + $0x28] sm:$0xff]
    %v5165 = vld [vmem:[%s61 + $0x30] sm:$0xff]
    %v5166 = vld [vmem:[%s61 + $0x38] sm:$0xff]
    %v5167 = vld [vmem:[%s61 + $0x40] sm:$0xff]
    %v5168 = vld [vmem:[%s61 + $0x48] sm:$0xff]
    %v5169 = vld [vmem:[%s61 + $0x50] sm:$0xff]
    %v5170 = vld [vmem:[%s61 + $0x58] sm:$0xff]
    %v5171 = vld [vmem:[%s61 + $0x60] sm:$0xff]
    %v5172 = vld [vmem:[%s61 + $0x68] sm:$0xff]
    %v5173 = vld [vmem:[%s61 + $0x70] sm:$0xff]
    %v5174 = vld [vmem:[%s61 + $0x78] sm:$0xff]
    %v5175 = vld [vmem:[%s63] sm:$0x3]
    %v5176 = vld [vmem:[%s65] sm:$0xf]
    %v5177 = vld [vmem:[%s65 + $0x4] sm:$0xf]
    %v5178 = vld [vmem:[%s65 + $0x8] sm:$0xf]
    %v5179 = vld [vmem:[%s65 + $0xc] sm:$0xf]
    %v5180 = vld [vmem:[%s65 + $0x10] sm:$0xf]
    %v5181 = vld [vmem:[%s65 + $0x14] sm:$0xf]
    %v5182 = vld [vmem:[%s65 + $0x18] sm:$0xf]
    %v5183 = vld [vmem:[%s65 + $0x1c] sm:$0xf]
    %v5184 = vld [vmem:[%s65 + $0x20] sm:$0xf]
    %v5185 = vld [vmem:[%s65 + $0x24] sm:$0xf]
    %v5186 = vld [vmem:[%s65 + $0x28] sm:$0xf]
    %v5187 = vld [vmem:[%s65 + $0x2c] sm:$0xf]
    %v5188 = vld [vmem:[%s65 + $0x30] sm:$0xf]
    %v5189 = vld [vmem:[%s65 + $0x34] sm:$0xf]
    %v5190 = vld [vmem:[%s65 + $0x38] sm:$0xf]
    %v5191 = vld [vmem:[%s65 + $0x3c] sm:$0xf]
    %v5192 = vld [vmem:[%s67] sm:$0x1]
    %v5193 = vld [vmem:[%s69] sm:$0x1]
    %v5194 = vld [vmem:[%s71] sm:$0x1]
    %v5195 = vpack.c.bf16 %v5141, %v5140
    %v5197 = vlaneseq
    %v5198 = vshrl.u32 %v5197, 7
    %v5199 = vsub.s32 0, %v5198
    %v5200 = vrot.slane %v5158, %v5199
    %v5218 = vunpack.c.l.b16 %v5142
    %v5219 = vunpack.c.l.b16 %v5143
    %v5220 = vunpack.c.l.b16 %v5144
    %v5221 = vunpack.c.l.b16 %v5145
    %v5222 = vunpack.c.l.b16 %v5146
    %v5223 = vunpack.c.l.b16 %v5147
    %v5224 = vunpack.c.l.b16 %v5148
    %v5225 = vunpack.c.l.b16 %v5149
    %v5226 = vunpack.c.l.b16 %v5150
    %v5227 = vunpack.c.l.b16 %v5151
    %v5228 = vunpack.c.l.b16 %v5152
    %v5229 = vunpack.c.l.b16 %v5153
    %v5230 = vunpack.c.l.b16 %v5154
    %v5231 = vunpack.c.l.b16 %v5155
    %v5232 = vunpack.c.l.b16 %v5156
    %v5233 = vunpack.c.l.b16 %v5157
    %v5234 = vpack.c.b16 %v5219, %v5218
    %v5235 = vpack.c.b16 %v5221, %v5220
    %v5236 = vpack.c.b16 %v5223, %v5222
    %v5237 = vpack.c.b16 %v5225, %v5224
    %v5238 = vpack.c.b16 %v5227, %v5226
    %v5239 = vpack.c.b16 %v5229, %v5228
    %v5240 = vpack.c.b16 %v5231, %v5230
    %v5241 = vpack.c.b16 %v5233, %v5232
    %5250 = vmatprep.subr.bf16.mxu0 0
    %5251 = vmatpush1.bf16.msra.mxu0 %v5234
    %5252 = vmatprep.subr.bf16.mxu0 0
    %5253 = vmatpush1.bf16.msra.mxu0 %v5235
    %5254 = vmatprep.subr.bf16.mxu0 0
    %5255 = vmatpush1.bf16.msra.mxu0 %v5236
    %5256 = vmatprep.subr.bf16.mxu0 0
    %5257 = vmatpush1.bf16.msra.mxu0 %v5237
    %5258 = vmatprep.subr.bf16.mxu0 0
    %5259 = vmatpush1.bf16.msra.mxu0 %v5238
    %5260 = vmatprep.subr.bf16.mxu0 0
    %5261 = vmatpush1.bf16.msra.mxu0 %v5239
    %5262 = vmatprep.subr.bf16.mxu0 0
    %5263 = vmatpush1.bf16.msra.mxu0 %v5240
    %5264 = vmatprep.subr.bf16.mxu0 0
    %5265 = vmatpush1.bf16.msra.mxu0 %v5241
    %5266 = vmatprep.subr.bf16.mxu0 0
    %5267 = vmatpush1.bf16.msra.mxu0 0
    %5268 = vmatprep.subr.bf16.mxu0 0
    %5269 = vmatpush1.bf16.msra.mxu0 0
    %5270 = vmatprep.subr.bf16.mxu0 0
    %5271 = vmatpush1.bf16.msra.mxu0 0
    %5272 = vmatprep.subr.bf16.mxu0 0
    %5273 = vmatpush1.bf16.msra.mxu0 0
    %5274 = vmatprep.subr.bf16.mxu0 0
    %5275 = vmatpush1.bf16.msra.mxu0 0
    %5276 = vmatprep.subr.bf16.mxu0 0
    %5277 = vmatpush1.bf16.msra.mxu0 0
    %5278 = vmatprep.subr.bf16.mxu0 0
    %5279 = vmatpush1.bf16.msra.mxu0 0
    %5280 = vmatprep.subr.bf16.mxu0 0
    %5281 = vmatpush1.bf16.msra.mxu0 0
    %5282 = vmatprep.mubr.bf16.mxu0 0
    %5283 = vmatmul.mubr.bf16.gmra.mrb[0].mxu0 %v5195
    %v5284 = vpop.f32.mrb[0].mxu0
    %v5285 = vadd.f32 %v5200, %v5284
    %v5286 = vpop.f32.mrb[0].mxu0
    %v5287 = vpop.f32.mrb[0].mxu0
    %v5288 = vadd.f32 %v5200, %v5287
    %v5289 = vpop.f32.mrb[0].mxu0
    %5290 = vdwg.mxu0
    %v5292 = vlaneseq
    %v5293 = vshrl.u32 %v5292, 7
    %v5294 = vsub.s32 0, %v5293
    %v5295 = vrot.slane %v5175, %v5294
    %v5296 = vlaneseq
    %v5297 = vshrl.u32 %v5296, 7
    %v5298 = vsub.s32 1, %v5297
    %v5299 = vrot.slane %v5175, %v5298
    %v5318 = vunpack.c.l.b16 %v5159
    %v5319 = vunpack.c.h.b16 %v5159
    %v5320 = vunpack.c.l.b16 %v5160
    %v5321 = vunpack.c.h.b16 %v5160
    %v5322 = vunpack.c.l.b16 %v5161
    %v5323 = vunpack.c.h.b16 %v5161
    %v5324 = vunpack.c.l.b16 %v5162
    %v5325 = vunpack.c.h.b16 %v5162
    %v5326 = vunpack.c.l.b16 %v5163
    %v5327 = vunpack.c.h.b16 %v5163
    %v5328 = vunpack.c.l.b16 %v5164
    %v5329 = vunpack.c.h.b16 %v5164
    %v5330 = vunpack.c.l.b16 %v5165
    %v5331 = vunpack.c.h.b16 %v5165
    %v5332 = vunpack.c.l.b16 %v5166
    %v5333 = vunpack.c.h.b16 %v5166
    %v5334 = vunpack.c.l.b16 %v5167
    %v5335 = vunpack.c.h.b16 %v5167
    %v5336 = vunpack.c.l.b16 %v5168
    %v5337 = vunpack.c.h.b16 %v5168
    %v5338 = vunpack.c.l.b16 %v5169
    %v5339 = vunpack.c.h.b16 %v5169
    %v5340 = vunpack.c.l.b16 %v5170
    %v5341 = vunpack.c.h.b16 %v5170
    %v5342 = vunpack.c.l.b16 %v5171
    %v5343 = vunpack.c.h.b16 %v5171
    %v5344 = vunpack.c.l.b16 %v5172
    %v5345 = vunpack.c.h.b16 %v5172
    %v5346 = vunpack.c.l.b16 %v5173
    %v5347 = vunpack.c.h.b16 %v5173
    %v5348 = vunpack.c.l.b16 %v5174
    %v5349 = vunpack.c.h.b16 %v5174
    %v5350 = vpack.c.b16 %v5320, %v5318
    %v5351 = vpack.c.b16 %v5321, %v5319
    %v5352 = vpack.c.b16 %v5324, %v5322
    %v5353 = vpack.c.b16 %v5325, %v5323
    %v5354 = vpack.c.b16 %v5328, %v5326
    %v5355 = vpack.c.b16 %v5329, %v5327
    %v5356 = vpack.c.b16 %v5332, %v5330
    %v5357 = vpack.c.b16 %v5333, %v5331
    %v5358 = vpack.c.b16 %v5336, %v5334
    %v5359 = vpack.c.b16 %v5337, %v5335
    %v5360 = vpack.c.b16 %v5340, %v5338
    %v5361 = vpack.c.b16 %v5341, %v5339
    %v5362 = vpack.c.b16 %v5344, %v5342
    %v5363 = vpack.c.b16 %v5345, %v5343
    %v5364 = vpack.c.b16 %v5348, %v5346
    %v5365 = vpack.c.b16 %v5349, %v5347
    %5382 = vmatprep.subr.bf16.mxu0 %v5351
    %5383 = vmatpush1.bf16.msra.mxu0 %v5350
    %5384 = vmatprep.subr.bf16.mxu0 %v5353
    %5385 = vmatpush1.bf16.msra.mxu0 %v5352
    %5386 = vmatprep.subr.bf16.mxu0 %v5355
    %5387 = vmatpush1.bf16.msra.mxu0 %v5354
    %5388 = vmatprep.subr.bf16.mxu0 %v5357
    %5389 = vmatpush1.bf16.msra.mxu0 %v5356
    %5390 = vmatprep.subr.bf16.mxu0 %v5359
    %5391 = vmatpush1.bf16.msra.mxu0 %v5358
    %5392 = vmatprep.subr.bf16.mxu0 %v5361
    %5393 = vmatpush1.bf16.msra.mxu0 %v5360
    %5394 = vmatprep.subr.bf16.mxu0 %v5363
    %5395 = vmatpush1.bf16.msra.mxu0 %v5362
    %5396 = vmatprep.subr.bf16.mxu0 %v5365
    %5397 = vmatpush1.bf16.msra.mxu0 %v5364
    %5398 = vmatprep.subr.bf16.mxu0 0
    %5399 = vmatpush1.bf16.msra.mxu0 0
    %5400 = vmatprep.subr.bf16.mxu0 0
    %5401 = vmatpush1.bf16.msra.mxu0 0
    %5402 = vmatprep.subr.bf16.mxu0 0
    %5403 = vmatpush1.bf16.msra.mxu0 0
    %5404 = vmatprep.subr.bf16.mxu0 0
    %5405 = vmatpush1.bf16.msra.mxu0 0
    %5406 = vmatprep.subr.bf16.mxu0 0
    %5407 = vmatpush1.bf16.msra.mxu0 0
    %5408 = vmatprep.subr.bf16.mxu0 0
    %5409 = vmatpush1.bf16.msra.mxu0 0
    %5410 = vmatprep.subr.bf16.mxu0 0
    %5411 = vmatpush1.bf16.msra.mxu0 0
    %5412 = vmatprep.subr.bf16.mxu0 0
    %5413 = vmatpush1.bf16.msra.mxu0 0
    %5414 = vmatprep.mubr.bf16.mxu0 0
    %5415 = vmatmul.mubr.bf16.gmra.mrb[0].mxu0 %v3760
    %v5416 = vpop.f32.mrb[0].mxu0
    %v5417 = vadd.f32 %v5295, %v5416
    %v5418 = vpop.f32.mrb[0].mxu0
    %v5419 = vadd.f32 %v5299, %v5418
    %v5420 = vpop.f32.mrb[0].mxu0
    %v5421 = vadd.f32 %v5295, %v5420
    %v5422 = vpop.f32.mrb[0].mxu0
    %v5423 = vadd.f32 %v5299, %v5422
    %5424 = vdwg.mxu0
    %v5425 = vpack.c.bf16 %v5288, %v5285
    %v5426 = vpack.c.bf16 %v5421, %v5417
    %v5427 = vpack.c.bf16 %v5423, %v5419
    %v5429 = vunpack.c.l.b16 %v5425
    %v5430 = vunpack.c.h.b16 %v5425
    %v5431 = vpack.c.b16 %v5429, %v5429
    %v5432 = vpack.c.b16 %v5430, %v5430
    %v5434 = vunpack.c.l.b16 %v5426
    %v5435 = vunpack.c.h.b16 %v5426
    %v5436 = vpack.c.b16 %v5434, %v5434
    %v5437 = vpack.c.b16 %v5435, %v5435
    %v5439 = vunpack.c.l.b16 %v5427
    %v5440 = vunpack.c.h.b16 %v5427
    %v5441 = vpack.c.b16 %v5439, %v5439
    %v5442 = vpack.c.b16 %v5440, %v5440
    %v5444 = vsel %vm576, %v5431, 0
    %v5447 = vsel %vm576, %v5436, 0
    %5449 = vmatprep.subr.bf16.mxu0 0
    %5450 = vmatpush1.bf16.xpose.msra.mxu0 %v5447
    %5451 = vmatprep.subr.bf16.mxu0 0
    %5452 = vmatpush1.bf16.xpose.msra.mxu0 0
    %5453 = vmatprep.subr.bf16.mxu0 0
    %5454 = vmatpush1.bf16.xpose.msra.mxu0 0
    %5455 = vmatprep.subr.bf16.mxu0 0
    %5456 = vmatpush1.bf16.xpose.msra.mxu0 0
    %5457 = vmatprep.subr.bf16.mxu0 0
    %5458 = vmatpush1.bf16.xpose.msra.mxu0 0
    %5459 = vmatprep.subr.bf16.mxu0 0
    %5460 = vmatpush1.bf16.xpose.msra.mxu0 0
    %5461 = vmatprep.subr.bf16.mxu0 0
    %5462 = vmatpush1.bf16.xpose.msra.mxu0 0
    %5463 = vmatprep.subr.bf16.mxu0 0
    %5464 = vmatpush1.bf16.xpose.msra.mxu0 0
    %5465 = vmatprep.subr.bf16.mxu0 0
    %5466 = vmatpush1.bf16.xpose.msra.mxu0 0
    %5467 = vmatprep.subr.bf16.mxu0 0
    %5468 = vmatpush1.bf16.xpose.msra.mxu0 0
    %5469 = vmatprep.subr.bf16.mxu0 0
    %5470 = vmatpush1.bf16.xpose.msra.mxu0 0
    %5471 = vmatprep.subr.bf16.mxu0 0
    %5472 = vmatpush1.bf16.xpose.msra.mxu0 0
    %5473 = vmatprep.subr.bf16.mxu0 0
    %5474 = vmatpush1.bf16.xpose.msra.mxu0 0
    %5475 = vmatprep.subr.bf16.mxu0 0
    %5476 = vmatpush1.bf16.xpose.msra.mxu0 0
    %5477 = vmatprep.subr.bf16.mxu0 0
    %5478 = vmatpush1.bf16.xpose.msra.mxu0 0
    %5479 = vmatprep.subr.bf16.mxu0 0
    %5480 = vmatpush1.bf16.xpose.msra.mxu0 0
    %5481 = vmatprep.mubr.bf16.mxu0 0
    %5482 = vmatmul.mubr.bf16.gmra.mrb[0].mxu0 %v5444
    %v5483 = vpop.f32.mrb[0].mxu0
    %v5484 = vadd.f32 %v569, %v5483
    %v5485 = vpop.f32.mrb[0].mxu0
    %v5486 = vpop.f32.mrb[0].mxu0
    %v5487 = vpop.f32.mrb[0].mxu0
    %5488 = vdwg.mxu0
    %v5490 = vsel %vm576, %v5432, 0
    %v5493 = vsel %vm576, %v5437, 0
    %5495 = vmatprep.subr.bf16.mxu0 0
    %5496 = vmatpush1.bf16.xpose.msra.mxu0 %v5493
    %5497 = vmatprep.subr.bf16.mxu0 0
    %5498 = vmatpush1.bf16.xpose.msra.mxu0 0
    %5499 = vmatprep.subr.bf16.mxu0 0
    %5500 = vmatpush1.bf16.xpose.msra.mxu0 0
    %5501 = vmatprep.subr.bf16.mxu0 0
    %5502 = vmatpush1.bf16.xpose.msra.mxu0 0
    %5503 = vmatprep.subr.bf16.mxu0 0
    %5504 = vmatpush1.bf16.xpose.msra.mxu0 0
    %5505 = vmatprep.subr.bf16.mxu0 0
    %5506 = vmatpush1.bf16.xpose.msra.mxu0 0
    %5507 = vmatprep.subr.bf16.mxu0 0
    %5508 = vmatpush1.bf16.xpose.msra.mxu0 0
    %5509 = vmatprep.subr.bf16.mxu0 0
    %5510 = vmatpush1.bf16.xpose.msra.mxu0 0
    %5511 = vmatprep.subr.bf16.mxu0 0
    %5512 = vmatpush1.bf16.xpose.msra.mxu0 0
    %5513 = vmatprep.subr.bf16.mxu0 0
    %5514 = vmatpush1.bf16.xpose.msra.mxu0 0
    %5515 = vmatprep.subr.bf16.mxu0 0
    %5516 = vmatpush1.bf16.xpose.msra.mxu0 0
    %5517 = vmatprep.subr.bf16.mxu0 0
    %5518 = vmatpush1.bf16.xpose.msra.mxu0 0
    %5519 = vmatprep.subr.bf16.mxu0 0
    %5520 = vmatpush1.bf16.xpose.msra.mxu0 0
    %5521 = vmatprep.subr.bf16.mxu0 0
    %5522 = vmatpush1.bf16.xpose.msra.mxu0 0
    %5523 = vmatprep.subr.bf16.mxu0 0
    %5524 = vmatpush1.bf16.xpose.msra.mxu0 0
    %5525 = vmatprep.subr.bf16.mxu0 0
    %5526 = vmatpush1.bf16.xpose.msra.mxu0 0
    %5527 = vmatprep.mubr.bf16.mxu0 0
    %5528 = vmatmul.mubr.bf16.gmra.mrb[0].mxu0 %v5490
    %v5529 = vpop.f32.mrb[0].mxu0
    %v5530 = vadd.f32 %v573, %v5529
    %v5531 = vpop.f32.mrb[0].mxu0
    %v5532 = vpop.f32.mrb[0].mxu0
    %v5533 = vpop.f32.mrb[0].mxu0
    %5534 = vdwg.mxu0
    %v5535 = vsel %vm669, %v5484, -inf
    %5536 = vmax.xlane.f32.xlu0 %v5535
    %v5537 = vpop.xlane.xlu0 %5536
    %v5538 = vsel %vm669, %v5530, -inf
    %5539 = vmax.xlane.f32.xlu0 %v5538
    %v5540 = vpop.xlane.xlu0 %5539
    %v5541 = vsub.f32 %v5484, %v5537
    %v5542 = vsub.f32 %v5530, %v5540
    %v5543 = vmul.f32 %v5541, 1.442695
    %v5544 = vpow.pop %v5543
    %v5545 = vmul.f32 %v5542, 1.442695
    %v5546 = vpow.pop %v5545
    %v5547 = vsel %vm669, %v5544, 0.0
    %5548 = vadd.xlane.f32.xlu0 %v5547
    %v5549 = vpop.xlane.xlu0 %5548
    %v5550 = vsel %vm669, %v5546, 0.0
    %5551 = vadd.xlane.f32.xlu0 %v5550
    %v5552 = vpop.xlane.xlu0 %5551
    %v5553 = vrcp.pop %v5549
    %v5554 = vrcp.pop %v5552
    %v5555 = vmul.f32 %v5544, %v5553
    %v5556 = vmul.f32 %v5546, %v5554
    %v5557 = vpack.c.bf16 %v5555, %v5555
    %v5558 = vpack.c.bf16 %v5556, %v5556
    %v5560 = vsel %vm669, %v5557, 0
    %v5563 = vsel %vm697, %v5441, 0
    %5565 = vmatprep.subr.bf16.mxu0 0
    %5566 = vmatpush1.bf16.msra.mxu0 %v5563
    %5567 = vmatprep.subr.bf16.mxu0 0
    %5568 = vmatpush1.bf16.msra.mxu0 0
    %5569 = vmatprep.subr.bf16.mxu0 0
    %5570 = vmatpush1.bf16.msra.mxu0 0
    %5571 = vmatprep.subr.bf16.mxu0 0
    %5572 = vmatpush1.bf16.msra.mxu0 0
    %5573 = vmatprep.subr.bf16.mxu0 0
    %5574 = vmatpush1.bf16.msra.mxu0 0
    %5575 = vmatprep.subr.bf16.mxu0 0
    %5576 = vmatpush1.bf16.msra.mxu0 0
    %5577 = vmatprep.subr.bf16.mxu0 0
    %5578 = vmatpush1.bf16.msra.mxu0 0
    %5579 = vmatprep.subr.bf16.mxu0 0
    %5580 = vmatpush1.bf16.msra.mxu0 0
    %5581 = vmatprep.subr.bf16.mxu0 0
    %5582 = vmatpush1.bf16.msra.mxu0 0
    %5583 = vmatprep.subr.bf16.mxu0 0
    %5584 = vmatpush1.bf16.msra.mxu0 0
    %5585 = vmatprep.subr.bf16.mxu0 0
    %5586 = vmatpush1.bf16.msra.mxu0 0
    %5587 = vmatprep.subr.bf16.mxu0 0
    %5588 = vmatpush1.bf16.msra.mxu0 0
    %5589 = vmatprep.subr.bf16.mxu0 0
    %5590 = vmatpush1.bf16.msra.mxu0 0
    %5591 = vmatprep.subr.bf16.mxu0 0
    %5592 = vmatpush1.bf16.msra.mxu0 0
    %5593 = vmatprep.subr.bf16.mxu0 0
    %5594 = vmatpush1.bf16.msra.mxu0 0
    %5595 = vmatprep.subr.bf16.mxu0 0
    %5596 = vmatpush1.bf16.msra.mxu0 0
    %5597 = vmatprep.mubr.bf16.mxu0 0
    %5598 = vmatmul.mubr.bf16.gmra.mrb[0].mxu0 %v5560
    %v5599 = vpop.f32.mrb[0].mxu0
    %v5600 = vadd.f32 0.0, %v5599
    %v5601 = vpop.f32.mrb[0].mxu0
    %v5602 = vpop.f32.mrb[0].mxu0
    %v5603 = vpop.f32.mrb[0].mxu0
    %5604 = vdwg.mxu0
    %v5606 = vsel %vm669, %v5558, 0
    %v5609 = vsel %vm697, %v5442, 0
    %5611 = vmatprep.subr.bf16.mxu0 0
    %5612 = vmatpush1.bf16.msra.mxu0 %v5609
    %5613 = vmatprep.subr.bf16.mxu0 0
    %5614 = vmatpush1.bf16.msra.mxu0 0
    %5615 = vmatprep.subr.bf16.mxu0 0
    %5616 = vmatpush1.bf16.msra.mxu0 0
    %5617 = vmatprep.subr.bf16.mxu0 0
    %5618 = vmatpush1.bf16.msra.mxu0 0
    %5619 = vmatprep.subr.bf16.mxu0 0
    %5620 = vmatpush1.bf16.msra.mxu0 0
    %5621 = vmatprep.subr.bf16.mxu0 0
    %5622 = vmatpush1.bf16.msra.mxu0 0
    %5623 = vmatprep.subr.bf16.mxu0 0
    %5624 = vmatpush1.bf16.msra.mxu0 0
    %5625 = vmatprep.subr.bf16.mxu0 0
    %5626 = vmatpush1.bf16.msra.mxu0 0
    %5627 = vmatprep.subr.bf16.mxu0 0
    %5628 = vmatpush1.bf16.msra.mxu0 0
    %5629 = vmatprep.subr.bf16.mxu0 0
    %5630 = vmatpush1.bf16.msra.mxu0 0
    %5631 = vmatprep.subr.bf16.mxu0 0
    %5632 = vmatpush1.bf16.msra.mxu0 0
    %5633 = vmatprep.subr.bf16.mxu0 0
    %5634 = vmatpush1.bf16.msra.mxu0 0
    %5635 = vmatprep.subr.bf16.mxu0 0
    %5636 = vmatpush1.bf16.msra.mxu0 0
    %5637 = vmatprep.subr.bf16.mxu0 0
    %5638 = vmatpush1.bf16.msra.mxu0 0
    %5639 = vmatprep.subr.bf16.mxu0 0
    %5640 = vmatpush1.bf16.msra.mxu0 0
    %5641 = vmatprep.subr.bf16.mxu0 0
    %5642 = vmatpush1.bf16.msra.mxu0 0
    %5643 = vmatprep.mubr.bf16.mxu0 0
    %5644 = vmatmul.mubr.bf16.gmra.mrb[0].mxu0 %v5606
    %v5645 = vpop.f32.mrb[0].mxu0
    %v5646 = vadd.f32 0.0, %v5645
    %v5647 = vpop.f32.mrb[0].mxu0
    %v5648 = vpop.f32.mrb[0].mxu0
    %v5649 = vpop.f32.mrb[0].mxu0
    %5650 = vdwg.mxu0
    %5651 = vrot.lane.b32.xlu0 %v5431, 96
    %v5652 = vpop.permute.xlu0 %5651
    %5653 = vrot.lane.b32.xlu0 %v5436, 96
    %v5654 = vpop.permute.xlu0 %5653
    %v5656 = vsel %vm576, %v5652, 0
    %v5659 = vsel %vm576, %v5654, 0
    %5661 = vmatprep.subr.bf16.mxu0 0
    %5662 = vmatpush1.bf16.xpose.msra.mxu0 %v5659
    %5663 = vmatprep.subr.bf16.mxu0 0
    %5664 = vmatpush1.bf16.xpose.msra.mxu0 0
    %5665 = vmatprep.subr.bf16.mxu0 0
    %5666 = vmatpush1.bf16.xpose.msra.mxu0 0
    %5667 = vmatprep.subr.bf16.mxu0 0
    %5668 = vmatpush1.bf16.xpose.msra.mxu0 0
    %5669 = vmatprep.subr.bf16.mxu0 0
    %5670 = vmatpush1.bf16.xpose.msra.mxu0 0
    %5671 = vmatprep.subr.bf16.mxu0 0
    %5672 = vmatpush1.bf16.xpose.msra.mxu0 0
    %5673 = vmatprep.subr.bf16.mxu0 0
    %5674 = vmatpush1.bf16.xpose.msra.mxu0 0
    %5675 = vmatprep.subr.bf16.mxu0 0
    %5676 = vmatpush1.bf16.xpose.msra.mxu0 0
    %5677 = vmatprep.subr.bf16.mxu0 0
    %5678 = vmatpush1.bf16.xpose.msra.mxu0 0
    %5679 = vmatprep.subr.bf16.mxu0 0
    %5680 = vmatpush1.bf16.xpose.msra.mxu0 0
    %5681 = vmatprep.subr.bf16.mxu0 0
    %5682 = vmatpush1.bf16.xpose.msra.mxu0 0
    %5683 = vmatprep.subr.bf16.mxu0 0
    %5684 = vmatpush1.bf16.xpose.msra.mxu0 0
    %5685 = vmatprep.subr.bf16.mxu0 0
    %5686 = vmatpush1.bf16.xpose.msra.mxu0 0
    %5687 = vmatprep.subr.bf16.mxu0 0
    %5688 = vmatpush1.bf16.xpose.msra.mxu0 0
    %5689 = vmatprep.subr.bf16.mxu0 0
    %5690 = vmatpush1.bf16.xpose.msra.mxu0 0
    %5691 = vmatprep.subr.bf16.mxu0 0
    %5692 = vmatpush1.bf16.xpose.msra.mxu0 0
    %5693 = vmatprep.mubr.bf16.mxu0 0
    %5694 = vmatmul.mubr.bf16.gmra.mrb[0].mxu0 %v5656
    %v5695 = vpop.f32.mrb[0].mxu0
    %v5696 = vadd.f32 %v569, %v5695
    %v5697 = vpop.f32.mrb[0].mxu0
    %v5698 = vpop.f32.mrb[0].mxu0
    %v5699 = vpop.f32.mrb[0].mxu0
    %5700 = vdwg.mxu0
    %5701 = vrot.lane.b32.xlu0 %v5432, 96
    %v5702 = vpop.permute.xlu0 %5701
    %5703 = vrot.lane.b32.xlu0 %v5437, 96
    %v5704 = vpop.permute.xlu0 %5703
    %v5706 = vsel %vm576, %v5702, 0
    %v5709 = vsel %vm576, %v5704, 0
    %5711 = vmatprep.subr.bf16.mxu0 0
    %5712 = vmatpush1.bf16.xpose.msra.mxu0 %v5709
    %5713 = vmatprep.subr.bf16.mxu0 0
    %5714 = vmatpush1.bf16.xpose.msra.mxu0 0
    %5715 = vmatprep.subr.bf16.mxu0 0
    %5716 = vmatpush1.bf16.xpose.msra.mxu0 0
    %5717 = vmatprep.subr.bf16.mxu0 0
    %5718 = vmatpush1.bf16.xpose.msra.mxu0 0
    %5719 = vmatprep.subr.bf16.mxu0 0
    %5720 = vmatpush1.bf16.xpose.msra.mxu0 0
    %5721 = vmatprep.subr.bf16.mxu0 0
    %5722 = vmatpush1.bf16.xpose.msra.mxu0 0
    %5723 = vmatprep.subr.bf16.mxu0 0
    %5724 = vmatpush1.bf16.xpose.msra.mxu0 0
    %5725 = vmatprep.subr.bf16.mxu0 0
    %5726 = vmatpush1.bf16.xpose.msra.mxu0 0
    %5727 = vmatprep.subr.bf16.mxu0 0
    %5728 = vmatpush1.bf16.xpose.msra.mxu0 0
    %5729 = vmatprep.subr.bf16.mxu0 0
    %5730 = vmatpush1.bf16.xpose.msra.mxu0 0
    %5731 = vmatprep.subr.bf16.mxu0 0
    %5732 = vmatpush1.bf16.xpose.msra.mxu0 0
    %5733 = vmatprep.subr.bf16.mxu0 0
    %5734 = vmatpush1.bf16.xpose.msra.mxu0 0
    %5735 = vmatprep.subr.bf16.mxu0 0
    %5736 = vmatpush1.bf16.xpose.msra.mxu0 0
    %5737 = vmatprep.subr.bf16.mxu0 0
    %5738 = vmatpush1.bf16.xpose.msra.mxu0 0
    %5739 = vmatprep.subr.bf16.mxu0 0
    %5740 = vmatpush1.bf16.xpose.msra.mxu0 0
    %5741 = vmatprep.subr.bf16.mxu0 0
    %5742 = vmatpush1.bf16.xpose.msra.mxu0 0
    %5743 = vmatprep.mubr.bf16.mxu0 0
    %5744 = vmatmul.mubr.bf16.gmra.mrb[0].mxu0 %v5706
    %v5745 = vpop.f32.mrb[0].mxu0
    %v5746 = vadd.f32 %v573, %v5745
    %v5747 = vpop.f32.mrb[0].mxu0
    %v5748 = vpop.f32.mrb[0].mxu0
    %v5749 = vpop.f32.mrb[0].mxu0
    %5750 = vdwg.mxu0
    %v5751 = vsel %vm669, %v5696, -inf
    %5752 = vmax.xlane.f32.xlu0 %v5751
    %v5753 = vpop.xlane.xlu0 %5752
    %v5754 = vsel %vm669, %v5746, -inf
    %5755 = vmax.xlane.f32.xlu0 %v5754
    %v5756 = vpop.xlane.xlu0 %5755
    %v5757 = vsub.f32 %v5696, %v5753
    %v5758 = vsub.f32 %v5746, %v5756
    %v5759 = vmul.f32 %v5757, 1.442695
    %v5760 = vpow.pop %v5759
    %v5761 = vmul.f32 %v5758, 1.442695
    %v5762 = vpow.pop %v5761
    %v5763 = vsel %vm669, %v5760, 0.0
    %5764 = vadd.xlane.f32.xlu0 %v5763
    %v5765 = vpop.xlane.xlu0 %5764
    %v5766 = vsel %vm669, %v5762, 0.0
    %5767 = vadd.xlane.f32.xlu0 %v5766
    %v5768 = vpop.xlane.xlu0 %5767
    %v5769 = vrcp.pop %v5765
    %v5770 = vrcp.pop %v5768
    %v5771 = vmul.f32 %v5760, %v5769
    %v5772 = vmul.f32 %v5762, %v5770
    %v5773 = vpack.c.bf16 %v5771, %v5771
    %v5774 = vpack.c.bf16 %v5772, %v5772
    %5775 = vrot.lane.b32.xlu0 %v5441, 96
    %v5776 = vpop.permute.xlu0 %5775
    %v5778 = vsel %vm669, %v5773, 0
    %v5781 = vsel %vm697, %v5776, 0
    %5783 = vmatprep.subr.bf16.mxu0 0
    %5784 = vmatpush1.bf16.msra.mxu0 %v5781
    %5785 = vmatprep.subr.bf16.mxu0 0
    %5786 = vmatpush1.bf16.msra.mxu0 0
    %5787 = vmatprep.subr.bf16.mxu0 0
    %5788 = vmatpush1.bf16.msra.mxu0 0
    %5789 = vmatprep.subr.bf16.mxu0 0
    %5790 = vmatpush1.bf16.msra.mxu0 0
    %5791 = vmatprep.subr.bf16.mxu0 0
    %5792 = vmatpush1.bf16.msra.mxu0 0
    %5793 = vmatprep.subr.bf16.mxu0 0
    %5794 = vmatpush1.bf16.msra.mxu0 0
    %5795 = vmatprep.subr.bf16.mxu0 0
    %5796 = vmatpush1.bf16.msra.mxu0 0
    %5797 = vmatprep.subr.bf16.mxu0 0
    %5798 = vmatpush1.bf16.msra.mxu0 0
    %5799 = vmatprep.subr.bf16.mxu0 0
    %5800 = vmatpush1.bf16.msra.mxu0 0
    %5801 = vmatprep.subr.bf16.mxu0 0
    %5802 = vmatpush1.bf16.msra.mxu0 0
    %5803 = vmatprep.subr.bf16.mxu0 0
    %5804 = vmatpush1.bf16.msra.mxu0 0
    %5805 = vmatprep.subr.bf16.mxu0 0
    %5806 = vmatpush1.bf16.msra.mxu0 0
    %5807 = vmatprep.subr.bf16.mxu0 0
    %5808 = vmatpush1.bf16.msra.mxu0 0
    %5809 = vmatprep.subr.bf16.mxu0 0
    %5810 = vmatpush1.bf16.msra.mxu0 0
    %5811 = vmatprep.subr.bf16.mxu0 0
    %5812 = vmatpush1.bf16.msra.mxu0 0
    %5813 = vmatprep.subr.bf16.mxu0 0
    %5814 = vmatpush1.bf16.msra.mxu0 0
    %5815 = vmatprep.mubr.bf16.mxu0 0
    %5816 = vmatmul.mubr.bf16.gmra.mrb[0].mxu0 %v5778
    %v5817 = vpop.f32.mrb[0].mxu0
    %v5818 = vadd.f32 0.0, %v5817
    %v5819 = vpop.f32.mrb[0].mxu0
    %v5820 = vpop.f32.mrb[0].mxu0
    %v5821 = vpop.f32.mrb[0].mxu0
    %5822 = vdwg.mxu0
    %5823 = vrot.lane.b32.xlu0 %v5442, 96
    %v5824 = vpop.permute.xlu0 %5823
    %v5826 = vsel %vm669, %v5774, 0
    %v5829 = vsel %vm697, %v5824, 0
    %5831 = vmatprep.subr.bf16.mxu0 0
    %5832 = vmatpush1.bf16.msra.mxu0 %v5829
    %5833 = vmatprep.subr.bf16.mxu0 0
    %5834 = vmatpush1.bf16.msra.mxu0 0
    %5835 = vmatprep.subr.bf16.mxu0 0
    %5836 = vmatpush1.bf16.msra.mxu0 0
    %5837 = vmatprep.subr.bf16.mxu0 0
    %5838 = vmatpush1.bf16.msra.mxu0 0
    %5839 = vmatprep.subr.bf16.mxu0 0
    %5840 = vmatpush1.bf16.msra.mxu0 0
    %5841 = vmatprep.subr.bf16.mxu0 0
    %5842 = vmatpush1.bf16.msra.mxu0 0
    %5843 = vmatprep.subr.bf16.mxu0 0
    %5844 = vmatpush1.bf16.msra.mxu0 0
    %5845 = vmatprep.subr.bf16.mxu0 0
    %5846 = vmatpush1.bf16.msra.mxu0 0
    %5847 = vmatprep.subr.bf16.mxu0 0
    %5848 = vmatpush1.bf16.msra.mxu0 0
    %5849 = vmatprep.subr.bf16.mxu0 0
    %5850 = vmatpush1.bf16.msra.mxu0 0
    %5851 = vmatprep.subr.bf16.mxu0 0
    %5852 = vmatpush1.bf16.msra.mxu0 0
    %5853 = vmatprep.subr.bf16.mxu0 0
    %5854 = vmatpush1.bf16.msra.mxu0 0
    %5855 = vmatprep.subr.bf16.mxu0 0
    %5856 = vmatpush1.bf16.msra.mxu0 0
    %5857 = vmatprep.subr.bf16.mxu0 0
    %5858 = vmatpush1.bf16.msra.mxu0 0
    %5859 = vmatprep.subr.bf16.mxu0 0
    %5860 = vmatpush1.bf16.msra.mxu0 0
    %5861 = vmatprep.subr.bf16.mxu0 0
    %5862 = vmatpush1.bf16.msra.mxu0 0
    %5863 = vmatprep.mubr.bf16.mxu0 0
    %5864 = vmatmul.mubr.bf16.gmra.mrb[0].mxu0 %v5826
    %v5865 = vpop.f32.mrb[0].mxu0
    %v5866 = vadd.f32 0.0, %v5865
    %v5867 = vpop.f32.mrb[0].mxu0
    %v5868 = vpop.f32.mrb[0].mxu0
    %v5869 = vpop.f32.mrb[0].mxu0
    %5870 = vdwg.mxu0
    %5871 = vrot.lane.b32.xlu0 %v5431, 64
    %v5872 = vpop.permute.xlu0 %5871
    %5873 = vrot.lane.b32.xlu0 %v5436, 64
    %v5874 = vpop.permute.xlu0 %5873
    %v5876 = vsel %vm576, %v5872, 0
    %v5879 = vsel %vm576, %v5874, 0
    %5881 = vmatprep.subr.bf16.mxu0 0
    %5882 = vmatpush1.bf16.xpose.msra.mxu0 %v5879
    %5883 = vmatprep.subr.bf16.mxu0 0
    %5884 = vmatpush1.bf16.xpose.msra.mxu0 0
    %5885 = vmatprep.subr.bf16.mxu0 0
    %5886 = vmatpush1.bf16.xpose.msra.mxu0 0
    %5887 = vmatprep.subr.bf16.mxu0 0
    %5888 = vmatpush1.bf16.xpose.msra.mxu0 0
    %5889 = vmatprep.subr.bf16.mxu0 0
    %5890 = vmatpush1.bf16.xpose.msra.mxu0 0
    %5891 = vmatprep.subr.bf16.mxu0 0
    %5892 = vmatpush1.bf16.xpose.msra.mxu0 0
    %5893 = vmatprep.subr.bf16.mxu0 0
    %5894 = vmatpush1.bf16.xpose.msra.mxu0 0
    %5895 = vmatprep.subr.bf16.mxu0 0
    %5896 = vmatpush1.bf16.xpose.msra.mxu0 0
    %5897 = vmatprep.subr.bf16.mxu0 0
    %5898 = vmatpush1.bf16.xpose.msra.mxu0 0
    %5899 = vmatprep.subr.bf16.mxu0 0
    %5900 = vmatpush1.bf16.xpose.msra.mxu0 0
    %5901 = vmatprep.subr.bf16.mxu0 0
    %5902 = vmatpush1.bf16.xpose.msra.mxu0 0
    %5903 = vmatprep.subr.bf16.mxu0 0
    %5904 = vmatpush1.bf16.xpose.msra.mxu0 0
    %5905 = vmatprep.subr.bf16.mxu0 0
    %5906 = vmatpush1.bf16.xpose.msra.mxu0 0
    %5907 = vmatprep.subr.bf16.mxu0 0
    %5908 = vmatpush1.bf16.xpose.msra.mxu0 0
    %5909 = vmatprep.subr.bf16.mxu0 0
    %5910 = vmatpush1.bf16.xpose.msra.mxu0 0
    %5911 = vmatprep.subr.bf16.mxu0 0
    %5912 = vmatpush1.bf16.xpose.msra.mxu0 0
    %5913 = vmatprep.mubr.bf16.mxu0 0
    %5914 = vmatmul.mubr.bf16.gmra.mrb[0].mxu0 %v5876
    %v5915 = vpop.f32.mrb[0].mxu0
    %v5916 = vadd.f32 %v569, %v5915
    %v5917 = vpop.f32.mrb[0].mxu0
    %v5918 = vpop.f32.mrb[0].mxu0
    %v5919 = vpop.f32.mrb[0].mxu0
    %5920 = vdwg.mxu0
    %5921 = vrot.lane.b32.xlu0 %v5432, 64
    %v5922 = vpop.permute.xlu0 %5921
    %5923 = vrot.lane.b32.xlu0 %v5437, 64
    %v5924 = vpop.permute.xlu0 %5923
    %v5926 = vsel %vm576, %v5922, 0
    %v5929 = vsel %vm576, %v5924, 0
    %5931 = vmatprep.subr.bf16.mxu0 0
    %5932 = vmatpush1.bf16.xpose.msra.mxu0 %v5929
    %5933 = vmatprep.subr.bf16.mxu0 0
    %5934 = vmatpush1.bf16.xpose.msra.mxu0 0
    %5935 = vmatprep.subr.bf16.mxu0 0
    %5936 = vmatpush1.bf16.xpose.msra.mxu0 0
    %5937 = vmatprep.subr.bf16.mxu0 0
    %5938 = vmatpush1.bf16.xpose.msra.mxu0 0
    %5939 = vmatprep.subr.bf16.mxu0 0
    %5940 = vmatpush1.bf16.xpose.msra.mxu0 0
    %5941 = vmatprep.subr.bf16.mxu0 0
    %5942 = vmatpush1.bf16.xpose.msra.mxu0 0
    %5943 = vmatprep.subr.bf16.mxu0 0
    %5944 = vmatpush1.bf16.xpose.msra.mxu0 0
    %5945 = vmatprep.subr.bf16.mxu0 0
    %5946 = vmatpush1.bf16.xpose.msra.mxu0 0
    %5947 = vmatprep.subr.bf16.mxu0 0
    %5948 = vmatpush1.bf16.xpose.msra.mxu0 0
    %5949 = vmatprep.subr.bf16.mxu0 0
    %5950 = vmatpush1.bf16.xpose.msra.mxu0 0
    %5951 = vmatprep.subr.bf16.mxu0 0
    %5952 = vmatpush1.bf16.xpose.msra.mxu0 0
    %5953 = vmatprep.subr.bf16.mxu0 0
    %5954 = vmatpush1.bf16.xpose.msra.mxu0 0
    %5955 = vmatprep.subr.bf16.mxu0 0
    %5956 = vmatpush1.bf16.xpose.msra.mxu0 0
    %5957 = vmatprep.subr.bf16.mxu0 0
    %5958 = vmatpush1.bf16.xpose.msra.mxu0 0
    %5959 = vmatprep.subr.bf16.mxu0 0
    %5960 = vmatpush1.bf16.xpose.msra.mxu0 0
    %5961 = vmatprep.subr.bf16.mxu0 0
    %5962 = vmatpush1.bf16.xpose.msra.mxu0 0
    %5963 = vmatprep.mubr.bf16.mxu0 0
    %5964 = vmatmul.mubr.bf16.gmra.mrb[0].mxu0 %v5926
    %v5965 = vpop.f32.mrb[0].mxu0
    %v5966 = vadd.f32 %v573, %v5965
    %v5967 = vpop.f32.mrb[0].mxu0
    %v5968 = vpop.f32.mrb[0].mxu0
    %v5969 = vpop.f32.mrb[0].mxu0
    %5970 = vdwg.mxu0
    %v5971 = vsel %vm669, %v5916, -inf
    %5972 = vmax.xlane.f32.xlu0 %v5971
    %v5973 = vpop.xlane.xlu0 %5972
    %v5974 = vsel %vm669, %v5966, -inf
    %5975 = vmax.xlane.f32.xlu0 %v5974
    %v5976 = vpop.xlane.xlu0 %5975
    %v5977 = vsub.f32 %v5916, %v5973
    %v5978 = vsub.f32 %v5966, %v5976
    %v5979 = vmul.f32 %v5977, 1.442695
    %v5980 = vpow.pop %v5979
    %v5981 = vmul.f32 %v5978, 1.442695
    %v5982 = vpow.pop %v5981
    %v5983 = vsel %vm669, %v5980, 0.0
    %5984 = vadd.xlane.f32.xlu0 %v5983
    %v5985 = vpop.xlane.xlu0 %5984
    %v5986 = vsel %vm669, %v5982, 0.0
    %5987 = vadd.xlane.f32.xlu0 %v5986
    %v5988 = vpop.xlane.xlu0 %5987
    %v5989 = vrcp.pop %v5985
    %v5990 = vrcp.pop %v5988
    %v5991 = vmul.f32 %v5980, %v5989
    %v5992 = vmul.f32 %v5982, %v5990
    %v5993 = vpack.c.bf16 %v5991, %v5991
    %v5994 = vpack.c.bf16 %v5992, %v5992
    %5995 = vrot.lane.b32.xlu0 %v5441, 64
    %v5996 = vpop.permute.xlu0 %5995
    %v5998 = vsel %vm669, %v5993, 0
    %v6001 = vsel %vm697, %v5996, 0
    %6003 = vmatprep.subr.bf16.mxu0 0
    %6004 = vmatpush1.bf16.msra.mxu0 %v6001
    %6005 = vmatprep.subr.bf16.mxu0 0
    %6006 = vmatpush1.bf16.msra.mxu0 0
    %6007 = vmatprep.subr.bf16.mxu0 0
    %6008 = vmatpush1.bf16.msra.mxu0 0
    %6009 = vmatprep.subr.bf16.mxu0 0
    %6010 = vmatpush1.bf16.msra.mxu0 0
    %6011 = vmatprep.subr.bf16.mxu0 0
    %6012 = vmatpush1.bf16.msra.mxu0 0
    %6013 = vmatprep.subr.bf16.mxu0 0
    %6014 = vmatpush1.bf16.msra.mxu0 0
    %6015 = vmatprep.subr.bf16.mxu0 0
    %6016 = vmatpush1.bf16.msra.mxu0 0
    %6017 = vmatprep.subr.bf16.mxu0 0
    %6018 = vmatpush1.bf16.msra.mxu0 0
    %6019 = vmatprep.subr.bf16.mxu0 0
    %6020 = vmatpush1.bf16.msra.mxu0 0
    %6021 = vmatprep.subr.bf16.mxu0 0
    %6022 = vmatpush1.bf16.msra.mxu0 0
    %6023 = vmatprep.subr.bf16.mxu0 0
    %6024 = vmatpush1.bf16.msra.mxu0 0
    %6025 = vmatprep.subr.bf16.mxu0 0
    %6026 = vmatpush1.bf16.msra.mxu0 0
    %6027 = vmatprep.subr.bf16.mxu0 0
    %6028 = vmatpush1.bf16.msra.mxu0 0
    %6029 = vmatprep.subr.bf16.mxu0 0
    %6030 = vmatpush1.bf16.msra.mxu0 0
    %6031 = vmatprep.subr.bf16.mxu0 0
    %6032 = vmatpush1.bf16.msra.mxu0 0
    %6033 = vmatprep.subr.bf16.mxu0 0
    %6034 = vmatpush1.bf16.msra.mxu0 0
    %6035 = vmatprep.mubr.bf16.mxu0 0
    %6036 = vmatmul.mubr.bf16.gmra.mrb[0].mxu0 %v5998
    %v6037 = vpop.f32.mrb[0].mxu0
    %v6038 = vadd.f32 0.0, %v6037
    %v6039 = vpop.f32.mrb[0].mxu0
    %v6040 = vpop.f32.mrb[0].mxu0
    %v6041 = vpop.f32.mrb[0].mxu0
    %6042 = vdwg.mxu0
    %6043 = vrot.lane.b32.xlu0 %v5442, 64
    %v6044 = vpop.permute.xlu0 %6043
    %v6046 = vsel %vm669, %v5994, 0
    %v6049 = vsel %vm697, %v6044, 0
    %6051 = vmatprep.subr.bf16.mxu0 0
    %6052 = vmatpush1.bf16.msra.mxu0 %v6049
    %6053 = vmatprep.subr.bf16.mxu0 0
    %6054 = vmatpush1.bf16.msra.mxu0 0
    %6055 = vmatprep.subr.bf16.mxu0 0
    %6056 = vmatpush1.bf16.msra.mxu0 0
    %6057 = vmatprep.subr.bf16.mxu0 0
    %6058 = vmatpush1.bf16.msra.mxu0 0
    %6059 = vmatprep.subr.bf16.mxu0 0
    %6060 = vmatpush1.bf16.msra.mxu0 0
    %6061 = vmatprep.subr.bf16.mxu0 0
    %6062 = vmatpush1.bf16.msra.mxu0 0
    %6063 = vmatprep.subr.bf16.mxu0 0
    %6064 = vmatpush1.bf16.msra.mxu0 0
    %6065 = vmatprep.subr.bf16.mxu0 0
    %6066 = vmatpush1.bf16.msra.mxu0 0
    %6067 = vmatprep.subr.bf16.mxu0 0
    %6068 = vmatpush1.bf16.msra.mxu0 0
    %6069 = vmatprep.subr.bf16.mxu0 0
    %6070 = vmatpush1.bf16.msra.mxu0 0
    %6071 = vmatprep.subr.bf16.mxu0 0
    %6072 = vmatpush1.bf16.msra.mxu0 0
    %6073 = vmatprep.subr.bf16.mxu0 0
    %6074 = vmatpush1.bf16.msra.mxu0 0
    %6075 = vmatprep.subr.bf16.mxu0 0
    %6076 = vmatpush1.bf16.msra.mxu0 0
    %6077 = vmatprep.subr.bf16.mxu0 0
    %6078 = vmatpush1.bf16.msra.mxu0 0
    %6079 = vmatprep.subr.bf16.mxu0 0
    %6080 = vmatpush1.bf16.msra.mxu0 0
    %6081 = vmatprep.subr.bf16.mxu0 0
    %6082 = vmatpush1.bf16.msra.mxu0 0
    %6083 = vmatprep.mubr.bf16.mxu0 0
    %6084 = vmatmul.mubr.bf16.gmra.mrb[0].mxu0 %v6046
    %v6085 = vpop.f32.mrb[0].mxu0
    %v6086 = vadd.f32 0.0, %v6085
    %v6087 = vpop.f32.mrb[0].mxu0
    %v6088 = vpop.f32.mrb[0].mxu0
    %v6089 = vpop.f32.mrb[0].mxu0
    %6090 = vdwg.mxu0
    %6091 = vrot.lane.b32.xlu0 %v5431, 32
    %v6092 = vpop.permute.xlu0 %6091
    %6093 = vrot.lane.b32.xlu0 %v5436, 32
    %v6094 = vpop.permute.xlu0 %6093
    %v6096 = vsel %vm576, %v6092, 0
    %v6099 = vsel %vm576, %v6094, 0
    %6101 = vmatprep.subr.bf16.mxu0 0
    %6102 = vmatpush1.bf16.xpose.msra.mxu0 %v6099
    %6103 = vmatprep.subr.bf16.mxu0 0
    %6104 = vmatpush1.bf16.xpose.msra.mxu0 0
    %6105 = vmatprep.subr.bf16.mxu0 0
    %6106 = vmatpush1.bf16.xpose.msra.mxu0 0
    %6107 = vmatprep.subr.bf16.mxu0 0
    %6108 = vmatpush1.bf16.xpose.msra.mxu0 0
    %6109 = vmatprep.subr.bf16.mxu0 0
    %6110 = vmatpush1.bf16.xpose.msra.mxu0 0
    %6111 = vmatprep.subr.bf16.mxu0 0
    %6112 = vmatpush1.bf16.xpose.msra.mxu0 0
    %6113 = vmatprep.subr.bf16.mxu0 0
    %6114 = vmatpush1.bf16.xpose.msra.mxu0 0
    %6115 = vmatprep.subr.bf16.mxu0 0
    %6116 = vmatpush1.bf16.xpose.msra.mxu0 0
    %6117 = vmatprep.subr.bf16.mxu0 0
    %6118 = vmatpush1.bf16.xpose.msra.mxu0 0
    %6119 = vmatprep.subr.bf16.mxu0 0
    %6120 = vmatpush1.bf16.xpose.msra.mxu0 0
    %6121 = vmatprep.subr.bf16.mxu0 0
    %6122 = vmatpush1.bf16.xpose.msra.mxu0 0
    %6123 = vmatprep.subr.bf16.mxu0 0
    %6124 = vmatpush1.bf16.xpose.msra.mxu0 0
    %6125 = vmatprep.subr.bf16.mxu0 0
    %6126 = vmatpush1.bf16.xpose.msra.mxu0 0
    %6127 = vmatprep.subr.bf16.mxu0 0
    %6128 = vmatpush1.bf16.xpose.msra.mxu0 0
    %6129 = vmatprep.subr.bf16.mxu0 0
    %6130 = vmatpush1.bf16.xpose.msra.mxu0 0
    %6131 = vmatprep.subr.bf16.mxu0 0
    %6132 = vmatpush1.bf16.xpose.msra.mxu0 0
    %6133 = vmatprep.mubr.bf16.mxu0 0
    %6134 = vmatmul.mubr.bf16.gmra.mrb[0].mxu0 %v6096
    %v6135 = vpop.f32.mrb[0].mxu0
    %v6136 = vadd.f32 %v569, %v6135
    %v6137 = vpop.f32.mrb[0].mxu0
    %v6138 = vpop.f32.mrb[0].mxu0
    %v6139 = vpop.f32.mrb[0].mxu0
    %6140 = vdwg.mxu0
    %6141 = vrot.lane.b32.xlu0 %v5432, 32
    %v6142 = vpop.permute.xlu0 %6141
    %6143 = vrot.lane.b32.xlu0 %v5437, 32
    %v6144 = vpop.permute.xlu0 %6143
    %v6146 = vsel %vm576, %v6142, 0
    %v6149 = vsel %vm576, %v6144, 0
    %6151 = vmatprep.subr.bf16.mxu0 0
    %6152 = vmatpush1.bf16.xpose.msra.mxu0 %v6149
    %6153 = vmatprep.subr.bf16.mxu0 0
    %6154 = vmatpush1.bf16.xpose.msra.mxu0 0
    %6155 = vmatprep.subr.bf16.mxu0 0
    %6156 = vmatpush1.bf16.xpose.msra.mxu0 0
    %6157 = vmatprep.subr.bf16.mxu0 0
    %6158 = vmatpush1.bf16.xpose.msra.mxu0 0
    %6159 = vmatprep.subr.bf16.mxu0 0
    %6160 = vmatpush1.bf16.xpose.msra.mxu0 0
    %6161 = vmatprep.subr.bf16.mxu0 0
    %6162 = vmatpush1.bf16.xpose.msra.mxu0 0
    %6163 = vmatprep.subr.bf16.mxu0 0
    %6164 = vmatpush1.bf16.xpose.msra.mxu0 0
    %6165 = vmatprep.subr.bf16.mxu0 0
    %6166 = vmatpush1.bf16.xpose.msra.mxu0 0
    %6167 = vmatprep.subr.bf16.mxu0 0
    %6168 = vmatpush1.bf16.xpose.msra.mxu0 0
    %6169 = vmatprep.subr.bf16.mxu0 0
    %6170 = vmatpush1.bf16.xpose.msra.mxu0 0
    %6171 = vmatprep.subr.bf16.mxu0 0
    %6172 = vmatpush1.bf16.xpose.msra.mxu0 0
    %6173 = vmatprep.subr.bf16.mxu0 0
    %6174 = vmatpush1.bf16.xpose.msra.mxu0 0
    %6175 = vmatprep.subr.bf16.mxu0 0
    %6176 = vmatpush1.bf16.xpose.msra.mxu0 0
    %6177 = vmatprep.subr.bf16.mxu0 0
    %6178 = vmatpush1.bf16.xpose.msra.mxu0 0
    %6179 = vmatprep.subr.bf16.mxu0 0
    %6180 = vmatpush1.bf16.xpose.msra.mxu0 0
    %6181 = vmatprep.subr.bf16.mxu0 0
    %6182 = vmatpush1.bf16.xpose.msra.mxu0 0
    %6183 = vmatprep.mubr.bf16.mxu0 0
    %6184 = vmatmul.mubr.bf16.gmra.mrb[0].mxu0 %v6146
    %v6185 = vpop.f32.mrb[0].mxu0
    %v6186 = vadd.f32 %v573, %v6185
    %v6187 = vpop.f32.mrb[0].mxu0
    %v6188 = vpop.f32.mrb[0].mxu0
    %v6189 = vpop.f32.mrb[0].mxu0
    %6190 = vdwg.mxu0
    %v6191 = vsel %vm669, %v6136, -inf
    %6192 = vmax.xlane.f32.xlu0 %v6191
    %v6193 = vpop.xlane.xlu0 %6192
    %v6194 = vsel %vm669, %v6186, -inf
    %6195 = vmax.xlane.f32.xlu0 %v6194
    %v6196 = vpop.xlane.xlu0 %6195
    %v6197 = vsub.f32 %v6136, %v6193
    %v6198 = vsub.f32 %v6186, %v6196
    %v6199 = vmul.f32 %v6197, 1.442695
    %v6200 = vpow.pop %v6199
    %v6201 = vmul.f32 %v6198, 1.442695
    %v6202 = vpow.pop %v6201
    %v6203 = vsel %vm669, %v6200, 0.0
    %6204 = vadd.xlane.f32.xlu0 %v6203
    %v6205 = vpop.xlane.xlu0 %6204
    %v6206 = vsel %vm669, %v6202, 0.0
    %6207 = vadd.xlane.f32.xlu0 %v6206
    %v6208 = vpop.xlane.xlu0 %6207
    %v6209 = vrcp.pop %v6205
    %v6210 = vrcp.pop %v6208
    %v6211 = vmul.f32 %v6200, %v6209
    %v6212 = vmul.f32 %v6202, %v6210
    %v6213 = vpack.c.bf16 %v6211, %v6211
    %v6214 = vpack.c.bf16 %v6212, %v6212
    %6215 = vrot.lane.b32.xlu0 %v5441, 32
    %v6216 = vpop.permute.xlu0 %6215
    %v6218 = vsel %vm669, %v6213, 0
    %v6221 = vsel %vm697, %v6216, 0
    %6223 = vmatprep.subr.bf16.mxu0 0
    %6224 = vmatpush1.bf16.msra.mxu0 %v6221
    %6225 = vmatprep.subr.bf16.mxu0 0
    %6226 = vmatpush1.bf16.msra.mxu0 0
    %6227 = vmatprep.subr.bf16.mxu0 0
    %6228 = vmatpush1.bf16.msra.mxu0 0
    %6229 = vmatprep.subr.bf16.mxu0 0
    %6230 = vmatpush1.bf16.msra.mxu0 0
    %6231 = vmatprep.subr.bf16.mxu0 0
    %6232 = vmatpush1.bf16.msra.mxu0 0
    %6233 = vmatprep.subr.bf16.mxu0 0
    %6234 = vmatpush1.bf16.msra.mxu0 0
    %6235 = vmatprep.subr.bf16.mxu0 0
    %6236 = vmatpush1.bf16.msra.mxu0 0
    %6237 = vmatprep.subr.bf16.mxu0 0
    %6238 = vmatpush1.bf16.msra.mxu0 0
    %6239 = vmatprep.subr.bf16.mxu0 0
    %6240 = vmatpush1.bf16.msra.mxu0 0
    %6241 = vmatprep.subr.bf16.mxu0 0
    %6242 = vmatpush1.bf16.msra.mxu0 0
    %6243 = vmatprep.subr.bf16.mxu0 0
    %6244 = vmatpush1.bf16.msra.mxu0 0
    %6245 = vmatprep.subr.bf16.mxu0 0
    %6246 = vmatpush1.bf16.msra.mxu0 0
    %6247 = vmatprep.subr.bf16.mxu0 0
    %6248 = vmatpush1.bf16.msra.mxu0 0
    %6249 = vmatprep.subr.bf16.mxu0 0
    %6250 = vmatpush1.bf16.msra.mxu0 0
    %6251 = vmatprep.subr.bf16.mxu0 0
    %6252 = vmatpush1.bf16.msra.mxu0 0
    %6253 = vmatprep.subr.bf16.mxu0 0
    %6254 = vmatpush1.bf16.msra.mxu0 0
    %6255 = vmatprep.mubr.bf16.mxu0 0
    %6256 = vmatmul.mubr.bf16.gmra.mrb[0].mxu0 %v6218
    %v6257 = vpop.f32.mrb[0].mxu0
    %v6258 = vadd.f32 0.0, %v6257
    %v6259 = vpop.f32.mrb[0].mxu0
    %v6260 = vpop.f32.mrb[0].mxu0
    %v6261 = vpop.f32.mrb[0].mxu0
    %6262 = vdwg.mxu0
    %6263 = vrot.lane.b32.xlu0 %v5442, 32
    %v6264 = vpop.permute.xlu0 %6263
    %v6266 = vsel %vm669, %v6214, 0
    %v6269 = vsel %vm697, %v6264, 0
    %6271 = vmatprep.subr.bf16.mxu0 0
    %6272 = vmatpush1.bf16.msra.mxu0 %v6269
    %6273 = vmatprep.subr.bf16.mxu0 0
    %6274 = vmatpush1.bf16.msra.mxu0 0
    %6275 = vmatprep.subr.bf16.mxu0 0
    %6276 = vmatpush1.bf16.msra.mxu0 0
    %6277 = vmatprep.subr.bf16.mxu0 0
    %6278 = vmatpush1.bf16.msra.mxu0 0
    %6279 = vmatprep.subr.bf16.mxu0 0
    %6280 = vmatpush1.bf16.msra.mxu0 0
    %6281 = vmatprep.subr.bf16.mxu0 0
    %6282 = vmatpush1.bf16.msra.mxu0 0
    %6283 = vmatprep.subr.bf16.mxu0 0
    %6284 = vmatpush1.bf16.msra.mxu0 0
    %6285 = vmatprep.subr.bf16.mxu0 0
    %6286 = vmatpush1.bf16.msra.mxu0 0
    %6287 = vmatprep.subr.bf16.mxu0 0
    %6288 = vmatpush1.bf16.msra.mxu0 0
    %6289 = vmatprep.subr.bf16.mxu0 0
    %6290 = vmatpush1.bf16.msra.mxu0 0
    %6291 = vmatprep.subr.bf16.mxu0 0
    %6292 = vmatpush1.bf16.msra.mxu0 0
    %6293 = vmatprep.subr.bf16.mxu0 0
    %6294 = vmatpush1.bf16.msra.mxu0 0
    %6295 = vmatprep.subr.bf16.mxu0 0
    %6296 = vmatpush1.bf16.msra.mxu0 0
    %6297 = vmatprep.subr.bf16.mxu0 0
    %6298 = vmatpush1.bf16.msra.mxu0 0
    %6299 = vmatprep.subr.bf16.mxu0 0
    %6300 = vmatpush1.bf16.msra.mxu0 0
    %6301 = vmatprep.subr.bf16.mxu0 0
    %6302 = vmatpush1.bf16.msra.mxu0 0
    %6303 = vmatprep.mubr.bf16.mxu0 0
    %6304 = vmatmul.mubr.bf16.gmra.mrb[0].mxu0 %v6266
    %v6305 = vpop.f32.mrb[0].mxu0
    %v6306 = vadd.f32 0.0, %v6305
    %v6307 = vpop.f32.mrb[0].mxu0
    %v6308 = vpop.f32.mrb[0].mxu0
    %v6309 = vpop.f32.mrb[0].mxu0
    %6310 = vdwg.mxu0
    %6313 = vrot.lane.b32.xlu0 %v5818, 32
    %v6314 = vpop.permute.xlu0 %6313
    %6315 = vrot.lane.b32.xlu0 %v5866, 32
    %v6316 = vpop.permute.xlu0 %6315
    %6321 = vrot.lane.b32.xlu0 %v6038, 64
    %v6322 = vpop.permute.xlu0 %6321
    %6323 = vrot.lane.b32.xlu0 %v6086, 64
    %v6324 = vpop.permute.xlu0 %6323
    %6329 = vrot.lane.b32.xlu0 %v6258, 96
    %v6330 = vpop.permute.xlu0 %6329
    %6331 = vrot.lane.b32.xlu0 %v6306, 96
    %v6332 = vpop.permute.xlu0 %6331
    %v6335 = vsel %vm576, %v5600, %v6314
    %v6336 = vsel %vm576, %v5646, %v6316
    %v6337 = vsel %vm1473, %v6335, %v6322
    %v6338 = vsel %vm1473, %v6336, %v6324
    %v6339 = vsel %vm1476, %v6337, %v6330
    %v6340 = vsel %vm1476, %v6338, %v6332
    %v6341 = vpack.c.bf16 %v6340, %v6339
    %v6343 = vlaneseq
    %v6344 = vshrl.u32 %v6343, 7
    %v6345 = vsub.s32 0, %v6344
    %v6346 = vrot.slane %v5192, %v6345
    %v6364 = vunpack.c.l.b16 %v5176
    %v6365 = vunpack.c.l.b16 %v5177
    %v6366 = vunpack.c.l.b16 %v5178
    %v6367 = vunpack.c.l.b16 %v5179
    %v6368 = vunpack.c.l.b16 %v5180
    %v6369 = vunpack.c.l.b16 %v5181
    %v6370 = vunpack.c.l.b16 %v5182
    %v6371 = vunpack.c.l.b16 %v5183
    %v6372 = vunpack.c.l.b16 %v5184
    %v6373 = vunpack.c.l.b16 %v5185
    %v6374 = vunpack.c.l.b16 %v5186
    %v6375 = vunpack.c.l.b16 %v5187
    %v6376 = vunpack.c.l.b16 %v5188
    %v6377 = vunpack.c.l.b16 %v5189
    %v6378 = vunpack.c.l.b16 %v5190
    %v6379 = vunpack.c.l.b16 %v5191
    %v6380 = vpack.c.b16 %v6365, %v6364
    %v6381 = vpack.c.b16 %v6367, %v6366
    %v6382 = vpack.c.b16 %v6369, %v6368
    %v6383 = vpack.c.b16 %v6371, %v6370
    %v6384 = vpack.c.b16 %v6373, %v6372
    %v6385 = vpack.c.b16 %v6375, %v6374
    %v6386 = vpack.c.b16 %v6377, %v6376
    %v6387 = vpack.c.b16 %v6379, %v6378
    %6396 = vmatprep.subr.bf16.mxu0 0
    %6397 = vmatpush1.bf16.msra.mxu0 %v6380
    %6398 = vmatprep.subr.bf16.mxu0 0
    %6399 = vmatpush1.bf16.msra.mxu0 %v6381
    %6400 = vmatprep.subr.bf16.mxu0 0
    %6401 = vmatpush1.bf16.msra.mxu0 %v6382
    %6402 = vmatprep.subr.bf16.mxu0 0
    %6403 = vmatpush1.bf16.msra.mxu0 %v6383
    %6404 = vmatprep.subr.bf16.mxu0 0
    %6405 = vmatpush1.bf16.msra.mxu0 %v6384
    %6406 = vmatprep.subr.bf16.mxu0 0
    %6407 = vmatpush1.bf16.msra.mxu0 %v6385
    %6408 = vmatprep.subr.bf16.mxu0 0
    %6409 = vmatpush1.bf16.msra.mxu0 %v6386
    %6410 = vmatprep.subr.bf16.mxu0 0
    %6411 = vmatpush1.bf16.msra.mxu0 %v6387
    %6412 = vmatprep.subr.bf16.mxu0 0
    %6413 = vmatpush1.bf16.msra.mxu0 0
    %6414 = vmatprep.subr.bf16.mxu0 0
    %6415 = vmatpush1.bf16.msra.mxu0 0
    %6416 = vmatprep.subr.bf16.mxu0 0
    %6417 = vmatpush1.bf16.msra.mxu0 0
    %6418 = vmatprep.subr.bf16.mxu0 0
    %6419 = vmatpush1.bf16.msra.mxu0 0
    %6420 = vmatprep.subr.bf16.mxu0 0
    %6421 = vmatpush1.bf16.msra.mxu0 0
    %6422 = vmatprep.subr.bf16.mxu0 0
    %6423 = vmatpush1.bf16.msra.mxu0 0
    %6424 = vmatprep.subr.bf16.mxu0 0
    %6425 = vmatpush1.bf16.msra.mxu0 0
    %6426 = vmatprep.subr.bf16.mxu0 0
    %6427 = vmatpush1.bf16.msra.mxu0 0
    %6428 = vmatprep.mubr.bf16.mxu0 0
    %6429 = vmatmul.mubr.bf16.gmra.mrb[0].mxu0 %v6341
    %v6430 = vpop.f32.mrb[0].mxu0
    %v6431 = vadd.f32 %v6346, %v6430
    %v6432 = vpop.f32.mrb[0].mxu0
    %v6433 = vpop.f32.mrb[0].mxu0
    %v6434 = vadd.f32 %v6346, %v6433
    %v6435 = vpop.f32.mrb[0].mxu0
    %6436 = vdwg.mxu0
    %v6437 = vadd.f32 %v6431, %v5140
    %v6438 = vadd.f32 %v6434, %v5141
    %6439 = vadd.xlane.f32.xlu0 %v6437
    %v6440 = vpop.xlane.xlu0 %6439
    %6441 = vadd.xlane.f32.xlu0 %v6438
    %v6442 = vpop.xlane.xlu0 %6441
    %v6443 = vmul.f32 %v6440, %v230
    %v6444 = vmul.f32 %v6442, %v230
    %v6445 = vsub.f32 %v6437, %v6443
    %v6446 = vsub.f32 %v6438, %v6444
    %v6447 = vmul.f32 %v6445, %v6445
    %v6448 = vmul.f32 %v6446, %v6446
    %6449 = vadd.xlane.f32.xlu0 %v6447
    %v6450 = vpop.xlane.xlu0 %6449
    %6451 = vadd.xlane.f32.xlu0 %v6448
    %v6452 = vpop.xlane.xlu0 %6451
    %v6453 = vmul.f32 %v6450, %v230
    %v6454 = vmul.f32 %v6452, %v230
    %v6455 = vadd.f32 %v6453, 1e-05
    %v6456 = vadd.f32 %v6454, 1e-05
    %v6457 = vrsqrt.pop %v6455
    %v6458 = vrsqrt.pop %v6456
    %v6459 = vmul.f32 %v6445, %v6457
    %v6460 = vmul.f32 %v6446, %v6458
    %v6462 = vlaneseq
    %v6463 = vshrl.u32 %v6462, 7
    %v6464 = vsub.s32 0, %v6463
    %v6465 = vrot.slane %v5193, %v6464
    %v6467 = vmul.f32 %v6459, %v6465
    %v6468 = vmul.f32 %v6460, %v6465
    %v6470 = vlaneseq
    %v6471 = vshrl.u32 %v6470, 7
    %v6472 = vsub.s32 0, %v6471
    %v6473 = vrot.slane %v5194, %v6472
    %v6475 = vadd.f32 %v6467, %v6473
    %v6476 = vadd.f32 %v6468, %v6473
    %v6477 = vld [vmem:[%s73] sm:$0xff]
    %v6478 = vld [vmem:[%s73 + $0x8] sm:$0xff]
    %v6479 = vld [vmem:[%s73 + $0x10] sm:$0xff]
    %v6480 = vld [vmem:[%s73 + $0x18] sm:$0xff]
    %v6481 = vld [vmem:[%s73 + $0x20] sm:$0xff]
    %v6482 = vld [vmem:[%s73 + $0x28] sm:$0xff]
    %v6483 = vld [vmem:[%s73 + $0x30] sm:$0xff]
    %v6484 = vld [vmem:[%s73 + $0x38] sm:$0xff]
    %v6485 = vld [vmem:[%s73 + $0x40] sm:$0xff]
    %v6486 = vld [vmem:[%s73 + $0x48] sm:$0xff]
    %v6487 = vld [vmem:[%s73 + $0x50] sm:$0xff]
    %v6488 = vld [vmem:[%s73 + $0x58] sm:$0xff]
    %v6489 = vld [vmem:[%s73 + $0x60] sm:$0xff]
    %v6490 = vld [vmem:[%s73 + $0x68] sm:$0xff]
    %v6491 = vld [vmem:[%s73 + $0x70] sm:$0xff]
    %v6492 = vld [vmem:[%s73 + $0x78] sm:$0xff]
    %v6493 = vld [vmem:[%s75] sm:$0x3]
    %v6494 = vld [vmem:[%s77] sm:$0xf]
    %v6495 = vld [vmem:[%s77 + $0x4] sm:$0xf]
    %v6496 = vld [vmem:[%s77 + $0x8] sm:$0xf]
    %v6497 = vld [vmem:[%s77 + $0xc] sm:$0xf]
    %v6498 = vld [vmem:[%s77 + $0x10] sm:$0xf]
    %v6499 = vld [vmem:[%s77 + $0x14] sm:$0xf]
    %v6500 = vld [vmem:[%s77 + $0x18] sm:$0xf]
    %v6501 = vld [vmem:[%s77 + $0x1c] sm:$0xf]
    %v6502 = vld [vmem:[%s77 + $0x20] sm:$0xf]
    %v6503 = vld [vmem:[%s77 + $0x24] sm:$0xf]
    %v6504 = vld [vmem:[%s77 + $0x28] sm:$0xf]
    %v6505 = vld [vmem:[%s77 + $0x2c] sm:$0xf]
    %v6506 = vld [vmem:[%s77 + $0x30] sm:$0xf]
    %v6507 = vld [vmem:[%s77 + $0x34] sm:$0xf]
    %v6508 = vld [vmem:[%s77 + $0x38] sm:$0xf]
    %v6509 = vld [vmem:[%s77 + $0x3c] sm:$0xf]
    %v6510 = vld [vmem:[%s77 + $0x40] sm:$0xf]
    %v6511 = vld [vmem:[%s77 + $0x44] sm:$0xf]
    %v6512 = vld [vmem:[%s77 + $0x48] sm:$0xf]
    %v6513 = vld [vmem:[%s77 + $0x4c] sm:$0xf]
    %v6514 = vld [vmem:[%s77 + $0x50] sm:$0xf]
    %v6515 = vld [vmem:[%s77 + $0x54] sm:$0xf]
    %v6516 = vld [vmem:[%s77 + $0x58] sm:$0xf]
    %v6517 = vld [vmem:[%s77 + $0x5c] sm:$0xf]
    %v6518 = vld [vmem:[%s77 + $0x60] sm:$0xf]
    %v6519 = vld [vmem:[%s77 + $0x64] sm:$0xf]
    %v6520 = vld [vmem:[%s77 + $0x68] sm:$0xf]
    %v6521 = vld [vmem:[%s77 + $0x6c] sm:$0xf]
    %v6522 = vld [vmem:[%s77 + $0x70] sm:$0xf]
    %v6523 = vld [vmem:[%s77 + $0x74] sm:$0xf]
    %v6524 = vld [vmem:[%s77 + $0x78] sm:$0xf]
    %v6525 = vld [vmem:[%s77 + $0x7c] sm:$0xf]
    %v6526 = vld [vmem:[%s79] sm:$0x1]
    %v6527 = vld [vmem:[%s81] sm:$0x1]
    %v6528 = vld [vmem:[%s83] sm:$0x1]
    %v6529 = vpack.c.bf16 %v6476, %v6475
    %v6531 = vlaneseq
    %v6532 = vshrl.u32 %v6531, 7
    %v6533 = vsub.s32 0, %v6532
    %v6534 = vrot.slane %v6493, %v6533
    %v6535 = vlaneseq
    %v6536 = vshrl.u32 %v6535, 7
    %v6537 = vsub.s32 1, %v6536
    %v6538 = vrot.slane %v6493, %v6537
    %v6557 = vunpack.c.l.b16 %v6477
    %v6558 = vunpack.c.h.b16 %v6477
    %v6559 = vunpack.c.l.b16 %v6478
    %v6560 = vunpack.c.h.b16 %v6478
    %v6561 = vunpack.c.l.b16 %v6479
    %v6562 = vunpack.c.h.b16 %v6479
    %v6563 = vunpack.c.l.b16 %v6480
    %v6564 = vunpack.c.h.b16 %v6480
    %v6565 = vunpack.c.l.b16 %v6481
    %v6566 = vunpack.c.h.b16 %v6481
    %v6567 = vunpack.c.l.b16 %v6482
    %v6568 = vunpack.c.h.b16 %v6482
    %v6569 = vunpack.c.l.b16 %v6483
    %v6570 = vunpack.c.h.b16 %v6483
    %v6571 = vunpack.c.l.b16 %v6484
    %v6572 = vunpack.c.h.b16 %v6484
    %v6573 = vunpack.c.l.b16 %v6485
    %v6574 = vunpack.c.h.b16 %v6485
    %v6575 = vunpack.c.l.b16 %v6486
    %v6576 = vunpack.c.h.b16 %v6486
    %v6577 = vunpack.c.l.b16 %v6487
    %v6578 = vunpack.c.h.b16 %v6487
    %v6579 = vunpack.c.l.b16 %v6488
    %v6580 = vunpack.c.h.b16 %v6488
    %v6581 = vunpack.c.l.b16 %v6489
    %v6582 = vunpack.c.h.b16 %v6489
    %v6583 = vunpack.c.l.b16 %v6490
    %v6584 = vunpack.c.h.b16 %v6490
    %v6585 = vunpack.c.l.b16 %v6491
    %v6586 = vunpack.c.h.b16 %v6491
    %v6587 = vunpack.c.l.b16 %v6492
    %v6588 = vunpack.c.h.b16 %v6492
    %v6589 = vpack.c.b16 %v6559, %v6557
    %v6590 = vpack.c.b16 %v6560, %v6558
    %v6591 = vpack.c.b16 %v6563, %v6561
    %v6592 = vpack.c.b16 %v6564, %v6562
    %v6593 = vpack.c.b16 %v6567, %v6565
    %v6594 = vpack.c.b16 %v6568, %v6566
    %v6595 = vpack.c.b16 %v6571, %v6569
    %v6596 = vpack.c.b16 %v6572, %v6570
    %v6597 = vpack.c.b16 %v6575, %v6573
    %v6598 = vpack.c.b16 %v6576, %v6574
    %v6599 = vpack.c.b16 %v6579, %v6577
    %v6600 = vpack.c.b16 %v6580, %v6578
    %v6601 = vpack.c.b16 %v6583, %v6581
    %v6602 = vpack.c.b16 %v6584, %v6582
    %v6603 = vpack.c.b16 %v6587, %v6585
    %v6604 = vpack.c.b16 %v6588, %v6586
    %6621 = vmatprep.subr.bf16.mxu0 %v6590
    %6622 = vmatpush1.bf16.msra.mxu0 %v6589
    %6623 = vmatprep.subr.bf16.mxu0 %v6592
    %6624 = vmatpush1.bf16.msra.mxu0 %v6591
    %6625 = vmatprep.subr.bf16.mxu0 %v6594
    %6626 = vmatpush1.bf16.msra.mxu0 %v6593
    %6627 = vmatprep.subr.bf16.mxu0 %v6596
    %6628 = vmatpush1.bf16.msra.mxu0 %v6595
    %6629 = vmatprep.subr.bf16.mxu0 %v6598
    %6630 = vmatpush1.bf16.msra.mxu0 %v6597
    %6631 = vmatprep.subr.bf16.mxu0 %v6600
    %6632 = vmatpush1.bf16.msra.mxu0 %v6599
    %6633 = vmatprep.subr.bf16.mxu0 %v6602
    %6634 = vmatpush1.bf16.msra.mxu0 %v6601
    %6635 = vmatprep.subr.bf16.mxu0 %v6604
    %6636 = vmatpush1.bf16.msra.mxu0 %v6603
    %6637 = vmatprep.subr.bf16.mxu0 0
    %6638 = vmatpush1.bf16.msra.mxu0 0
    %6639 = vmatprep.subr.bf16.mxu0 0
    %6640 = vmatpush1.bf16.msra.mxu0 0
    %6641 = vmatprep.subr.bf16.mxu0 0
    %6642 = vmatpush1.bf16.msra.mxu0 0
    %6643 = vmatprep.subr.bf16.mxu0 0
    %6644 = vmatpush1.bf16.msra.mxu0 0
    %6645 = vmatprep.subr.bf16.mxu0 0
    %6646 = vmatpush1.bf16.msra.mxu0 0
    %6647 = vmatprep.subr.bf16.mxu0 0
    %6648 = vmatpush1.bf16.msra.mxu0 0
    %6649 = vmatprep.subr.bf16.mxu0 0
    %6650 = vmatpush1.bf16.msra.mxu0 0
    %6651 = vmatprep.subr.bf16.mxu0 0
    %6652 = vmatpush1.bf16.msra.mxu0 0
    %6653 = vmatprep.mubr.bf16.mxu0 0
    %6654 = vmatmul.mubr.bf16.gmra.mrb[0].mxu0 %v6529
    %v6655 = vpop.f32.mrb[0].mxu0
    %v6656 = vadd.f32 %v6534, %v6655
    %v6657 = vpop.f32.mrb[0].mxu0
    %v6658 = vadd.f32 %v6538, %v6657
    %v6659 = vpop.f32.mrb[0].mxu0
    %v6660 = vadd.f32 %v6534, %v6659
    %v6661 = vpop.f32.mrb[0].mxu0
    %v6662 = vadd.f32 %v6538, %v6661
    %6663 = vdwg.mxu0
    %v6664 = vxor.u32 %v6656, 2147483648
    %v6665 = vxor.u32 %v6658, 2147483648
    %v6666 = vxor.u32 %v6660, 2147483648
    %v6667 = vxor.u32 %v6662, 2147483648
    %v6668 = vmul.f32 %v6664, 1.442695
    %v6669 = vpow.pop %v6668
    %v6670 = vmul.f32 %v6665, 1.442695
    %v6671 = vpow.pop %v6670
    %v6672 = vmul.f32 %v6666, 1.442695
    %v6673 = vpow.pop %v6672
    %v6674 = vmul.f32 %v6667, 1.442695
    %v6675 = vpow.pop %v6674
    %v6676 = vadd.f32 %v6669, 1.0
    %v6677 = vadd.f32 %v6671, 1.0
    %v6678 = vadd.f32 %v6673, 1.0
    %v6679 = vadd.f32 %v6675, 1.0
    %v6680 = vrcp.pop %v6676
    %v6681 = vmul.f32 1.0, %v6680
    %v6682 = vrcp.pop %v6677
    %v6683 = vmul.f32 1.0, %v6682
    %v6684 = vrcp.pop %v6678
    %v6685 = vmul.f32 1.0, %v6684
    %v6686 = vrcp.pop %v6679
    %v6687 = vmul.f32 1.0, %v6686
    %v6688 = vmul.f32 %v6656, %v6681
    %v6689 = vmul.f32 %v6658, %v6683
    %v6690 = vmul.f32 %v6660, %v6685
    %v6691 = vmul.f32 %v6662, %v6687
    %v6692 = vpack.c.bf16 %v6690, %v6688
    %v6693 = vpack.c.bf16 %v6691, %v6689
    %v6695 = vlaneseq
    %v6696 = vshrl.u32 %v6695, 7
    %v6697 = vsub.s32 0, %v6696
    %v6698 = vrot.slane %v6526, %v6697
    %v6732 = vunpack.c.l.b16 %v6494
    %v6733 = vunpack.c.l.b16 %v6495
    %v6734 = vunpack.c.l.b16 %v6496
    %v6735 = vunpack.c.l.b16 %v6497
    %v6736 = vunpack.c.l.b16 %v6498
    %v6737 = vunpack.c.l.b16 %v6499
    %v6738 = vunpack.c.l.b16 %v6500
    %v6739 = vunpack.c.l.b16 %v6501
    %v6740 = vunpack.c.l.b16 %v6502
    %v6741 = vunpack.c.l.b16 %v6503
    %v6742 = vunpack.c.l.b16 %v6504
    %v6743 = vunpack.c.l.b16 %v6505
    %v6744 = vunpack.c.l.b16 %v6506
    %v6745 = vunpack.c.l.b16 %v6507
    %v6746 = vunpack.c.l.b16 %v6508
    %v6747 = vunpack.c.l.b16 %v6509
    %v6748 = vunpack.c.l.b16 %v6510
    %v6749 = vunpack.c.l.b16 %v6511
    %v6750 = vunpack.c.l.b16 %v6512
    %v6751 = vunpack.c.l.b16 %v6513
    %v6752 = vunpack.c.l.b16 %v6514
    %v6753 = vunpack.c.l.b16 %v6515
    %v6754 = vunpack.c.l.b16 %v6516
    %v6755 = vunpack.c.l.b16 %v6517
    %v6756 = vunpack.c.l.b16 %v6518
    %v6757 = vunpack.c.l.b16 %v6519
    %v6758 = vunpack.c.l.b16 %v6520
    %v6759 = vunpack.c.l.b16 %v6521
    %v6760 = vunpack.c.l.b16 %v6522
    %v6761 = vunpack.c.l.b16 %v6523
    %v6762 = vunpack.c.l.b16 %v6524
    %v6763 = vunpack.c.l.b16 %v6525
    %v6764 = vpack.c.b16 %v6733, %v6732
    %v6765 = vpack.c.b16 %v6735, %v6734
    %v6766 = vpack.c.b16 %v6737, %v6736
    %v6767 = vpack.c.b16 %v6739, %v6738
    %v6768 = vpack.c.b16 %v6741, %v6740
    %v6769 = vpack.c.b16 %v6743, %v6742
    %v6770 = vpack.c.b16 %v6745, %v6744
    %v6771 = vpack.c.b16 %v6747, %v6746
    %v6772 = vpack.c.b16 %v6749, %v6748
    %v6773 = vpack.c.b16 %v6751, %v6750
    %v6774 = vpack.c.b16 %v6753, %v6752
    %v6775 = vpack.c.b16 %v6755, %v6754
    %v6776 = vpack.c.b16 %v6757, %v6756
    %v6777 = vpack.c.b16 %v6759, %v6758
    %v6778 = vpack.c.b16 %v6761, %v6760
    %v6779 = vpack.c.b16 %v6763, %v6762
    %6796 = vmatprep.subr.bf16.mxu0 0
    %6797 = vmatpush1.bf16.msra.mxu0 %v6764
    %6798 = vmatprep.subr.bf16.mxu0 0
    %6799 = vmatpush1.bf16.msra.mxu0 %v6765
    %6800 = vmatprep.subr.bf16.mxu0 0
    %6801 = vmatpush1.bf16.msra.mxu0 %v6766
    %6802 = vmatprep.subr.bf16.mxu0 0
    %6803 = vmatpush1.bf16.msra.mxu0 %v6767
    %6804 = vmatprep.subr.bf16.mxu0 0
    %6805 = vmatpush1.bf16.msra.mxu0 %v6768
    %6806 = vmatprep.subr.bf16.mxu0 0
    %6807 = vmatpush1.bf16.msra.mxu0 %v6769
    %6808 = vmatprep.subr.bf16.mxu0 0
    %6809 = vmatpush1.bf16.msra.mxu0 %v6770
    %6810 = vmatprep.subr.bf16.mxu0 0
    %6811 = vmatpush1.bf16.msra.mxu0 %v6771
    %6812 = vmatprep.subr.bf16.mxu0 0
    %6813 = vmatpush1.bf16.msra.mxu0 %v6772
    %6814 = vmatprep.subr.bf16.mxu0 0
    %6815 = vmatpush1.bf16.msra.mxu0 %v6773
    %6816 = vmatprep.subr.bf16.mxu0 0
    %6817 = vmatpush1.bf16.msra.mxu0 %v6774
    %6818 = vmatprep.subr.bf16.mxu0 0
    %6819 = vmatpush1.bf16.msra.mxu0 %v6775
    %6820 = vmatprep.subr.bf16.mxu0 0
    %6821 = vmatpush1.bf16.msra.mxu0 %v6776
    %6822 = vmatprep.subr.bf16.mxu0 0
    %6823 = vmatpush1.bf16.msra.mxu0 %v6777
    %6824 = vmatprep.subr.bf16.mxu0 0
    %6825 = vmatpush1.bf16.msra.mxu0 %v6778
    %6826 = vmatprep.subr.bf16.mxu0 0
    %6827 = vmatpush1.bf16.msra.mxu0 %v6779
    %6828 = vmatprep.mubr.bf16.mxu0 %v6693
    %6829 = vmatmul.mubr.bf16.gmra.mrb[0].mxu0 %v6692
    %v6830 = vpop.f32.mrb[0].mxu0
    %v6831 = vadd.f32 %v6698, %v6830
    %v6832 = vpop.f32.mrb[0].mxu0
    %v6833 = vpop.f32.mrb[0].mxu0
    %v6834 = vadd.f32 %v6698, %v6833
    %v6835 = vpop.f32.mrb[0].mxu0
    %6836 = vdwg.mxu0
    %v6837 = vadd.f32 %v6831, %v6475
    %v6838 = vadd.f32 %v6834, %v6476
    %6839 = vadd.xlane.f32.xlu0 %v6837
    %v6840 = vpop.xlane.xlu0 %6839
    %6841 = vadd.xlane.f32.xlu0 %v6838
    %v6842 = vpop.xlane.xlu0 %6841
    %v6843 = vmul.f32 %v6840, %v230
    %v6844 = vmul.f32 %v6842, %v230
    %v6845 = vsub.f32 %v6837, %v6843
    %v6846 = vsub.f32 %v6838, %v6844
    %v6847 = vmul.f32 %v6845, %v6845
    %v6848 = vmul.f32 %v6846, %v6846
    %6849 = vadd.xlane.f32.xlu0 %v6847
    %v6850 = vpop.xlane.xlu0 %6849
    %6851 = vadd.xlane.f32.xlu0 %v6848
    %v6852 = vpop.xlane.xlu0 %6851
    %v6853 = vmul.f32 %v6850, %v230
    %v6854 = vmul.f32 %v6852, %v230
    %v6855 = vadd.f32 %v6853, 1e-05
    %v6856 = vadd.f32 %v6854, 1e-05
    %v6857 = vrsqrt.pop %v6855
    %v6858 = vrsqrt.pop %v6856
    %v6859 = vmul.f32 %v6845, %v6857
    %v6860 = vmul.f32 %v6846, %v6858
    %v6862 = vlaneseq
    %v6863 = vshrl.u32 %v6862, 7
    %v6864 = vsub.s32 0, %v6863
    %v6865 = vrot.slane %v6527, %v6864
    %v6867 = vmul.f32 %v6859, %v6865
    %v6868 = vmul.f32 %v6860, %v6865
    %v6870 = vlaneseq
    %v6871 = vshrl.u32 %v6870, 7
    %v6872 = vsub.s32 0, %v6871
    %v6873 = vrot.slane %v6528, %v6872
    %v6875 = vadd.f32 %v6867, %v6873
    %v6876 = vadd.f32 %v6868, %v6873
    %s6877 = scalar_lea.vmem %s45, 192
    %v6878 = vld [vmem:[%s6877] sm:$0xff]
    %v6879 = vld [vmem:[%s6877 + $0x8] sm:$0xf]
    %v6880 = vld [vmem:[%s6877 + $0xc] sm:$0xff]
    %v6881 = vld [vmem:[%s6877 + $0x14] sm:$0xf]
    %v6882 = vld [vmem:[%s6877 + $0x18] sm:$0xff]
    %v6883 = vld [vmem:[%s6877 + $0x20] sm:$0xf]
    %v6884 = vld [vmem:[%s6877 + $0x24] sm:$0xff]
    %v6885 = vld [vmem:[%s6877 + $0x2c] sm:$0xf]
    %v6886 = vld [vmem:[%s6877 + $0x30] sm:$0xff]
    %v6887 = vld [vmem:[%s6877 + $0x38] sm:$0xf]
    %v6888 = vld [vmem:[%s6877 + $0x3c] sm:$0xff]
    %v6889 = vld [vmem:[%s6877 + $0x44] sm:$0xf]
    %v6890 = vld [vmem:[%s6877 + $0x48] sm:$0xff]
    %v6891 = vld [vmem:[%s6877 + $0x50] sm:$0xf]
    %v6892 = vld [vmem:[%s6877 + $0x54] sm:$0xff]
    %v6893 = vld [vmem:[%s6877 + $0x5c] sm:$0xf]
    %v6894 = vld [vmem:[%s6877 + $0x60] sm:$0xff]
    %v6895 = vld [vmem:[%s6877 + $0x68] sm:$0xf]
    %v6896 = vld [vmem:[%s6877 + $0x6c] sm:$0xff]
    %v6897 = vld [vmem:[%s6877 + $0x74] sm:$0xf]
    %v6898 = vld [vmem:[%s6877 + $0x78] sm:$0xff]
    %v6899 = vld [vmem:[%s6877 + $0x80] sm:$0xf]
    %v6900 = vld [vmem:[%s6877 + $0x84] sm:$0xff]
    %v6901 = vld [vmem:[%s6877 + $0x8c] sm:$0xf]
    %v6902 = vld [vmem:[%s6877 + $0x90] sm:$0xff]
    %v6903 = vld [vmem:[%s6877 + $0x98] sm:$0xf]
    %v6904 = vld [vmem:[%s6877 + $0x9c] sm:$0xff]
    %v6905 = vld [vmem:[%s6877 + $0xa4] sm:$0xf]
    %v6906 = vld [vmem:[%s6877 + $0xa8] sm:$0xff]
    %v6907 = vld [vmem:[%s6877 + $0xb0] sm:$0xf]
    %v6908 = vld [vmem:[%s6877 + $0xb4] sm:$0xff]
    %v6909 = vld [vmem:[%s6877 + $0xbc] sm:$0xf]
    %s6910 = scalar_lea.vmem %s47, 3
    %v6911 = vld [vmem:[%s6910] sm:$0x7]
    %s6912 = scalar_lea.vmem %s49, 64
    %v6913 = vld [vmem:[%s6912] sm:$0xf]
    %v6914 = vld [vmem:[%s6912 + $0x4] sm:$0xf]
    %v6915 = vld [vmem:[%s6912 + $0x8] sm:$0xf]
    %v6916 = vld [vmem:[%s6912 + $0xc] sm:$0xf]
    %v6917 = vld [vmem:[%s6912 + $0x10] sm:$0xf]
    %v6918 = vld [vmem:[%s6912 + $0x14] sm:$0xf]
    %v6919 = vld [vmem:[%s6912 + $0x18] sm:$0xf]
    %v6920 = vld [vmem:[%s6912 + $0x1c] sm:$0xf]
    %v6921 = vld [vmem:[%s6912 + $0x20] sm:$0xf]
    %v6922 = vld [vmem:[%s6912 + $0x24] sm:$0xf]
    %v6923 = vld [vmem:[%s6912 + $0x28] sm:$0xf]
    %v6924 = vld [vmem:[%s6912 + $0x2c] sm:$0xf]
    %v6925 = vld [vmem:[%s6912 + $0x30] sm:$0xf]
    %v6926 = vld [vmem:[%s6912 + $0x34] sm:$0xf]
    %v6927 = vld [vmem:[%s6912 + $0x38] sm:$0xf]
    %v6928 = vld [vmem:[%s6912 + $0x3c] sm:$0xf]
    %s6929 = scalar_lea.vmem %s51, 1
    %v6930 = vld [vmem:[%s6929] sm:$0x1]
    %s6931 = scalar_lea.vmem %s53, 1
    %v6932 = vld [vmem:[%s6931] sm:$0x1]
    %s6933 = scalar_lea.vmem %s55, 1
    %v6934 = vld [vmem:[%s6933] sm:$0x1]
    %v6935 = vpack.c.bf16 %v6876, %v6875
    %v6937 = vlaneseq
    %v6938 = vshrl.u32 %v6937, 7
    %v6939 = vsub.s32 0, %v6938
    %v6940 = vrot.slane %v6911, %v6939
    %v6941 = vlaneseq
    %v6942 = vshrl.u32 %v6941, 7
    %v6943 = vsub.s32 1, %v6942
    %v6944 = vrot.slane %v6911, %v6943
    %v6945 = vlaneseq
    %v6946 = vshrl.u32 %v6945, 7
    %v6947 = vsub.s32 2, %v6946
    %v6948 = vrot.slane %v6911, %v6947
    %v6984 = vunpack.c.l.b16 %v6878
    %v6985 = vunpack.c.h.b16 %v6878
    %v6986 = vunpack.c.l.b16 %v6879
    %v6987 = vunpack.c.l.b16 %v6880
    %v6988 = vunpack.c.h.b16 %v6880
    %v6989 = vunpack.c.l.b16 %v6881
    %v6990 = vunpack.c.l.b16 %v6882
    %v6991 = vunpack.c.h.b16 %v6882
    %v6992 = vunpack.c.l.b16 %v6883
    %v6993 = vunpack.c.l.b16 %v6884
    %v6994 = vunpack.c.h.b16 %v6884
    %v6995 = vunpack.c.l.b16 %v6885
    %v6996 = vunpack.c.l.b16 %v6886
    %v6997 = vunpack.c.h.b16 %v6886
    %v6998 = vunpack.c.l.b16 %v6887
    %v6999 = vunpack.c.l.b16 %v6888
    %v7000 = vunpack.c.h.b16 %v6888
    %v7001 = vunpack.c.l.b16 %v6889
    %v7002 = vunpack.c.l.b16 %v6890
    %v7003 = vunpack.c.h.b16 %v6890
    %v7004 = vunpack.c.l.b16 %v6891
    %v7005 = vunpack.c.l.b16 %v6892
    %v7006 = vunpack.c.h.b16 %v6892
    %v7007 = vunpack.c.l.b16 %v6893
    %v7008 = vunpack.c.l.b16 %v6894
    %v7009 = vunpack.c.h.b16 %v6894
    %v7010 = vunpack.c.l.b16 %v6895
    %v7011 = vunpack.c.l.b16 %v6896
    %v7012 = vunpack.c.h.b16 %v6896
    %v7013 = vunpack.c.l.b16 %v6897
    %v7014 = vunpack.c.l.b16 %v6898
    %v7015 = vunpack.c.h.b16 %v6898
    %v7016 = vunpack.c.l.b16 %v6899
    %v7017 = vunpack.c.l.b16 %v6900
    %v7018 = vunpack.c.h.b16 %v6900
    %v7019 = vunpack.c.l.b16 %v6901
    %v7020 = vunpack.c.l.b16 %v6902
    %v7021 = vunpack.c.h.b16 %v6902
    %v7022 = vunpack.c.l.b16 %v6903
    %v7023 = vunpack.c.l.b16 %v6904
    %v7024 = vunpack.c.h.b16 %v6904
    %v7025 = vunpack.c.l.b16 %v6905
    %v7026 = vunpack.c.l.b16 %v6906
    %v7027 = vunpack.c.h.b16 %v6906
    %v7028 = vunpack.c.l.b16 %v6907
    %v7029 = vunpack.c.l.b16 %v6908
    %v7030 = vunpack.c.h.b16 %v6908
    %v7031 = vunpack.c.l.b16 %v6909
    %v7032 = vpack.c.b16 %v6987, %v6984
    %v7033 = vpack.c.b16 %v6988, %v6985
    %v7034 = vpack.c.b16 %v6989, %v6986
    %v7035 = vpack.c.b16 %v6993, %v6990
    %v7036 = vpack.c.b16 %v6994, %v6991
    %v7037 = vpack.c.b16 %v6995, %v6992
    %v7038 = vpack.c.b16 %v6999, %v6996
    %v7039 = vpack.c.b16 %v7000, %v6997
    %v7040 = vpack.c.b16 %v7001, %v6998
    %v7041 = vpack.c.b16 %v7005, %v7002
    %v7042 = vpack.c.b16 %v7006, %v7003
    %v7043 = vpack.c.b16 %v7007, %v7004
    %v7044 = vpack.c.b16 %v7011, %v7008
    %v7045 = vpack.c.b16 %v7012, %v7009
    %v7046 = vpack.c.b16 %v7013, %v7010
    %v7047 = vpack.c.b16 %v7017, %v7014
    %v7048 = vpack.c.b16 %v7018, %v7015
    %v7049 = vpack.c.b16 %v7019, %v7016
    %v7050 = vpack.c.b16 %v7023, %v7020
    %v7051 = vpack.c.b16 %v7024, %v7021
    %v7052 = vpack.c.b16 %v7025, %v7022
    %v7053 = vpack.c.b16 %v7029, %v7026
    %v7054 = vpack.c.b16 %v7030, %v7027
    %v7055 = vpack.c.b16 %v7031, %v7028
    %7080 = vmatprep.subr.bf16.mxu0 %v7033
    %7081 = vmatpush1.bf16.msra.mxu0 %v7032
    %7082 = vmatprep.subr.bf16.mxu0 %v7036
    %7083 = vmatpush1.bf16.msra.mxu0 %v7035
    %7084 = vmatprep.subr.bf16.mxu0 %v7039
    %7085 = vmatpush1.bf16.msra.mxu0 %v7038
    %7086 = vmatprep.subr.bf16.mxu0 %v7042
    %7087 = vmatpush1.bf16.msra.mxu0 %v7041
    %7088 = vmatprep.subr.bf16.mxu0 %v7045
    %7089 = vmatpush1.bf16.msra.mxu0 %v7044
    %7090 = vmatprep.subr.bf16.mxu0 %v7048
    %7091 = vmatpush1.bf16.msra.mxu0 %v7047
    %7092 = vmatprep.subr.bf16.mxu0 %v7051
    %7093 = vmatpush1.bf16.msra.mxu0 %v7050
    %7094 = vmatprep.subr.bf16.mxu0 %v7054
    %7095 = vmatpush1.bf16.msra.mxu0 %v7053
    %7096 = vmatprep.subr.bf16.mxu0 0
    %7097 = vmatpush1.bf16.msra.mxu0 0
    %7098 = vmatprep.subr.bf16.mxu0 0
    %7099 = vmatpush1.bf16.msra.mxu0 0
    %7100 = vmatprep.subr.bf16.mxu0 0
    %7101 = vmatpush1.bf16.msra.mxu0 0
    %7102 = vmatprep.subr.bf16.mxu0 0
    %7103 = vmatpush1.bf16.msra.mxu0 0
    %7104 = vmatprep.subr.bf16.mxu0 0
    %7105 = vmatpush1.bf16.msra.mxu0 0
    %7106 = vmatprep.subr.bf16.mxu0 0
    %7107 = vmatpush1.bf16.msra.mxu0 0
    %7108 = vmatprep.subr.bf16.mxu0 0
    %7109 = vmatpush1.bf16.msra.mxu0 0
    %7110 = vmatprep.subr.bf16.mxu0 0
    %7111 = vmatpush1.bf16.msra.mxu0 0
    %7112 = vmatprep.mubr.bf16.mxu0 0
    %7113 = vmatmul.mubr.bf16.gmra.mrb[0].mxu0 %v6935
    %v7114 = vpop.f32.mrb[0].mxu0
    %v7115 = vadd.f32 %v6940, %v7114
    %v7116 = vpop.f32.mrb[0].mxu0
    %v7117 = vadd.f32 %v6944, %v7116
    %v7118 = vpop.f32.mrb[0].mxu0
    %v7119 = vadd.f32 %v6940, %v7118
    %v7120 = vpop.f32.mrb[0].mxu0
    %v7121 = vadd.f32 %v6944, %v7120
    %7122 = vdwg.mxu0
    %7123 = vmatprep.subr.bf16.mxu0 0
    %7124 = vmatpush1.bf16.msra.mxu0 %v7034
    %7125 = vmatprep.subr.bf16.mxu0 0
    %7126 = vmatpush1.bf16.msra.mxu0 %v7037
    %7127 = vmatprep.subr.bf16.mxu0 0
    %7128 = vmatpush1.bf16.msra.mxu0 %v7040
    %7129 = vmatprep.subr.bf16.mxu0 0
    %7130 = vmatpush1.bf16.msra.mxu0 %v7043
    %7131 = vmatprep.subr.bf16.mxu0 0
    %7132 = vmatpush1.bf16.msra.mxu0 %v7046
    %7133 = vmatprep.subr.bf16.mxu0 0
    %7134 = vmatpush1.bf16.msra.mxu0 %v7049
    %7135 = vmatprep.subr.bf16.mxu0 0
    %7136 = vmatpush1.bf16.msra.mxu0 %v7052
    %7137 = vmatprep.subr.bf16.mxu0 0
    %7138 = vmatpush1.bf16.msra.mxu0 %v7055
    %7139 = vmatprep.subr.bf16.mxu0 0
    %7140 = vmatpush1.bf16.msra.mxu0 0
    %7141 = vmatprep.subr.bf16.mxu0 0
    %7142 = vmatpush1.bf16.msra.mxu0 0
    %7143 = vmatprep.subr.bf16.mxu0 0
    %7144 = vmatpush1.bf16.msra.mxu0 0
    %7145 = vmatprep.subr.bf16.mxu0 0
    %7146 = vmatpush1.bf16.msra.mxu0 0
    %7147 = vmatprep.subr.bf16.mxu0 0
    %7148 = vmatpush1.bf16.msra.mxu0 0
    %7149 = vmatprep.subr.bf16.mxu0 0
    %7150 = vmatpush1.bf16.msra.mxu0 0
    %7151 = vmatprep.subr.bf16.mxu0 0
    %7152 = vmatpush1.bf16.msra.mxu0 0
    %7153 = vmatprep.subr.bf16.mxu0 0
    %7154 = vmatpush1.bf16.msra.mxu0 0
    %7155 = vmatprep.mubr.bf16.mxu0 0
    %7156 = vmatmul.mubr.bf16.gmra.mrb[0].mxu0 %v6935
    %v7157 = vpop.f32.mrb[0].mxu0
    %v7158 = vadd.f32 %v6948, %v7157
    %v7159 = vpop.f32.mrb[0].mxu0
    %v7160 = vpop.f32.mrb[0].mxu0
    %v7161 = vadd.f32 %v6948, %v7160
    %v7162 = vpop.f32.mrb[0].mxu0
    %7163 = vdwg.mxu0
    %v7164 = vpack.c.bf16 %v7119, %v7115
    %v7165 = vpack.c.bf16 %v7121, %v7117
    %v7166 = vpack.c.bf16 %v7161, %v7158
    %v7168 = vunpack.c.l.b16 %v7164
    %v7169 = vunpack.c.h.b16 %v7164
    %v7170 = vpack.c.b16 %v7168, %v7168
    %v7171 = vpack.c.b16 %v7169, %v7169
    %v7173 = vunpack.c.l.b16 %v7165
    %v7174 = vunpack.c.h.b16 %v7165
    %v7175 = vpack.c.b16 %v7173, %v7173
    %v7176 = vpack.c.b16 %v7174, %v7174
    %v7178 = vunpack.c.l.b16 %v7166
    %v7179 = vunpack.c.h.b16 %v7166
    %v7180 = vpack.c.b16 %v7178, %v7178
    %v7181 = vpack.c.b16 %v7179, %v7179
    %v7183 = vsel %vm576, %v7170, 0
    %v7186 = vsel %vm576, %v7175, 0
    %7188 = vmatprep.subr.bf16.mxu0 0
    %7189 = vmatpush1.bf16.xpose.msra.mxu0 %v7186
    %7190 = vmatprep.subr.bf16.mxu0 0
    %7191 = vmatpush1.bf16.xpose.msra.mxu0 0
    %7192 = vmatprep.subr.bf16.mxu0 0
    %7193 = vmatpush1.bf16.xpose.msra.mxu0 0
    %7194 = vmatprep.subr.bf16.mxu0 0
    %7195 = vmatpush1.bf16.xpose.msra.mxu0 0
    %7196 = vmatprep.subr.bf16.mxu0 0
    %7197 = vmatpush1.bf16.xpose.msra.mxu0 0
    %7198 = vmatprep.subr.bf16.mxu0 0
    %7199 = vmatpush1.bf16.xpose.msra.mxu0 0
    %7200 = vmatprep.subr.bf16.mxu0 0
    %7201 = vmatpush1.bf16.xpose.msra.mxu0 0
    %7202 = vmatprep.subr.bf16.mxu0 0
    %7203 = vmatpush1.bf16.xpose.msra.mxu0 0
    %7204 = vmatprep.subr.bf16.mxu0 0
    %7205 = vmatpush1.bf16.xpose.msra.mxu0 0
    %7206 = vmatprep.subr.bf16.mxu0 0
    %7207 = vmatpush1.bf16.xpose.msra.mxu0 0
    %7208 = vmatprep.subr.bf16.mxu0 0
    %7209 = vmatpush1.bf16.xpose.msra.mxu0 0
    %7210 = vmatprep.subr.bf16.mxu0 0
    %7211 = vmatpush1.bf16.xpose.msra.mxu0 0
    %7212 = vmatprep.subr.bf16.mxu0 0
    %7213 = vmatpush1.bf16.xpose.msra.mxu0 0
    %7214 = vmatprep.subr.bf16.mxu0 0
    %7215 = vmatpush1.bf16.xpose.msra.mxu0 0
    %7216 = vmatprep.subr.bf16.mxu0 0
    %7217 = vmatpush1.bf16.xpose.msra.mxu0 0
    %7218 = vmatprep.subr.bf16.mxu0 0
    %7219 = vmatpush1.bf16.xpose.msra.mxu0 0
    %7220 = vmatprep.mubr.bf16.mxu0 0
    %7221 = vmatmul.mubr.bf16.gmra.mrb[0].mxu0 %v7183
    %v7222 = vpop.f32.mrb[0].mxu0
    %v7223 = vadd.f32 %v214, %v7222
    %v7224 = vpop.f32.mrb[0].mxu0
    %v7225 = vpop.f32.mrb[0].mxu0
    %v7226 = vpop.f32.mrb[0].mxu0
    %7227 = vdwg.mxu0
    %v7229 = vsel %vm576, %v7171, 0
    %v7232 = vsel %vm576, %v7176, 0
    %7234 = vmatprep.subr.bf16.mxu0 0
    %7235 = vmatpush1.bf16.xpose.msra.mxu0 %v7232
    %7236 = vmatprep.subr.bf16.mxu0 0
    %7237 = vmatpush1.bf16.xpose.msra.mxu0 0
    %7238 = vmatprep.subr.bf16.mxu0 0
    %7239 = vmatpush1.bf16.xpose.msra.mxu0 0
    %7240 = vmatprep.subr.bf16.mxu0 0
    %7241 = vmatpush1.bf16.xpose.msra.mxu0 0
    %7242 = vmatprep.subr.bf16.mxu0 0
    %7243 = vmatpush1.bf16.xpose.msra.mxu0 0
    %7244 = vmatprep.subr.bf16.mxu0 0
    %7245 = vmatpush1.bf16.xpose.msra.mxu0 0
    %7246 = vmatprep.subr.bf16.mxu0 0
    %7247 = vmatpush1.bf16.xpose.msra.mxu0 0
    %7248 = vmatprep.subr.bf16.mxu0 0
    %7249 = vmatpush1.bf16.xpose.msra.mxu0 0
    %7250 = vmatprep.subr.bf16.mxu0 0
    %7251 = vmatpush1.bf16.xpose.msra.mxu0 0
    %7252 = vmatprep.subr.bf16.mxu0 0
    %7253 = vmatpush1.bf16.xpose.msra.mxu0 0
    %7254 = vmatprep.subr.bf16.mxu0 0
    %7255 = vmatpush1.bf16.xpose.msra.mxu0 0
    %7256 = vmatprep.subr.bf16.mxu0 0
    %7257 = vmatpush1.bf16.xpose.msra.mxu0 0
    %7258 = vmatprep.subr.bf16.mxu0 0
    %7259 = vmatpush1.bf16.xpose.msra.mxu0 0
    %7260 = vmatprep.subr.bf16.mxu0 0
    %7261 = vmatpush1.bf16.xpose.msra.mxu0 0
    %7262 = vmatprep.subr.bf16.mxu0 0
    %7263 = vmatpush1.bf16.xpose.msra.mxu0 0
    %7264 = vmatprep.subr.bf16.mxu0 0
    %7265 = vmatpush1.bf16.xpose.msra.mxu0 0
    %7266 = vmatprep.mubr.bf16.mxu0 0
    %7267 = vmatmul.mubr.bf16.gmra.mrb[0].mxu0 %v7229
    %v7268 = vpop.f32.mrb[0].mxu0
    %v7269 = vadd.f32 %v215, %v7268
    %v7270 = vpop.f32.mrb[0].mxu0
    %v7271 = vpop.f32.mrb[0].mxu0
    %v7272 = vpop.f32.mrb[0].mxu0
    %7273 = vdwg.mxu0
    %v7274 = vsel %vm669, %v7223, -inf
    %7275 = vmax.xlane.f32.xlu0 %v7274
    %v7276 = vpop.xlane.xlu0 %7275
    %v7277 = vsel %vm669, %v7269, -inf
    %7278 = vmax.xlane.f32.xlu0 %v7277
    %v7279 = vpop.xlane.xlu0 %7278
    %v7280 = vsub.f32 %v7223, %v7276
    %v7281 = vsub.f32 %v7269, %v7279
    %v7282 = vmul.f32 %v7280, 1.442695
    %v7283 = vpow.pop %v7282
    %v7284 = vmul.f32 %v7281, 1.442695
    %v7285 = vpow.pop %v7284
    %v7286 = vsel %vm669, %v7283, 0.0
    %7287 = vadd.xlane.f32.xlu0 %v7286
    %v7288 = vpop.xlane.xlu0 %7287
    %v7289 = vsel %vm669, %v7285, 0.0
    %7290 = vadd.xlane.f32.xlu0 %v7289
    %v7291 = vpop.xlane.xlu0 %7290
    %v7292 = vrcp.pop %v7288
    %v7293 = vrcp.pop %v7291
    %v7294 = vmul.f32 %v7283, %v7292
    %v7295 = vmul.f32 %v7285, %v7293
    %v7296 = vpack.c.bf16 %v7294, %v7294
    %v7297 = vpack.c.bf16 %v7295, %v7295
    %v7299 = vsel %vm669, %v7296, 0
    %v7302 = vsel %vm697, %v7180, 0
    %7304 = vmatprep.subr.bf16.mxu0 0
    %7305 = vmatpush1.bf16.msra.mxu0 %v7302
    %7306 = vmatprep.subr.bf16.mxu0 0
    %7307 = vmatpush1.bf16.msra.mxu0 0
    %7308 = vmatprep.subr.bf16.mxu0 0
    %7309 = vmatpush1.bf16.msra.mxu0 0
    %7310 = vmatprep.subr.bf16.mxu0 0
    %7311 = vmatpush1.bf16.msra.mxu0 0
    %7312 = vmatprep.subr.bf16.mxu0 0
    %7313 = vmatpush1.bf16.msra.mxu0 0
    %7314 = vmatprep.subr.bf16.mxu0 0
    %7315 = vmatpush1.bf16.msra.mxu0 0
    %7316 = vmatprep.subr.bf16.mxu0 0
    %7317 = vmatpush1.bf16.msra.mxu0 0
    %7318 = vmatprep.subr.bf16.mxu0 0
    %7319 = vmatpush1.bf16.msra.mxu0 0
    %7320 = vmatprep.subr.bf16.mxu0 0
    %7321 = vmatpush1.bf16.msra.mxu0 0
    %7322 = vmatprep.subr.bf16.mxu0 0
    %7323 = vmatpush1.bf16.msra.mxu0 0
    %7324 = vmatprep.subr.bf16.mxu0 0
    %7325 = vmatpush1.bf16.msra.mxu0 0
    %7326 = vmatprep.subr.bf16.mxu0 0
    %7327 = vmatpush1.bf16.msra.mxu0 0
    %7328 = vmatprep.subr.bf16.mxu0 0
    %7329 = vmatpush1.bf16.msra.mxu0 0
    %7330 = vmatprep.subr.bf16.mxu0 0
    %7331 = vmatpush1.bf16.msra.mxu0 0
    %7332 = vmatprep.subr.bf16.mxu0 0
    %7333 = vmatpush1.bf16.msra.mxu0 0
    %7334 = vmatprep.subr.bf16.mxu0 0
    %7335 = vmatpush1.bf16.msra.mxu0 0
    %7336 = vmatprep.mubr.bf16.mxu0 0
    %7337 = vmatmul.mubr.bf16.gmra.mrb[0].mxu0 %v7299
    %v7338 = vpop.f32.mrb[0].mxu0
    %v7339 = vadd.f32 0.0, %v7338
    %v7340 = vpop.f32.mrb[0].mxu0
    %v7341 = vpop.f32.mrb[0].mxu0
    %v7342 = vpop.f32.mrb[0].mxu0
    %7343 = vdwg.mxu0
    %v7345 = vsel %vm669, %v7297, 0
    %v7348 = vsel %vm697, %v7181, 0
    %7350 = vmatprep.subr.bf16.mxu0 0
    %7351 = vmatpush1.bf16.msra.mxu0 %v7348
    %7352 = vmatprep.subr.bf16.mxu0 0
    %7353 = vmatpush1.bf16.msra.mxu0 0
    %7354 = vmatprep.subr.bf16.mxu0 0
    %7355 = vmatpush1.bf16.msra.mxu0 0
    %7356 = vmatprep.subr.bf16.mxu0 0
    %7357 = vmatpush1.bf16.msra.mxu0 0
    %7358 = vmatprep.subr.bf16.mxu0 0
    %7359 = vmatpush1.bf16.msra.mxu0 0
    %7360 = vmatprep.subr.bf16.mxu0 0
    %7361 = vmatpush1.bf16.msra.mxu0 0
    %7362 = vmatprep.subr.bf16.mxu0 0
    %7363 = vmatpush1.bf16.msra.mxu0 0
    %7364 = vmatprep.subr.bf16.mxu0 0
    %7365 = vmatpush1.bf16.msra.mxu0 0
    %7366 = vmatprep.subr.bf16.mxu0 0
    %7367 = vmatpush1.bf16.msra.mxu0 0
    %7368 = vmatprep.subr.bf16.mxu0 0
    %7369 = vmatpush1.bf16.msra.mxu0 0
    %7370 = vmatprep.subr.bf16.mxu0 0
    %7371 = vmatpush1.bf16.msra.mxu0 0
    %7372 = vmatprep.subr.bf16.mxu0 0
    %7373 = vmatpush1.bf16.msra.mxu0 0
    %7374 = vmatprep.subr.bf16.mxu0 0
    %7375 = vmatpush1.bf16.msra.mxu0 0
    %7376 = vmatprep.subr.bf16.mxu0 0
    %7377 = vmatpush1.bf16.msra.mxu0 0
    %7378 = vmatprep.subr.bf16.mxu0 0
    %7379 = vmatpush1.bf16.msra.mxu0 0
    %7380 = vmatprep.subr.bf16.mxu0 0
    %7381 = vmatpush1.bf16.msra.mxu0 0
    %7382 = vmatprep.mubr.bf16.mxu0 0
    %7383 = vmatmul.mubr.bf16.gmra.mrb[0].mxu0 %v7345
    %v7384 = vpop.f32.mrb[0].mxu0
    %v7385 = vadd.f32 0.0, %v7384
    %v7386 = vpop.f32.mrb[0].mxu0
    %v7387 = vpop.f32.mrb[0].mxu0
    %v7388 = vpop.f32.mrb[0].mxu0
    %7389 = vdwg.mxu0
    %7390 = vrot.lane.b32.xlu0 %v7170, 96
    %v7391 = vpop.permute.xlu0 %7390
    %7392 = vrot.lane.b32.xlu0 %v7175, 96
    %v7393 = vpop.permute.xlu0 %7392
    %v7395 = vsel %vm576, %v7391, 0
    %v7398 = vsel %vm576, %v7393, 0
    %7400 = vmatprep.subr.bf16.mxu0 0
    %7401 = vmatpush1.bf16.xpose.msra.mxu0 %v7398
    %7402 = vmatprep.subr.bf16.mxu0 0
    %7403 = vmatpush1.bf16.xpose.msra.mxu0 0
    %7404 = vmatprep.subr.bf16.mxu0 0
    %7405 = vmatpush1.bf16.xpose.msra.mxu0 0
    %7406 = vmatprep.subr.bf16.mxu0 0
    %7407 = vmatpush1.bf16.xpose.msra.mxu0 0
    %7408 = vmatprep.subr.bf16.mxu0 0
    %7409 = vmatpush1.bf16.xpose.msra.mxu0 0
    %7410 = vmatprep.subr.bf16.mxu0 0
    %7411 = vmatpush1.bf16.xpose.msra.mxu0 0
    %7412 = vmatprep.subr.bf16.mxu0 0
    %7413 = vmatpush1.bf16.xpose.msra.mxu0 0
    %7414 = vmatprep.subr.bf16.mxu0 0
    %7415 = vmatpush1.bf16.xpose.msra.mxu0 0
    %7416 = vmatprep.subr.bf16.mxu0 0
    %7417 = vmatpush1.bf16.xpose.msra.mxu0 0
    %7418 = vmatprep.subr.bf16.mxu0 0
    %7419 = vmatpush1.bf16.xpose.msra.mxu0 0
    %7420 = vmatprep.subr.bf16.mxu0 0
    %7421 = vmatpush1.bf16.xpose.msra.mxu0 0
    %7422 = vmatprep.subr.bf16.mxu0 0
    %7423 = vmatpush1.bf16.xpose.msra.mxu0 0
    %7424 = vmatprep.subr.bf16.mxu0 0
    %7425 = vmatpush1.bf16.xpose.msra.mxu0 0
    %7426 = vmatprep.subr.bf16.mxu0 0
    %7427 = vmatpush1.bf16.xpose.msra.mxu0 0
    %7428 = vmatprep.subr.bf16.mxu0 0
    %7429 = vmatpush1.bf16.xpose.msra.mxu0 0
    %7430 = vmatprep.subr.bf16.mxu0 0
    %7431 = vmatpush1.bf16.xpose.msra.mxu0 0
    %7432 = vmatprep.mubr.bf16.mxu0 0
    %7433 = vmatmul.mubr.bf16.gmra.mrb[0].mxu0 %v7395
    %v7434 = vpop.f32.mrb[0].mxu0
    %v7435 = vadd.f32 %v214, %v7434
    %v7436 = vpop.f32.mrb[0].mxu0
    %v7437 = vpop.f32.mrb[0].mxu0
    %v7438 = vpop.f32.mrb[0].mxu0
    %7439 = vdwg.mxu0
    %7440 = vrot.lane.b32.xlu0 %v7171, 96
    %v7441 = vpop.permute.xlu0 %7440
    %7442 = vrot.lane.b32.xlu0 %v7176, 96
    %v7443 = vpop.permute.xlu0 %7442
    %v7445 = vsel %vm576, %v7441, 0
    %v7448 = vsel %vm576, %v7443, 0
    %7450 = vmatprep.subr.bf16.mxu0 0
    %7451 = vmatpush1.bf16.xpose.msra.mxu0 %v7448
    %7452 = vmatprep.subr.bf16.mxu0 0
    %7453 = vmatpush1.bf16.xpose.msra.mxu0 0
    %7454 = vmatprep.subr.bf16.mxu0 0
    %7455 = vmatpush1.bf16.xpose.msra.mxu0 0
    %7456 = vmatprep.subr.bf16.mxu0 0
    %7457 = vmatpush1.bf16.xpose.msra.mxu0 0
    %7458 = vmatprep.subr.bf16.mxu0 0
    %7459 = vmatpush1.bf16.xpose.msra.mxu0 0
    %7460 = vmatprep.subr.bf16.mxu0 0
    %7461 = vmatpush1.bf16.xpose.msra.mxu0 0
    %7462 = vmatprep.subr.bf16.mxu0 0
    %7463 = vmatpush1.bf16.xpose.msra.mxu0 0
    %7464 = vmatprep.subr.bf16.mxu0 0
    %7465 = vmatpush1.bf16.xpose.msra.mxu0 0
    %7466 = vmatprep.subr.bf16.mxu0 0
    %7467 = vmatpush1.bf16.xpose.msra.mxu0 0
    %7468 = vmatprep.subr.bf16.mxu0 0
    %7469 = vmatpush1.bf16.xpose.msra.mxu0 0
    %7470 = vmatprep.subr.bf16.mxu0 0
    %7471 = vmatpush1.bf16.xpose.msra.mxu0 0
    %7472 = vmatprep.subr.bf16.mxu0 0
    %7473 = vmatpush1.bf16.xpose.msra.mxu0 0
    %7474 = vmatprep.subr.bf16.mxu0 0
    %7475 = vmatpush1.bf16.xpose.msra.mxu0 0
    %7476 = vmatprep.subr.bf16.mxu0 0
    %7477 = vmatpush1.bf16.xpose.msra.mxu0 0
    %7478 = vmatprep.subr.bf16.mxu0 0
    %7479 = vmatpush1.bf16.xpose.msra.mxu0 0
    %7480 = vmatprep.subr.bf16.mxu0 0
    %7481 = vmatpush1.bf16.xpose.msra.mxu0 0
    %7482 = vmatprep.mubr.bf16.mxu0 0
    %7483 = vmatmul.mubr.bf16.gmra.mrb[0].mxu0 %v7445
    %v7484 = vpop.f32.mrb[0].mxu0
    %v7485 = vadd.f32 %v215, %v7484
    %v7486 = vpop.f32.mrb[0].mxu0
    %v7487 = vpop.f32.mrb[0].mxu0
    %v7488 = vpop.f32.mrb[0].mxu0
    %7489 = vdwg.mxu0
    %v7490 = vsel %vm669, %v7435, -inf
    %7491 = vmax.xlane.f32.xlu0 %v7490
    %v7492 = vpop.xlane.xlu0 %7491
    %v7493 = vsel %vm669, %v7485, -inf
    %7494 = vmax.xlane.f32.xlu0 %v7493
    %v7495 = vpop.xlane.xlu0 %7494
    %v7496 = vsub.f32 %v7435, %v7492
    %v7497 = vsub.f32 %v7485, %v7495
    %v7498 = vmul.f32 %v7496, 1.442695
    %v7499 = vpow.pop %v7498
    %v7500 = vmul.f32 %v7497, 1.442695
    %v7501 = vpow.pop %v7500
    %v7502 = vsel %vm669, %v7499, 0.0
    %7503 = vadd.xlane.f32.xlu0 %v7502
    %v7504 = vpop.xlane.xlu0 %7503
    %v7505 = vsel %vm669, %v7501, 0.0
    %7506 = vadd.xlane.f32.xlu0 %v7505
    %v7507 = vpop.xlane.xlu0 %7506
    %v7508 = vrcp.pop %v7504
    %v7509 = vrcp.pop %v7507
    %v7510 = vmul.f32 %v7499, %v7508
    %v7511 = vmul.f32 %v7501, %v7509
    %v7512 = vpack.c.bf16 %v7510, %v7510
    %v7513 = vpack.c.bf16 %v7511, %v7511
    %7514 = vrot.lane.b32.xlu0 %v7180, 96
    %v7515 = vpop.permute.xlu0 %7514
    %v7517 = vsel %vm669, %v7512, 0
    %v7520 = vsel %vm697, %v7515, 0
    %7522 = vmatprep.subr.bf16.mxu0 0
    %7523 = vmatpush1.bf16.msra.mxu0 %v7520
    %7524 = vmatprep.subr.bf16.mxu0 0
    %7525 = vmatpush1.bf16.msra.mxu0 0
    %7526 = vmatprep.subr.bf16.mxu0 0
    %7527 = vmatpush1.bf16.msra.mxu0 0
    %7528 = vmatprep.subr.bf16.mxu0 0
    %7529 = vmatpush1.bf16.msra.mxu0 0
    %7530 = vmatprep.subr.bf16.mxu0 0
    %7531 = vmatpush1.bf16.msra.mxu0 0
    %7532 = vmatprep.subr.bf16.mxu0 0
    %7533 = vmatpush1.bf16.msra.mxu0 0
    %7534 = vmatprep.subr.bf16.mxu0 0
    %7535 = vmatpush1.bf16.msra.mxu0 0
    %7536 = vmatprep.subr.bf16.mxu0 0
    %7537 = vmatpush1.bf16.msra.mxu0 0
    %7538 = vmatprep.subr.bf16.mxu0 0
    %7539 = vmatpush1.bf16.msra.mxu0 0
    %7540 = vmatprep.subr.bf16.mxu0 0
    %7541 = vmatpush1.bf16.msra.mxu0 0
    %7542 = vmatprep.subr.bf16.mxu0 0
    %7543 = vmatpush1.bf16.msra.mxu0 0
    %7544 = vmatprep.subr.bf16.mxu0 0
    %7545 = vmatpush1.bf16.msra.mxu0 0
    %7546 = vmatprep.subr.bf16.mxu0 0
    %7547 = vmatpush1.bf16.msra.mxu0 0
    %7548 = vmatprep.subr.bf16.mxu0 0
    %7549 = vmatpush1.bf16.msra.mxu0 0
    %7550 = vmatprep.subr.bf16.mxu0 0
    %7551 = vmatpush1.bf16.msra.mxu0 0
    %7552 = vmatprep.subr.bf16.mxu0 0
    %7553 = vmatpush1.bf16.msra.mxu0 0
    %7554 = vmatprep.mubr.bf16.mxu0 0
    %7555 = vmatmul.mubr.bf16.gmra.mrb[0].mxu0 %v7517
    %v7556 = vpop.f32.mrb[0].mxu0
    %v7557 = vadd.f32 0.0, %v7556
    %v7558 = vpop.f32.mrb[0].mxu0
    %v7559 = vpop.f32.mrb[0].mxu0
    %v7560 = vpop.f32.mrb[0].mxu0
    %7561 = vdwg.mxu0
    %7562 = vrot.lane.b32.xlu0 %v7181, 96
    %v7563 = vpop.permute.xlu0 %7562
    %v7565 = vsel %vm669, %v7513, 0
    %v7568 = vsel %vm697, %v7563, 0
    %7570 = vmatprep.subr.bf16.mxu0 0
    %7571 = vmatpush1.bf16.msra.mxu0 %v7568
    %7572 = vmatprep.subr.bf16.mxu0 0
    %7573 = vmatpush1.bf16.msra.mxu0 0
    %7574 = vmatprep.subr.bf16.mxu0 0
    %7575 = vmatpush1.bf16.msra.mxu0 0
    %7576 = vmatprep.subr.bf16.mxu0 0
    %7577 = vmatpush1.bf16.msra.mxu0 0
    %7578 = vmatprep.subr.bf16.mxu0 0
    %7579 = vmatpush1.bf16.msra.mxu0 0
    %7580 = vmatprep.subr.bf16.mxu0 0
    %7581 = vmatpush1.bf16.msra.mxu0 0
    %7582 = vmatprep.subr.bf16.mxu0 0
    %7583 = vmatpush1.bf16.msra.mxu0 0
    %7584 = vmatprep.subr.bf16.mxu0 0
    %7585 = vmatpush1.bf16.msra.mxu0 0
    %7586 = vmatprep.subr.bf16.mxu0 0
    %7587 = vmatpush1.bf16.msra.mxu0 0
    %7588 = vmatprep.subr.bf16.mxu0 0
    %7589 = vmatpush1.bf16.msra.mxu0 0
    %7590 = vmatprep.subr.bf16.mxu0 0
    %7591 = vmatpush1.bf16.msra.mxu0 0
    %7592 = vmatprep.subr.bf16.mxu0 0
    %7593 = vmatpush1.bf16.msra.mxu0 0
    %7594 = vmatprep.subr.bf16.mxu0 0
    %7595 = vmatpush1.bf16.msra.mxu0 0
    %7596 = vmatprep.subr.bf16.mxu0 0
    %7597 = vmatpush1.bf16.msra.mxu0 0
    %7598 = vmatprep.subr.bf16.mxu0 0
    %7599 = vmatpush1.bf16.msra.mxu0 0
    %7600 = vmatprep.subr.bf16.mxu0 0
    %7601 = vmatpush1.bf16.msra.mxu0 0
    %7602 = vmatprep.mubr.bf16.mxu0 0
    %7603 = vmatmul.mubr.bf16.gmra.mrb[0].mxu0 %v7565
    %v7604 = vpop.f32.mrb[0].mxu0
    %v7605 = vadd.f32 0.0, %v7604
    %v7606 = vpop.f32.mrb[0].mxu0
    %v7607 = vpop.f32.mrb[0].mxu0
    %v7608 = vpop.f32.mrb[0].mxu0
    %7609 = vdwg.mxu0
    %7610 = vrot.lane.b32.xlu0 %v7170, 64
    %v7611 = vpop.permute.xlu0 %7610
    %7612 = vrot.lane.b32.xlu0 %v7175, 64
    %v7613 = vpop.permute.xlu0 %7612
    %v7615 = vsel %vm576, %v7611, 0
    %v7618 = vsel %vm576, %v7613, 0
    %7620 = vmatprep.subr.bf16.mxu0 0
    %7621 = vmatpush1.bf16.xpose.msra.mxu0 %v7618
    %7622 = vmatprep.subr.bf16.mxu0 0
    %7623 = vmatpush1.bf16.xpose.msra.mxu0 0
    %7624 = vmatprep.subr.bf16.mxu0 0
    %7625 = vmatpush1.bf16.xpose.msra.mxu0 0
    %7626 = vmatprep.subr.bf16.mxu0 0
    %7627 = vmatpush1.bf16.xpose.msra.mxu0 0
    %7628 = vmatprep.subr.bf16.mxu0 0
    %7629 = vmatpush1.bf16.xpose.msra.mxu0 0
    %7630 = vmatprep.subr.bf16.mxu0 0
    %7631 = vmatpush1.bf16.xpose.msra.mxu0 0
    %7632 = vmatprep.subr.bf16.mxu0 0
    %7633 = vmatpush1.bf16.xpose.msra.mxu0 0
    %7634 = vmatprep.subr.bf16.mxu0 0
    %7635 = vmatpush1.bf16.xpose.msra.mxu0 0
    %7636 = vmatprep.subr.bf16.mxu0 0
    %7637 = vmatpush1.bf16.xpose.msra.mxu0 0
    %7638 = vmatprep.subr.bf16.mxu0 0
    %7639 = vmatpush1.bf16.xpose.msra.mxu0 0
    %7640 = vmatprep.subr.bf16.mxu0 0
    %7641 = vmatpush1.bf16.xpose.msra.mxu0 0
    %7642 = vmatprep.subr.bf16.mxu0 0
    %7643 = vmatpush1.bf16.xpose.msra.mxu0 0
    %7644 = vmatprep.subr.bf16.mxu0 0
    %7645 = vmatpush1.bf16.xpose.msra.mxu0 0
    %7646 = vmatprep.subr.bf16.mxu0 0
    %7647 = vmatpush1.bf16.xpose.msra.mxu0 0
    %7648 = vmatprep.subr.bf16.mxu0 0
    %7649 = vmatpush1.bf16.xpose.msra.mxu0 0
    %7650 = vmatprep.subr.bf16.mxu0 0
    %7651 = vmatpush1.bf16.xpose.msra.mxu0 0
    %7652 = vmatprep.mubr.bf16.mxu0 0
    %7653 = vmatmul.mubr.bf16.gmra.mrb[0].mxu0 %v7615
    %v7654 = vpop.f32.mrb[0].mxu0
    %v7655 = vadd.f32 %v214, %v7654
    %v7656 = vpop.f32.mrb[0].mxu0
    %v7657 = vpop.f32.mrb[0].mxu0
    %v7658 = vpop.f32.mrb[0].mxu0
    %7659 = vdwg.mxu0
    %7660 = vrot.lane.b32.xlu0 %v7171, 64
    %v7661 = vpop.permute.xlu0 %7660
    %7662 = vrot.lane.b32.xlu0 %v7176, 64
    %v7663 = vpop.permute.xlu0 %7662
    %v7665 = vsel %vm576, %v7661, 0
    %v7668 = vsel %vm576, %v7663, 0
    %7670 = vmatprep.subr.bf16.mxu0 0
    %7671 = vmatpush1.bf16.xpose.msra.mxu0 %v7668
    %7672 = vmatprep.subr.bf16.mxu0 0
    %7673 = vmatpush1.bf16.xpose.msra.mxu0 0
    %7674 = vmatprep.subr.bf16.mxu0 0
    %7675 = vmatpush1.bf16.xpose.msra.mxu0 0
    %7676 = vmatprep.subr.bf16.mxu0 0
    %7677 = vmatpush1.bf16.xpose.msra.mxu0 0
    %7678 = vmatprep.subr.bf16.mxu0 0
    %7679 = vmatpush1.bf16.xpose.msra.mxu0 0
    %7680 = vmatprep.subr.bf16.mxu0 0
    %7681 = vmatpush1.bf16.xpose.msra.mxu0 0
    %7682 = vmatprep.subr.bf16.mxu0 0
    %7683 = vmatpush1.bf16.xpose.msra.mxu0 0
    %7684 = vmatprep.subr.bf16.mxu0 0
    %7685 = vmatpush1.bf16.xpose.msra.mxu0 0
    %7686 = vmatprep.subr.bf16.mxu0 0
    %7687 = vmatpush1.bf16.xpose.msra.mxu0 0
    %7688 = vmatprep.subr.bf16.mxu0 0
    %7689 = vmatpush1.bf16.xpose.msra.mxu0 0
    %7690 = vmatprep.subr.bf16.mxu0 0
    %7691 = vmatpush1.bf16.xpose.msra.mxu0 0
    %7692 = vmatprep.subr.bf16.mxu0 0
    %7693 = vmatpush1.bf16.xpose.msra.mxu0 0
    %7694 = vmatprep.subr.bf16.mxu0 0
    %7695 = vmatpush1.bf16.xpose.msra.mxu0 0
    %7696 = vmatprep.subr.bf16.mxu0 0
    %7697 = vmatpush1.bf16.xpose.msra.mxu0 0
    %7698 = vmatprep.subr.bf16.mxu0 0
    %7699 = vmatpush1.bf16.xpose.msra.mxu0 0
    %7700 = vmatprep.subr.bf16.mxu0 0
    %7701 = vmatpush1.bf16.xpose.msra.mxu0 0
    %7702 = vmatprep.mubr.bf16.mxu0 0
    %7703 = vmatmul.mubr.bf16.gmra.mrb[0].mxu0 %v7665
    %v7704 = vpop.f32.mrb[0].mxu0
    %v7705 = vadd.f32 %v215, %v7704
    %v7706 = vpop.f32.mrb[0].mxu0
    %v7707 = vpop.f32.mrb[0].mxu0
    %v7708 = vpop.f32.mrb[0].mxu0
    %7709 = vdwg.mxu0
    %v7710 = vsel %vm669, %v7655, -inf
    %7711 = vmax.xlane.f32.xlu0 %v7710
    %v7712 = vpop.xlane.xlu0 %7711
    %v7713 = vsel %vm669, %v7705, -inf
    %7714 = vmax.xlane.f32.xlu0 %v7713
    %v7715 = vpop.xlane.xlu0 %7714
    %v7716 = vsub.f32 %v7655, %v7712
    %v7717 = vsub.f32 %v7705, %v7715
    %v7718 = vmul.f32 %v7716, 1.442695
    %v7719 = vpow.pop %v7718
    %v7720 = vmul.f32 %v7717, 1.442695
    %v7721 = vpow.pop %v7720
    %v7722 = vsel %vm669, %v7719, 0.0
    %7723 = vadd.xlane.f32.xlu0 %v7722
    %v7724 = vpop.xlane.xlu0 %7723
    %v7725 = vsel %vm669, %v7721, 0.0
    %7726 = vadd.xlane.f32.xlu0 %v7725
    %v7727 = vpop.xlane.xlu0 %7726
    %v7728 = vrcp.pop %v7724
    %v7729 = vrcp.pop %v7727
    %v7730 = vmul.f32 %v7719, %v7728
    %v7731 = vmul.f32 %v7721, %v7729
    %v7732 = vpack.c.bf16 %v7730, %v7730
    %v7733 = vpack.c.bf16 %v7731, %v7731
    %7734 = vrot.lane.b32.xlu0 %v7180, 64
    %v7735 = vpop.permute.xlu0 %7734
    %v7737 = vsel %vm669, %v7732, 0
    %v7740 = vsel %vm697, %v7735, 0
    %7742 = vmatprep.subr.bf16.mxu0 0
    %7743 = vmatpush1.bf16.msra.mxu0 %v7740
    %7744 = vmatprep.subr.bf16.mxu0 0
    %7745 = vmatpush1.bf16.msra.mxu0 0
    %7746 = vmatprep.subr.bf16.mxu0 0
    %7747 = vmatpush1.bf16.msra.mxu0 0
    %7748 = vmatprep.subr.bf16.mxu0 0
    %7749 = vmatpush1.bf16.msra.mxu0 0
    %7750 = vmatprep.subr.bf16.mxu0 0
    %7751 = vmatpush1.bf16.msra.mxu0 0
    %7752 = vmatprep.subr.bf16.mxu0 0
    %7753 = vmatpush1.bf16.msra.mxu0 0
    %7754 = vmatprep.subr.bf16.mxu0 0
    %7755 = vmatpush1.bf16.msra.mxu0 0
    %7756 = vmatprep.subr.bf16.mxu0 0
    %7757 = vmatpush1.bf16.msra.mxu0 0
    %7758 = vmatprep.subr.bf16.mxu0 0
    %7759 = vmatpush1.bf16.msra.mxu0 0
    %7760 = vmatprep.subr.bf16.mxu0 0
    %7761 = vmatpush1.bf16.msra.mxu0 0
    %7762 = vmatprep.subr.bf16.mxu0 0
    %7763 = vmatpush1.bf16.msra.mxu0 0
    %7764 = vmatprep.subr.bf16.mxu0 0
    %7765 = vmatpush1.bf16.msra.mxu0 0
    %7766 = vmatprep.subr.bf16.mxu0 0
    %7767 = vmatpush1.bf16.msra.mxu0 0
    %7768 = vmatprep.subr.bf16.mxu0 0
    %7769 = vmatpush1.bf16.msra.mxu0 0
    %7770 = vmatprep.subr.bf16.mxu0 0
    %7771 = vmatpush1.bf16.msra.mxu0 0
    %7772 = vmatprep.subr.bf16.mxu0 0
    %7773 = vmatpush1.bf16.msra.mxu0 0
    %7774 = vmatprep.mubr.bf16.mxu0 0
    %7775 = vmatmul.mubr.bf16.gmra.mrb[0].mxu0 %v7737
    %v7776 = vpop.f32.mrb[0].mxu0
    %v7777 = vadd.f32 0.0, %v7776
    %v7778 = vpop.f32.mrb[0].mxu0
    %v7779 = vpop.f32.mrb[0].mxu0
    %v7780 = vpop.f32.mrb[0].mxu0
    %7781 = vdwg.mxu0
    %7782 = vrot.lane.b32.xlu0 %v7181, 64
    %v7783 = vpop.permute.xlu0 %7782
    %v7785 = vsel %vm669, %v7733, 0
    %v7788 = vsel %vm697, %v7783, 0
    %7790 = vmatprep.subr.bf16.mxu0 0
    %7791 = vmatpush1.bf16.msra.mxu0 %v7788
    %7792 = vmatprep.subr.bf16.mxu0 0
    %7793 = vmatpush1.bf16.msra.mxu0 0
    %7794 = vmatprep.subr.bf16.mxu0 0
    %7795 = vmatpush1.bf16.msra.mxu0 0
    %7796 = vmatprep.subr.bf16.mxu0 0
    %7797 = vmatpush1.bf16.msra.mxu0 0
    %7798 = vmatprep.subr.bf16.mxu0 0
    %7799 = vmatpush1.bf16.msra.mxu0 0
    %7800 = vmatprep.subr.bf16.mxu0 0
    %7801 = vmatpush1.bf16.msra.mxu0 0
    %7802 = vmatprep.subr.bf16.mxu0 0
    %7803 = vmatpush1.bf16.msra.mxu0 0
    %7804 = vmatprep.subr.bf16.mxu0 0
    %7805 = vmatpush1.bf16.msra.mxu0 0
    %7806 = vmatprep.subr.bf16.mxu0 0
    %7807 = vmatpush1.bf16.msra.mxu0 0
    %7808 = vmatprep.subr.bf16.mxu0 0
    %7809 = vmatpush1.bf16.msra.mxu0 0
    %7810 = vmatprep.subr.bf16.mxu0 0
    %7811 = vmatpush1.bf16.msra.mxu0 0
    %7812 = vmatprep.subr.bf16.mxu0 0
    %7813 = vmatpush1.bf16.msra.mxu0 0
    %7814 = vmatprep.subr.bf16.mxu0 0
    %7815 = vmatpush1.bf16.msra.mxu0 0
    %7816 = vmatprep.subr.bf16.mxu0 0
    %7817 = vmatpush1.bf16.msra.mxu0 0
    %7818 = vmatprep.subr.bf16.mxu0 0
    %7819 = vmatpush1.bf16.msra.mxu0 0
    %7820 = vmatprep.subr.bf16.mxu0 0
    %7821 = vmatpush1.bf16.msra.mxu0 0
    %7822 = vmatprep.mubr.bf16.mxu0 0
    %7823 = vmatmul.mubr.bf16.gmra.mrb[0].mxu0 %v7785
    %v7824 = vpop.f32.mrb[0].mxu0
    %v7825 = vadd.f32 0.0, %v7824
    %v7826 = vpop.f32.mrb[0].mxu0
    %v7827 = vpop.f32.mrb[0].mxu0
    %v7828 = vpop.f32.mrb[0].mxu0
    %7829 = vdwg.mxu0
    %7830 = vrot.lane.b32.xlu0 %v7170, 32
    %v7831 = vpop.permute.xlu0 %7830
    %7832 = vrot.lane.b32.xlu0 %v7175, 32
    %v7833 = vpop.permute.xlu0 %7832
    %v7835 = vsel %vm576, %v7831, 0
    %v7838 = vsel %vm576, %v7833, 0
    %7840 = vmatprep.subr.bf16.mxu0 0
    %7841 = vmatpush1.bf16.xpose.msra.mxu0 %v7838
    %7842 = vmatprep.subr.bf16.mxu0 0
    %7843 = vmatpush1.bf16.xpose.msra.mxu0 0
    %7844 = vmatprep.subr.bf16.mxu0 0
    %7845 = vmatpush1.bf16.xpose.msra.mxu0 0
    %7846 = vmatprep.subr.bf16.mxu0 0
    %7847 = vmatpush1.bf16.xpose.msra.mxu0 0
    %7848 = vmatprep.subr.bf16.mxu0 0
    %7849 = vmatpush1.bf16.xpose.msra.mxu0 0
    %7850 = vmatprep.subr.bf16.mxu0 0
    %7851 = vmatpush1.bf16.xpose.msra.mxu0 0
    %7852 = vmatprep.subr.bf16.mxu0 0
    %7853 = vmatpush1.bf16.xpose.msra.mxu0 0
    %7854 = vmatprep.subr.bf16.mxu0 0
    %7855 = vmatpush1.bf16.xpose.msra.mxu0 0
    %7856 = vmatprep.subr.bf16.mxu0 0
    %7857 = vmatpush1.bf16.xpose.msra.mxu0 0
    %7858 = vmatprep.subr.bf16.mxu0 0
    %7859 = vmatpush1.bf16.xpose.msra.mxu0 0
    %7860 = vmatprep.subr.bf16.mxu0 0
    %7861 = vmatpush1.bf16.xpose.msra.mxu0 0
    %7862 = vmatprep.subr.bf16.mxu0 0
    %7863 = vmatpush1.bf16.xpose.msra.mxu0 0
    %7864 = vmatprep.subr.bf16.mxu0 0
    %7865 = vmatpush1.bf16.xpose.msra.mxu0 0
    %7866 = vmatprep.subr.bf16.mxu0 0
    %7867 = vmatpush1.bf16.xpose.msra.mxu0 0
    %7868 = vmatprep.subr.bf16.mxu0 0
    %7869 = vmatpush1.bf16.xpose.msra.mxu0 0
    %7870 = vmatprep.subr.bf16.mxu0 0
    %7871 = vmatpush1.bf16.xpose.msra.mxu0 0
    %7872 = vmatprep.mubr.bf16.mxu0 0
    %7873 = vmatmul.mubr.bf16.gmra.mrb[0].mxu0 %v7835
    %v7874 = vpop.f32.mrb[0].mxu0
    %v7875 = vadd.f32 %v214, %v7874
    %v7876 = vpop.f32.mrb[0].mxu0
    %v7877 = vpop.f32.mrb[0].mxu0
    %v7878 = vpop.f32.mrb[0].mxu0
    %7879 = vdwg.mxu0
    %7880 = vrot.lane.b32.xlu0 %v7171, 32
    %v7881 = vpop.permute.xlu0 %7880
    %7882 = vrot.lane.b32.xlu0 %v7176, 32
    %v7883 = vpop.permute.xlu0 %7882
    %v7885 = vsel %vm576, %v7881, 0
    %v7888 = vsel %vm576, %v7883, 0
    %7890 = vmatprep.subr.bf16.mxu0 0
    %7891 = vmatpush1.bf16.xpose.msra.mxu0 %v7888
    %7892 = vmatprep.subr.bf16.mxu0 0
    %7893 = vmatpush1.bf16.xpose.msra.mxu0 0
    %7894 = vmatprep.subr.bf16.mxu0 0
    %7895 = vmatpush1.bf16.xpose.msra.mxu0 0
    %7896 = vmatprep.subr.bf16.mxu0 0
    %7897 = vmatpush1.bf16.xpose.msra.mxu0 0
    %7898 = vmatprep.subr.bf16.mxu0 0
    %7899 = vmatpush1.bf16.xpose.msra.mxu0 0
    %7900 = vmatprep.subr.bf16.mxu0 0
    %7901 = vmatpush1.bf16.xpose.msra.mxu0 0
    %7902 = vmatprep.subr.bf16.mxu0 0
    %7903 = vmatpush1.bf16.xpose.msra.mxu0 0
    %7904 = vmatprep.subr.bf16.mxu0 0
    %7905 = vmatpush1.bf16.xpose.msra.mxu0 0
    %7906 = vmatprep.subr.bf16.mxu0 0
    %7907 = vmatpush1.bf16.xpose.msra.mxu0 0
    %7908 = vmatprep.subr.bf16.mxu0 0
    %7909 = vmatpush1.bf16.xpose.msra.mxu0 0
    %7910 = vmatprep.subr.bf16.mxu0 0
    %7911 = vmatpush1.bf16.xpose.msra.mxu0 0
    %7912 = vmatprep.subr.bf16.mxu0 0
    %7913 = vmatpush1.bf16.xpose.msra.mxu0 0
    %7914 = vmatprep.subr.bf16.mxu0 0
    %7915 = vmatpush1.bf16.xpose.msra.mxu0 0
    %7916 = vmatprep.subr.bf16.mxu0 0
    %7917 = vmatpush1.bf16.xpose.msra.mxu0 0
    %7918 = vmatprep.subr.bf16.mxu0 0
    %7919 = vmatpush1.bf16.xpose.msra.mxu0 0
    %7920 = vmatprep.subr.bf16.mxu0 0
    %7921 = vmatpush1.bf16.xpose.msra.mxu0 0
    %7922 = vmatprep.mubr.bf16.mxu0 0
    %7923 = vmatmul.mubr.bf16.gmra.mrb[0].mxu0 %v7885
    %v7924 = vpop.f32.mrb[0].mxu0
    %v7925 = vadd.f32 %v215, %v7924
    %v7926 = vpop.f32.mrb[0].mxu0
    %v7927 = vpop.f32.mrb[0].mxu0
    %v7928 = vpop.f32.mrb[0].mxu0
    %7929 = vdwg.mxu0
    %v7930 = vsel %vm669, %v7875, -inf
    %7931 = vmax.xlane.f32.xlu0 %v7930
    %v7932 = vpop.xlane.xlu0 %7931
    %v7933 = vsel %vm669, %v7925, -inf
    %7934 = vmax.xlane.f32.xlu0 %v7933
    %v7935 = vpop.xlane.xlu0 %7934
    %v7936 = vsub.f32 %v7875, %v7932
    %v7937 = vsub.f32 %v7925, %v7935
    %v7938 = vmul.f32 %v7936, 1.442695
    %v7939 = vpow.pop %v7938
    %v7940 = vmul.f32 %v7937, 1.442695
    %v7941 = vpow.pop %v7940
    %v7942 = vsel %vm669, %v7939, 0.0
    %7943 = vadd.xlane.f32.xlu0 %v7942
    %v7944 = vpop.xlane.xlu0 %7943
    %v7945 = vsel %vm669, %v7941, 0.0
    %7946 = vadd.xlane.f32.xlu0 %v7945
    %v7947 = vpop.xlane.xlu0 %7946
    %v7948 = vrcp.pop %v7944
    %v7949 = vrcp.pop %v7947
    %v7950 = vmul.f32 %v7939, %v7948
    %v7951 = vmul.f32 %v7941, %v7949
    %v7952 = vpack.c.bf16 %v7950, %v7950
    %v7953 = vpack.c.bf16 %v7951, %v7951
    %7954 = vrot.lane.b32.xlu0 %v7180, 32
    %v7955 = vpop.permute.xlu0 %7954
    %v7957 = vsel %vm669, %v7952, 0
    %v7960 = vsel %vm697, %v7955, 0
    %7962 = vmatprep.subr.bf16.mxu0 0
    %7963 = vmatpush1.bf16.msra.mxu0 %v7960
    %7964 = vmatprep.subr.bf16.mxu0 0
    %7965 = vmatpush1.bf16.msra.mxu0 0
    %7966 = vmatprep.subr.bf16.mxu0 0
    %7967 = vmatpush1.bf16.msra.mxu0 0
    %7968 = vmatprep.subr.bf16.mxu0 0
    %7969 = vmatpush1.bf16.msra.mxu0 0
    %7970 = vmatprep.subr.bf16.mxu0 0
    %7971 = vmatpush1.bf16.msra.mxu0 0
    %7972 = vmatprep.subr.bf16.mxu0 0
    %7973 = vmatpush1.bf16.msra.mxu0 0
    %7974 = vmatprep.subr.bf16.mxu0 0
    %7975 = vmatpush1.bf16.msra.mxu0 0
    %7976 = vmatprep.subr.bf16.mxu0 0
    %7977 = vmatpush1.bf16.msra.mxu0 0
    %7978 = vmatprep.subr.bf16.mxu0 0
    %7979 = vmatpush1.bf16.msra.mxu0 0
    %7980 = vmatprep.subr.bf16.mxu0 0
    %7981 = vmatpush1.bf16.msra.mxu0 0
    %7982 = vmatprep.subr.bf16.mxu0 0
    %7983 = vmatpush1.bf16.msra.mxu0 0
    %7984 = vmatprep.subr.bf16.mxu0 0
    %7985 = vmatpush1.bf16.msra.mxu0 0
    %7986 = vmatprep.subr.bf16.mxu0 0
    %7987 = vmatpush1.bf16.msra.mxu0 0
    %7988 = vmatprep.subr.bf16.mxu0 0
    %7989 = vmatpush1.bf16.msra.mxu0 0
    %7990 = vmatprep.subr.bf16.mxu0 0
    %7991 = vmatpush1.bf16.msra.mxu0 0
    %7992 = vmatprep.subr.bf16.mxu0 0
    %7993 = vmatpush1.bf16.msra.mxu0 0
    %7994 = vmatprep.mubr.bf16.mxu0 0
    %7995 = vmatmul.mubr.bf16.gmra.mrb[0].mxu0 %v7957
    %v7996 = vpop.f32.mrb[0].mxu0
    %v7997 = vadd.f32 0.0, %v7996
    %v7998 = vpop.f32.mrb[0].mxu0
    %v7999 = vpop.f32.mrb[0].mxu0
    %v8000 = vpop.f32.mrb[0].mxu0
    %8001 = vdwg.mxu0
    %8002 = vrot.lane.b32.xlu0 %v7181, 32
    %v8003 = vpop.permute.xlu0 %8002
    %v8005 = vsel %vm669, %v7953, 0
    %v8008 = vsel %vm697, %v8003, 0
    %8010 = vmatprep.subr.bf16.mxu0 0
    %8011 = vmatpush1.bf16.msra.mxu0 %v8008
    %8012 = vmatprep.subr.bf16.mxu0 0
    %8013 = vmatpush1.bf16.msra.mxu0 0
    %8014 = vmatprep.subr.bf16.mxu0 0
    %8015 = vmatpush1.bf16.msra.mxu0 0
    %8016 = vmatprep.subr.bf16.mxu0 0
    %8017 = vmatpush1.bf16.msra.mxu0 0
    %8018 = vmatprep.subr.bf16.mxu0 0
    %8019 = vmatpush1.bf16.msra.mxu0 0
    %8020 = vmatprep.subr.bf16.mxu0 0
    %8021 = vmatpush1.bf16.msra.mxu0 0
    %8022 = vmatprep.subr.bf16.mxu0 0
    %8023 = vmatpush1.bf16.msra.mxu0 0
    %8024 = vmatprep.subr.bf16.mxu0 0
    %8025 = vmatpush1.bf16.msra.mxu0 0
    %8026 = vmatprep.subr.bf16.mxu0 0
    %8027 = vmatpush1.bf16.msra.mxu0 0
    %8028 = vmatprep.subr.bf16.mxu0 0
    %8029 = vmatpush1.bf16.msra.mxu0 0
    %8030 = vmatprep.subr.bf16.mxu0 0
    %8031 = vmatpush1.bf16.msra.mxu0 0
    %8032 = vmatprep.subr.bf16.mxu0 0
    %8033 = vmatpush1.bf16.msra.mxu0 0
    %8034 = vmatprep.subr.bf16.mxu0 0
    %8035 = vmatpush1.bf16.msra.mxu0 0
    %8036 = vmatprep.subr.bf16.mxu0 0
    %8037 = vmatpush1.bf16.msra.mxu0 0
    %8038 = vmatprep.subr.bf16.mxu0 0
    %8039 = vmatpush1.bf16.msra.mxu0 0
    %8040 = vmatprep.subr.bf16.mxu0 0
    %8041 = vmatpush1.bf16.msra.mxu0 0
    %8042 = vmatprep.mubr.bf16.mxu0 0
    %8043 = vmatmul.mubr.bf16.gmra.mrb[0].mxu0 %v8005
    %v8044 = vpop.f32.mrb[0].mxu0
    %v8045 = vadd.f32 0.0, %v8044
    %v8046 = vpop.f32.mrb[0].mxu0
    %v8047 = vpop.f32.mrb[0].mxu0
    %v8048 = vpop.f32.mrb[0].mxu0
    %8049 = vdwg.mxu0
    %8052 = vrot.lane.b32.xlu0 %v7557, 32
    %v8053 = vpop.permute.xlu0 %8052
    %8054 = vrot.lane.b32.xlu0 %v7605, 32
    %v8055 = vpop.permute.xlu0 %8054
    %8060 = vrot.lane.b32.xlu0 %v7777, 64
    %v8061 = vpop.permute.xlu0 %8060
    %8062 = vrot.lane.b32.xlu0 %v7825, 64
    %v8063 = vpop.permute.xlu0 %8062
    %8068 = vrot.lane.b32.xlu0 %v7997, 96
    %v8069 = vpop.permute.xlu0 %8068
    %8070 = vrot.lane.b32.xlu0 %v8045, 96
    %v8071 = vpop.permute.xlu0 %8070
    %v8074 = vsel %vm576, %v7339, %v8053
    %v8075 = vsel %vm576, %v7385, %v8055
    %v8076 = vsel %vm1473, %v8074, %v8061
    %v8077 = vsel %vm1473, %v8075, %v8063
    %v8078 = vsel %vm1476, %v8076, %v8069
    %v8079 = vsel %vm1476, %v8077, %v8071
    %v8080 = vpack.c.bf16 %v8079, %v8078
    %v8082 = vlaneseq
    %v8083 = vshrl.u32 %v8082, 7
    %v8084 = vsub.s32 0, %v8083
    %v8085 = vrot.slane %v6930, %v8084
    %v8103 = vunpack.c.l.b16 %v6913
    %v8104 = vunpack.c.l.b16 %v6914
    %v8105 = vunpack.c.l.b16 %v6915
    %v8106 = vunpack.c.l.b16 %v6916
    %v8107 = vunpack.c.l.b16 %v6917
    %v8108 = vunpack.c.l.b16 %v6918
    %v8109 = vunpack.c.l.b16 %v6919
    %v8110 = vunpack.c.l.b16 %v6920
    %v8111 = vunpack.c.l.b16 %v6921
    %v8112 = vunpack.c.l.b16 %v6922
    %v8113 = vunpack.c.l.b16 %v6923
    %v8114 = vunpack.c.l.b16 %v6924
    %v8115 = vunpack.c.l.b16 %v6925
    %v8116 = vunpack.c.l.b16 %v6926
    %v8117 = vunpack.c.l.b16 %v6927
    %v8118 = vunpack.c.l.b16 %v6928
    %v8119 = vpack.c.b16 %v8104, %v8103
    %v8120 = vpack.c.b16 %v8106, %v8105
    %v8121 = vpack.c.b16 %v8108, %v8107
    %v8122 = vpack.c.b16 %v8110, %v8109
    %v8123 = vpack.c.b16 %v8112, %v8111
    %v8124 = vpack.c.b16 %v8114, %v8113
    %v8125 = vpack.c.b16 %v8116, %v8115
    %v8126 = vpack.c.b16 %v8118, %v8117
    %8135 = vmatprep.subr.bf16.mxu0 0
    %8136 = vmatpush1.bf16.msra.mxu0 %v8119
    %8137 = vmatprep.subr.bf16.mxu0 0
    %8138 = vmatpush1.bf16.msra.mxu0 %v8120
    %8139 = vmatprep.subr.bf16.mxu0 0
    %8140 = vmatpush1.bf16.msra.mxu0 %v8121
    %8141 = vmatprep.subr.bf16.mxu0 0
    %8142 = vmatpush1.bf16.msra.mxu0 %v8122
    %8143 = vmatprep.subr.bf16.mxu0 0
    %8144 = vmatpush1.bf16.msra.mxu0 %v8123
    %8145 = vmatprep.subr.bf16.mxu0 0
    %8146 = vmatpush1.bf16.msra.mxu0 %v8124
    %8147 = vmatprep.subr.bf16.mxu0 0
    %8148 = vmatpush1.bf16.msra.mxu0 %v8125
    %8149 = vmatprep.subr.bf16.mxu0 0
    %8150 = vmatpush1.bf16.msra.mxu0 %v8126
    %8151 = vmatprep.subr.bf16.mxu0 0
    %8152 = vmatpush1.bf16.msra.mxu0 0
    %8153 = vmatprep.subr.bf16.mxu0 0
    %8154 = vmatpush1.bf16.msra.mxu0 0
    %8155 = vmatprep.subr.bf16.mxu0 0
    %8156 = vmatpush1.bf16.msra.mxu0 0
    %8157 = vmatprep.subr.bf16.mxu0 0
    %8158 = vmatpush1.bf16.msra.mxu0 0
    %8159 = vmatprep.subr.bf16.mxu0 0
    %8160 = vmatpush1.bf16.msra.mxu0 0
    %8161 = vmatprep.subr.bf16.mxu0 0
    %8162 = vmatpush1.bf16.msra.mxu0 0
    %8163 = vmatprep.subr.bf16.mxu0 0
    %8164 = vmatpush1.bf16.msra.mxu0 0
    %8165 = vmatprep.subr.bf16.mxu0 0
    %8166 = vmatpush1.bf16.msra.mxu0 0
    %8167 = vmatprep.mubr.bf16.mxu0 0
    %8168 = vmatmul.mubr.bf16.gmra.mrb[0].mxu0 %v8080
    %v8169 = vpop.f32.mrb[0].mxu0
    %v8170 = vadd.f32 %v8085, %v8169
    %v8171 = vpop.f32.mrb[0].mxu0
    %v8172 = vpop.f32.mrb[0].mxu0
    %v8173 = vadd.f32 %v8085, %v8172
    %v8174 = vpop.f32.mrb[0].mxu0
    %8175 = vdwg.mxu0
    %v8176 = vadd.f32 %v8170, %v6875
    %v8177 = vadd.f32 %v8173, %v6876
    %8178 = vadd.xlane.f32.xlu0 %v8176
    %v8179 = vpop.xlane.xlu0 %8178
    %8180 = vadd.xlane.f32.xlu0 %v8177
    %v8181 = vpop.xlane.xlu0 %8180
    %v8182 = vmul.f32 %v8179, %v230
    %v8183 = vmul.f32 %v8181, %v230
    %v8184 = vsub.f32 %v8176, %v8182
    %v8185 = vsub.f32 %v8177, %v8183
    %v8186 = vmul.f32 %v8184, %v8184
    %v8187 = vmul.f32 %v8185, %v8185
    %8188 = vadd.xlane.f32.xlu0 %v8186
    %v8189 = vpop.xlane.xlu0 %8188
    %8190 = vadd.xlane.f32.xlu0 %v8187
    %v8191 = vpop.xlane.xlu0 %8190
    %v8192 = vmul.f32 %v8189, %v230
    %v8193 = vmul.f32 %v8191, %v230
    %v8194 = vadd.f32 %v8192, 1e-05
    %v8195 = vadd.f32 %v8193, 1e-05
    %v8196 = vrsqrt.pop %v8194
    %v8197 = vrsqrt.pop %v8195
    %v8198 = vmul.f32 %v8184, %v8196
    %v8199 = vmul.f32 %v8185, %v8197
    %v8201 = vlaneseq
    %v8202 = vshrl.u32 %v8201, 7
    %v8203 = vsub.s32 0, %v8202
    %v8204 = vrot.slane %v6932, %v8203
    %v8206 = vmul.f32 %v8198, %v8204
    %v8207 = vmul.f32 %v8199, %v8204
    %v8209 = vlaneseq
    %v8210 = vshrl.u32 %v8209, 7
    %v8211 = vsub.s32 0, %v8210
    %v8212 = vrot.slane %v6934, %v8211
    %v8214 = vadd.f32 %v8206, %v8212
    %v8215 = vadd.f32 %v8207, %v8212
    %s8216 = scalar_lea.vmem %s57, 64
    %v8217 = vld [vmem:[%s8216] sm:$0xf]
    %v8218 = vld [vmem:[%s8216 + $0x4] sm:$0xf]
    %v8219 = vld [vmem:[%s8216 + $0x8] sm:$0xf]
    %v8220 = vld [vmem:[%s8216 + $0xc] sm:$0xf]
    %v8221 = vld [vmem:[%s8216 + $0x10] sm:$0xf]
    %v8222 = vld [vmem:[%s8216 + $0x14] sm:$0xf]
    %v8223 = vld [vmem:[%s8216 + $0x18] sm:$0xf]
    %v8224 = vld [vmem:[%s8216 + $0x1c] sm:$0xf]
    %v8225 = vld [vmem:[%s8216 + $0x20] sm:$0xf]
    %v8226 = vld [vmem:[%s8216 + $0x24] sm:$0xf]
    %v8227 = vld [vmem:[%s8216 + $0x28] sm:$0xf]
    %v8228 = vld [vmem:[%s8216 + $0x2c] sm:$0xf]
    %v8229 = vld [vmem:[%s8216 + $0x30] sm:$0xf]
    %v8230 = vld [vmem:[%s8216 + $0x34] sm:$0xf]
    %v8231 = vld [vmem:[%s8216 + $0x38] sm:$0xf]
    %v8232 = vld [vmem:[%s8216 + $0x3c] sm:$0xf]
    %s8233 = scalar_lea.vmem %s59, 1
    %v8234 = vld [vmem:[%s8233] sm:$0x1]
    %s8235 = scalar_lea.vmem %s61, 128
    %v8236 = vld [vmem:[%s8235] sm:$0xff]
    %v8237 = vld [vmem:[%s8235 + $0x8] sm:$0xff]
    %v8238 = vld [vmem:[%s8235 + $0x10] sm:$0xff]
    %v8239 = vld [vmem:[%s8235 + $0x18] sm:$0xff]
    %v8240 = vld [vmem:[%s8235 + $0x20] sm:$0xff]
    %v8241 = vld [vmem:[%s8235 + $0x28] sm:$0xff]
    %v8242 = vld [vmem:[%s8235 + $0x30] sm:$0xff]
    %v8243 = vld [vmem:[%s8235 + $0x38] sm:$0xff]
    %v8244 = vld [vmem:[%s8235 + $0x40] sm:$0xff]
    %v8245 = vld [vmem:[%s8235 + $0x48] sm:$0xff]
    %v8246 = vld [vmem:[%s8235 + $0x50] sm:$0xff]
    %v8247 = vld [vmem:[%s8235 + $0x58] sm:$0xff]
    %v8248 = vld [vmem:[%s8235 + $0x60] sm:$0xff]
    %v8249 = vld [vmem:[%s8235 + $0x68] sm:$0xff]
    %v8250 = vld [vmem:[%s8235 + $0x70] sm:$0xff]
    %v8251 = vld [vmem:[%s8235 + $0x78] sm:$0xff]
    %s8252 = scalar_lea.vmem %s63, 2
    %v8253 = vld [vmem:[%s8252] sm:$0x3]
    %s8254 = scalar_lea.vmem %s65, 64
    %v8255 = vld [vmem:[%s8254] sm:$0xf]
    %v8256 = vld [vmem:[%s8254 + $0x4] sm:$0xf]
    %v8257 = vld [vmem:[%s8254 + $0x8] sm:$0xf]
    %v8258 = vld [vmem:[%s8254 + $0xc] sm:$0xf]
    %v8259 = vld [vmem:[%s8254 + $0x10] sm:$0xf]
    %v8260 = vld [vmem:[%s8254 + $0x14] sm:$0xf]
    %v8261 = vld [vmem:[%s8254 + $0x18] sm:$0xf]
    %v8262 = vld [vmem:[%s8254 + $0x1c] sm:$0xf]
    %v8263 = vld [vmem:[%s8254 + $0x20] sm:$0xf]
    %v8264 = vld [vmem:[%s8254 + $0x24] sm:$0xf]
    %v8265 = vld [vmem:[%s8254 + $0x28] sm:$0xf]
    %v8266 = vld [vmem:[%s8254 + $0x2c] sm:$0xf]
    %v8267 = vld [vmem:[%s8254 + $0x30] sm:$0xf]
    %v8268 = vld [vmem:[%s8254 + $0x34] sm:$0xf]
    %v8269 = vld [vmem:[%s8254 + $0x38] sm:$0xf]
    %v8270 = vld [vmem:[%s8254 + $0x3c] sm:$0xf]
    %s8271 = scalar_lea.vmem %s67, 1
    %v8272 = vld [vmem:[%s8271] sm:$0x1]
    %s8273 = scalar_lea.vmem %s69, 1
    %v8274 = vld [vmem:[%s8273] sm:$0x1]
    %s8275 = scalar_lea.vmem %s71, 1
    %v8276 = vld [vmem:[%s8275] sm:$0x1]
    %v8277 = vpack.c.bf16 %v8215, %v8214
    %v8279 = vlaneseq
    %v8280 = vshrl.u32 %v8279, 7
    %v8281 = vsub.s32 0, %v8280
    %v8282 = vrot.slane %v8234, %v8281
    %v8300 = vunpack.c.l.b16 %v8217
    %v8301 = vunpack.c.l.b16 %v8218
    %v8302 = vunpack.c.l.b16 %v8219
    %v8303 = vunpack.c.l.b16 %v8220
    %v8304 = vunpack.c.l.b16 %v8221
    %v8305 = vunpack.c.l.b16 %v8222
    %v8306 = vunpack.c.l.b16 %v8223
    %v8307 = vunpack.c.l.b16 %v8224
    %v8308 = vunpack.c.l.b16 %v8225
    %v8309 = vunpack.c.l.b16 %v8226
    %v8310 = vunpack.c.l.b16 %v8227
    %v8311 = vunpack.c.l.b16 %v8228
    %v8312 = vunpack.c.l.b16 %v8229
    %v8313 = vunpack.c.l.b16 %v8230
    %v8314 = vunpack.c.l.b16 %v8231
    %v8315 = vunpack.c.l.b16 %v8232
    %v8316 = vpack.c.b16 %v8301, %v8300
    %v8317 = vpack.c.b16 %v8303, %v8302
    %v8318 = vpack.c.b16 %v8305, %v8304
    %v8319 = vpack.c.b16 %v8307, %v8306
    %v8320 = vpack.c.b16 %v8309, %v8308
    %v8321 = vpack.c.b16 %v8311, %v8310
    %v8322 = vpack.c.b16 %v8313, %v8312
    %v8323 = vpack.c.b16 %v8315, %v8314
    %8332 = vmatprep.subr.bf16.mxu0 0
    %8333 = vmatpush1.bf16.msra.mxu0 %v8316
    %8334 = vmatprep.subr.bf16.mxu0 0
    %8335 = vmatpush1.bf16.msra.mxu0 %v8317
    %8336 = vmatprep.subr.bf16.mxu0 0
    %8337 = vmatpush1.bf16.msra.mxu0 %v8318
    %8338 = vmatprep.subr.bf16.mxu0 0
    %8339 = vmatpush1.bf16.msra.mxu0 %v8319
    %8340 = vmatprep.subr.bf16.mxu0 0
    %8341 = vmatpush1.bf16.msra.mxu0 %v8320
    %8342 = vmatprep.subr.bf16.mxu0 0
    %8343 = vmatpush1.bf16.msra.mxu0 %v8321
    %8344 = vmatprep.subr.bf16.mxu0 0
    %8345 = vmatpush1.bf16.msra.mxu0 %v8322
    %8346 = vmatprep.subr.bf16.mxu0 0
    %8347 = vmatpush1.bf16.msra.mxu0 %v8323
    %8348 = vmatprep.subr.bf16.mxu0 0
    %8349 = vmatpush1.bf16.msra.mxu0 0
    %8350 = vmatprep.subr.bf16.mxu0 0
    %8351 = vmatpush1.bf16.msra.mxu0 0
    %8352 = vmatprep.subr.bf16.mxu0 0
    %8353 = vmatpush1.bf16.msra.mxu0 0
    %8354 = vmatprep.subr.bf16.mxu0 0
    %8355 = vmatpush1.bf16.msra.mxu0 0
    %8356 = vmatprep.subr.bf16.mxu0 0
    %8357 = vmatpush1.bf16.msra.mxu0 0
    %8358 = vmatprep.subr.bf16.mxu0 0
    %8359 = vmatpush1.bf16.msra.mxu0 0
    %8360 = vmatprep.subr.bf16.mxu0 0
    %8361 = vmatpush1.bf16.msra.mxu0 0
    %8362 = vmatprep.subr.bf16.mxu0 0
    %8363 = vmatpush1.bf16.msra.mxu0 0
    %8364 = vmatprep.mubr.bf16.mxu0 0
    %8365 = vmatmul.mubr.bf16.gmra.mrb[0].mxu0 %v8277
    %v8366 = vpop.f32.mrb[0].mxu0
    %v8367 = vadd.f32 %v8282, %v8366
    %v8368 = vpop.f32.mrb[0].mxu0
    %v8369 = vpop.f32.mrb[0].mxu0
    %v8370 = vadd.f32 %v8282, %v8369
    %v8371 = vpop.f32.mrb[0].mxu0
    %8372 = vdwg.mxu0
    %v8374 = vlaneseq
    %v8375 = vshrl.u32 %v8374, 7
    %v8376 = vsub.s32 0, %v8375
    %v8377 = vrot.slane %v8253, %v8376
    %v8378 = vlaneseq
    %v8379 = vshrl.u32 %v8378, 7
    %v8380 = vsub.s32 1, %v8379
    %v8381 = vrot.slane %v8253, %v8380
    %v8400 = vunpack.c.l.b16 %v8236
    %v8401 = vunpack.c.h.b16 %v8236
    %v8402 = vunpack.c.l.b16 %v8237
    %v8403 = vunpack.c.h.b16 %v8237
    %v8404 = vunpack.c.l.b16 %v8238
    %v8405 = vunpack.c.h.b16 %v8238
    %v8406 = vunpack.c.l.b16 %v8239
    %v8407 = vunpack.c.h.b16 %v8239
    %v8408 = vunpack.c.l.b16 %v8240
    %v8409 = vunpack.c.h.b16 %v8240
    %v8410 = vunpack.c.l.b16 %v8241
    %v8411 = vunpack.c.h.b16 %v8241
    %v8412 = vunpack.c.l.b16 %v8242
    %v8413 = vunpack.c.h.b16 %v8242
    %v8414 = vunpack.c.l.b16 %v8243
    %v8415 = vunpack.c.h.b16 %v8243
    %v8416 = vunpack.c.l.b16 %v8244
    %v8417 = vunpack.c.h.b16 %v8244
    %v8418 = vunpack.c.l.b16 %v8245
    %v8419 = vunpack.c.h.b16 %v8245
    %v8420 = vunpack.c.l.b16 %v8246
    %v8421 = vunpack.c.h.b16 %v8246
    %v8422 = vunpack.c.l.b16 %v8247
    %v8423 = vunpack.c.h.b16 %v8247
    %v8424 = vunpack.c.l.b16 %v8248
    %v8425 = vunpack.c.h.b16 %v8248
    %v8426 = vunpack.c.l.b16 %v8249
    %v8427 = vunpack.c.h.b16 %v8249
    %v8428 = vunpack.c.l.b16 %v8250
    %v8429 = vunpack.c.h.b16 %v8250
    %v8430 = vunpack.c.l.b16 %v8251
    %v8431 = vunpack.c.h.b16 %v8251
    %v8432 = vpack.c.b16 %v8402, %v8400
    %v8433 = vpack.c.b16 %v8403, %v8401
    %v8434 = vpack.c.b16 %v8406, %v8404
    %v8435 = vpack.c.b16 %v8407, %v8405
    %v8436 = vpack.c.b16 %v8410, %v8408
    %v8437 = vpack.c.b16 %v8411, %v8409
    %v8438 = vpack.c.b16 %v8414, %v8412
    %v8439 = vpack.c.b16 %v8415, %v8413
    %v8440 = vpack.c.b16 %v8418, %v8416
    %v8441 = vpack.c.b16 %v8419, %v8417
    %v8442 = vpack.c.b16 %v8422, %v8420
    %v8443 = vpack.c.b16 %v8423, %v8421
    %v8444 = vpack.c.b16 %v8426, %v8424
    %v8445 = vpack.c.b16 %v8427, %v8425
    %v8446 = vpack.c.b16 %v8430, %v8428
    %v8447 = vpack.c.b16 %v8431, %v8429
    %8464 = vmatprep.subr.bf16.mxu0 %v8433
    %8465 = vmatpush1.bf16.msra.mxu0 %v8432
    %8466 = vmatprep.subr.bf16.mxu0 %v8435
    %8467 = vmatpush1.bf16.msra.mxu0 %v8434
    %8468 = vmatprep.subr.bf16.mxu0 %v8437
    %8469 = vmatpush1.bf16.msra.mxu0 %v8436
    %8470 = vmatprep.subr.bf16.mxu0 %v8439
    %8471 = vmatpush1.bf16.msra.mxu0 %v8438
    %8472 = vmatprep.subr.bf16.mxu0 %v8441
    %8473 = vmatpush1.bf16.msra.mxu0 %v8440
    %8474 = vmatprep.subr.bf16.mxu0 %v8443
    %8475 = vmatpush1.bf16.msra.mxu0 %v8442
    %8476 = vmatprep.subr.bf16.mxu0 %v8445
    %8477 = vmatpush1.bf16.msra.mxu0 %v8444
    %8478 = vmatprep.subr.bf16.mxu0 %v8447
    %8479 = vmatpush1.bf16.msra.mxu0 %v8446
    %8480 = vmatprep.subr.bf16.mxu0 0
    %8481 = vmatpush1.bf16.msra.mxu0 0
    %8482 = vmatprep.subr.bf16.mxu0 0
    %8483 = vmatpush1.bf16.msra.mxu0 0
    %8484 = vmatprep.subr.bf16.mxu0 0
    %8485 = vmatpush1.bf16.msra.mxu0 0
    %8486 = vmatprep.subr.bf16.mxu0 0
    %8487 = vmatpush1.bf16.msra.mxu0 0
    %8488 = vmatprep.subr.bf16.mxu0 0
    %8489 = vmatpush1.bf16.msra.mxu0 0
    %8490 = vmatprep.subr.bf16.mxu0 0
    %8491 = vmatpush1.bf16.msra.mxu0 0
    %8492 = vmatprep.subr.bf16.mxu0 0
    %8493 = vmatpush1.bf16.msra.mxu0 0
    %8494 = vmatprep.subr.bf16.mxu0 0
    %8495 = vmatpush1.bf16.msra.mxu0 0
    %8496 = vmatprep.mubr.bf16.mxu0 0
    %8497 = vmatmul.mubr.bf16.gmra.mrb[0].mxu0 %v3760
    %v8498 = vpop.f32.mrb[0].mxu0
    %v8499 = vadd.f32 %v8377, %v8498
    %v8500 = vpop.f32.mrb[0].mxu0
    %v8501 = vadd.f32 %v8381, %v8500
    %v8502 = vpop.f32.mrb[0].mxu0
    %v8503 = vadd.f32 %v8377, %v8502
    %v8504 = vpop.f32.mrb[0].mxu0
    %v8505 = vadd.f32 %v8381, %v8504
    %8506 = vdwg.mxu0
    %v8507 = vpack.c.bf16 %v8370, %v8367
    %v8508 = vpack.c.bf16 %v8503, %v8499
    %v8509 = vpack.c.bf16 %v8505, %v8501
    %v8511 = vunpack.c.l.b16 %v8507
    %v8512 = vunpack.c.h.b16 %v8507
    %v8513 = vpack.c.b16 %v8511, %v8511
    %v8514 = vpack.c.b16 %v8512, %v8512
    %v8516 = vunpack.c.l.b16 %v8508
    %v8517 = vunpack.c.h.b16 %v8508
    %v8518 = vpack.c.b16 %v8516, %v8516
    %v8519 = vpack.c.b16 %v8517, %v8517
    %v8521 = vunpack.c.l.b16 %v8509
    %v8522 = vunpack.c.h.b16 %v8509
    %v8523 = vpack.c.b16 %v8521, %v8521
    %v8524 = vpack.c.b16 %v8522, %v8522
    %v8526 = vsel %vm576, %v8513, 0
    %v8529 = vsel %vm576, %v8518, 0
    %8531 = vmatprep.subr.bf16.mxu0 0
    %8532 = vmatpush1.bf16.xpose.msra.mxu0 %v8529
    %8533 = vmatprep.subr.bf16.mxu0 0
    %8534 = vmatpush1.bf16.xpose.msra.mxu0 0
    %8535 = vmatprep.subr.bf16.mxu0 0
    %8536 = vmatpush1.bf16.xpose.msra.mxu0 0
    %8537 = vmatprep.subr.bf16.mxu0 0
    %8538 = vmatpush1.bf16.xpose.msra.mxu0 0
    %8539 = vmatprep.subr.bf16.mxu0 0
    %8540 = vmatpush1.bf16.xpose.msra.mxu0 0
    %8541 = vmatprep.subr.bf16.mxu0 0
    %8542 = vmatpush1.bf16.xpose.msra.mxu0 0
    %8543 = vmatprep.subr.bf16.mxu0 0
    %8544 = vmatpush1.bf16.xpose.msra.mxu0 0
    %8545 = vmatprep.subr.bf16.mxu0 0
    %8546 = vmatpush1.bf16.xpose.msra.mxu0 0
    %8547 = vmatprep.subr.bf16.mxu0 0
    %8548 = vmatpush1.bf16.xpose.msra.mxu0 0
    %8549 = vmatprep.subr.bf16.mxu0 0
    %8550 = vmatpush1.bf16.xpose.msra.mxu0 0
    %8551 = vmatprep.subr.bf16.mxu0 0
    %8552 = vmatpush1.bf16.xpose.msra.mxu0 0
    %8553 = vmatprep.subr.bf16.mxu0 0
    %8554 = vmatpush1.bf16.xpose.msra.mxu0 0
    %8555 = vmatprep.subr.bf16.mxu0 0
    %8556 = vmatpush1.bf16.xpose.msra.mxu0 0
    %8557 = vmatprep.subr.bf16.mxu0 0
    %8558 = vmatpush1.bf16.xpose.msra.mxu0 0
    %8559 = vmatprep.subr.bf16.mxu0 0
    %8560 = vmatpush1.bf16.xpose.msra.mxu0 0
    %8561 = vmatprep.subr.bf16.mxu0 0
    %8562 = vmatpush1.bf16.xpose.msra.mxu0 0
    %8563 = vmatprep.mubr.bf16.mxu0 0
    %8564 = vmatmul.mubr.bf16.gmra.mrb[0].mxu0 %v8526
    %v8565 = vpop.f32.mrb[0].mxu0
    %v8566 = vadd.f32 %v569, %v8565
    %v8567 = vpop.f32.mrb[0].mxu0
    %v8568 = vpop.f32.mrb[0].mxu0
    %v8569 = vpop.f32.mrb[0].mxu0
    %8570 = vdwg.mxu0
    %v8572 = vsel %vm576, %v8514, 0
    %v8575 = vsel %vm576, %v8519, 0
    %8577 = vmatprep.subr.bf16.mxu0 0
    %8578 = vmatpush1.bf16.xpose.msra.mxu0 %v8575
    %8579 = vmatprep.subr.bf16.mxu0 0
    %8580 = vmatpush1.bf16.xpose.msra.mxu0 0
    %8581 = vmatprep.subr.bf16.mxu0 0
    %8582 = vmatpush1.bf16.xpose.msra.mxu0 0
    %8583 = vmatprep.subr.bf16.mxu0 0
    %8584 = vmatpush1.bf16.xpose.msra.mxu0 0
    %8585 = vmatprep.subr.bf16.mxu0 0
    %8586 = vmatpush1.bf16.xpose.msra.mxu0 0
    %8587 = vmatprep.subr.bf16.mxu0 0
    %8588 = vmatpush1.bf16.xpose.msra.mxu0 0
    %8589 = vmatprep.subr.bf16.mxu0 0
    %8590 = vmatpush1.bf16.xpose.msra.mxu0 0
    %8591 = vmatprep.subr.bf16.mxu0 0
    %8592 = vmatpush1.bf16.xpose.msra.mxu0 0
    %8593 = vmatprep.subr.bf16.mxu0 0
    %8594 = vmatpush1.bf16.xpose.msra.mxu0 0
    %8595 = vmatprep.subr.bf16.mxu0 0
    %8596 = vmatpush1.bf16.xpose.msra.mxu0 0
    %8597 = vmatprep.subr.bf16.mxu0 0
    %8598 = vmatpush1.bf16.xpose.msra.mxu0 0
    %8599 = vmatprep.subr.bf16.mxu0 0
    %8600 = vmatpush1.bf16.xpose.msra.mxu0 0
    %8601 = vmatprep.subr.bf16.mxu0 0
    %8602 = vmatpush1.bf16.xpose.msra.mxu0 0
    %8603 = vmatprep.subr.bf16.mxu0 0
    %8604 = vmatpush1.bf16.xpose.msra.mxu0 0
    %8605 = vmatprep.subr.bf16.mxu0 0
    %8606 = vmatpush1.bf16.xpose.msra.mxu0 0
    %8607 = vmatprep.subr.bf16.mxu0 0
    %8608 = vmatpush1.bf16.xpose.msra.mxu0 0
    %8609 = vmatprep.mubr.bf16.mxu0 0
    %8610 = vmatmul.mubr.bf16.gmra.mrb[0].mxu0 %v8572
    %v8611 = vpop.f32.mrb[0].mxu0
    %v8612 = vadd.f32 %v573, %v8611
    %v8613 = vpop.f32.mrb[0].mxu0
    %v8614 = vpop.f32.mrb[0].mxu0
    %v8615 = vpop.f32.mrb[0].mxu0
    %8616 = vdwg.mxu0
    %v8617 = vsel %vm669, %v8566, -inf
    %8618 = vmax.xlane.f32.xlu0 %v8617
    %v8619 = vpop.xlane.xlu0 %8618
    %v8620 = vsel %vm669, %v8612, -inf
    %8621 = vmax.xlane.f32.xlu0 %v8620
    %v8622 = vpop.xlane.xlu0 %8621
    %v8623 = vsub.f32 %v8566, %v8619
    %v8624 = vsub.f32 %v8612, %v8622
    %v8625 = vmul.f32 %v8623, 1.442695
    %v8626 = vpow.pop %v8625
    %v8627 = vmul.f32 %v8624, 1.442695
    %v8628 = vpow.pop %v8627
    %v8629 = vsel %vm669, %v8626, 0.0
    %8630 = vadd.xlane.f32.xlu0 %v8629
    %v8631 = vpop.xlane.xlu0 %8630
    %v8632 = vsel %vm669, %v8628, 0.0
    %8633 = vadd.xlane.f32.xlu0 %v8632
    %v8634 = vpop.xlane.xlu0 %8633
    %v8635 = vrcp.pop %v8631
    %v8636 = vrcp.pop %v8634
    %v8637 = vmul.f32 %v8626, %v8635
    %v8638 = vmul.f32 %v8628, %v8636
    %v8639 = vpack.c.bf16 %v8637, %v8637
    %v8640 = vpack.c.bf16 %v8638, %v8638
    %v8642 = vsel %vm669, %v8639, 0
    %v8645 = vsel %vm697, %v8523, 0
    %8647 = vmatprep.subr.bf16.mxu0 0
    %8648 = vmatpush1.bf16.msra.mxu0 %v8645
    %8649 = vmatprep.subr.bf16.mxu0 0
    %8650 = vmatpush1.bf16.msra.mxu0 0
    %8651 = vmatprep.subr.bf16.mxu0 0
    %8652 = vmatpush1.bf16.msra.mxu0 0
    %8653 = vmatprep.subr.bf16.mxu0 0
    %8654 = vmatpush1.bf16.msra.mxu0 0
    %8655 = vmatprep.subr.bf16.mxu0 0
    %8656 = vmatpush1.bf16.msra.mxu0 0
    %8657 = vmatprep.subr.bf16.mxu0 0
    %8658 = vmatpush1.bf16.msra.mxu0 0
    %8659 = vmatprep.subr.bf16.mxu0 0
    %8660 = vmatpush1.bf16.msra.mxu0 0
    %8661 = vmatprep.subr.bf16.mxu0 0
    %8662 = vmatpush1.bf16.msra.mxu0 0
    %8663 = vmatprep.subr.bf16.mxu0 0
    %8664 = vmatpush1.bf16.msra.mxu0 0
    %8665 = vmatprep.subr.bf16.mxu0 0
    %8666 = vmatpush1.bf16.msra.mxu0 0
    %8667 = vmatprep.subr.bf16.mxu0 0
    %8668 = vmatpush1.bf16.msra.mxu0 0
    %8669 = vmatprep.subr.bf16.mxu0 0
    %8670 = vmatpush1.bf16.msra.mxu0 0
    %8671 = vmatprep.subr.bf16.mxu0 0
    %8672 = vmatpush1.bf16.msra.mxu0 0
    %8673 = vmatprep.subr.bf16.mxu0 0
    %8674 = vmatpush1.bf16.msra.mxu0 0
    %8675 = vmatprep.subr.bf16.mxu0 0
    %8676 = vmatpush1.bf16.msra.mxu0 0
    %8677 = vmatprep.subr.bf16.mxu0 0
    %8678 = vmatpush1.bf16.msra.mxu0 0
    %8679 = vmatprep.mubr.bf16.mxu0 0
    %8680 = vmatmul.mubr.bf16.gmra.mrb[0].mxu0 %v8642
    %v8681 = vpop.f32.mrb[0].mxu0
    %v8682 = vadd.f32 0.0, %v8681
    %v8683 = vpop.f32.mrb[0].mxu0
    %v8684 = vpop.f32.mrb[0].mxu0
    %v8685 = vpop.f32.mrb[0].mxu0
    %8686 = vdwg.mxu0
    %v8688 = vsel %vm669, %v8640, 0
    %v8691 = vsel %vm697, %v8524, 0
    %8693 = vmatprep.subr.bf16.mxu0 0
    %8694 = vmatpush1.bf16.msra.mxu0 %v8691
    %8695 = vmatprep.subr.bf16.mxu0 0
    %8696 = vmatpush1.bf16.msra.mxu0 0
    %8697 = vmatprep.subr.bf16.mxu0 0
    %8698 = vmatpush1.bf16.msra.mxu0 0
    %8699 = vmatprep.subr.bf16.mxu0 0
    %8700 = vmatpush1.bf16.msra.mxu0 0
    %8701 = vmatprep.subr.bf16.mxu0 0
    %8702 = vmatpush1.bf16.msra.mxu0 0
    %8703 = vmatprep.subr.bf16.mxu0 0
    %8704 = vmatpush1.bf16.msra.mxu0 0
    %8705 = vmatprep.subr.bf16.mxu0 0
    %8706 = vmatpush1.bf16.msra.mxu0 0
    %8707 = vmatprep.subr.bf16.mxu0 0
    %8708 = vmatpush1.bf16.msra.mxu0 0
    %8709 = vmatprep.subr.bf16.mxu0 0
    %8710 = vmatpush1.bf16.msra.mxu0 0
    %8711 = vmatprep.subr.bf16.mxu0 0
    %8712 = vmatpush1.bf16.msra.mxu0 0
    %8713 = vmatprep.subr.bf16.mxu0 0
    %8714 = vmatpush1.bf16.msra.mxu0 0
    %8715 = vmatprep.subr.bf16.mxu0 0
    %8716 = vmatpush1.bf16.msra.mxu0 0
    %8717 = vmatprep.subr.bf16.mxu0 0
    %8718 = vmatpush1.bf16.msra.mxu0 0
    %8719 = vmatprep.subr.bf16.mxu0 0
    %8720 = vmatpush1.bf16.msra.mxu0 0
    %8721 = vmatprep.subr.bf16.mxu0 0
    %8722 = vmatpush1.bf16.msra.mxu0 0
    %8723 = vmatprep.subr.bf16.mxu0 0
    %8724 = vmatpush1.bf16.msra.mxu0 0
    %8725 = vmatprep.mubr.bf16.mxu0 0
    %8726 = vmatmul.mubr.bf16.gmra.mrb[0].mxu0 %v8688
    %v8727 = vpop.f32.mrb[0].mxu0
    %v8728 = vadd.f32 0.0, %v8727
    %v8729 = vpop.f32.mrb[0].mxu0
    %v8730 = vpop.f32.mrb[0].mxu0
    %v8731 = vpop.f32.mrb[0].mxu0
    %8732 = vdwg.mxu0
    %8733 = vrot.lane.b32.xlu0 %v8513, 96
    %v8734 = vpop.permute.xlu0 %8733
    %8735 = vrot.lane.b32.xlu0 %v8518, 96
    %v8736 = vpop.permute.xlu0 %8735
    %v8738 = vsel %vm576, %v8734, 0
    %v8741 = vsel %vm576, %v8736, 0
    %8743 = vmatprep.subr.bf16.mxu0 0
    %8744 = vmatpush1.bf16.xpose.msra.mxu0 %v8741
    %8745 = vmatprep.subr.bf16.mxu0 0
    %8746 = vmatpush1.bf16.xpose.msra.mxu0 0
    %8747 = vmatprep.subr.bf16.mxu0 0
    %8748 = vmatpush1.bf16.xpose.msra.mxu0 0
    %8749 = vmatprep.subr.bf16.mxu0 0
    %8750 = vmatpush1.bf16.xpose.msra.mxu0 0
    %8751 = vmatprep.subr.bf16.mxu0 0
    %8752 = vmatpush1.bf16.xpose.msra.mxu0 0
    %8753 = vmatprep.subr.bf16.mxu0 0
    %8754 = vmatpush1.bf16.xpose.msra.mxu0 0
    %8755 = vmatprep.subr.bf16.mxu0 0
    %8756 = vmatpush1.bf16.xpose.msra.mxu0 0
    %8757 = vmatprep.subr.bf16.mxu0 0
    %8758 = vmatpush1.bf16.xpose.msra.mxu0 0
    %8759 = vmatprep.subr.bf16.mxu0 0
    %8760 = vmatpush1.bf16.xpose.msra.mxu0 0
    %8761 = vmatprep.subr.bf16.mxu0 0
    %8762 = vmatpush1.bf16.xpose.msra.mxu0 0
    %8763 = vmatprep.subr.bf16.mxu0 0
    %8764 = vmatpush1.bf16.xpose.msra.mxu0 0
    %8765 = vmatprep.subr.bf16.mxu0 0
    %8766 = vmatpush1.bf16.xpose.msra.mxu0 0
    %8767 = vmatprep.subr.bf16.mxu0 0
    %8768 = vmatpush1.bf16.xpose.msra.mxu0 0
    %8769 = vmatprep.subr.bf16.mxu0 0
    %8770 = vmatpush1.bf16.xpose.msra.mxu0 0
    %8771 = vmatprep.subr.bf16.mxu0 0
    %8772 = vmatpush1.bf16.xpose.msra.mxu0 0
    %8773 = vmatprep.subr.bf16.mxu0 0
    %8774 = vmatpush1.bf16.xpose.msra.mxu0 0
    %8775 = vmatprep.mubr.bf16.mxu0 0
    %8776 = vmatmul.mubr.bf16.gmra.mrb[0].mxu0 %v8738
    %v8777 = vpop.f32.mrb[0].mxu0
    %v8778 = vadd.f32 %v569, %v8777
    %v8779 = vpop.f32.mrb[0].mxu0
    %v8780 = vpop.f32.mrb[0].mxu0
    %v8781 = vpop.f32.mrb[0].mxu0
    %8782 = vdwg.mxu0
    %8783 = vrot.lane.b32.xlu0 %v8514, 96
    %v8784 = vpop.permute.xlu0 %8783
    %8785 = vrot.lane.b32.xlu0 %v8519, 96
    %v8786 = vpop.permute.xlu0 %8785
    %v8788 = vsel %vm576, %v8784, 0
    %v8791 = vsel %vm576, %v8786, 0
    %8793 = vmatprep.subr.bf16.mxu0 0
    %8794 = vmatpush1.bf16.xpose.msra.mxu0 %v8791
    %8795 = vmatprep.subr.bf16.mxu0 0
    %8796 = vmatpush1.bf16.xpose.msra.mxu0 0
    %8797 = vmatprep.subr.bf16.mxu0 0
    %8798 = vmatpush1.bf16.xpose.msra.mxu0 0
    %8799 = vmatprep.subr.bf16.mxu0 0
    %8800 = vmatpush1.bf16.xpose.msra.mxu0 0
    %8801 = vmatprep.subr.bf16.mxu0 0
    %8802 = vmatpush1.bf16.xpose.msra.mxu0 0
    %8803 = vmatprep.subr.bf16.mxu0 0
    %8804 = vmatpush1.bf16.xpose.msra.mxu0 0
    %8805 = vmatprep.subr.bf16.mxu0 0
    %8806 = vmatpush1.bf16.xpose.msra.mxu0 0
    %8807 = vmatprep.subr.bf16.mxu0 0
    %8808 = vmatpush1.bf16.xpose.msra.mxu0 0
    %8809 = vmatprep.subr.bf16.mxu0 0
    %8810 = vmatpush1.bf16.xpose.msra.mxu0 0
    %8811 = vmatprep.subr.bf16.mxu0 0
    %8812 = vmatpush1.bf16.xpose.msra.mxu0 0
    %8813 = vmatprep.subr.bf16.mxu0 0
    %8814 = vmatpush1.bf16.xpose.msra.mxu0 0
    %8815 = vmatprep.subr.bf16.mxu0 0
    %8816 = vmatpush1.bf16.xpose.msra.mxu0 0
    %8817 = vmatprep.subr.bf16.mxu0 0
    %8818 = vmatpush1.bf16.xpose.msra.mxu0 0
    %8819 = vmatprep.subr.bf16.mxu0 0
    %8820 = vmatpush1.bf16.xpose.msra.mxu0 0
    %8821 = vmatprep.subr.bf16.mxu0 0
    %8822 = vmatpush1.bf16.xpose.msra.mxu0 0
    %8823 = vmatprep.subr.bf16.mxu0 0
    %8824 = vmatpush1.bf16.xpose.msra.mxu0 0
    %8825 = vmatprep.mubr.bf16.mxu0 0
    %8826 = vmatmul.mubr.bf16.gmra.mrb[0].mxu0 %v8788
    %v8827 = vpop.f32.mrb[0].mxu0
    %v8828 = vadd.f32 %v573, %v8827
    %v8829 = vpop.f32.mrb[0].mxu0
    %v8830 = vpop.f32.mrb[0].mxu0
    %v8831 = vpop.f32.mrb[0].mxu0
    %8832 = vdwg.mxu0
    %v8833 = vsel %vm669, %v8778, -inf
    %8834 = vmax.xlane.f32.xlu0 %v8833
    %v8835 = vpop.xlane.xlu0 %8834
    %v8836 = vsel %vm669, %v8828, -inf
    %8837 = vmax.xlane.f32.xlu0 %v8836
    %v8838 = vpop.xlane.xlu0 %8837
    %v8839 = vsub.f32 %v8778, %v8835
    %v8840 = vsub.f32 %v8828, %v8838
    %v8841 = vmul.f32 %v8839, 1.442695
    %v8842 = vpow.pop %v8841
    %v8843 = vmul.f32 %v8840, 1.442695
    %v8844 = vpow.pop %v8843
    %v8845 = vsel %vm669, %v8842, 0.0
    %8846 = vadd.xlane.f32.xlu0 %v8845
    %v8847 = vpop.xlane.xlu0 %8846
    %v8848 = vsel %vm669, %v8844, 0.0
    %8849 = vadd.xlane.f32.xlu0 %v8848
    %v8850 = vpop.xlane.xlu0 %8849
    %v8851 = vrcp.pop %v8847
    %v8852 = vrcp.pop %v8850
    %v8853 = vmul.f32 %v8842, %v8851
    %v8854 = vmul.f32 %v8844, %v8852
    %v8855 = vpack.c.bf16 %v8853, %v8853
    %v8856 = vpack.c.bf16 %v8854, %v8854
    %8857 = vrot.lane.b32.xlu0 %v8523, 96
    %v8858 = vpop.permute.xlu0 %8857
    %v8860 = vsel %vm669, %v8855, 0
    %v8863 = vsel %vm697, %v8858, 0
    %8865 = vmatprep.subr.bf16.mxu0 0
    %8866 = vmatpush1.bf16.msra.mxu0 %v8863
    %8867 = vmatprep.subr.bf16.mxu0 0
    %8868 = vmatpush1.bf16.msra.mxu0 0
    %8869 = vmatprep.subr.bf16.mxu0 0
    %8870 = vmatpush1.bf16.msra.mxu0 0
    %8871 = vmatprep.subr.bf16.mxu0 0
    %8872 = vmatpush1.bf16.msra.mxu0 0
    %8873 = vmatprep.subr.bf16.mxu0 0
    %8874 = vmatpush1.bf16.msra.mxu0 0
    %8875 = vmatprep.subr.bf16.mxu0 0
    %8876 = vmatpush1.bf16.msra.mxu0 0
    %8877 = vmatprep.subr.bf16.mxu0 0
    %8878 = vmatpush1.bf16.msra.mxu0 0
    %8879 = vmatprep.subr.bf16.mxu0 0
    %8880 = vmatpush1.bf16.msra.mxu0 0
    %8881 = vmatprep.subr.bf16.mxu0 0
    %8882 = vmatpush1.bf16.msra.mxu0 0
    %8883 = vmatprep.subr.bf16.mxu0 0
    %8884 = vmatpush1.bf16.msra.mxu0 0
    %8885 = vmatprep.subr.bf16.mxu0 0
    %8886 = vmatpush1.bf16.msra.mxu0 0
    %8887 = vmatprep.subr.bf16.mxu0 0
    %8888 = vmatpush1.bf16.msra.mxu0 0
    %8889 = vmatprep.subr.bf16.mxu0 0
    %8890 = vmatpush1.bf16.msra.mxu0 0
    %8891 = vmatprep.subr.bf16.mxu0 0
    %8892 = vmatpush1.bf16.msra.mxu0 0
    %8893 = vmatprep.subr.bf16.mxu0 0
    %8894 = vmatpush1.bf16.msra.mxu0 0
    %8895 = vmatprep.subr.bf16.mxu0 0
    %8896 = vmatpush1.bf16.msra.mxu0 0
    %8897 = vmatprep.mubr.bf16.mxu0 0
    %8898 = vmatmul.mubr.bf16.gmra.mrb[0].mxu0 %v8860
    %v8899 = vpop.f32.mrb[0].mxu0
    %v8900 = vadd.f32 0.0, %v8899
    %v8901 = vpop.f32.mrb[0].mxu0
    %v8902 = vpop.f32.mrb[0].mxu0
    %v8903 = vpop.f32.mrb[0].mxu0
    %8904 = vdwg.mxu0
    %8905 = vrot.lane.b32.xlu0 %v8524, 96
    %v8906 = vpop.permute.xlu0 %8905
    %v8908 = vsel %vm669, %v8856, 0
    %v8911 = vsel %vm697, %v8906, 0
    %8913 = vmatprep.subr.bf16.mxu0 0
    %8914 = vmatpush1.bf16.msra.mxu0 %v8911
    %8915 = vmatprep.subr.bf16.mxu0 0
    %8916 = vmatpush1.bf16.msra.mxu0 0
    %8917 = vmatprep.subr.bf16.mxu0 0
    %8918 = vmatpush1.bf16.msra.mxu0 0
    %8919 = vmatprep.subr.bf16.mxu0 0
    %8920 = vmatpush1.bf16.msra.mxu0 0
    %8921 = vmatprep.subr.bf16.mxu0 0
    %8922 = vmatpush1.bf16.msra.mxu0 0
    %8923 = vmatprep.subr.bf16.mxu0 0
    %8924 = vmatpush1.bf16.msra.mxu0 0
    %8925 = vmatprep.subr.bf16.mxu0 0
    %8926 = vmatpush1.bf16.msra.mxu0 0
    %8927 = vmatprep.subr.bf16.mxu0 0
    %8928 = vmatpush1.bf16.msra.mxu0 0
    %8929 = vmatprep.subr.bf16.mxu0 0
    %8930 = vmatpush1.bf16.msra.mxu0 0
    %8931 = vmatprep.subr.bf16.mxu0 0
    %8932 = vmatpush1.bf16.msra.mxu0 0
    %8933 = vmatprep.subr.bf16.mxu0 0
    %8934 = vmatpush1.bf16.msra.mxu0 0
    %8935 = vmatprep.subr.bf16.mxu0 0
    %8936 = vmatpush1.bf16.msra.mxu0 0
    %8937 = vmatprep.subr.bf16.mxu0 0
    %8938 = vmatpush1.bf16.msra.mxu0 0
    %8939 = vmatprep.subr.bf16.mxu0 0
    %8940 = vmatpush1.bf16.msra.mxu0 0
    %8941 = vmatprep.subr.bf16.mxu0 0
    %8942 = vmatpush1.bf16.msra.mxu0 0
    %8943 = vmatprep.subr.bf16.mxu0 0
    %8944 = vmatpush1.bf16.msra.mxu0 0
    %8945 = vmatprep.mubr.bf16.mxu0 0
    %8946 = vmatmul.mubr.bf16.gmra.mrb[0].mxu0 %v8908
    %v8947 = vpop.f32.mrb[0].mxu0
    %v8948 = vadd.f32 0.0, %v8947
    %v8949 = vpop.f32.mrb[0].mxu0
    %v8950 = vpop.f32.mrb[0].mxu0
    %v8951 = vpop.f32.mrb[0].mxu0
    %8952 = vdwg.mxu0
    %8953 = vrot.lane.b32.xlu0 %v8513, 64
    %v8954 = vpop.permute.xlu0 %8953
    %8955 = vrot.lane.b32.xlu0 %v8518, 64
    %v8956 = vpop.permute.xlu0 %8955
    %v8958 = vsel %vm576, %v8954, 0
    %v8961 = vsel %vm576, %v8956, 0
    %8963 = vmatprep.subr.bf16.mxu0 0
    %8964 = vmatpush1.bf16.xpose.msra.mxu0 %v8961
    %8965 = vmatprep.subr.bf16.mxu0 0
    %8966 = vmatpush1.bf16.xpose.msra.mxu0 0
    %8967 = vmatprep.subr.bf16.mxu0 0
    %8968 = vmatpush1.bf16.xpose.msra.mxu0 0
    %8969 = vmatprep.subr.bf16.mxu0 0
    %8970 = vmatpush1.bf16.xpose.msra.mxu0 0
    %8971 = vmatprep.subr.bf16.mxu0 0
    %8972 = vmatpush1.bf16.xpose.msra.mxu0 0
    %8973 = vmatprep.subr.bf16.mxu0 0
    %8974 = vmatpush1.bf16.xpose.msra.mxu0 0
    %8975 = vmatprep.subr.bf16.mxu0 0
    %8976 = vmatpush1.bf16.xpose.msra.mxu0 0
    %8977 = vmatprep.subr.bf16.mxu0 0
    %8978 = vmatpush1.bf16.xpose.msra.mxu0 0
    %8979 = vmatprep.subr.bf16.mxu0 0
    %8980 = vmatpush1.bf16.xpose.msra.mxu0 0
    %8981 = vmatprep.subr.bf16.mxu0 0
    %8982 = vmatpush1.bf16.xpose.msra.mxu0 0
    %8983 = vmatprep.subr.bf16.mxu0 0
    %8984 = vmatpush1.bf16.xpose.msra.mxu0 0
    %8985 = vmatprep.subr.bf16.mxu0 0
    %8986 = vmatpush1.bf16.xpose.msra.mxu0 0
    %8987 = vmatprep.subr.bf16.mxu0 0
    %8988 = vmatpush1.bf16.xpose.msra.mxu0 0
    %8989 = vmatprep.subr.bf16.mxu0 0
    %8990 = vmatpush1.bf16.xpose.msra.mxu0 0
    %8991 = vmatprep.subr.bf16.mxu0 0
    %8992 = vmatpush1.bf16.xpose.msra.mxu0 0
    %8993 = vmatprep.subr.bf16.mxu0 0
    %8994 = vmatpush1.bf16.xpose.msra.mxu0 0
    %8995 = vmatprep.mubr.bf16.mxu0 0
    %8996 = vmatmul.mubr.bf16.gmra.mrb[0].mxu0 %v8958
    %v8997 = vpop.f32.mrb[0].mxu0
    %v8998 = vadd.f32 %v569, %v8997
    %v8999 = vpop.f32.mrb[0].mxu0
    %v9000 = vpop.f32.mrb[0].mxu0
    %v9001 = vpop.f32.mrb[0].mxu0
    %9002 = vdwg.mxu0
    %9003 = vrot.lane.b32.xlu0 %v8514, 64
    %v9004 = vpop.permute.xlu0 %9003
    %9005 = vrot.lane.b32.xlu0 %v8519, 64
    %v9006 = vpop.permute.xlu0 %9005
    %v9008 = vsel %vm576, %v9004, 0
    %v9011 = vsel %vm576, %v9006, 0
    %9013 = vmatprep.subr.bf16.mxu0 0
    %9014 = vmatpush1.bf16.xpose.msra.mxu0 %v9011
    %9015 = vmatprep.subr.bf16.mxu0 0
    %9016 = vmatpush1.bf16.xpose.msra.mxu0 0
    %9017 = vmatprep.subr.bf16.mxu0 0
    %9018 = vmatpush1.bf16.xpose.msra.mxu0 0
    %9019 = vmatprep.subr.bf16.mxu0 0
    %9020 = vmatpush1.bf16.xpose.msra.mxu0 0
    %9021 = vmatprep.subr.bf16.mxu0 0
    %9022 = vmatpush1.bf16.xpose.msra.mxu0 0
    %9023 = vmatprep.subr.bf16.mxu0 0
    %9024 = vmatpush1.bf16.xpose.msra.mxu0 0
    %9025 = vmatprep.subr.bf16.mxu0 0
    %9026 = vmatpush1.bf16.xpose.msra.mxu0 0
    %9027 = vmatprep.subr.bf16.mxu0 0
    %9028 = vmatpush1.bf16.xpose.msra.mxu0 0
    %9029 = vmatprep.subr.bf16.mxu0 0
    %9030 = vmatpush1.bf16.xpose.msra.mxu0 0
    %9031 = vmatprep.subr.bf16.mxu0 0
    %9032 = vmatpush1.bf16.xpose.msra.mxu0 0
    %9033 = vmatprep.subr.bf16.mxu0 0
    %9034 = vmatpush1.bf16.xpose.msra.mxu0 0
    %9035 = vmatprep.subr.bf16.mxu0 0
    %9036 = vmatpush1.bf16.xpose.msra.mxu0 0
    %9037 = vmatprep.subr.bf16.mxu0 0
    %9038 = vmatpush1.bf16.xpose.msra.mxu0 0
    %9039 = vmatprep.subr.bf16.mxu0 0
    %9040 = vmatpush1.bf16.xpose.msra.mxu0 0
    %9041 = vmatprep.subr.bf16.mxu0 0
    %9042 = vmatpush1.bf16.xpose.msra.mxu0 0
    %9043 = vmatprep.subr.bf16.mxu0 0
    %9044 = vmatpush1.bf16.xpose.msra.mxu0 0
    %9045 = vmatprep.mubr.bf16.mxu0 0
    %9046 = vmatmul.mubr.bf16.gmra.mrb[0].mxu0 %v9008
    %v9047 = vpop.f32.mrb[0].mxu0
    %v9048 = vadd.f32 %v573, %v9047
    %v9049 = vpop.f32.mrb[0].mxu0
    %v9050 = vpop.f32.mrb[0].mxu0
    %v9051 = vpop.f32.mrb[0].mxu0
    %9052 = vdwg.mxu0
    %v9053 = vsel %vm669, %v8998, -inf
    %9054 = vmax.xlane.f32.xlu0 %v9053
    %v9055 = vpop.xlane.xlu0 %9054
    %v9056 = vsel %vm669, %v9048, -inf
    %9057 = vmax.xlane.f32.xlu0 %v9056
    %v9058 = vpop.xlane.xlu0 %9057
    %v9059 = vsub.f32 %v8998, %v9055
    %v9060 = vsub.f32 %v9048, %v9058
    %v9061 = vmul.f32 %v9059, 1.442695
    %v9062 = vpow.pop %v9061
    %v9063 = vmul.f32 %v9060, 1.442695
    %v9064 = vpow.pop %v9063
    %v9065 = vsel %vm669, %v9062, 0.0
    %9066 = vadd.xlane.f32.xlu0 %v9065
    %v9067 = vpop.xlane.xlu0 %9066
    %v9068 = vsel %vm669, %v9064, 0.0
    %9069 = vadd.xlane.f32.xlu0 %v9068
    %v9070 = vpop.xlane.xlu0 %9069
    %v9071 = vrcp.pop %v9067
    %v9072 = vrcp.pop %v9070
    %v9073 = vmul.f32 %v9062, %v9071
    %v9074 = vmul.f32 %v9064, %v9072
    %v9075 = vpack.c.bf16 %v9073, %v9073
    %v9076 = vpack.c.bf16 %v9074, %v9074
    %9077 = vrot.lane.b32.xlu0 %v8523, 64
    %v9078 = vpop.permute.xlu0 %9077
    %v9080 = vsel %vm669, %v9075, 0
    %v9083 = vsel %vm697, %v9078, 0
    %9085 = vmatprep.subr.bf16.mxu0 0
    %9086 = vmatpush1.bf16.msra.mxu0 %v9083
    %9087 = vmatprep.subr.bf16.mxu0 0
    %9088 = vmatpush1.bf16.msra.mxu0 0
    %9089 = vmatprep.subr.bf16.mxu0 0
    %9090 = vmatpush1.bf16.msra.mxu0 0
    %9091 = vmatprep.subr.bf16.mxu0 0
    %9092 = vmatpush1.bf16.msra.mxu0 0
    %9093 = vmatprep.subr.bf16.mxu0 0
    %9094 = vmatpush1.bf16.msra.mxu0 0
    %9095 = vmatprep.subr.bf16.mxu0 0
    %9096 = vmatpush1.bf16.msra.mxu0 0
    %9097 = vmatprep.subr.bf16.mxu0 0
    %9098 = vmatpush1.bf16.msra.mxu0 0
    %9099 = vmatprep.subr.bf16.mxu0 0
    %9100 = vmatpush1.bf16.msra.mxu0 0
    %9101 = vmatprep.subr.bf16.mxu0 0
    %9102 = vmatpush1.bf16.msra.mxu0 0
    %9103 = vmatprep.subr.bf16.mxu0 0
    %9104 = vmatpush1.bf16.msra.mxu0 0
    %9105 = vmatprep.subr.bf16.mxu0 0
    %9106 = vmatpush1.bf16.msra.mxu0 0
    %9107 = vmatprep.subr.bf16.mxu0 0
    %9108 = vmatpush1.bf16.msra.mxu0 0
    %9109 = vmatprep.subr.bf16.mxu0 0
    %9110 = vmatpush1.bf16.msra.mxu0 0
    %9111 = vmatprep.subr.bf16.mxu0 0
    %9112 = vmatpush1.bf16.msra.mxu0 0
    %9113 = vmatprep.subr.bf16.mxu0 0
    %9114 = vmatpush1.bf16.msra.mxu0 0
    %9115 = vmatprep.subr.bf16.mxu0 0
    %9116 = vmatpush1.bf16.msra.mxu0 0
    %9117 = vmatprep.mubr.bf16.mxu0 0
    %9118 = vmatmul.mubr.bf16.gmra.mrb[0].mxu0 %v9080
    %v9119 = vpop.f32.mrb[0].mxu0
    %v9120 = vadd.f32 0.0, %v9119
    %v9121 = vpop.f32.mrb[0].mxu0
    %v9122 = vpop.f32.mrb[0].mxu0
    %v9123 = vpop.f32.mrb[0].mxu0
    %9124 = vdwg.mxu0
    %9125 = vrot.lane.b32.xlu0 %v8524, 64
    %v9126 = vpop.permute.xlu0 %9125
    %v9128 = vsel %vm669, %v9076, 0
    %v9131 = vsel %vm697, %v9126, 0
    %9133 = vmatprep.subr.bf16.mxu0 0
    %9134 = vmatpush1.bf16.msra.mxu0 %v9131
    %9135 = vmatprep.subr.bf16.mxu0 0
    %9136 = vmatpush1.bf16.msra.mxu0 0
    %9137 = vmatprep.subr.bf16.mxu0 0
    %9138 = vmatpush1.bf16.msra.mxu0 0
    %9139 = vmatprep.subr.bf16.mxu0 0
    %9140 = vmatpush1.bf16.msra.mxu0 0
    %9141 = vmatprep.subr.bf16.mxu0 0
    %9142 = vmatpush1.bf16.msra.mxu0 0
    %9143 = vmatprep.subr.bf16.mxu0 0
    %9144 = vmatpush1.bf16.msra.mxu0 0
    %9145 = vmatprep.subr.bf16.mxu0 0
    %9146 = vmatpush1.bf16.msra.mxu0 0
    %9147 = vmatprep.subr.bf16.mxu0 0
    %9148 = vmatpush1.bf16.msra.mxu0 0
    %9149 = vmatprep.subr.bf16.mxu0 0
    %9150 = vmatpush1.bf16.msra.mxu0 0
    %9151 = vmatprep.subr.bf16.mxu0 0
    %9152 = vmatpush1.bf16.msra.mxu0 0
    %9153 = vmatprep.subr.bf16.mxu0 0
    %9154 = vmatpush1.bf16.msra.mxu0 0
    %9155 = vmatprep.subr.bf16.mxu0 0
    %9156 = vmatpush1.bf16.msra.mxu0 0
    %9157 = vmatprep.subr.bf16.mxu0 0
    %9158 = vmatpush1.bf16.msra.mxu0 0
    %9159 = vmatprep.subr.bf16.mxu0 0
    %9160 = vmatpush1.bf16.msra.mxu0 0
    %9161 = vmatprep.subr.bf16.mxu0 0
    %9162 = vmatpush1.bf16.msra.mxu0 0
    %9163 = vmatprep.subr.bf16.mxu0 0
    %9164 = vmatpush1.bf16.msra.mxu0 0
    %9165 = vmatprep.mubr.bf16.mxu0 0
    %9166 = vmatmul.mubr.bf16.gmra.mrb[0].mxu0 %v9128
    %v9167 = vpop.f32.mrb[0].mxu0
    %v9168 = vadd.f32 0.0, %v9167
    %v9169 = vpop.f32.mrb[0].mxu0
    %v9170 = vpop.f32.mrb[0].mxu0
    %v9171 = vpop.f32.mrb[0].mxu0
    %9172 = vdwg.mxu0
    %9173 = vrot.lane.b32.xlu0 %v8513, 32
    %v9174 = vpop.permute.xlu0 %9173
    %9175 = vrot.lane.b32.xlu0 %v8518, 32
    %v9176 = vpop.permute.xlu0 %9175
    %v9178 = vsel %vm576, %v9174, 0
    %v9181 = vsel %vm576, %v9176, 0
    %9183 = vmatprep.subr.bf16.mxu0 0
    %9184 = vmatpush1.bf16.xpose.msra.mxu0 %v9181
    %9185 = vmatprep.subr.bf16.mxu0 0
    %9186 = vmatpush1.bf16.xpose.msra.mxu0 0
    %9187 = vmatprep.subr.bf16.mxu0 0
    %9188 = vmatpush1.bf16.xpose.msra.mxu0 0
    %9189 = vmatprep.subr.bf16.mxu0 0
    %9190 = vmatpush1.bf16.xpose.msra.mxu0 0
    %9191 = vmatprep.subr.bf16.mxu0 0
    %9192 = vmatpush1.bf16.xpose.msra.mxu0 0
    %9193 = vmatprep.subr.bf16.mxu0 0
    %9194 = vmatpush1.bf16.xpose.msra.mxu0 0
    %9195 = vmatprep.subr.bf16.mxu0 0
    %9196 = vmatpush1.bf16.xpose.msra.mxu0 0
    %9197 = vmatprep.subr.bf16.mxu0 0
    %9198 = vmatpush1.bf16.xpose.msra.mxu0 0
    %9199 = vmatprep.subr.bf16.mxu0 0
    %9200 = vmatpush1.bf16.xpose.msra.mxu0 0
    %9201 = vmatprep.subr.bf16.mxu0 0
    %9202 = vmatpush1.bf16.xpose.msra.mxu0 0
    %9203 = vmatprep.subr.bf16.mxu0 0
    %9204 = vmatpush1.bf16.xpose.msra.mxu0 0
    %9205 = vmatprep.subr.bf16.mxu0 0
    %9206 = vmatpush1.bf16.xpose.msra.mxu0 0
    %9207 = vmatprep.subr.bf16.mxu0 0
    %9208 = vmatpush1.bf16.xpose.msra.mxu0 0
    %9209 = vmatprep.subr.bf16.mxu0 0
    %9210 = vmatpush1.bf16.xpose.msra.mxu0 0
    %9211 = vmatprep.subr.bf16.mxu0 0
    %9212 = vmatpush1.bf16.xpose.msra.mxu0 0
    %9213 = vmatprep.subr.bf16.mxu0 0
    %9214 = vmatpush1.bf16.xpose.msra.mxu0 0
    %9215 = vmatprep.mubr.bf16.mxu0 0
    %9216 = vmatmul.mubr.bf16.gmra.mrb[0].mxu0 %v9178
    %v9217 = vpop.f32.mrb[0].mxu0
    %v9218 = vadd.f32 %v569, %v9217
    %v9219 = vpop.f32.mrb[0].mxu0
    %v9220 = vpop.f32.mrb[0].mxu0
    %v9221 = vpop.f32.mrb[0].mxu0
    %9222 = vdwg.mxu0
    %9223 = vrot.lane.b32.xlu0 %v8514, 32
    %v9224 = vpop.permute.xlu0 %9223
    %9225 = vrot.lane.b32.xlu0 %v8519, 32
    %v9226 = vpop.permute.xlu0 %9225
    %v9228 = vsel %vm576, %v9224, 0
    %v9231 = vsel %vm576, %v9226, 0
    %9233 = vmatprep.subr.bf16.mxu0 0
    %9234 = vmatpush1.bf16.xpose.msra.mxu0 %v9231
    %9235 = vmatprep.subr.bf16.mxu0 0
    %9236 = vmatpush1.bf16.xpose.msra.mxu0 0
    %9237 = vmatprep.subr.bf16.mxu0 0
    %9238 = vmatpush1.bf16.xpose.msra.mxu0 0
    %9239 = vmatprep.subr.bf16.mxu0 0
    %9240 = vmatpush1.bf16.xpose.msra.mxu0 0
    %9241 = vmatprep.subr.bf16.mxu0 0
    %9242 = vmatpush1.bf16.xpose.msra.mxu0 0
    %9243 = vmatprep.subr.bf16.mxu0 0
    %9244 = vmatpush1.bf16.xpose.msra.mxu0 0
    %9245 = vmatprep.subr.bf16.mxu0 0
    %9246 = vmatpush1.bf16.xpose.msra.mxu0 0
    %9247 = vmatprep.subr.bf16.mxu0 0
    %9248 = vmatpush1.bf16.xpose.msra.mxu0 0
    %9249 = vmatprep.subr.bf16.mxu0 0
    %9250 = vmatpush1.bf16.xpose.msra.mxu0 0
    %9251 = vmatprep.subr.bf16.mxu0 0
    %9252 = vmatpush1.bf16.xpose.msra.mxu0 0
    %9253 = vmatprep.subr.bf16.mxu0 0
    %9254 = vmatpush1.bf16.xpose.msra.mxu0 0
    %9255 = vmatprep.subr.bf16.mxu0 0
    %9256 = vmatpush1.bf16.xpose.msra.mxu0 0
    %9257 = vmatprep.subr.bf16.mxu0 0
    %9258 = vmatpush1.bf16.xpose.msra.mxu0 0
    %9259 = vmatprep.subr.bf16.mxu0 0
    %9260 = vmatpush1.bf16.xpose.msra.mxu0 0
    %9261 = vmatprep.subr.bf16.mxu0 0
    %9262 = vmatpush1.bf16.xpose.msra.mxu0 0
    %9263 = vmatprep.subr.bf16.mxu0 0
    %9264 = vmatpush1.bf16.xpose.msra.mxu0 0
    %9265 = vmatprep.mubr.bf16.mxu0 0
    %9266 = vmatmul.mubr.bf16.gmra.mrb[0].mxu0 %v9228
    %v9267 = vpop.f32.mrb[0].mxu0
    %v9268 = vadd.f32 %v573, %v9267
    %v9269 = vpop.f32.mrb[0].mxu0
    %v9270 = vpop.f32.mrb[0].mxu0
    %v9271 = vpop.f32.mrb[0].mxu0
    %9272 = vdwg.mxu0
    %v9273 = vsel %vm669, %v9218, -inf
    %9274 = vmax.xlane.f32.xlu0 %v9273
    %v9275 = vpop.xlane.xlu0 %9274
    %v9276 = vsel %vm669, %v9268, -inf
    %9277 = vmax.xlane.f32.xlu0 %v9276
    %v9278 = vpop.xlane.xlu0 %9277
    %v9279 = vsub.f32 %v9218, %v9275
    %v9280 = vsub.f32 %v9268, %v9278
    %v9281 = vmul.f32 %v9279, 1.442695
    %v9282 = vpow.pop %v9281
    %v9283 = vmul.f32 %v9280, 1.442695
    %v9284 = vpow.pop %v9283
    %v9285 = vsel %vm669, %v9282, 0.0
    %9286 = vadd.xlane.f32.xlu0 %v9285
    %v9287 = vpop.xlane.xlu0 %9286
    %v9288 = vsel %vm669, %v9284, 0.0
    %9289 = vadd.xlane.f32.xlu0 %v9288
    %v9290 = vpop.xlane.xlu0 %9289
    %v9291 = vrcp.pop %v9287
    %v9292 = vrcp.pop %v9290
    %v9293 = vmul.f32 %v9282, %v9291
    %v9294 = vmul.f32 %v9284, %v9292
    %v9295 = vpack.c.bf16 %v9293, %v9293
    %v9296 = vpack.c.bf16 %v9294, %v9294
    %9297 = vrot.lane.b32.xlu0 %v8523, 32
    %v9298 = vpop.permute.xlu0 %9297
    %v9300 = vsel %vm669, %v9295, 0
    %v9303 = vsel %vm697, %v9298, 0
    %9305 = vmatprep.subr.bf16.mxu0 0
    %9306 = vmatpush1.bf16.msra.mxu0 %v9303
    %9307 = vmatprep.subr.bf16.mxu0 0
    %9308 = vmatpush1.bf16.msra.mxu0 0
    %9309 = vmatprep.subr.bf16.mxu0 0
    %9310 = vmatpush1.bf16.msra.mxu0 0
    %9311 = vmatprep.subr.bf16.mxu0 0
    %9312 = vmatpush1.bf16.msra.mxu0 0
    %9313 = vmatprep.subr.bf16.mxu0 0
    %9314 = vmatpush1.bf16.msra.mxu0 0
    %9315 = vmatprep.subr.bf16.mxu0 0
    %9316 = vmatpush1.bf16.msra.mxu0 0
    %9317 = vmatprep.subr.bf16.mxu0 0
    %9318 = vmatpush1.bf16.msra.mxu0 0
    %9319 = vmatprep.subr.bf16.mxu0 0
    %9320 = vmatpush1.bf16.msra.mxu0 0
    %9321 = vmatprep.subr.bf16.mxu0 0
    %9322 = vmatpush1.bf16.msra.mxu0 0
    %9323 = vmatprep.subr.bf16.mxu0 0
    %9324 = vmatpush1.bf16.msra.mxu0 0
    %9325 = vmatprep.subr.bf16.mxu0 0
    %9326 = vmatpush1.bf16.msra.mxu0 0
    %9327 = vmatprep.subr.bf16.mxu0 0
    %9328 = vmatpush1.bf16.msra.mxu0 0
    %9329 = vmatprep.subr.bf16.mxu0 0
    %9330 = vmatpush1.bf16.msra.mxu0 0
    %9331 = vmatprep.subr.bf16.mxu0 0
    %9332 = vmatpush1.bf16.msra.mxu0 0
    %9333 = vmatprep.subr.bf16.mxu0 0
    %9334 = vmatpush1.bf16.msra.mxu0 0
    %9335 = vmatprep.subr.bf16.mxu0 0
    %9336 = vmatpush1.bf16.msra.mxu0 0
    %9337 = vmatprep.mubr.bf16.mxu0 0
    %9338 = vmatmul.mubr.bf16.gmra.mrb[0].mxu0 %v9300
    %v9339 = vpop.f32.mrb[0].mxu0
    %v9340 = vadd.f32 0.0, %v9339
    %v9341 = vpop.f32.mrb[0].mxu0
    %v9342 = vpop.f32.mrb[0].mxu0
    %v9343 = vpop.f32.mrb[0].mxu0
    %9344 = vdwg.mxu0
    %9345 = vrot.lane.b32.xlu0 %v8524, 32
    %v9346 = vpop.permute.xlu0 %9345
    %v9348 = vsel %vm669, %v9296, 0
    %v9351 = vsel %vm697, %v9346, 0
    %9353 = vmatprep.subr.bf16.mxu0 0
    %9354 = vmatpush1.bf16.msra.mxu0 %v9351
    %9355 = vmatprep.subr.bf16.mxu0 0
    %9356 = vmatpush1.bf16.msra.mxu0 0
    %9357 = vmatprep.subr.bf16.mxu0 0
    %9358 = vmatpush1.bf16.msra.mxu0 0
    %9359 = vmatprep.subr.bf16.mxu0 0
    %9360 = vmatpush1.bf16.msra.mxu0 0
    %9361 = vmatprep.subr.bf16.mxu0 0
    %9362 = vmatpush1.bf16.msra.mxu0 0
    %9363 = vmatprep.subr.bf16.mxu0 0
    %9364 = vmatpush1.bf16.msra.mxu0 0
    %9365 = vmatprep.subr.bf16.mxu0 0
    %9366 = vmatpush1.bf16.msra.mxu0 0
    %9367 = vmatprep.subr.bf16.mxu0 0
    %9368 = vmatpush1.bf16.msra.mxu0 0
    %9369 = vmatprep.subr.bf16.mxu0 0
    %9370 = vmatpush1.bf16.msra.mxu0 0
    %9371 = vmatprep.subr.bf16.mxu0 0
    %9372 = vmatpush1.bf16.msra.mxu0 0
    %9373 = vmatprep.subr.bf16.mxu0 0
    %9374 = vmatpush1.bf16.msra.mxu0 0
    %9375 = vmatprep.subr.bf16.mxu0 0
    %9376 = vmatpush1.bf16.msra.mxu0 0
    %9377 = vmatprep.subr.bf16.mxu0 0
    %9378 = vmatpush1.bf16.msra.mxu0 0
    %9379 = vmatprep.subr.bf16.mxu0 0
    %9380 = vmatpush1.bf16.msra.mxu0 0
    %9381 = vmatprep.subr.bf16.mxu0 0
    %9382 = vmatpush1.bf16.msra.mxu0 0
    %9383 = vmatprep.subr.bf16.mxu0 0
    %9384 = vmatpush1.bf16.msra.mxu0 0
    %9385 = vmatprep.mubr.bf16.mxu0 0
    %9386 = vmatmul.mubr.bf16.gmra.mrb[0].mxu0 %v9348
    %v9387 = vpop.f32.mrb[0].mxu0
    %v9388 = vadd.f32 0.0, %v9387
    %v9389 = vpop.f32.mrb[0].mxu0
    %v9390 = vpop.f32.mrb[0].mxu0
    %v9391 = vpop.f32.mrb[0].mxu0
    %9392 = vdwg.mxu0
    %9395 = vrot.lane.b32.xlu0 %v8900, 32
    %v9396 = vpop.permute.xlu0 %9395
    %9397 = vrot.lane.b32.xlu0 %v8948, 32
    %v9398 = vpop.permute.xlu0 %9397
    %9403 = vrot.lane.b32.xlu0 %v9120, 64
    %v9404 = vpop.permute.xlu0 %9403
    %9405 = vrot.lane.b32.xlu0 %v9168, 64
    %v9406 = vpop.permute.xlu0 %9405
    %9411 = vrot.lane.b32.xlu0 %v9340, 96
    %v9412 = vpop.permute.xlu0 %9411
    %9413 = vrot.lane.b32.xlu0 %v9388, 96
    %v9414 = vpop.permute.xlu0 %9413
    %v9417 = vsel %vm576, %v8682, %v9396
    %v9418 = vsel %vm576, %v8728, %v9398
    %v9419 = vsel %vm1473, %v9417, %v9404
    %v9420 = vsel %vm1473, %v9418, %v9406
    %v9421 = vsel %vm1476, %v9419, %v9412
    %v9422 = vsel %vm1476, %v9420, %v9414
    %v9423 = vpack.c.bf16 %v9422, %v9421
    %v9425 = vlaneseq
    %v9426 = vshrl.u32 %v9425, 7
    %v9427 = vsub.s32 0, %v9426
    %v9428 = vrot.slane %v8272, %v9427
    %v9446 = vunpack.c.l.b16 %v8255
    %v9447 = vunpack.c.l.b16 %v8256
    %v9448 = vunpack.c.l.b16 %v8257
    %v9449 = vunpack.c.l.b16 %v8258
    %v9450 = vunpack.c.l.b16 %v8259
    %v9451 = vunpack.c.l.b16 %v8260
    %v9452 = vunpack.c.l.b16 %v8261
    %v9453 = vunpack.c.l.b16 %v8262
    %v9454 = vunpack.c.l.b16 %v8263
    %v9455 = vunpack.c.l.b16 %v8264
    %v9456 = vunpack.c.l.b16 %v8265
    %v9457 = vunpack.c.l.b16 %v8266
    %v9458 = vunpack.c.l.b16 %v8267
    %v9459 = vunpack.c.l.b16 %v8268
    %v9460 = vunpack.c.l.b16 %v8269
    %v9461 = vunpack.c.l.b16 %v8270
    %v9462 = vpack.c.b16 %v9447, %v9446
    %v9463 = vpack.c.b16 %v9449, %v9448
    %v9464 = vpack.c.b16 %v9451, %v9450
    %v9465 = vpack.c.b16 %v9453, %v9452
    %v9466 = vpack.c.b16 %v9455, %v9454
    %v9467 = vpack.c.b16 %v9457, %v9456
    %v9468 = vpack.c.b16 %v9459, %v9458
    %v9469 = vpack.c.b16 %v9461, %v9460
    %9478 = vmatprep.subr.bf16.mxu0 0
    %9479 = vmatpush1.bf16.msra.mxu0 %v9462
    %9480 = vmatprep.subr.bf16.mxu0 0
    %9481 = vmatpush1.bf16.msra.mxu0 %v9463
    %9482 = vmatprep.subr.bf16.mxu0 0
    %9483 = vmatpush1.bf16.msra.mxu0 %v9464
    %9484 = vmatprep.subr.bf16.mxu0 0
    %9485 = vmatpush1.bf16.msra.mxu0 %v9465
    %9486 = vmatprep.subr.bf16.mxu0 0
    %9487 = vmatpush1.bf16.msra.mxu0 %v9466
    %9488 = vmatprep.subr.bf16.mxu0 0
    %9489 = vmatpush1.bf16.msra.mxu0 %v9467
    %9490 = vmatprep.subr.bf16.mxu0 0
    %9491 = vmatpush1.bf16.msra.mxu0 %v9468
    %9492 = vmatprep.subr.bf16.mxu0 0
    %9493 = vmatpush1.bf16.msra.mxu0 %v9469
    %9494 = vmatprep.subr.bf16.mxu0 0
    %9495 = vmatpush1.bf16.msra.mxu0 0
    %9496 = vmatprep.subr.bf16.mxu0 0
    %9497 = vmatpush1.bf16.msra.mxu0 0
    %9498 = vmatprep.subr.bf16.mxu0 0
    %9499 = vmatpush1.bf16.msra.mxu0 0
    %9500 = vmatprep.subr.bf16.mxu0 0
    %9501 = vmatpush1.bf16.msra.mxu0 0
    %9502 = vmatprep.subr.bf16.mxu0 0
    %9503 = vmatpush1.bf16.msra.mxu0 0
    %9504 = vmatprep.subr.bf16.mxu0 0
    %9505 = vmatpush1.bf16.msra.mxu0 0
    %9506 = vmatprep.subr.bf16.mxu0 0
    %9507 = vmatpush1.bf16.msra.mxu0 0
    %9508 = vmatprep.subr.bf16.mxu0 0
    %9509 = vmatpush1.bf16.msra.mxu0 0
    %9510 = vmatprep.mubr.bf16.mxu0 0
    %9511 = vmatmul.mubr.bf16.gmra.mrb[0].mxu0 %v9423
    %v9512 = vpop.f32.mrb[0].mxu0
    %v9513 = vadd.f32 %v9428, %v9512
    %v9514 = vpop.f32.mrb[0].mxu0
    %v9515 = vpop.f32.mrb[0].mxu0
    %v9516 = vadd.f32 %v9428, %v9515
    %v9517 = vpop.f32.mrb[0].mxu0
    %9518 = vdwg.mxu0
    %v9519 = vadd.f32 %v9513, %v8214
    %v9520 = vadd.f32 %v9516, %v8215
    %9521 = vadd.xlane.f32.xlu0 %v9519
    %v9522 = vpop.xlane.xlu0 %9521
    %9523 = vadd.xlane.f32.xlu0 %v9520
    %v9524 = vpop.xlane.xlu0 %9523
    %v9525 = vmul.f32 %v9522, %v230
    %v9526 = vmul.f32 %v9524, %v230
    %v9527 = vsub.f32 %v9519, %v9525
    %v9528 = vsub.f32 %v9520, %v9526
    %v9529 = vmul.f32 %v9527, %v9527
    %v9530 = vmul.f32 %v9528, %v9528
    %9531 = vadd.xlane.f32.xlu0 %v9529
    %v9532 = vpop.xlane.xlu0 %9531
    %9533 = vadd.xlane.f32.xlu0 %v9530
    %v9534 = vpop.xlane.xlu0 %9533
    %v9535 = vmul.f32 %v9532, %v230
    %v9536 = vmul.f32 %v9534, %v230
    %v9537 = vadd.f32 %v9535, 1e-05
    %v9538 = vadd.f32 %v9536, 1e-05
    %v9539 = vrsqrt.pop %v9537
    %v9540 = vrsqrt.pop %v9538
    %v9541 = vmul.f32 %v9527, %v9539
    %v9542 = vmul.f32 %v9528, %v9540
    %v9544 = vlaneseq
    %v9545 = vshrl.u32 %v9544, 7
    %v9546 = vsub.s32 0, %v9545
    %v9547 = vrot.slane %v8274, %v9546
    %v9549 = vmul.f32 %v9541, %v9547
    %v9550 = vmul.f32 %v9542, %v9547
    %v9552 = vlaneseq
    %v9553 = vshrl.u32 %v9552, 7
    %v9554 = vsub.s32 0, %v9553
    %v9555 = vrot.slane %v8276, %v9554
    %v9557 = vadd.f32 %v9549, %v9555
    %v9558 = vadd.f32 %v9550, %v9555
    %s9559 = scalar_lea.vmem %s73, 128
    %v9560 = vld [vmem:[%s9559] sm:$0xff]
    %v9561 = vld [vmem:[%s9559 + $0x8] sm:$0xff]
    %v9562 = vld [vmem:[%s9559 + $0x10] sm:$0xff]
    %v9563 = vld [vmem:[%s9559 + $0x18] sm:$0xff]
    %v9564 = vld [vmem:[%s9559 + $0x20] sm:$0xff]
    %v9565 = vld [vmem:[%s9559 + $0x28] sm:$0xff]
    %v9566 = vld [vmem:[%s9559 + $0x30] sm:$0xff]
    %v9567 = vld [vmem:[%s9559 + $0x38] sm:$0xff]
    %v9568 = vld [vmem:[%s9559 + $0x40] sm:$0xff]
    %v9569 = vld [vmem:[%s9559 + $0x48] sm:$0xff]
    %v9570 = vld [vmem:[%s9559 + $0x50] sm:$0xff]
    %v9571 = vld [vmem:[%s9559 + $0x58] sm:$0xff]
    %v9572 = vld [vmem:[%s9559 + $0x60] sm:$0xff]
    %v9573 = vld [vmem:[%s9559 + $0x68] sm:$0xff]
    %v9574 = vld [vmem:[%s9559 + $0x70] sm:$0xff]
    %v9575 = vld [vmem:[%s9559 + $0x78] sm:$0xff]
    %s9576 = scalar_lea.vmem %s75, 2
    %v9577 = vld [vmem:[%s9576] sm:$0x3]
    %s9578 = scalar_lea.vmem %s77, 128
    %v9579 = vld [vmem:[%s9578] sm:$0xf]
    %v9580 = vld [vmem:[%s9578 + $0x4] sm:$0xf]
    %v9581 = vld [vmem:[%s9578 + $0x8] sm:$0xf]
    %v9582 = vld [vmem:[%s9578 + $0xc] sm:$0xf]
    %v9583 = vld [vmem:[%s9578 + $0x10] sm:$0xf]
    %v9584 = vld [vmem:[%s9578 + $0x14] sm:$0xf]
    %v9585 = vld [vmem:[%s9578 + $0x18] sm:$0xf]
    %v9586 = vld [vmem:[%s9578 + $0x1c] sm:$0xf]
    %v9587 = vld [vmem:[%s9578 + $0x20] sm:$0xf]
    %v9588 = vld [vmem:[%s9578 + $0x24] sm:$0xf]
    %v9589 = vld [vmem:[%s9578 + $0x28] sm:$0xf]
    %v9590 = vld [vmem:[%s9578 + $0x2c] sm:$0xf]
    %v9591 = vld [vmem:[%s9578 + $0x30] sm:$0xf]
    %v9592 = vld [vmem:[%s9578 + $0x34] sm:$0xf]
    %v9593 = vld [vmem:[%s9578 + $0x38] sm:$0xf]
    %v9594 = vld [vmem:[%s9578 + $0x3c] sm:$0xf]
    %v9595 = vld [vmem:[%s9578 + $0x40] sm:$0xf]
    %v9596 = vld [vmem:[%s9578 + $0x44] sm:$0xf]
    %v9597 = vld [vmem:[%s9578 + $0x48] sm:$0xf]
    %v9598 = vld [vmem:[%s9578 + $0x4c] sm:$0xf]
    %v9599 = vld [vmem:[%s9578 + $0x50] sm:$0xf]
    %v9600 = vld [vmem:[%s9578 + $0x54] sm:$0xf]
    %v9601 = vld [vmem:[%s9578 + $0x58] sm:$0xf]
    %v9602 = vld [vmem:[%s9578 + $0x5c] sm:$0xf]
    %v9603 = vld [vmem:[%s9578 + $0x60] sm:$0xf]
    %v9604 = vld [vmem:[%s9578 + $0x64] sm:$0xf]
    %v9605 = vld [vmem:[%s9578 + $0x68] sm:$0xf]
    %v9606 = vld [vmem:[%s9578 + $0x6c] sm:$0xf]
    %v9607 = vld [vmem:[%s9578 + $0x70] sm:$0xf]
    %v9608 = vld [vmem:[%s9578 + $0x74] sm:$0xf]
    %v9609 = vld [vmem:[%s9578 + $0x78] sm:$0xf]
    %v9610 = vld [vmem:[%s9578 + $0x7c] sm:$0xf]
    %s9611 = scalar_lea.vmem %s79, 1
    %v9612 = vld [vmem:[%s9611] sm:$0x1]
    %s9613 = scalar_lea.vmem %s81, 1
    %v9614 = vld [vmem:[%s9613] sm:$0x1]
    %s9615 = scalar_lea.vmem %s83, 1
    %v9616 = vld [vmem:[%s9615] sm:$0x1]
    %v9617 = vpack.c.bf16 %v9558, %v9557
    %v9619 = vlaneseq
    %v9620 = vshrl.u32 %v9619, 7
    %v9621 = vsub.s32 0, %v9620
    %v9622 = vrot.slane %v9577, %v9621
    %v9623 = vlaneseq
    %v9624 = vshrl.u32 %v9623, 7
    %v9625 = vsub.s32 1, %v9624
    %v9626 = vrot.slane %v9577, %v9625
    %v9645 = vunpack.c.l.b16 %v9560
    %v9646 = vunpack.c.h.b16 %v9560
    %v9647 = vunpack.c.l.b16 %v9561
    %v9648 = vunpack.c.h.b16 %v9561
    %v9649 = vunpack.c.l.b16 %v9562
    %v9650 = vunpack.c.h.b16 %v9562
    %v9651 = vunpack.c.l.b16 %v9563
    %v9652 = vunpack.c.h.b16 %v9563
    %v9653 = vunpack.c.l.b16 %v9564
    %v9654 = vunpack.c.h.b16 %v9564
    %v9655 = vunpack.c.l.b16 %v9565
    %v9656 = vunpack.c.h.b16 %v9565
    %v9657 = vunpack.c.l.b16 %v9566
    %v9658 = vunpack.c.h.b16 %v9566
    %v9659 = vunpack.c.l.b16 %v9567
    %v9660 = vunpack.c.h.b16 %v9567
    %v9661 = vunpack.c.l.b16 %v9568
    %v9662 = vunpack.c.h.b16 %v9568
    %v9663 = vunpack.c.l.b16 %v9569
    %v9664 = vunpack.c.h.b16 %v9569
    %v9665 = vunpack.c.l.b16 %v9570
    %v9666 = vunpack.c.h.b16 %v9570
    %v9667 = vunpack.c.l.b16 %v9571
    %v9668 = vunpack.c.h.b16 %v9571
    %v9669 = vunpack.c.l.b16 %v9572
    %v9670 = vunpack.c.h.b16 %v9572
    %v9671 = vunpack.c.l.b16 %v9573
    %v9672 = vunpack.c.h.b16 %v9573
    %v9673 = vunpack.c.l.b16 %v9574
    %v9674 = vunpack.c.h.b16 %v9574
    %v9675 = vunpack.c.l.b16 %v9575
    %v9676 = vunpack.c.h.b16 %v9575
    %v9677 = vpack.c.b16 %v9647, %v9645
    %v9678 = vpack.c.b16 %v9648, %v9646
    %v9679 = vpack.c.b16 %v9651, %v9649
    %v9680 = vpack.c.b16 %v9652, %v9650
    %v9681 = vpack.c.b16 %v9655, %v9653
    %v9682 = vpack.c.b16 %v9656, %v9654
    %v9683 = vpack.c.b16 %v9659, %v9657
    %v9684 = vpack.c.b16 %v9660, %v9658
    %v9685 = vpack.c.b16 %v9663, %v9661
    %v9686 = vpack.c.b16 %v9664, %v9662
    %v9687 = vpack.c.b16 %v9667, %v9665
    %v9688 = vpack.c.b16 %v9668, %v9666
    %v9689 = vpack.c.b16 %v9671, %v9669
    %v9690 = vpack.c.b16 %v9672, %v9670
    %v9691 = vpack.c.b16 %v9675, %v9673
    %v9692 = vpack.c.b16 %v9676, %v9674
    %9709 = vmatprep.subr.bf16.mxu0 %v9678
    %9710 = vmatpush1.bf16.msra.mxu0 %v9677
    %9711 = vmatprep.subr.bf16.mxu0 %v9680
    %9712 = vmatpush1.bf16.msra.mxu0 %v9679
    %9713 = vmatprep.subr.bf16.mxu0 %v9682
    %9714 = vmatpush1.bf16.msra.mxu0 %v9681
    %9715 = vmatprep.subr.bf16.mxu0 %v9684
    %9716 = vmatpush1.bf16.msra.mxu0 %v9683
    %9717 = vmatprep.subr.bf16.mxu0 %v9686
    %9718 = vmatpush1.bf16.msra.mxu0 %v9685
    %9719 = vmatprep.subr.bf16.mxu0 %v9688
    %9720 = vmatpush1.bf16.msra.mxu0 %v9687
    %9721 = vmatprep.subr.bf16.mxu0 %v9690
    %9722 = vmatpush1.bf16.msra.mxu0 %v9689
    %9723 = vmatprep.subr.bf16.mxu0 %v9692
    %9724 = vmatpush1.bf16.msra.mxu0 %v9691
    %9725 = vmatprep.subr.bf16.mxu0 0
    %9726 = vmatpush1.bf16.msra.mxu0 0
    %9727 = vmatprep.subr.bf16.mxu0 0
    %9728 = vmatpush1.bf16.msra.mxu0 0
    %9729 = vmatprep.subr.bf16.mxu0 0
    %9730 = vmatpush1.bf16.msra.mxu0 0
    %9731 = vmatprep.subr.bf16.mxu0 0
    %9732 = vmatpush1.bf16.msra.mxu0 0
    %9733 = vmatprep.subr.bf16.mxu0 0
    %9734 = vmatpush1.bf16.msra.mxu0 0
    %9735 = vmatprep.subr.bf16.mxu0 0
    %9736 = vmatpush1.bf16.msra.mxu0 0
    %9737 = vmatprep.subr.bf16.mxu0 0
    %9738 = vmatpush1.bf16.msra.mxu0 0
    %9739 = vmatprep.subr.bf16.mxu0 0
    %9740 = vmatpush1.bf16.msra.mxu0 0
    %9741 = vmatprep.mubr.bf16.mxu0 0
    %9742 = vmatmul.mubr.bf16.gmra.mrb[0].mxu0 %v9617
    %v9743 = vpop.f32.mrb[0].mxu0
    %v9744 = vadd.f32 %v9622, %v9743
    %v9745 = vpop.f32.mrb[0].mxu0
    %v9746 = vadd.f32 %v9626, %v9745
    %v9747 = vpop.f32.mrb[0].mxu0
    %v9748 = vadd.f32 %v9622, %v9747
    %v9749 = vpop.f32.mrb[0].mxu0
    %v9750 = vadd.f32 %v9626, %v9749
    %9751 = vdwg.mxu0
    %v9752 = vxor.u32 %v9744, 2147483648
    %v9753 = vxor.u32 %v9746, 2147483648
    %v9754 = vxor.u32 %v9748, 2147483648
    %v9755 = vxor.u32 %v9750, 2147483648
    %v9756 = vmul.f32 %v9752, 1.442695
    %v9757 = vpow.pop %v9756
    %v9758 = vmul.f32 %v9753, 1.442695
    %v9759 = vpow.pop %v9758
    %v9760 = vmul.f32 %v9754, 1.442695
    %v9761 = vpow.pop %v9760
    %v9762 = vmul.f32 %v9755, 1.442695
    %v9763 = vpow.pop %v9762
    %v9764 = vadd.f32 %v9757, 1.0
    %v9765 = vadd.f32 %v9759, 1.0
    %v9766 = vadd.f32 %v9761, 1.0
    %v9767 = vadd.f32 %v9763, 1.0
    %v9768 = vrcp.pop %v9764
    %v9769 = vmul.f32 1.0, %v9768
    %v9770 = vrcp.pop %v9765
    %v9771 = vmul.f32 1.0, %v9770
    %v9772 = vrcp.pop %v9766
    %v9773 = vmul.f32 1.0, %v9772
    %v9774 = vrcp.pop %v9767
    %v9775 = vmul.f32 1.0, %v9774
    %v9776 = vmul.f32 %v9744, %v9769
    %v9777 = vmul.f32 %v9746, %v9771
    %v9778 = vmul.f32 %v9748, %v9773
    %v9779 = vmul.f32 %v9750, %v9775
    %v9780 = vpack.c.bf16 %v9778, %v9776
    %v9781 = vpack.c.bf16 %v9779, %v9777
    %v9783 = vlaneseq
    %v9784 = vshrl.u32 %v9783, 7
    %v9785 = vsub.s32 0, %v9784
    %v9786 = vrot.slane %v9612, %v9785
    %v9820 = vunpack.c.l.b16 %v9579
    %v9821 = vunpack.c.l.b16 %v9580
    %v9822 = vunpack.c.l.b16 %v9581
    %v9823 = vunpack.c.l.b16 %v9582
    %v9824 = vunpack.c.l.b16 %v9583
    %v9825 = vunpack.c.l.b16 %v9584
    %v9826 = vunpack.c.l.b16 %v9585
    %v9827 = vunpack.c.l.b16 %v9586
    %v9828 = vunpack.c.l.b16 %v9587
    %v9829 = vunpack.c.l.b16 %v9588
    %v9830 = vunpack.c.l.b16 %v9589
    %v9831 = vunpack.c.l.b16 %v9590
    %v9832 = vunpack.c.l.b16 %v9591
    %v9833 = vunpack.c.l.b16 %v9592
    %v9834 = vunpack.c.l.b16 %v9593
    %v9835 = vunpack.c.l.b16 %v9594
    %v9836 = vunpack.c.l.b16 %v9595
    %v9837 = vunpack.c.l.b16 %v9596
    %v9838 = vunpack.c.l.b16 %v9597
    %v9839 = vunpack.c.l.b16 %v9598
    %v9840 = vunpack.c.l.b16 %v9599
    %v9841 = vunpack.c.l.b16 %v9600
    %v9842 = vunpack.c.l.b16 %v9601
    %v9843 = vunpack.c.l.b16 %v9602
    %v9844 = vunpack.c.l.b16 %v9603
    %v9845 = vunpack.c.l.b16 %v9604
    %v9846 = vunpack.c.l.b16 %v9605
    %v9847 = vunpack.c.l.b16 %v9606
    %v9848 = vunpack.c.l.b16 %v9607
    %v9849 = vunpack.c.l.b16 %v9608
    %v9850 = vunpack.c.l.b16 %v9609
    %v9851 = vunpack.c.l.b16 %v9610
    %v9852 = vpack.c.b16 %v9821, %v9820
    %v9853 = vpack.c.b16 %v9823, %v9822
    %v9854 = vpack.c.b16 %v9825, %v9824
    %v9855 = vpack.c.b16 %v9827, %v9826
    %v9856 = vpack.c.b16 %v9829, %v9828
    %v9857 = vpack.c.b16 %v9831, %v9830
    %v9858 = vpack.c.b16 %v9833, %v9832
    %v9859 = vpack.c.b16 %v9835, %v9834
    %v9860 = vpack.c.b16 %v9837, %v9836
    %v9861 = vpack.c.b16 %v9839, %v9838
    %v9862 = vpack.c.b16 %v9841, %v9840
    %v9863 = vpack.c.b16 %v9843, %v9842
    %v9864 = vpack.c.b16 %v9845, %v9844
    %v9865 = vpack.c.b16 %v9847, %v9846
    %v9866 = vpack.c.b16 %v9849, %v9848
    %v9867 = vpack.c.b16 %v9851, %v9850
    %9884 = vmatprep.subr.bf16.mxu0 0
    %9885 = vmatpush1.bf16.msra.mxu0 %v9852
    %9886 = vmatprep.subr.bf16.mxu0 0
    %9887 = vmatpush1.bf16.msra.mxu0 %v9853
    %9888 = vmatprep.subr.bf16.mxu0 0
    %9889 = vmatpush1.bf16.msra.mxu0 %v9854
    %9890 = vmatprep.subr.bf16.mxu0 0
    %9891 = vmatpush1.bf16.msra.mxu0 %v9855
    %9892 = vmatprep.subr.bf16.mxu0 0
    %9893 = vmatpush1.bf16.msra.mxu0 %v9856
    %9894 = vmatprep.subr.bf16.mxu0 0
    %9895 = vmatpush1.bf16.msra.mxu0 %v9857
    %9896 = vmatprep.subr.bf16.mxu0 0
    %9897 = vmatpush1.bf16.msra.mxu0 %v9858
    %9898 = vmatprep.subr.bf16.mxu0 0
    %9899 = vmatpush1.bf16.msra.mxu0 %v9859
    %9900 = vmatprep.subr.bf16.mxu0 0
    %9901 = vmatpush1.bf16.msra.mxu0 %v9860
    %9902 = vmatprep.subr.bf16.mxu0 0
    %9903 = vmatpush1.bf16.msra.mxu0 %v9861
    %9904 = vmatprep.subr.bf16.mxu0 0
    %9905 = vmatpush1.bf16.msra.mxu0 %v9862
    %9906 = vmatprep.subr.bf16.mxu0 0
    %9907 = vmatpush1.bf16.msra.mxu0 %v9863
    %9908 = vmatprep.subr.bf16.mxu0 0
    %9909 = vmatpush1.bf16.msra.mxu0 %v9864
    %9910 = vmatprep.subr.bf16.mxu0 0
    %9911 = vmatpush1.bf16.msra.mxu0 %v9865
    %9912 = vmatprep.subr.bf16.mxu0 0
    %9913 = vmatpush1.bf16.msra.mxu0 %v9866
    %9914 = vmatprep.subr.bf16.mxu0 0
    %9915 = vmatpush1.bf16.msra.mxu0 %v9867
    %9916 = vmatprep.mubr.bf16.mxu0 %v9781
    %9917 = vmatmul.mubr.bf16.gmra.mrb[0].mxu0 %v9780
    %v9918 = vpop.f32.mrb[0].mxu0
    %v9919 = vadd.f32 %v9786, %v9918
    %v9920 = vpop.f32.mrb[0].mxu0
    %v9921 = vpop.f32.mrb[0].mxu0
    %v9922 = vadd.f32 %v9786, %v9921
    %v9923 = vpop.f32.mrb[0].mxu0
    %9924 = vdwg.mxu0
    %v9925 = vadd.f32 %v9919, %v9557
    %v9926 = vadd.f32 %v9922, %v9558
    %9927 = vadd.xlane.f32.xlu0 %v9925
    %v9928 = vpop.xlane.xlu0 %9927
    %9929 = vadd.xlane.f32.xlu0 %v9926
    %v9930 = vpop.xlane.xlu0 %9929
    %v9931 = vmul.f32 %v9928, %v230
    %v9932 = vmul.f32 %v9930, %v230
    %v9933 = vsub.f32 %v9925, %v9931
    %v9934 = vsub.f32 %v9926, %v9932
    %v9935 = vmul.f32 %v9933, %v9933
    %v9936 = vmul.f32 %v9934, %v9934
    %9937 = vadd.xlane.f32.xlu0 %v9935
    %v9938 = vpop.xlane.xlu0 %9937
    %9939 = vadd.xlane.f32.xlu0 %v9936
    %v9940 = vpop.xlane.xlu0 %9939
    %v9941 = vmul.f32 %v9938, %v230
    %v9942 = vmul.f32 %v9940, %v230
    %v9943 = vadd.f32 %v9941, 1e-05
    %v9944 = vadd.f32 %v9942, 1e-05
    %v9945 = vrsqrt.pop %v9943
    %v9946 = vrsqrt.pop %v9944
    %v9947 = vmul.f32 %v9933, %v9945
    %v9948 = vmul.f32 %v9934, %v9946
    %v9950 = vlaneseq
    %v9951 = vshrl.u32 %v9950, 7
    %v9952 = vsub.s32 0, %v9951
    %v9953 = vrot.slane %v9614, %v9952
    %v9955 = vmul.f32 %v9947, %v9953
    %v9956 = vmul.f32 %v9948, %v9953
    %v9958 = vlaneseq
    %v9959 = vshrl.u32 %v9958, 7
    %v9960 = vsub.s32 0, %v9959
    %v9961 = vrot.slane %v9616, %v9960
    %v9963 = vadd.f32 %v9955, %v9961
    %v9964 = vadd.f32 %v9956, %v9961
    %v9965 = vpack.c.bf16 %v9964, %v9963
    %v9966 = vld [vmem:[%s85] sm:$0xff]
    %v9967 = vld [vmem:[%s85 + $0x8] sm:$0xff]
    %v9968 = vld [vmem:[%s85 + $0x10] sm:$0xff]
    %v9969 = vld [vmem:[%s85 + $0x18] sm:$0xff]
    %v9970 = vld [vmem:[%s85 + $0x20] sm:$0xff]
    %v9971 = vld [vmem:[%s85 + $0x28] sm:$0xff]
    %v9972 = vld [vmem:[%s85 + $0x30] sm:$0xff]
    %v9973 = vld [vmem:[%s85 + $0x38] sm:$0xff]
    %v9974 = vld [vmem:[%s85 + $0x40] sm:$0xff]
    %v9975 = vld [vmem:[%s85 + $0x48] sm:$0xff]
    %v9976 = vld [vmem:[%s85 + $0x50] sm:$0xff]
    %v9977 = vld [vmem:[%s85 + $0x58] sm:$0xff]
    %v9978 = vld [vmem:[%s85 + $0x60] sm:$0xff]
    %v9979 = vld [vmem:[%s85 + $0x68] sm:$0xff]
    %v9980 = vld [vmem:[%s85 + $0x70] sm:$0xff]
    %v9981 = vld [vmem:[%s85 + $0x78] sm:$0xff]
    %v9982 = vld [vmem:[%s87] sm:$0x3]
    %v9984 = vlaneseq
    %v9985 = vshrl.u32 %v9984, 7
    %v9986 = vsub.s32 0, %v9985
    %v9987 = vrot.slane %v9982, %v9986
    %v9988 = vlaneseq
    %v9989 = vshrl.u32 %v9988, 7
    %v9990 = vsub.s32 1, %v9989
    %v9991 = vrot.slane %v9982, %v9990
    %v10010 = vunpack.c.l.b16 %v9966
    %v10011 = vunpack.c.h.b16 %v9966
    %v10012 = vunpack.c.l.b16 %v9967
    %v10013 = vunpack.c.h.b16 %v9967
    %v10014 = vunpack.c.l.b16 %v9968
    %v10015 = vunpack.c.h.b16 %v9968
    %v10016 = vunpack.c.l.b16 %v9969
    %v10017 = vunpack.c.h.b16 %v9969
    %v10018 = vunpack.c.l.b16 %v9970
    %v10019 = vunpack.c.h.b16 %v9970
    %v10020 = vunpack.c.l.b16 %v9971
    %v10021 = vunpack.c.h.b16 %v9971
    %v10022 = vunpack.c.l.b16 %v9972
    %v10023 = vunpack.c.h.b16 %v9972
    %v10024 = vunpack.c.l.b16 %v9973
    %v10025 = vunpack.c.h.b16 %v9973
    %v10026 = vunpack.c.l.b16 %v9974
    %v10027 = vunpack.c.h.b16 %v9974
    %v10028 = vunpack.c.l.b16 %v9975
    %v10029 = vunpack.c.h.b16 %v9975
    %v10030 = vunpack.c.l.b16 %v9976
    %v10031 = vunpack.c.h.b16 %v9976
    %v10032 = vunpack.c.l.b16 %v9977
    %v10033 = vunpack.c.h.b16 %v9977
    %v10034 = vunpack.c.l.b16 %v9978
    %v10035 = vunpack.c.h.b16 %v9978
    %v10036 = vunpack.c.l.b16 %v9979
    %v10037 = vunpack.c.h.b16 %v9979
    %v10038 = vunpack.c.l.b16 %v9980
    %v10039 = vunpack.c.h.b16 %v9980
    %v10040 = vunpack.c.l.b16 %v9981
    %v10041 = vunpack.c.h.b16 %v9981
    %v10042 = vpack.c.b16 %v10012, %v10010
    %v10043 = vpack.c.b16 %v10013, %v10011
    %v10044 = vpack.c.b16 %v10016, %v10014
    %v10045 = vpack.c.b16 %v10017, %v10015
    %v10046 = vpack.c.b16 %v10020, %v10018
    %v10047 = vpack.c.b16 %v10021, %v10019
    %v10048 = vpack.c.b16 %v10024, %v10022
    %v10049 = vpack.c.b16 %v10025, %v10023
    %v10050 = vpack.c.b16 %v10028, %v10026
    %v10051 = vpack.c.b16 %v10029, %v10027
    %v10052 = vpack.c.b16 %v10032, %v10030
    %v10053 = vpack.c.b16 %v10033, %v10031
    %v10054 = vpack.c.b16 %v10036, %v10034
    %v10055 = vpack.c.b16 %v10037, %v10035
    %v10056 = vpack.c.b16 %v10040, %v10038
    %v10057 = vpack.c.b16 %v10041, %v10039
    %10074 = vmatprep.subr.bf16.mxu0 %v10043
    %10075 = vmatpush1.bf16.msra.mxu0 %v10042
    %10076 = vmatprep.subr.bf16.mxu0 %v10045
    %10077 = vmatpush1.bf16.msra.mxu0 %v10044
    %10078 = vmatprep.subr.bf16.mxu0 %v10047
    %10079 = vmatpush1.bf16.msra.mxu0 %v10046
    %10080 = vmatprep.subr.bf16.mxu0 %v10049
    %10081 = vmatpush1.bf16.msra.mxu0 %v10048
    %10082 = vmatprep.subr.bf16.mxu0 %v10051
    %10083 = vmatpush1.bf16.msra.mxu0 %v10050
    %10084 = vmatprep.subr.bf16.mxu0 %v10053
    %10085 = vmatpush1.bf16.msra.mxu0 %v10052
    %10086 = vmatprep.subr.bf16.mxu0 %v10055
    %10087 = vmatpush1.bf16.msra.mxu0 %v10054
    %10088 = vmatprep.subr.bf16.mxu0 %v10057
    %10089 = vmatpush1.bf16.msra.mxu0 %v10056
    %10090 = vmatprep.subr.bf16.mxu0 0
    %10091 = vmatpush1.bf16.msra.mxu0 0
    %10092 = vmatprep.subr.bf16.mxu0 0
    %10093 = vmatpush1.bf16.msra.mxu0 0
    %10094 = vmatprep.subr.bf16.mxu0 0
    %10095 = vmatpush1.bf16.msra.mxu0 0
    %10096 = vmatprep.subr.bf16.mxu0 0
    %10097 = vmatpush1.bf16.msra.mxu0 0
    %10098 = vmatprep.subr.bf16.mxu0 0
    %10099 = vmatpush1.bf16.msra.mxu0 0
    %10100 = vmatprep.subr.bf16.mxu0 0
    %10101 = vmatpush1.bf16.msra.mxu0 0
    %10102 = vmatprep.subr.bf16.mxu0 0
    %10103 = vmatpush1.bf16.msra.mxu0 0
    %10104 = vmatprep.subr.bf16.mxu0 0
    %10105 = vmatpush1.bf16.msra.mxu0 0
    %10106 = vmatprep.mubr.bf16.mxu0 0
    %10107 = vmatmul.mubr.bf16.gmra.mrb[0].mxu0 %v9965
    %v10108 = vpop.f32.mrb[0].mxu0
    %v10109 = vadd.f32 %v9987, %v10108
    %v10110 = vpop.f32.mrb[0].mxu0
    %v10111 = vadd.f32 %v9991, %v10110
    %v10112 = vpop.f32.mrb[0].mxu0
    %v10113 = vadd.f32 %v9987, %v10112
    %v10114 = vpop.f32.mrb[0].mxu0
    %v10115 = vadd.f32 %v9991, %v10114
    %10116 = vdwg.mxu0
    %10117 = vst [vmem:[#allocation2] sm:$0xff] %v10109
    %10118 = vst [vmem:[#allocation2 + $0x8] sm:$0xff] %v10111
    %10119 = vst [vmem:[#allocation2 + $0x10] sm:$0xff] %v10113
    %10120 = vst [vmem:[#allocation2 + $0x18] sm:$0xff] %v10115
    // Predicated region
    $region178: #{run.1} parent=1 // pred_check
      _
    $region179: #{run.1} parent=1 // pred_check_branch
      %10122 = sbr.rel (0) target = $region181
    $region180: #{run.1} parent=1 // pred_region
      %s10124 = ssub.s32 512, 512
      %10125 = vsyncadd [#allocation3], %s10124
      %s10126 = sshll.u32 [#allocation2], 4
      %s10127 = int_to_ptr.vmem [resolvable:$true] %s10126
      %10132 = dma.vmem_to_hbm [thread:$0]  %s10127, 512, %s89, [#allocation3], 256, 256, 16
    $region181: #{run.1} parent=1 // pred_fallthru
      _
    // Predicated region
    $region182: #{run.1} parent=1 // pred_check
      _
    $region183: #{run.1} parent=1 // pred_check_branch
      %10134 = sbr.rel (0) target = $region185
    $region184: #{run.1} parent=1 // pred_region
      %10135 = dma.done [#allocation3], 512
    $region185: #{run.1} parent=1 // pred_fallthru
      _
    %10136 = vsyncpa [#allocation3], 1

</llo_original>
